<compile_context>
chip_gen: v5e
topology: v5e:2x2
jax: 0.10.0
libtpu: 0.0.40
codegen_flags: <defaults>
</compile_context>

<pallas_src>
import functools

import jax
import jax.numpy as jnp
from jax import lax
from jax.experimental import pallas as pl
from jax.experimental.pallas import tpu as pltpu

# ----------------------------- model constants ----------------------------- #
NUM_FEATURES = 4
HIDDEN = 32
NUM_CLASSES = 3
HEADS = 4

# ------------------------------ demo constants ----------------------------- #
N_NODES = 16           # nodes per graph
N_EDGES = 40           # directed edges per graph
GRAPHS_PER_BLOCK = 8   # G graphs packed block-diagonally per grid step (G*N=128)
NUM_GRAPHS = 32        # total graphs per call -> grid of 4 "parallel" steps
                       # (>= 2 steps per v7x TensorCore => intra-TC pipelining)

# ------------------------------ kernel config ------------------------------ #
LANES = 256            # lane width of the packed parameter slab
ATT_COLS = 128         # lane width of the per-layer attention matrices
OUT_LANES = 128        # lane-dense output width (first NUM_CLASSES lanes valid)
NEG_INF = -1e30
MM_DTYPE = jnp.float32 # keep f32 (kernel is VPU/XLU-bound, not MXU-bound)


def _align8(r):
    return (r + 7) & ~7


def _build_layout(hidden=HIDDEN, heads=HEADS, nf=NUM_FEATURES):
    """Row layout of the single packed parameter slab [TOTAL_ROWS, LANES]."""
    entries = [
        # name, rows, cols
        ("ip_w", nf, hidden),
        ("c1_w", hidden, heads * hidden),
        ("c1_a", heads * hidden, ATT_COLS),
        ("p2_w", hidden, 2 * hidden),
        ("c2_w", hidden, heads * 2 * hidden),
        ("c2_a", heads * 2 * hidden, ATT_COLS),
        ("p3_w", 2 * hidden, hidden),
        ("c3_w", 2 * hidden, heads * hidden),
        ("c3_a", heads * hidden, ATT_COLS),
        ("cl1_w", hidden, hidden),
        ("cl2_w", hidden, OUT_LANES),          # zero-padded beyond NUM_CLASSES
        # single-row vectors (biases / LayerNorm params)
        ("ip_b", 1, hidden),
        ("c1_b", 1, hidden), ("n1_g", 1, hidden), ("n1_b", 1, hidden),
        ("p2_b", 1, 2 * hidden),
        ("c2_b", 1, 2 * hidden), ("n2_g", 1, 2 * hidden), ("n2_b", 1, 2 * hidden),
        ("p3_b", 1, hidden),
        ("c3_b", 1, hidden), ("n3_g", 1, hidden), ("n3_b", 1, hidden),
        ("cl1_b", 1, hidden), ("cln_g", 1, hidden), ("cln_b", 1, hidden),
        ("cl2_b", 1, OUT_LANES),               # -1e30 beyond NUM_CLASSES
    ]
    layout = {}
    row = 0
    for name, r, c in entries:
        if r > 1:
            row = _align8(row)      # keep multi-row (matmul) operands 8-aligned
        assert c <= LANES
        layout[name] = (row, r, c)
        row += r
    return layout, _align8(row)


LAYOUT, TOTAL_ROWS = _build_layout()


# --------------------------------- kernel ---------------------------------- #

def gnn_kernel(x_ref, mask_ref, ea_ref, p_ref, ke_ref, out_ref, *,
               hidden, heads, layout):
    """One grid step = one block-diagonal super-graph of G*N = 128 nodes."""

    def w(name):                        # static 2-D slice of the param slab
        r, nr, nc = layout[name]
        return p_ref[r:r + nr, :nc]

    def v(name):                        # [1, C] vector row of the param slab
        r, _, nc = layout[name]
        return p_ref[r:r + 1, :nc]

    def mm(a, b):                       # MXU matmul, f32 accumulation
        return jnp.dot(a.astype(MM_DTYPE), b.astype(MM_DTYPE),
                       preferred_element_type=jnp.float32)

    def layernorm(t, gname, bname, eps=1e-5):
        mu = jnp.mean(t, axis=-1, keepdims=True)
        var = jnp.mean((t - mu) ** 2, axis=-1, keepdims=True)
        return (t - mu) * lax.rsqrt(var + eps) * v(gname) + v(bname)

    x = x_ref[...]
    mask = mask_ref[...]                # additive: 0 on (self-looped) edges, -1e30 elsewhere
    ea = ea_ref[...]
    m_rows = mask.shape[0]
    # hoisted once: used to compute all softmax denominators on the MXU
    ones_col = jnp.ones((m_rows, 1), jnp.float32)

    def gat(h_in, wname, aname, bname, ke_base, out_ch):
        """Dense GATConv (concat=False, edge_dim=1, negative_slope=0.2)."""
        hmat = mm(h_in, w(wname))                       # [M, H*C]
        # All per-head (src, dst) attention coefficients from ONE matmul:
        # column h -> alpha_src head h, column heads+h -> alpha_dst head h.
        a_both = mm(hmat, w(aname))                     # [M, ATT_COLS]
        # Transpose only the 2*heads meaningful columns ([128,8] -> [8,128]).
        a_src_t = jnp.transpose(a_both[:, :2 * heads])  # rows 0..H-1 = src coeffs
        acc = None
        for hh in range(heads):                         # static unroll, heads == 4
            ke_h = ke_ref[ke_base + hh]                 # SMEM scalar
            logits = (a_both[:, heads + hh:heads + hh + 1]   # dst term (column)
                      + a_src_t[hh:hh + 1, :]                # src term (row)
                      + ke_h * ea)                           # edge term
            logits = jnp.maximum(logits, 0.2 * logits)       # leaky_relu(0.2)
            masked = logits + mask                           # additive mask (no select)
            mrow = jnp.max(masked, axis=1, keepdims=True)
            p = jnp.exp(masked - mrow)                       # UNNORMALIZED probs
            denom = mm(p, ones_col)                          # [M, 1] row sums on the MXU
            o_h = mm(p, hmat[:, hh * out_ch:(hh + 1) * out_ch])    # [M, C]
            # deferred softmax normalization: scale the small [M, C] result
            acc_h = o_h * pl.reciprocal(denom, approx=True)
            acc = acc_h if acc is None else acc + acc_h
        return acc * (1.0 / heads) + v(bname)                # mean over heads + bias

    # input projection + relu
    h = jnp.maximum(mm(x, w("ip_w")) + v("ip_b"), 0.0)

    # block 1: GAT(H->H), LayerNorm, residual, relu    (dropout = identity, eval)
    identity = h
    h = jnp.maximum(layernorm(gat(h, "c1_w", "c1_a", "c1_b", 0, hidden),
                              "n1_g", "n1_b") + identity, 0.0)

    # block 2: GAT(H->2H), LayerNorm, projected residual, relu
    identity = mm(h, w("p2_w")) + v("p2_b")
    h = jnp.maximum(layernorm(gat(h, "c2_w", "c2_a", "c2_b", heads, 2 * hidden),
                              "n2_g", "n2_b") + identity, 0.0)

    # block 3: GAT(2H->H), LayerNorm, projected residual, relu
    identity = mm(h, w("p3_w")) + v("p3_b")
    h = jnp.maximum(layernorm(gat(h, "c3_w", "c3_a", "c3_b", 2 * heads, hidden),
                              "n3_g", "n3_b") + identity, 0.0)

    # classifier: Linear -> LayerNorm -> ReLU -> (Dropout: identity) -> Linear
    c = mm(h, w("cl1_w")) + v("cl1_b")
    c = jnp.maximum(layernorm(c, "cln_g", "cln_b"), 0.0)

    # Lane-dense log-softmax: cl2_w is zero-padded and cl2_b holds -1e30 in the
    # padding lanes, so padding never wins the max and contributes exp(.) == 0
    # to the lse -> first NUM_CLASSES lanes are the exact log-softmax.
    logits = mm(c, w("cl2_w")) + v("cl2_b")                  # [M, OUT_LANES]
    m = jnp.max(logits, axis=-1, keepdims=True)
    lse = jnp.log(jnp.sum(jnp.exp(logits - m), axis=-1, keepdims=True)) + m
    out_ref[...] = logits - lse


# --------------------------------- wrapper ---------------------------------- #

@jax.jit
def particle_gnn_forward(x, edge_index, edge_attr, param_slab, k_edge):
    """x: [B, N, F]; edge_index: [B, 2, E] (row0=src, row1=dst, local node ids);
    edge_attr: [B, E, 1]; param_slab: [TOTAL_ROWS, LANES]; k_edge: [3*heads]."""
    B, N, F = x.shape
    G = GRAPHS_PER_BLOCK
    assert B % G == 0, "NUM_GRAPHS must be a multiple of GRAPHS_PER_BLOCK"
    nb = B // G
    GN = G * N

    # --- scatter-free dense super-graph build (one-hot matmuls, fused under jit)
    src = edge_index[:, 0, :]
    dst = edge_index[:, 1, :]
    oh_src = jax.nn.one_hot(src, N, dtype=jnp.float32)               # [B, E, N]
    oh_dst = jax.nn.one_hot(dst, N, dtype=jnp.float32)               # [B, E, N]
    adj_g = jnp.einsum('bei,bej->bij', oh_dst, oh_src)               # [B, N, N]
    ea_g = jnp.einsum('bei,bej->bij', oh_dst * edge_attr, oh_src)    # [B, N, N]

    # PyG add_self_loops(fill_value='mean'): per-target mean of incoming attrs.
    deg = jnp.sum(adj_g, axis=-1)                                    # [B, N]
    ssum = jnp.sum(ea_g, axis=-1)
    loop_val = jnp.where(deg > 0, ssum / jnp.maximum(deg, 1.0), 0.0)
    eye_n = jnp.eye(N, dtype=jnp.float32)
    adj_g = adj_g * (1.0 - eye_n) + eye_n
    ea_g = ea_g * (1.0 - eye_n) + eye_n * loop_val[:, :, None]

    # block-diagonal packing of G graphs per grid step (broadcast, no scatter)
    eye_g = jnp.eye(G, dtype=jnp.float32)
    adj_bd = jnp.einsum('bgij,gh->bgihj', adj_g.reshape(nb, G, N, N),
                        eye_g).reshape(nb * GN, GN)
    ea_bd = jnp.einsum('bgij,gh->bgihj', ea_g.reshape(nb, G, N, N),
                       eye_g).reshape(nb * GN, GN)
    # additive attention mask (replaces the adjacency input entirely)
    mask_bias = jnp.where(adj_bd > 0.0, 0.0, NEG_INF).astype(jnp.float32)

    x_all = x.reshape(B * N, F).astype(jnp.float32)

    kernel = functools.partial(gnn_kernel, hidden=HIDDEN, heads=HEADS,
                               layout=LAYOUT)
    out = pl.pallas_call(
        kernel,
        out_shape=jax.ShapeDtypeStruct((nb * GN, OUT_LANES), jnp.float32),
        grid=(nb,),
        in_specs=[
            pl.BlockSpec((GN, F), lambda b: (b, 0)),              # node features
            pl.BlockSpec((GN, GN), lambda b: (b, 0)),             # additive mask
            pl.BlockSpec((GN, GN), lambda b: (b, 0)),             # block-diag edge attr
            pl.BlockSpec((TOTAL_ROWS, LANES), lambda b: (0, 0)),  # packed params (resident)
            pl.BlockSpec(memory_space=pltpu.MemorySpace.SMEM),    # per-head edge scalars
        ],
        out_specs=pl.BlockSpec((GN, OUT_LANES), lambda b: (b, 0)),
        compiler_params=pltpu.CompilerParams(
            dimension_semantics=("parallel",),     # v7x: batch axis over 2 TCs
            vmem_limit_bytes=32 * 1024 * 1024),
    )(x_all, mask_bias, ea_bd, param_slab, k_edge)

    # drop the lane padding of the lane-dense output
    return out[:, :NUM_CLASSES].reshape(B, N, NUM_CLASSES)


# ----------------------------- parameter setup ------------------------------ #

def init_raw_params(key, num_features=NUM_FEATURES, hidden=HIDDEN,
                    num_classes=NUM_CLASSES, heads=HEADS):
    keys = iter(jax.random.split(key, 64))

    def nrm(shape, scale):
        return scale * jax.random.normal(next(keys), shape, jnp.float32)

    def linear(fi, fo):
        s = 1.0 / float(fi) ** 0.5
        return nrm((fi, fo), s), nrm((fo,), s)

    def gat(fi, oc):
        s = 1.0 / float(fi) ** 0.5
        return dict(w=nrm((fi, heads * oc), s),        # lin weight (no bias in PyG)
                    att_src=nrm((heads, oc), 0.3),
                    att_dst=nrm((heads, oc), 0.3),
                    att_edge=nrm((heads, oc), 0.3),
                    w_e=nrm((heads, oc), 1.0),         # lin_edge weight (edge_dim=1)
                    bias=jnp.zeros((oc,), jnp.float32))

    def ln(c):
        return jnp.ones((c,), jnp.float32), jnp.zeros((c,), jnp.float32)

    p = {}
    p["ip_w"], p["ip_b"] = linear(num_features, hidden)
    p["c1"] = gat(hidden, hidden)
    p["n1_g"], p["n1_b"] = ln(hidden)
    p["p2_w"], p["p2_b"] = linear(hidden, 2 * hidden)
    p["c2"] = gat(hidden, 2 * hidden)
    p["n2_g"], p["n2_b"] = ln(2 * hidden)
    p["p3_w"], p["p3_b"] = linear(2 * hidden, hidden)
    p["c3"] = gat(2 * hidden, hidden)
    p["n3_g"], p["n3_b"] = ln(hidden)
    p["cl1_w"], p["cl1_b"] = linear(hidden, hidden)
    p["cln_g"], p["cln_b"] = ln(hidden)
    p["cl2_w"], p["cl2_b"] = linear(hidden, num_classes)
    return p


def pack_params(p, heads=HEADS, hidden=HIDDEN, nc=NUM_CLASSES):
    """Pack all parameters into one lane-aligned f32 slab + SMEM edge scalars."""

    def abd(conv, oc):
        # [H*C, 128]: col h = att_src[h], col heads+h = att_dst[h] (rest zero),
        # so hmat @ abd yields every per-head src/dst coefficient in one matmul.
        a = jnp.zeros((heads * oc, ATT_COLS), jnp.float32)
        for h in range(heads):
            a = a.at[h * oc:(h + 1) * oc, h].set(conv["att_src"][h])
            a = a.at[h * oc:(h + 1) * oc, heads + h].set(conv["att_dst"][h])
        return a

    # lane-dense classifier head: zero-pad the weight columns; bias carries
    # -1e30 in the padding lanes so they drop out of the in-kernel log-softmax.
    cl2_w_pad = jnp.zeros((hidden, OUT_LANES), jnp.float32).at[:, :nc].set(p["cl2_w"])
    cl2_b_pad = jnp.full((OUT_LANES,), NEG_INF, jnp.float32).at[:nc].set(p["cl2_b"])

    mats = {
        "ip_w": p["ip_w"],
        "c1_w": p["c1"]["w"], "c1_a": abd(p["c1"], hidden),
        "p2_w": p["p2_w"],
        "c2_w": p["c2"]["w"], "c2_a": abd(p["c2"], 2 * hidden),
        "p3_w": p["p3_w"],
        "c3_w": p["c3"]["w"], "c3_a": abd(p["c3"], hidden),
        "cl1_w": p["cl1_w"], "cl2_w": cl2_w_pad,
        "ip_b": p["ip_b"],
        "c1_b": p["c1"]["bias"], "n1_g": p["n1_g"], "n1_b": p["n1_b"],
        "p2_b": p["p2_b"],
        "c2_b": p["c2"]["bias"], "n2_g": p["n2_g"], "n2_b": p["n2_b"],
        "p3_b": p["p3_b"],
        "c3_b": p["c3"]["bias"], "n3_g": p["n3_g"], "n3_b": p["n3_b"],
        "cl1_b": p["cl1_b"], "cln_g": p["cln_g"], "cln_b": p["cln_b"],
        "cl2_b": cl2_b_pad,
    }
    slab = jnp.zeros((TOTAL_ROWS, LANES), jnp.float32)
    for name, arr in mats.items():
        r, nr, ncols = LAYOUT[name]
        slab = slab.at[r:r + nr, :ncols].set(arr.reshape(nr, ncols))
    # edge contribution collapses to a per-head scalar: lin_edge(e).att_edge = e*k
    k_edge = jnp.concatenate(
        [jnp.sum(p[c]["w_e"] * p[c]["att_edge"], axis=-1)
         for c in ("c1", "c2", "c3")])                          # [3 * heads]
    return slab, k_edge


# ------------------------- pure-JAX reference (test) ------------------------ #

def _hp_dot(a, b):
    return jnp.dot(a, b, precision=jax.lax.Precision.HIGHEST)


def densify_dense(edge_index, edge_attr, n):
    src, dst = edge_index[0], edge_index[1]
    ev = edge_attr[:, 0]
    adj = jnp.zeros((n, n), jnp.float32).at[dst, src].set(1.0)
    ea = jnp.zeros((n, n), jnp.float32).at[dst, src].set(ev)
    deg = jnp.zeros((n,), jnp.float32).at[dst].add(1.0)
    ssum = jnp.zeros((n,), jnp.float32).at[dst].add(ev)
    lv = jnp.where(deg > 0, ssum / jnp.maximum(deg, 1.0), 0.0)
    d = jnp.arange(n)
    return adj.at[d, d].set(1.0), ea.at[d, d].set(lv)


def reference_forward(x, adj, ea, p):
    """Pure-JAX reference for ONE dense graph (adj/ea already have self loops)."""
    heads, hidden = HEADS, HIDDEN

    def ln(t, g, b, eps=1e-5):
        mu = jnp.mean(t, axis=-1, keepdims=True)
        var = jnp.mean((t - mu) ** 2, axis=-1, keepdims=True)
        return (t - mu) / jnp.sqrt(var + eps) * g + b

    def gat(xin, conv, oc):
        hm = _hp_dot(xin, conv["w"])
        acc = jnp.zeros((xin.shape[0], oc), jnp.float32)
        for h in range(heads):
            hh = hm[:, h * oc:(h + 1) * oc]
            adst = jnp.sum(hh * conv["att_dst"][h], -1, keepdims=True)
            asrc = jnp.sum(hh * conv["att_src"][h], -1)[None, :]
            ke = jnp.sum(conv["w_e"][h] * conv["att_edge"][h])
            lg = adst + asrc + ke * ea
            lg = jnp.where(lg >= 0.0, lg, 0.2 * lg)
            msk = jnp.where(adj > 0.0, lg, -1e30)
            m = jnp.max(msk, 1, keepdims=True)
            pr = jnp.exp(msk - m)
            al = pr / jnp.sum(pr, 1, keepdims=True)
            acc = acc + _hp_dot(al, hh)
        return acc / heads + conv["bias"]

    h = jax.nn.relu(_hp_dot(x, p["ip_w"]) + p["ip_b"])
    h = jax.nn.relu(ln(gat(h, p["c1"], hidden), p["n1_g"], p["n1_b"]) + h)
    ident = _hp_dot(h, p["p2_w"]) + p["p2_b"]
    h = jax.nn.relu(ln(gat(h, p["c2"], 2 * hidden), p["n2_g"], p["n2_b"]) + ident)
    ident = _hp_dot(h, p["p3_w"]) + p["p3_b"]
    h = jax.nn.relu(ln(gat(h, p["c3"], hidden), p["n3_g"], p["n3_b"]) + ident)
    c = jax.nn.relu(ln(_hp_dot(h, p["cl1_w"]) + p["cl1_b"], p["cln_g"], p["cln_b"]))
    return jax.nn.log_softmax(_hp_dot(c, p["cl2_w"]) + p["cl2_b"], axis=-1)


# ----------------------------------- main ----------------------------------- #

if __name__ == "__main__":
    key = jax.random.PRNGKey(0)
    k_x, k_e, k_a, k_p = jax.random.split(key, 4)

    B, N, E, F = NUM_GRAPHS, N_NODES, N_EDGES, NUM_FEATURES

    # node features for B graphs
    x = jax.random.normal(k_x, (B, N, F), jnp.float32)

    # deterministic random directed edges per graph (no self loops / duplicates)
    all_pairs = jnp.array([(i, j) for i in range(N) for j in range(N) if i != j],
                          dtype=jnp.int32)                       # [N*(N-1), 2]
    ek = jax.random.split(k_e, B)
    edge_index = jnp.stack(
        [all_pairs[jax.random.permutation(ek[b], all_pairs.shape[0])[:E]].T
         for b in range(B)])                                     # [B, 2, E]
    edge_attr = jax.random.uniform(k_a, (B, E, 1), jnp.float32)

    raw = init_raw_params(k_p)
    slab, k_edge = pack_params(raw)

    out = particle_gnn_forward(x, edge_index, edge_attr, slab, k_edge)
    out = jax.block_until_ready(out)

    assert out.shape == (B, N, NUM_CLASSES)
    assert bool(jnp.all(jnp.isfinite(out)))
    # rows of log_softmax should exp-sum to 1
    assert bool(jnp.allclose(jnp.sum(jnp.exp(out), axis=-1), 1.0, atol=1e-4))

    # pure-JAX per-graph reference to validate the batched block-diagonal kernel
    adj_all, ea_all = jax.vmap(lambda ei, ev: densify_dense(ei, ev, N))(
        edge_index, edge_attr)
    ref = jax.jit(jax.vmap(reference_forward, in_axes=(0, 0, 0, None)))(
        x, adj_all, ea_all, raw)
    max_diff = float(jnp.max(jnp.abs(out - ref)))
    assert max_diff < 5e-2, f"kernel vs reference max abs diff = {max_diff}"

    print("KERNEL_OK")
</pallas_src>

<mosaic_0001>
module attributes {stable_mosaic.version = 11 : i64} {
  func.func @gnn_kernel(%arg0: i32, %arg1: memref<128x4xf32, #tpu.memory_space<vmem>>, %arg2: memref<128x128xf32, #tpu.memory_space<vmem>>, %arg3: memref<128x128xf32, #tpu.memory_space<vmem>>, %arg4: memref<824x256xf32, #tpu.memory_space<vmem>>, %arg5: memref<12xf32, #tpu.memory_space<smem>>, %arg6: memref<128x128xf32, #tpu.memory_space<vmem>>) attributes {dimension_semantics = [#tpu.dimension_semantics<parallel>], iteration_bounds = array<i64: 4>, scalar_prefetch = 0 : i64, scratch_operands = 0 : i64, tpu.core_type = #tpu.core_type<tc>, window_params = [{transform_indices = @transform_0, window_bounds = array<i64: 128, 4>}, {transform_indices = @transform_1, window_bounds = array<i64: 128, 128>}, {transform_indices = @transform_2, window_bounds = array<i64: 128, 128>}, {pipeline_mode = #tpu.pipeline_mode<synchronous>, transform_indices = @transform_3, window_bounds = array<i64: 824, 256>}, {transform_indices = @transform_4, window_bounds = array<i64: 12>}, {transform_indices = @transform_5, window_bounds = array<i64: 128, 128>}]} {
    %c0 = arith.constant 0 : index
    %c0_0 = arith.constant 0 : index
    %0 = vector.load %arg1[%c0, %c0_0] : memref<128x4xf32, #tpu.memory_space<vmem>>, vector<128x4xf32>
    %c0_1 = arith.constant 0 : index
    %c0_2 = arith.constant 0 : index
    %1 = vector.load %arg2[%c0_1, %c0_2] : memref<128x128xf32, #tpu.memory_space<vmem>>, vector<128x128xf32>
    %c0_3 = arith.constant 0 : index
    %c0_4 = arith.constant 0 : index
    %2 = vector.load %arg3[%c0_3, %c0_4] : memref<128x128xf32, #tpu.memory_space<vmem>>, vector<128x128xf32>
    %cst = arith.constant 1.000000e+00 : f32
    %3 = vector.broadcast %cst : f32 to vector<128x1xf32>
    %c0_5 = arith.constant 0 : index
    %c0_6 = arith.constant 0 : index
    %4 = vector.load %arg4[%c0_5, %c0_6] : memref<824x256xf32, #tpu.memory_space<vmem>>, vector<4x32xf32>
    %cst_7 = arith.constant dense<0.000000e+00> : vector<128x32xf32>
    %5 = tpu.matmul %0, %4, %cst_7 {dimension_numbers = #tpu.dot_dimension_numbers<[1], [0], [0], [1], [0, 0, 1, 1], [], []>} : vector<128x4xf32>, vector<4x32xf32>, vector<128x32xf32> -> vector<128x32xf32>
    %c808 = arith.constant 808 : index
    %c0_8 = arith.constant 0 : index
    %6 = vector.load %arg4[%c808, %c0_8] : memref<824x256xf32, #tpu.memory_space<vmem>>, vector<1x32xf32>
    %7 = vector.broadcast %6 : vector<1x32xf32> to vector<128x32xf32>
    %8 = arith.addf %5, %7 : vector<128x32xf32>
    %cst_9 = arith.constant 0.000000e+00 : f32
    %9 = vector.broadcast %cst_9 : f32 to vector<128x32xf32>
    %10 = arith.maximumf %8, %9 : vector<128x32xf32>
    %c8 = arith.constant 8 : index
    %c0_10 = arith.constant 0 : index
    %11 = vector.load %arg4[%c8, %c0_10] : memref<824x256xf32, #tpu.memory_space<vmem>>, vector<32x128xf32>
    %cst_11 = arith.constant dense<0.000000e+00> : vector<128x128xf32>
    %12 = tpu.matmul %10, %11, %cst_11 {dimension_numbers = #tpu.dot_dimension_numbers<[1], [0], [0], [1], [0, 0, 1, 1], [], []>} : vector<128x32xf32>, vector<32x128xf32>, vector<128x128xf32> -> vector<128x128xf32>
    %c40 = arith.constant 40 : index
    %c0_12 = arith.constant 0 : index
    %13 = vector.load %arg4[%c40, %c0_12] : memref<824x256xf32, #tpu.memory_space<vmem>>, vector<128x128xf32>
    %cst_13 = arith.constant dense<0.000000e+00> : vector<128x128xf32>
    %14 = tpu.matmul %12, %13, %cst_13 {dimension_numbers = #tpu.dot_dimension_numbers<[1], [0], [0], [1], [0, 0, 1, 1], [], []>} : vector<128x128xf32>, vector<128x128xf32>, vector<128x128xf32> -> vector<128x128xf32>
    %15 = vector.extract_strided_slice %14 {offsets = [0, 0], sizes = [128, 8], strides = [1, 1]} : vector<128x128xf32> to vector<128x8xf32>
    %16 = tpu.transpose %15, [1, 0] : vector<128x8xf32> -> vector<8x128xf32>
    %c0_14 = arith.constant 0 : index
    %17 = memref.load %arg5[%c0_14] : memref<12xf32, #tpu.memory_space<smem>>
    %18 = vector.extract_strided_slice %14 {offsets = [0, 4], sizes = [128, 1], strides = [1, 1]} : vector<128x128xf32> to vector<128x1xf32>
    %19 = vector.extract_strided_slice %16 {offsets = [0, 0], sizes = [1, 128], strides = [1, 1]} : vector<8x128xf32> to vector<1x128xf32>
    %20 = vector.broadcast %18 : vector<128x1xf32> to vector<128x128xf32>
    %21 = vector.broadcast %19 : vector<1x128xf32> to vector<128x128xf32>
    %22 = arith.addf %20, %21 : vector<128x128xf32>
    %23 = vector.broadcast %17 : f32 to vector<128x128xf32>
    %24 = arith.mulf %23, %2 : vector<128x128xf32>
    %25 = arith.addf %22, %24 : vector<128x128xf32>
    %cst_15 = arith.constant 2.000000e-01 : f32
    %26 = vector.broadcast %cst_15 : f32 to vector<128x128xf32>
    %27 = arith.mulf %26, %25 : vector<128x128xf32>
    %28 = arith.maximumf %25, %27 : vector<128x128xf32>
    %29 = arith.addf %28, %1 : vector<128x128xf32>
    %cst_16 = arith.constant dense<0xFF800000> : vector<128xf32>
    %30 = vector.multi_reduction <maximumf>, %29, %cst_16 [1] : vector<128x128xf32> to vector<128xf32>
    %31 = vector.shape_cast %30 : vector<128xf32> to vector<128x1xf32>
    %32 = vector.broadcast %31 : vector<128x1xf32> to vector<128x128xf32>
    %33 = arith.subf %29, %32 : vector<128x128xf32>
    %34 = math.exp %33 : vector<128x128xf32>
    %cst_17 = arith.constant dense<0.000000e+00> : vector<128x1xf32>
    %35 = tpu.matmul %34, %3, %cst_17 {dimension_numbers = #tpu.dot_dimension_numbers<[1], [0], [0], [1], [0, 0, 1, 1], [], []>} : vector<128x128xf32>, vector<128x1xf32>, vector<128x1xf32> -> vector<128x1xf32>
    %36 = vector.extract_strided_slice %12 {offsets = [0, 0], sizes = [128, 32], strides = [1, 1]} : vector<128x128xf32> to vector<128x32xf32>
    %cst_18 = arith.constant dense<0.000000e+00> : vector<128x32xf32>
    %37 = tpu.matmul %34, %36, %cst_18 {dimension_numbers = #tpu.dot_dimension_numbers<[1], [0], [0], [1], [0, 0, 1, 1], [], []>} : vector<128x128xf32>, vector<128x32xf32>, vector<128x32xf32> -> vector<128x32xf32>
    %38 = tpu.reciprocal %35 {approx = true} : vector<128x1xf32> -> vector<128x1xf32>
    %39 = vector.broadcast %38 : vector<128x1xf32> to vector<128x32xf32>
    %40 = arith.mulf %37, %39 : vector<128x32xf32>
    %c1 = arith.constant 1 : index
    %41 = memref.load %arg5[%c1] : memref<12xf32, #tpu.memory_space<smem>>
    %42 = vector.extract_strided_slice %14 {offsets = [0, 5], sizes = [128, 1], strides = [1, 1]} : vector<128x128xf32> to vector<128x1xf32>
    %43 = vector.extract_strided_slice %16 {offsets = [1, 0], sizes = [1, 128], strides = [1, 1]} : vector<8x128xf32> to vector<1x128xf32>
    %44 = vector.broadcast %42 : vector<128x1xf32> to vector<128x128xf32>
    %45 = vector.broadcast %43 : vector<1x128xf32> to vector<128x128xf32>
    %46 = arith.addf %44, %45 : vector<128x128xf32>
    %47 = vector.broadcast %41 : f32 to vector<128x128xf32>
    %48 = arith.mulf %47, %2 : vector<128x128xf32>
    %49 = arith.addf %46, %48 : vector<128x128xf32>
    %cst_19 = arith.constant 2.000000e-01 : f32
    %50 = vector.broadcast %cst_19 : f32 to vector<128x128xf32>
    %51 = arith.mulf %50, %49 : vector<128x128xf32>
    %52 = arith.maximumf %49, %51 : vector<128x128xf32>
    %53 = arith.addf %52, %1 : vector<128x128xf32>
    %cst_20 = arith.constant dense<0xFF800000> : vector<128xf32>
    %54 = vector.multi_reduction <maximumf>, %53, %cst_20 [1] : vector<128x128xf32> to vector<128xf32>
    %55 = vector.shape_cast %54 : vector<128xf32> to vector<128x1xf32>
    %56 = vector.broadcast %55 : vector<128x1xf32> to vector<128x128xf32>
    %57 = arith.subf %53, %56 : vector<128x128xf32>
    %58 = math.exp %57 : vector<128x128xf32>
    %cst_21 = arith.constant dense<0.000000e+00> : vector<128x1xf32>
    %59 = tpu.matmul %58, %3, %cst_21 {dimension_numbers = #tpu.dot_dimension_numbers<[1], [0], [0], [1], [0, 0, 1, 1], [], []>} : vector<128x128xf32>, vector<128x1xf32>, vector<128x1xf32> -> vector<128x1xf32>
    %60 = vector.extract_strided_slice %12 {offsets = [0, 32], sizes = [128, 32], strides = [1, 1]} : vector<128x128xf32> to vector<128x32xf32>
    %cst_22 = arith.constant dense<0.000000e+00> : vector<128x32xf32>
    %61 = tpu.matmul %58, %60, %cst_22 {dimension_numbers = #tpu.dot_dimension_numbers<[1], [0], [0], [1], [0, 0, 1, 1], [], []>} : vector<128x128xf32>, vector<128x32xf32>, vector<128x32xf32> -> vector<128x32xf32>
    %62 = tpu.reciprocal %59 {approx = true} : vector<128x1xf32> -> vector<128x1xf32>
    %63 = vector.broadcast %62 : vector<128x1xf32> to vector<128x32xf32>
    %64 = arith.mulf %61, %63 : vector<128x32xf32>
    %65 = arith.addf %40, %64 : vector<128x32xf32>
    %c2 = arith.constant 2 : index
    %66 = memref.load %arg5[%c2] : memref<12xf32, #tpu.memory_space<smem>>
    %67 = vector.extract_strided_slice %14 {offsets = [0, 6], sizes = [128, 1], strides = [1, 1]} : vector<128x128xf32> to vector<128x1xf32>
    %68 = vector.extract_strided_slice %16 {offsets = [2, 0], sizes = [1, 128], strides = [1, 1]} : vector<8x128xf32> to vector<1x128xf32>
    %69 = vector.broadcast %67 : vector<128x1xf32> to vector<128x128xf32>
    %70 = vector.broadcast %68 : vector<1x128xf32> to vector<128x128xf32>
    %71 = arith.addf %69, %70 : vector<128x128xf32>
    %72 = vector.broadcast %66 : f32 to vector<128x128xf32>
    %73 = arith.mulf %72, %2 : vector<128x128xf32>
    %74 = arith.addf %71, %73 : vector<128x128xf32>
    %cst_23 = arith.constant 2.000000e-01 : f32
    %75 = vector.broadcast %cst_23 : f32 to vector<128x128xf32>
    %76 = arith.mulf %75, %74 : vector<128x128xf32>
    %77 = arith.maximumf %74, %76 : vector<128x128xf32>
    %78 = arith.addf %77, %1 : vector<128x128xf32>
    %cst_24 = arith.constant dense<0xFF800000> : vector<128xf32>
    %79 = vector.multi_reduction <maximumf>, %78, %cst_24 [1] : vector<128x128xf32> to vector<128xf32>
    %80 = vector.shape_cast %79 : vector<128xf32> to vector<128x1xf32>
    %81 = vector.broadcast %80 : vector<128x1xf32> to vector<128x128xf32>
    %82 = arith.subf %78, %81 : vector<128x128xf32>
    %83 = math.exp %82 : vector<128x128xf32>
    %cst_25 = arith.constant dense<0.000000e+00> : vector<128x1xf32>
    %84 = tpu.matmul %83, %3, %cst_25 {dimension_numbers = #tpu.dot_dimension_numbers<[1], [0], [0], [1], [0, 0, 1, 1], [], []>} : vector<128x128xf32>, vector<128x1xf32>, vector<128x1xf32> -> vector<128x1xf32>
    %85 = vector.extract_strided_slice %12 {offsets = [0, 64], sizes = [128, 32], strides = [1, 1]} : vector<128x128xf32> to vector<128x32xf32>
    %cst_26 = arith.constant dense<0.000000e+00> : vector<128x32xf32>
    %86 = tpu.matmul %83, %85, %cst_26 {dimension_numbers = #tpu.dot_dimension_numbers<[1], [0], [0], [1], [0, 0, 1, 1], [], []>} : vector<128x128xf32>, vector<128x32xf32>, vector<128x32xf32> -> vector<128x32xf32>
    %87 = tpu.reciprocal %84 {approx = true} : vector<128x1xf32> -> vector<128x1xf32>
    %88 = vector.broadcast %87 : vector<128x1xf32> to vector<128x32xf32>
    %89 = arith.mulf %86, %88 : vector<128x32xf32>
    %90 = arith.addf %65, %89 : vector<128x32xf32>
    %c3 = arith.constant 3 : index
    %91 = memref.load %arg5[%c3] : memref<12xf32, #tpu.memory_space<smem>>
    %92 = vector.extract_strided_slice %14 {offsets = [0, 7], sizes = [128, 1], strides = [1, 1]} : vector<128x128xf32> to vector<128x1xf32>
    %93 = vector.extract_strided_slice %16 {offsets = [3, 0], sizes = [1, 128], strides = [1, 1]} : vector<8x128xf32> to vector<1x128xf32>
    %94 = vector.broadcast %92 : vector<128x1xf32> to vector<128x128xf32>
    %95 = vector.broadcast %93 : vector<1x128xf32> to vector<128x128xf32>
    %96 = arith.addf %94, %95 : vector<128x128xf32>
    %97 = vector.broadcast %91 : f32 to vector<128x128xf32>
    %98 = arith.mulf %97, %2 : vector<128x128xf32>
    %99 = arith.addf %96, %98 : vector<128x128xf32>
    %cst_27 = arith.constant 2.000000e-01 : f32
    %100 = vector.broadcast %cst_27 : f32 to vector<128x128xf32>
    %101 = arith.mulf %100, %99 : vector<128x128xf32>
    %102 = arith.maximumf %99, %101 : vector<128x128xf32>
    %103 = arith.addf %102, %1 : vector<128x128xf32>
    %cst_28 = arith.constant dense<0xFF800000> : vector<128xf32>
    %104 = vector.multi_reduction <maximumf>, %103, %cst_28 [1] : vector<128x128xf32> to vector<128xf32>
    %105 = vector.shape_cast %104 : vector<128xf32> to vector<128x1xf32>
    %106 = vector.broadcast %105 : vector<128x1xf32> to vector<128x128xf32>
    %107 = arith.subf %103, %106 : vector<128x128xf32>
    %108 = math.exp %107 : vector<128x128xf32>
    %cst_29 = arith.constant dense<0.000000e+00> : vector<128x1xf32>
    %109 = tpu.matmul %108, %3, %cst_29 {dimension_numbers = #tpu.dot_dimension_numbers<[1], [0], [0], [1], [0, 0, 1, 1], [], []>} : vector<128x128xf32>, vector<128x1xf32>, vector<128x1xf32> -> vector<128x1xf32>
    %110 = vector.extract_strided_slice %12 {offsets = [0, 96], sizes = [128, 32], strides = [1, 1]} : vector<128x128xf32> to vector<128x32xf32>
    %cst_30 = arith.constant dense<0.000000e+00> : vector<128x32xf32>
    %111 = tpu.matmul %108, %110, %cst_30 {dimension_numbers = #tpu.dot_dimension_numbers<[1], [0], [0], [1], [0, 0, 1, 1], [], []>} : vector<128x128xf32>, vector<128x32xf32>, vector<128x32xf32> -> vector<128x32xf32>
    %112 = tpu.reciprocal %109 {approx = true} : vector<128x1xf32> -> vector<128x1xf32>
    %113 = vector.broadcast %112 : vector<128x1xf32> to vector<128x32xf32>
    %114 = arith.mulf %111, %113 : vector<128x32xf32>
    %115 = arith.addf %90, %114 : vector<128x32xf32>
    %cst_31 = arith.constant 2.500000e-01 : f32
    %116 = vector.broadcast %cst_31 : f32 to vector<128x32xf32>
    %117 = arith.mulf %115, %116 : vector<128x32xf32>
    %c809 = arith.constant 809 : index
    %c0_32 = arith.constant 0 : index
    %118 = vector.load %arg4[%c809, %c0_32] : memref<824x256xf32, #tpu.memory_space<vmem>>, vector<1x32xf32>
    %119 = vector.broadcast %118 : vector<1x32xf32> to vector<128x32xf32>
    %120 = arith.addf %117, %119 : vector<128x32xf32>
    %cst_33 = arith.constant dense<0.000000e+00> : vector<128xf32>
    %121 = vector.multi_reduction <add>, %120, %cst_33 [1] : vector<128x32xf32> to vector<128xf32>
    %122 = vector.shape_cast %121 : vector<128xf32> to vector<128x1xf32>
    %cst_34 = arith.constant 3.200000e+01 : f32
    %123 = vector.broadcast %cst_34 : f32 to vector<128x1xf32>
    %124 = arith.divf %122, %123 : vector<128x1xf32>
    %125 = vector.broadcast %124 : vector<128x1xf32> to vector<128x32xf32>
    %126 = arith.subf %120, %125 : vector<128x32xf32>
    %127 = arith.mulf %126, %126 : vector<128x32xf32>
    %cst_35 = arith.constant dense<0.000000e+00> : vector<128xf32>
    %128 = vector.multi_reduction <add>, %127, %cst_35 [1] : vector<128x32xf32> to vector<128xf32>
    %129 = vector.shape_cast %128 : vector<128xf32> to vector<128x1xf32>
    %cst_36 = arith.constant 3.200000e+01 : f32
    %130 = vector.broadcast %cst_36 : f32 to vector<128x1xf32>
    %131 = arith.divf %129, %130 : vector<128x1xf32>
    %132 = vector.broadcast %124 : vector<128x1xf32> to vector<128x32xf32>
    %133 = arith.subf %120, %132 : vector<128x32xf32>
    %cst_37 = arith.constant 9.99999974E-6 : f32
    %134 = vector.broadcast %cst_37 : f32 to vector<128x1xf32>
    %135 = arith.addf %131, %134 : vector<128x1xf32>
    %136 = math.rsqrt %135 : vector<128x1xf32>
    %137 = vector.broadcast %136 : vector<128x1xf32> to vector<128x32xf32>
    %138 = arith.mulf %133, %137 : vector<128x32xf32>
    %c810 = arith.constant 810 : index
    %c0_38 = arith.constant 0 : index
    %139 = vector.load %arg4[%c810, %c0_38] : memref<824x256xf32, #tpu.memory_space<vmem>>, vector<1x32xf32>
    %140 = vector.broadcast %139 : vector<1x32xf32> to vector<128x32xf32>
    %141 = arith.mulf %138, %140 : vector<128x32xf32>
    %c811 = arith.constant 811 : index
    %c0_39 = arith.constant 0 : index
    %142 = vector.load %arg4[%c811, %c0_39] : memref<824x256xf32, #tpu.memory_space<vmem>>, vector<1x32xf32>
    %143 = vector.broadcast %142 : vector<1x32xf32> to vector<128x32xf32>
    %144 = arith.addf %141, %143 : vector<128x32xf32>
    %145 = arith.addf %144, %10 : vector<128x32xf32>
    %cst_40 = arith.constant 0.000000e+00 : f32
    %146 = vector.broadcast %cst_40 : f32 to vector<128x32xf32>
    %147 = arith.maximumf %145, %146 : vector<128x32xf32>
    %c168 = arith.constant 168 : index
    %c0_41 = arith.constant 0 : index
    %148 = vector.load %arg4[%c168, %c0_41] : memref<824x256xf32, #tpu.memory_space<vmem>>, vector<32x64xf32>
    %cst_42 = arith.constant dense<0.000000e+00> : vector<128x64xf32>
    %149 = tpu.matmul %147, %148, %cst_42 {dimension_numbers = #tpu.dot_dimension_numbers<[1], [0], [0], [1], [0, 0, 1, 1], [], []>} : vector<128x32xf32>, vector<32x64xf32>, vector<128x64xf32> -> vector<128x64xf32>
    %c812 = arith.constant 812 : index
    %c0_43 = arith.constant 0 : index
    %150 = vector.load %arg4[%c812, %c0_43] : memref<824x256xf32, #tpu.memory_space<vmem>>, vector<1x64xf32>
    %151 = vector.broadcast %150 : vector<1x64xf32> to vector<128x64xf32>
    %152 = arith.addf %149, %151 : vector<128x64xf32>
    %c200 = arith.constant 200 : index
    %c0_44 = arith.constant 0 : index
    %153 = vector.load %arg4[%c200, %c0_44] : memref<824x256xf32, #tpu.memory_space<vmem>>, vector<32x256xf32>
    %cst_45 = arith.constant dense<0.000000e+00> : vector<128x256xf32>
    %154 = tpu.matmul %147, %153, %cst_45 {dimension_numbers = #tpu.dot_dimension_numbers<[1], [0], [0], [1], [0, 0, 1, 1], [], []>} : vector<128x32xf32>, vector<32x256xf32>, vector<128x256xf32> -> vector<128x256xf32>
    %c232 = arith.constant 232 : index
    %c0_46 = arith.constant 0 : index
    %155 = vector.load %arg4[%c232, %c0_46] : memref<824x256xf32, #tpu.memory_space<vmem>>, vector<256x128xf32>
    %cst_47 = arith.constant dense<0.000000e+00> : vector<128x128xf32>
    %156 = tpu.matmul %154, %155, %cst_47 {dimension_numbers = #tpu.dot_dimension_numbers<[1], [0], [0], [1], [0, 0, 1, 1], [], []>} : vector<128x256xf32>, vector<256x128xf32>, vector<128x128xf32> -> vector<128x128xf32>
    %157 = vector.extract_strided_slice %156 {offsets = [0, 0], sizes = [128, 8], strides = [1, 1]} : vector<128x128xf32> to vector<128x8xf32>
    %158 = tpu.transpose %157, [1, 0] : vector<128x8xf32> -> vector<8x128xf32>
    %c4 = arith.constant 4 : index
    %159 = memref.load %arg5[%c4] : memref<12xf32, #tpu.memory_space<smem>>
    %160 = vector.extract_strided_slice %156 {offsets = [0, 4], sizes = [128, 1], strides = [1, 1]} : vector<128x128xf32> to vector<128x1xf32>
    %161 = vector.extract_strided_slice %158 {offsets = [0, 0], sizes = [1, 128], strides = [1, 1]} : vector<8x128xf32> to vector<1x128xf32>
    %162 = vector.broadcast %160 : vector<128x1xf32> to vector<128x128xf32>
    %163 = vector.broadcast %161 : vector<1x128xf32> to vector<128x128xf32>
    %164 = arith.addf %162, %163 : vector<128x128xf32>
    %165 = vector.broadcast %159 : f32 to vector<128x128xf32>
    %166 = arith.mulf %165, %2 : vector<128x128xf32>
    %167 = arith.addf %164, %166 : vector<128x128xf32>
    %cst_48 = arith.constant 2.000000e-01 : f32
    %168 = vector.broadcast %cst_48 : f32 to vector<128x128xf32>
    %169 = arith.mulf %168, %167 : vector<128x128xf32>
    %170 = arith.maximumf %167, %169 : vector<128x128xf32>
    %171 = arith.addf %170, %1 : vector<128x128xf32>
    %cst_49 = arith.constant dense<0xFF800000> : vector<128xf32>
    %172 = vector.multi_reduction <maximumf>, %171, %cst_49 [1] : vector<128x128xf32> to vector<128xf32>
    %173 = vector.shape_cast %172 : vector<128xf32> to vector<128x1xf32>
    %174 = vector.broadcast %173 : vector<128x1xf32> to vector<128x128xf32>
    %175 = arith.subf %171, %174 : vector<128x128xf32>
    %176 = math.exp %175 : vector<128x128xf32>
    %cst_50 = arith.constant dense<0.000000e+00> : vector<128x1xf32>
    %177 = tpu.matmul %176, %3, %cst_50 {dimension_numbers = #tpu.dot_dimension_numbers<[1], [0], [0], [1], [0, 0, 1, 1], [], []>} : vector<128x128xf32>, vector<128x1xf32>, vector<128x1xf32> -> vector<128x1xf32>
    %178 = vector.extract_strided_slice %154 {offsets = [0, 0], sizes = [128, 64], strides = [1, 1]} : vector<128x256xf32> to vector<128x64xf32>
    %cst_51 = arith.constant dense<0.000000e+00> : vector<128x64xf32>
    %179 = tpu.matmul %176, %178, %cst_51 {dimension_numbers = #tpu.dot_dimension_numbers<[1], [0], [0], [1], [0, 0, 1, 1], [], []>} : vector<128x128xf32>, vector<128x64xf32>, vector<128x64xf32> -> vector<128x64xf32>
    %180 = tpu.reciprocal %177 {approx = true} : vector<128x1xf32> -> vector<128x1xf32>
    %181 = vector.broadcast %180 : vector<128x1xf32> to vector<128x64xf32>
    %182 = arith.mulf %179, %181 : vector<128x64xf32>
    %c5 = arith.constant 5 : index
    %183 = memref.load %arg5[%c5] : memref<12xf32, #tpu.memory_space<smem>>
    %184 = vector.extract_strided_slice %156 {offsets = [0, 5], sizes = [128, 1], strides = [1, 1]} : vector<128x128xf32> to vector<128x1xf32>
    %185 = vector.extract_strided_slice %158 {offsets = [1, 0], sizes = [1, 128], strides = [1, 1]} : vector<8x128xf32> to vector<1x128xf32>
    %186 = vector.broadcast %184 : vector<128x1xf32> to vector<128x128xf32>
    %187 = vector.broadcast %185 : vector<1x128xf32> to vector<128x128xf32>
    %188 = arith.addf %186, %187 : vector<128x128xf32>
    %189 = vector.broadcast %183 : f32 to vector<128x128xf32>
    %190 = arith.mulf %189, %2 : vector<128x128xf32>
    %191 = arith.addf %188, %190 : vector<128x128xf32>
    %cst_52 = arith.constant 2.000000e-01 : f32
    %192 = vector.broadcast %cst_52 : f32 to vector<128x128xf32>
    %193 = arith.mulf %192, %191 : vector<128x128xf32>
    %194 = arith.maximumf %191, %193 : vector<128x128xf32>
    %195 = arith.addf %194, %1 : vector<128x128xf32>
    %cst_53 = arith.constant dense<0xFF800000> : vector<128xf32>
    %196 = vector.multi_reduction <maximumf>, %195, %cst_53 [1] : vector<128x128xf32> to vector<128xf32>
    %197 = vector.shape_cast %196 : vector<128xf32> to vector<128x1xf32>
    %198 = vector.broadcast %197 : vector<128x1xf32> to vector<128x128xf32>
    %199 = arith.subf %195, %198 : vector<128x128xf32>
    %200 = math.exp %199 : vector<128x128xf32>
    %cst_54 = arith.constant dense<0.000000e+00> : vector<128x1xf32>
    %201 = tpu.matmul %200, %3, %cst_54 {dimension_numbers = #tpu.dot_dimension_numbers<[1], [0], [0], [1], [0, 0, 1, 1], [], []>} : vector<128x128xf32>, vector<128x1xf32>, vector<128x1xf32> -> vector<128x1xf32>
    %202 = vector.extract_strided_slice %154 {offsets = [0, 64], sizes = [128, 64], strides = [1, 1]} : vector<128x256xf32> to vector<128x64xf32>
    %cst_55 = arith.constant dense<0.000000e+00> : vector<128x64xf32>
    %203 = tpu.matmul %200, %202, %cst_55 {dimension_numbers = #tpu.dot_dimension_numbers<[1], [0], [0], [1], [0, 0, 1, 1], [], []>} : vector<128x128xf32>, vector<128x64xf32>, vector<128x64xf32> -> vector<128x64xf32>
    %204 = tpu.reciprocal %201 {approx = true} : vector<128x1xf32> -> vector<128x1xf32>
    %205 = vector.broadcast %204 : vector<128x1xf32> to vector<128x64xf32>
    %206 = arith.mulf %203, %205 : vector<128x64xf32>
    %207 = arith.addf %182, %206 : vector<128x64xf32>
    %c6 = arith.constant 6 : index
    %208 = memref.load %arg5[%c6] : memref<12xf32, #tpu.memory_space<smem>>
    %209 = vector.extract_strided_slice %156 {offsets = [0, 6], sizes = [128, 1], strides = [1, 1]} : vector<128x128xf32> to vector<128x1xf32>
    %210 = vector.extract_strided_slice %158 {offsets = [2, 0], sizes = [1, 128], strides = [1, 1]} : vector<8x128xf32> to vector<1x128xf32>
    %211 = vector.broadcast %209 : vector<128x1xf32> to vector<128x128xf32>
    %212 = vector.broadcast %210 : vector<1x128xf32> to vector<128x128xf32>
    %213 = arith.addf %211, %212 : vector<128x128xf32>
    %214 = vector.broadcast %208 : f32 to vector<128x128xf32>
    %215 = arith.mulf %214, %2 : vector<128x128xf32>
    %216 = arith.addf %213, %215 : vector<128x128xf32>
    %cst_56 = arith.constant 2.000000e-01 : f32
    %217 = vector.broadcast %cst_56 : f32 to vector<128x128xf32>
    %218 = arith.mulf %217, %216 : vector<128x128xf32>
    %219 = arith.maximumf %216, %218 : vector<128x128xf32>
    %220 = arith.addf %219, %1 : vector<128x128xf32>
    %cst_57 = arith.constant dense<0xFF800000> : vector<128xf32>
    %221 = vector.multi_reduction <maximumf>, %220, %cst_57 [1] : vector<128x128xf32> to vector<128xf32>
    %222 = vector.shape_cast %221 : vector<128xf32> to vector<128x1xf32>
    %223 = vector.broadcast %222 : vector<128x1xf32> to vector<128x128xf32>
    %224 = arith.subf %220, %223 : vector<128x128xf32>
    %225 = math.exp %224 : vector<128x128xf32>
    %cst_58 = arith.constant dense<0.000000e+00> : vector<128x1xf32>
    %226 = tpu.matmul %225, %3, %cst_58 {dimension_numbers = #tpu.dot_dimension_numbers<[1], [0], [0], [1], [0, 0, 1, 1], [], []>} : vector<128x128xf32>, vector<128x1xf32>, vector<128x1xf32> -> vector<128x1xf32>
    %227 = vector.extract_strided_slice %154 {offsets = [0, 128], sizes = [128, 64], strides = [1, 1]} : vector<128x256xf32> to vector<128x64xf32>
    %cst_59 = arith.constant dense<0.000000e+00> : vector<128x64xf32>
    %228 = tpu.matmul %225, %227, %cst_59 {dimension_numbers = #tpu.dot_dimension_numbers<[1], [0], [0], [1], [0, 0, 1, 1], [], []>} : vector<128x128xf32>, vector<128x64xf32>, vector<128x64xf32> -> vector<128x64xf32>
    %229 = tpu.reciprocal %226 {approx = true} : vector<128x1xf32> -> vector<128x1xf32>
    %230 = vector.broadcast %229 : vector<128x1xf32> to vector<128x64xf32>
    %231 = arith.mulf %228, %230 : vector<128x64xf32>
    %232 = arith.addf %207, %231 : vector<128x64xf32>
    %c7 = arith.constant 7 : index
    %233 = memref.load %arg5[%c7] : memref<12xf32, #tpu.memory_space<smem>>
    %234 = vector.extract_strided_slice %156 {offsets = [0, 7], sizes = [128, 1], strides = [1, 1]} : vector<128x128xf32> to vector<128x1xf32>
    %235 = vector.extract_strided_slice %158 {offsets = [3, 0], sizes = [1, 128], strides = [1, 1]} : vector<8x128xf32> to vector<1x128xf32>
    %236 = vector.broadcast %234 : vector<128x1xf32> to vector<128x128xf32>
    %237 = vector.broadcast %235 : vector<1x128xf32> to vector<128x128xf32>
    %238 = arith.addf %236, %237 : vector<128x128xf32>
    %239 = vector.broadcast %233 : f32 to vector<128x128xf32>
    %240 = arith.mulf %239, %2 : vector<128x128xf32>
    %241 = arith.addf %238, %240 : vector<128x128xf32>
    %cst_60 = arith.constant 2.000000e-01 : f32
    %242 = vector.broadcast %cst_60 : f32 to vector<128x128xf32>
    %243 = arith.mulf %242, %241 : vector<128x128xf32>
    %244 = arith.maximumf %241, %243 : vector<128x128xf32>
    %245 = arith.addf %244, %1 : vector<128x128xf32>
    %cst_61 = arith.constant dense<0xFF800000> : vector<128xf32>
    %246 = vector.multi_reduction <maximumf>, %245, %cst_61 [1] : vector<128x128xf32> to vector<128xf32>
    %247 = vector.shape_cast %246 : vector<128xf32> to vector<128x1xf32>
    %248 = vector.broadcast %247 : vector<128x1xf32> to vector<128x128xf32>
    %249 = arith.subf %245, %248 : vector<128x128xf32>
    %250 = math.exp %249 : vector<128x128xf32>
    %cst_62 = arith.constant dense<0.000000e+00> : vector<128x1xf32>
    %251 = tpu.matmul %250, %3, %cst_62 {dimension_numbers = #tpu.dot_dimension_numbers<[1], [0], [0], [1], [0, 0, 1, 1], [], []>} : vector<128x128xf32>, vector<128x1xf32>, vector<128x1xf32> -> vector<128x1xf32>
    %252 = vector.extract_strided_slice %154 {offsets = [0, 192], sizes = [128, 64], strides = [1, 1]} : vector<128x256xf32> to vector<128x64xf32>
    %cst_63 = arith.constant dense<0.000000e+00> : vector<128x64xf32>
    %253 = tpu.matmul %250, %252, %cst_63 {dimension_numbers = #tpu.dot_dimension_numbers<[1], [0], [0], [1], [0, 0, 1, 1], [], []>} : vector<128x128xf32>, vector<128x64xf32>, vector<128x64xf32> -> vector<128x64xf32>
    %254 = tpu.reciprocal %251 {approx = true} : vector<128x1xf32> -> vector<128x1xf32>
    %255 = vector.broadcast %254 : vector<128x1xf32> to vector<128x64xf32>
    %256 = arith.mulf %253, %255 : vector<128x64xf32>
    %257 = arith.addf %232, %256 : vector<128x64xf32>
    %cst_64 = arith.constant 2.500000e-01 : f32
    %258 = vector.broadcast %cst_64 : f32 to vector<128x64xf32>
    %259 = arith.mulf %257, %258 : vector<128x64xf32>
    %c813 = arith.constant 813 : index
    %c0_65 = arith.constant 0 : index
    %260 = vector.load %arg4[%c813, %c0_65] : memref<824x256xf32, #tpu.memory_space<vmem>>, vector<1x64xf32>
    %261 = vector.broadcast %260 : vector<1x64xf32> to vector<128x64xf32>
    %262 = arith.addf %259, %261 : vector<128x64xf32>
    %cst_66 = arith.constant dense<0.000000e+00> : vector<128xf32>
    %263 = vector.multi_reduction <add>, %262, %cst_66 [1] : vector<128x64xf32> to vector<128xf32>
    %264 = vector.shape_cast %263 : vector<128xf32> to vector<128x1xf32>
    %cst_67 = arith.constant 6.400000e+01 : f32
    %265 = vector.broadcast %cst_67 : f32 to vector<128x1xf32>
    %266 = arith.divf %264, %265 : vector<128x1xf32>
    %267 = vector.broadcast %266 : vector<128x1xf32> to vector<128x64xf32>
    %268 = arith.subf %262, %267 : vector<128x64xf32>
    %269 = arith.mulf %268, %268 : vector<128x64xf32>
    %cst_68 = arith.constant dense<0.000000e+00> : vector<128xf32>
    %270 = vector.multi_reduction <add>, %269, %cst_68 [1] : vector<128x64xf32> to vector<128xf32>
    %271 = vector.shape_cast %270 : vector<128xf32> to vector<128x1xf32>
    %cst_69 = arith.constant 6.400000e+01 : f32
    %272 = vector.broadcast %cst_69 : f32 to vector<128x1xf32>
    %273 = arith.divf %271, %272 : vector<128x1xf32>
    %274 = vector.broadcast %266 : vector<128x1xf32> to vector<128x64xf32>
    %275 = arith.subf %262, %274 : vector<128x64xf32>
    %cst_70 = arith.constant 9.99999974E-6 : f32
    %276 = vector.broadcast %cst_70 : f32 to vector<128x1xf32>
    %277 = arith.addf %273, %276 : vector<128x1xf32>
    %278 = math.rsqrt %277 : vector<128x1xf32>
    %279 = vector.broadcast %278 : vector<128x1xf32> to vector<128x64xf32>
    %280 = arith.mulf %275, %279 : vector<128x64xf32>
    %c814 = arith.constant 814 : index
    %c0_71 = arith.constant 0 : index
    %281 = vector.load %arg4[%c814, %c0_71] : memref<824x256xf32, #tpu.memory_space<vmem>>, vector<1x64xf32>
    %282 = vector.broadcast %281 : vector<1x64xf32> to vector<128x64xf32>
    %283 = arith.mulf %280, %282 : vector<128x64xf32>
    %c815 = arith.constant 815 : index
    %c0_72 = arith.constant 0 : index
    %284 = vector.load %arg4[%c815, %c0_72] : memref<824x256xf32, #tpu.memory_space<vmem>>, vector<1x64xf32>
    %285 = vector.broadcast %284 : vector<1x64xf32> to vector<128x64xf32>
    %286 = arith.addf %283, %285 : vector<128x64xf32>
    %287 = arith.addf %286, %152 : vector<128x64xf32>
    %cst_73 = arith.constant 0.000000e+00 : f32
    %288 = vector.broadcast %cst_73 : f32 to vector<128x64xf32>
    %289 = arith.maximumf %287, %288 : vector<128x64xf32>
    %c488 = arith.constant 488 : index
    %c0_74 = arith.constant 0 : index
    %290 = vector.load %arg4[%c488, %c0_74] : memref<824x256xf32, #tpu.memory_space<vmem>>, vector<64x32xf32>
    %cst_75 = arith.constant dense<0.000000e+00> : vector<128x32xf32>
    %291 = tpu.matmul %289, %290, %cst_75 {dimension_numbers = #tpu.dot_dimension_numbers<[1], [0], [0], [1], [0, 0, 1, 1], [], []>} : vector<128x64xf32>, vector<64x32xf32>, vector<128x32xf32> -> vector<128x32xf32>
    %c816 = arith.constant 816 : index
    %c0_76 = arith.constant 0 : index
    %292 = vector.load %arg4[%c816, %c0_76] : memref<824x256xf32, #tpu.memory_space<vmem>>, vector<1x32xf32>
    %293 = vector.broadcast %292 : vector<1x32xf32> to vector<128x32xf32>
    %294 = arith.addf %291, %293 : vector<128x32xf32>
    %c552 = arith.constant 552 : index
    %c0_77 = arith.constant 0 : index
    %295 = vector.load %arg4[%c552, %c0_77] : memref<824x256xf32, #tpu.memory_space<vmem>>, vector<64x128xf32>
    %cst_78 = arith.constant dense<0.000000e+00> : vector<128x128xf32>
    %296 = tpu.matmul %289, %295, %cst_78 {dimension_numbers = #tpu.dot_dimension_numbers<[1], [0], [0], [1], [0, 0, 1, 1], [], []>} : vector<128x64xf32>, vector<64x128xf32>, vector<128x128xf32> -> vector<128x128xf32>
    %c616 = arith.constant 616 : index
    %c0_79 = arith.constant 0 : index
    %297 = vector.load %arg4[%c616, %c0_79] : memref<824x256xf32, #tpu.memory_space<vmem>>, vector<128x128xf32>
    %cst_80 = arith.constant dense<0.000000e+00> : vector<128x128xf32>
    %298 = tpu.matmul %296, %297, %cst_80 {dimension_numbers = #tpu.dot_dimension_numbers<[1], [0], [0], [1], [0, 0, 1, 1], [], []>} : vector<128x128xf32>, vector<128x128xf32>, vector<128x128xf32> -> vector<128x128xf32>
    %299 = vector.extract_strided_slice %298 {offsets = [0, 0], sizes = [128, 8], strides = [1, 1]} : vector<128x128xf32> to vector<128x8xf32>
    %300 = tpu.transpose %299, [1, 0] : vector<128x8xf32> -> vector<8x128xf32>
    %c8_81 = arith.constant 8 : index
    %301 = memref.load %arg5[%c8_81] : memref<12xf32, #tpu.memory_space<smem>>
    %302 = vector.extract_strided_slice %298 {offsets = [0, 4], sizes = [128, 1], strides = [1, 1]} : vector<128x128xf32> to vector<128x1xf32>
    %303 = vector.extract_strided_slice %300 {offsets = [0, 0], sizes = [1, 128], strides = [1, 1]} : vector<8x128xf32> to vector<1x128xf32>
    %304 = vector.broadcast %302 : vector<128x1xf32> to vector<128x128xf32>
    %305 = vector.broadcast %303 : vector<1x128xf32> to vector<128x128xf32>
    %306 = arith.addf %304, %305 : vector<128x128xf32>
    %307 = vector.broadcast %301 : f32 to vector<128x128xf32>
    %308 = arith.mulf %307, %2 : vector<128x128xf32>
    %309 = arith.addf %306, %308 : vector<128x128xf32>
    %cst_82 = arith.constant 2.000000e-01 : f32
    %310 = vector.broadcast %cst_82 : f32 to vector<128x128xf32>
    %311 = arith.mulf %310, %309 : vector<128x128xf32>
    %312 = arith.maximumf %309, %311 : vector<128x128xf32>
    %313 = arith.addf %312, %1 : vector<128x128xf32>
    %cst_83 = arith.constant dense<0xFF800000> : vector<128xf32>
    %314 = vector.multi_reduction <maximumf>, %313, %cst_83 [1] : vector<128x128xf32> to vector<128xf32>
    %315 = vector.shape_cast %314 : vector<128xf32> to vector<128x1xf32>
    %316 = vector.broadcast %315 : vector<128x1xf32> to vector<128x128xf32>
    %317 = arith.subf %313, %316 : vector<128x128xf32>
    %318 = math.exp %317 : vector<128x128xf32>
    %cst_84 = arith.constant dense<0.000000e+00> : vector<128x1xf32>
    %319 = tpu.matmul %318, %3, %cst_84 {dimension_numbers = #tpu.dot_dimension_numbers<[1], [0], [0], [1], [0, 0, 1, 1], [], []>} : vector<128x128xf32>, vector<128x1xf32>, vector<128x1xf32> -> vector<128x1xf32>
    %320 = vector.extract_strided_slice %296 {offsets = [0, 0], sizes = [128, 32], strides = [1, 1]} : vector<128x128xf32> to vector<128x32xf32>
    %cst_85 = arith.constant dense<0.000000e+00> : vector<128x32xf32>
    %321 = tpu.matmul %318, %320, %cst_85 {dimension_numbers = #tpu.dot_dimension_numbers<[1], [0], [0], [1], [0, 0, 1, 1], [], []>} : vector<128x128xf32>, vector<128x32xf32>, vector<128x32xf32> -> vector<128x32xf32>
    %322 = tpu.reciprocal %319 {approx = true} : vector<128x1xf32> -> vector<128x1xf32>
    %323 = vector.broadcast %322 : vector<128x1xf32> to vector<128x32xf32>
    %324 = arith.mulf %321, %323 : vector<128x32xf32>
    %c9 = arith.constant 9 : index
    %325 = memref.load %arg5[%c9] : memref<12xf32, #tpu.memory_space<smem>>
    %326 = vector.extract_strided_slice %298 {offsets = [0, 5], sizes = [128, 1], strides = [1, 1]} : vector<128x128xf32> to vector<128x1xf32>
    %327 = vector.extract_strided_slice %300 {offsets = [1, 0], sizes = [1, 128], strides = [1, 1]} : vector<8x128xf32> to vector<1x128xf32>
    %328 = vector.broadcast %326 : vector<128x1xf32> to vector<128x128xf32>
    %329 = vector.broadcast %327 : vector<1x128xf32> to vector<128x128xf32>
    %330 = arith.addf %328, %329 : vector<128x128xf32>
    %331 = vector.broadcast %325 : f32 to vector<128x128xf32>
    %332 = arith.mulf %331, %2 : vector<128x128xf32>
    %333 = arith.addf %330, %332 : vector<128x128xf32>
    %cst_86 = arith.constant 2.000000e-01 : f32
    %334 = vector.broadcast %cst_86 : f32 to vector<128x128xf32>
    %335 = arith.mulf %334, %333 : vector<128x128xf32>
    %336 = arith.maximumf %333, %335 : vector<128x128xf32>
    %337 = arith.addf %336, %1 : vector<128x128xf32>
    %cst_87 = arith.constant dense<0xFF800000> : vector<128xf32>
    %338 = vector.multi_reduction <maximumf>, %337, %cst_87 [1] : vector<128x128xf32> to vector<128xf32>
    %339 = vector.shape_cast %338 : vector<128xf32> to vector<128x1xf32>
    %340 = vector.broadcast %339 : vector<128x1xf32> to vector<128x128xf32>
    %341 = arith.subf %337, %340 : vector<128x128xf32>
    %342 = math.exp %341 : vector<128x128xf32>
    %cst_88 = arith.constant dense<0.000000e+00> : vector<128x1xf32>
    %343 = tpu.matmul %342, %3, %cst_88 {dimension_numbers = #tpu.dot_dimension_numbers<[1], [0], [0], [1], [0, 0, 1, 1], [], []>} : vector<128x128xf32>, vector<128x1xf32>, vector<128x1xf32> -> vector<128x1xf32>
    %344 = vector.extract_strided_slice %296 {offsets = [0, 32], sizes = [128, 32], strides = [1, 1]} : vector<128x128xf32> to vector<128x32xf32>
    %cst_89 = arith.constant dense<0.000000e+00> : vector<128x32xf32>
    %345 = tpu.matmul %342, %344, %cst_89 {dimension_numbers = #tpu.dot_dimension_numbers<[1], [0], [0], [1], [0, 0, 1, 1], [], []>} : vector<128x128xf32>, vector<128x32xf32>, vector<128x32xf32> -> vector<128x32xf32>
    %346 = tpu.reciprocal %343 {approx = true} : vector<128x1xf32> -> vector<128x1xf32>
    %347 = vector.broadcast %346 : vector<128x1xf32> to vector<128x32xf32>
    %348 = arith.mulf %345, %347 : vector<128x32xf32>
    %349 = arith.addf %324, %348 : vector<128x32xf32>
    %c10 = arith.constant 10 : index
    %350 = memref.load %arg5[%c10] : memref<12xf32, #tpu.memory_space<smem>>
    %351 = vector.extract_strided_slice %298 {offsets = [0, 6], sizes = [128, 1], strides = [1, 1]} : vector<128x128xf32> to vector<128x1xf32>
    %352 = vector.extract_strided_slice %300 {offsets = [2, 0], sizes = [1, 128], strides = [1, 1]} : vector<8x128xf32> to vector<1x128xf32>
    %353 = vector.broadcast %351 : vector<128x1xf32> to vector<128x128xf32>
    %354 = vector.broadcast %352 : vector<1x128xf32> to vector<128x128xf32>
    %355 = arith.addf %353, %354 : vector<128x128xf32>
    %356 = vector.broadcast %350 : f32 to vector<128x128xf32>
    %357 = arith.mulf %356, %2 : vector<128x128xf32>
    %358 = arith.addf %355, %357 : vector<128x128xf32>
    %cst_90 = arith.constant 2.000000e-01 : f32
    %359 = vector.broadcast %cst_90 : f32 to vector<128x128xf32>
    %360 = arith.mulf %359, %358 : vector<128x128xf32>
    %361 = arith.maximumf %358, %360 : vector<128x128xf32>
    %362 = arith.addf %361, %1 : vector<128x128xf32>
    %cst_91 = arith.constant dense<0xFF800000> : vector<128xf32>
    %363 = vector.multi_reduction <maximumf>, %362, %cst_91 [1] : vector<128x128xf32> to vector<128xf32>
    %364 = vector.shape_cast %363 : vector<128xf32> to vector<128x1xf32>
    %365 = vector.broadcast %364 : vector<128x1xf32> to vector<128x128xf32>
    %366 = arith.subf %362, %365 : vector<128x128xf32>
    %367 = math.exp %366 : vector<128x128xf32>
    %cst_92 = arith.constant dense<0.000000e+00> : vector<128x1xf32>
    %368 = tpu.matmul %367, %3, %cst_92 {dimension_numbers = #tpu.dot_dimension_numbers<[1], [0], [0], [1], [0, 0, 1, 1], [], []>} : vector<128x128xf32>, vector<128x1xf32>, vector<128x1xf32> -> vector<128x1xf32>
    %369 = vector.extract_strided_slice %296 {offsets = [0, 64], sizes = [128, 32], strides = [1, 1]} : vector<128x128xf32> to vector<128x32xf32>
    %cst_93 = arith.constant dense<0.000000e+00> : vector<128x32xf32>
    %370 = tpu.matmul %367, %369, %cst_93 {dimension_numbers = #tpu.dot_dimension_numbers<[1], [0], [0], [1], [0, 0, 1, 1], [], []>} : vector<128x128xf32>, vector<128x32xf32>, vector<128x32xf32> -> vector<128x32xf32>
    %371 = tpu.reciprocal %368 {approx = true} : vector<128x1xf32> -> vector<128x1xf32>
    %372 = vector.broadcast %371 : vector<128x1xf32> to vector<128x32xf32>
    %373 = arith.mulf %370, %372 : vector<128x32xf32>
    %374 = arith.addf %349, %373 : vector<128x32xf32>
    %c11 = arith.constant 11 : index
    %375 = memref.load %arg5[%c11] : memref<12xf32, #tpu.memory_space<smem>>
    %376 = vector.extract_strided_slice %298 {offsets = [0, 7], sizes = [128, 1], strides = [1, 1]} : vector<128x128xf32> to vector<128x1xf32>
    %377 = vector.extract_strided_slice %300 {offsets = [3, 0], sizes = [1, 128], strides = [1, 1]} : vector<8x128xf32> to vector<1x128xf32>
    %378 = vector.broadcast %376 : vector<128x1xf32> to vector<128x128xf32>
    %379 = vector.broadcast %377 : vector<1x128xf32> to vector<128x128xf32>
    %380 = arith.addf %378, %379 : vector<128x128xf32>
    %381 = vector.broadcast %375 : f32 to vector<128x128xf32>
    %382 = arith.mulf %381, %2 : vector<128x128xf32>
    %383 = arith.addf %380, %382 : vector<128x128xf32>
    %cst_94 = arith.constant 2.000000e-01 : f32
    %384 = vector.broadcast %cst_94 : f32 to vector<128x128xf32>
    %385 = arith.mulf %384, %383 : vector<128x128xf32>
    %386 = arith.maximumf %383, %385 : vector<128x128xf32>
    %387 = arith.addf %386, %1 : vector<128x128xf32>
    %cst_95 = arith.constant dense<0xFF800000> : vector<128xf32>
    %388 = vector.multi_reduction <maximumf>, %387, %cst_95 [1] : vector<128x128xf32> to vector<128xf32>
    %389 = vector.shape_cast %388 : vector<128xf32> to vector<128x1xf32>
    %390 = vector.broadcast %389 : vector<128x1xf32> to vector<128x128xf32>
    %391 = arith.subf %387, %390 : vector<128x128xf32>
    %392 = math.exp %391 : vector<128x128xf32>
    %cst_96 = arith.constant dense<0.000000e+00> : vector<128x1xf32>
    %393 = tpu.matmul %392, %3, %cst_96 {dimension_numbers = #tpu.dot_dimension_numbers<[1], [0], [0], [1], [0, 0, 1, 1], [], []>} : vector<128x128xf32>, vector<128x1xf32>, vector<128x1xf32> -> vector<128x1xf32>
    %394 = vector.extract_strided_slice %296 {offsets = [0, 96], sizes = [128, 32], strides = [1, 1]} : vector<128x128xf32> to vector<128x32xf32>
    %cst_97 = arith.constant dense<0.000000e+00> : vector<128x32xf32>
    %395 = tpu.matmul %392, %394, %cst_97 {dimension_numbers = #tpu.dot_dimension_numbers<[1], [0], [0], [1], [0, 0, 1, 1], [], []>} : vector<128x128xf32>, vector<128x32xf32>, vector<128x32xf32> -> vector<128x32xf32>
    %396 = tpu.reciprocal %393 {approx = true} : vector<128x1xf32> -> vector<128x1xf32>
    %397 = vector.broadcast %396 : vector<128x1xf32> to vector<128x32xf32>
    %398 = arith.mulf %395, %397 : vector<128x32xf32>
    %399 = arith.addf %374, %398 : vector<128x32xf32>
    %cst_98 = arith.constant 2.500000e-01 : f32
    %400 = vector.broadcast %cst_98 : f32 to vector<128x32xf32>
    %401 = arith.mulf %399, %400 : vector<128x32xf32>
    %c817 = arith.constant 817 : index
    %c0_99 = arith.constant 0 : index
    %402 = vector.load %arg4[%c817, %c0_99] : memref<824x256xf32, #tpu.memory_space<vmem>>, vector<1x32xf32>
    %403 = vector.broadcast %402 : vector<1x32xf32> to vector<128x32xf32>
    %404 = arith.addf %401, %403 : vector<128x32xf32>
    %cst_100 = arith.constant dense<0.000000e+00> : vector<128xf32>
    %405 = vector.multi_reduction <add>, %404, %cst_100 [1] : vector<128x32xf32> to vector<128xf32>
    %406 = vector.shape_cast %405 : vector<128xf32> to vector<128x1xf32>
    %cst_101 = arith.constant 3.200000e+01 : f32
    %407 = vector.broadcast %cst_101 : f32 to vector<128x1xf32>
    %408 = arith.divf %406, %407 : vector<128x1xf32>
    %409 = vector.broadcast %408 : vector<128x1xf32> to vector<128x32xf32>
    %410 = arith.subf %404, %409 : vector<128x32xf32>
    %411 = arith.mulf %410, %410 : vector<128x32xf32>
    %cst_102 = arith.constant dense<0.000000e+00> : vector<128xf32>
    %412 = vector.multi_reduction <add>, %411, %cst_102 [1] : vector<128x32xf32> to vector<128xf32>
    %413 = vector.shape_cast %412 : vector<128xf32> to vector<128x1xf32>
    %cst_103 = arith.constant 3.200000e+01 : f32
    %414 = vector.broadcast %cst_103 : f32 to vector<128x1xf32>
    %415 = arith.divf %413, %414 : vector<128x1xf32>
    %416 = vector.broadcast %408 : vector<128x1xf32> to vector<128x32xf32>
    %417 = arith.subf %404, %416 : vector<128x32xf32>
    %cst_104 = arith.constant 9.99999974E-6 : f32
    %418 = vector.broadcast %cst_104 : f32 to vector<128x1xf32>
    %419 = arith.addf %415, %418 : vector<128x1xf32>
    %420 = math.rsqrt %419 : vector<128x1xf32>
    %421 = vector.broadcast %420 : vector<128x1xf32> to vector<128x32xf32>
    %422 = arith.mulf %417, %421 : vector<128x32xf32>
    %c818 = arith.constant 818 : index
    %c0_105 = arith.constant 0 : index
    %423 = vector.load %arg4[%c818, %c0_105] : memref<824x256xf32, #tpu.memory_space<vmem>>, vector<1x32xf32>
    %424 = vector.broadcast %423 : vector<1x32xf32> to vector<128x32xf32>
    %425 = arith.mulf %422, %424 : vector<128x32xf32>
    %c819 = arith.constant 819 : index
    %c0_106 = arith.constant 0 : index
    %426 = vector.load %arg4[%c819, %c0_106] : memref<824x256xf32, #tpu.memory_space<vmem>>, vector<1x32xf32>
    %427 = vector.broadcast %426 : vector<1x32xf32> to vector<128x32xf32>
    %428 = arith.addf %425, %427 : vector<128x32xf32>
    %429 = arith.addf %428, %294 : vector<128x32xf32>
    %cst_107 = arith.constant 0.000000e+00 : f32
    %430 = vector.broadcast %cst_107 : f32 to vector<128x32xf32>
    %431 = arith.maximumf %429, %430 : vector<128x32xf32>
    %c744 = arith.constant 744 : index
    %c0_108 = arith.constant 0 : index
    %432 = vector.load %arg4[%c744, %c0_108] : memref<824x256xf32, #tpu.memory_space<vmem>>, vector<32x32xf32>
    %cst_109 = arith.constant dense<0.000000e+00> : vector<128x32xf32>
    %433 = tpu.matmul %431, %432, %cst_109 {dimension_numbers = #tpu.dot_dimension_numbers<[1], [0], [0], [1], [0, 0, 1, 1], [], []>} : vector<128x32xf32>, vector<32x32xf32>, vector<128x32xf32> -> vector<128x32xf32>
    %c820 = arith.constant 820 : index
    %c0_110 = arith.constant 0 : index
    %434 = vector.load %arg4[%c820, %c0_110] : memref<824x256xf32, #tpu.memory_space<vmem>>, vector<1x32xf32>
    %435 = vector.broadcast %434 : vector<1x32xf32> to vector<128x32xf32>
    %436 = arith.addf %433, %435 : vector<128x32xf32>
    %cst_111 = arith.constant dense<0.000000e+00> : vector<128xf32>
    %437 = vector.multi_reduction <add>, %436, %cst_111 [1] : vector<128x32xf32> to vector<128xf32>
    %438 = vector.shape_cast %437 : vector<128xf32> to vector<128x1xf32>
    %cst_112 = arith.constant 3.200000e+01 : f32
    %439 = vector.broadcast %cst_112 : f32 to vector<128x1xf32>
    %440 = arith.divf %438, %439 : vector<128x1xf32>
    %441 = vector.broadcast %440 : vector<128x1xf32> to vector<128x32xf32>
    %442 = arith.subf %436, %441 : vector<128x32xf32>
    %443 = arith.mulf %442, %442 : vector<128x32xf32>
    %cst_113 = arith.constant dense<0.000000e+00> : vector<128xf32>
    %444 = vector.multi_reduction <add>, %443, %cst_113 [1] : vector<128x32xf32> to vector<128xf32>
    %445 = vector.shape_cast %444 : vector<128xf32> to vector<128x1xf32>
    %cst_114 = arith.constant 3.200000e+01 : f32
    %446 = vector.broadcast %cst_114 : f32 to vector<128x1xf32>
    %447 = arith.divf %445, %446 : vector<128x1xf32>
    %448 = vector.broadcast %440 : vector<128x1xf32> to vector<128x32xf32>
    %449 = arith.subf %436, %448 : vector<128x32xf32>
    %cst_115 = arith.constant 9.99999974E-6 : f32
    %450 = vector.broadcast %cst_115 : f32 to vector<128x1xf32>
    %451 = arith.addf %447, %450 : vector<128x1xf32>
    %452 = math.rsqrt %451 : vector<128x1xf32>
    %453 = vector.broadcast %452 : vector<128x1xf32> to vector<128x32xf32>
    %454 = arith.mulf %449, %453 : vector<128x32xf32>
    %c821 = arith.constant 821 : index
    %c0_116 = arith.constant 0 : index
    %455 = vector.load %arg4[%c821, %c0_116] : memref<824x256xf32, #tpu.memory_space<vmem>>, vector<1x32xf32>
    %456 = vector.broadcast %455 : vector<1x32xf32> to vector<128x32xf32>
    %457 = arith.mulf %454, %456 : vector<128x32xf32>
    %c822 = arith.constant 822 : index
    %c0_117 = arith.constant 0 : index
    %458 = vector.load %arg4[%c822, %c0_117] : memref<824x256xf32, #tpu.memory_space<vmem>>, vector<1x32xf32>
    %459 = vector.broadcast %458 : vector<1x32xf32> to vector<128x32xf32>
    %460 = arith.addf %457, %459 : vector<128x32xf32>
    %cst_118 = arith.constant 0.000000e+00 : f32
    %461 = vector.broadcast %cst_118 : f32 to vector<128x32xf32>
    %462 = arith.maximumf %460, %461 : vector<128x32xf32>
    %c776 = arith.constant 776 : index
    %c0_119 = arith.constant 0 : index
    %463 = vector.load %arg4[%c776, %c0_119] : memref<824x256xf32, #tpu.memory_space<vmem>>, vector<32x128xf32>
    %cst_120 = arith.constant dense<0.000000e+00> : vector<128x128xf32>
    %464 = tpu.matmul %462, %463, %cst_120 {dimension_numbers = #tpu.dot_dimension_numbers<[1], [0], [0], [1], [0, 0, 1, 1], [], []>} : vector<128x32xf32>, vector<32x128xf32>, vector<128x128xf32> -> vector<128x128xf32>
    %c823 = arith.constant 823 : index
    %c0_121 = arith.constant 0 : index
    %465 = vector.load %arg4[%c823, %c0_121] : memref<824x256xf32, #tpu.memory_space<vmem>>, vector<1x128xf32>
    %466 = vector.broadcast %465 : vector<1x128xf32> to vector<128x128xf32>
    %467 = arith.addf %464, %466 : vector<128x128xf32>
    %cst_122 = arith.constant dense<0xFF800000> : vector<128xf32>
    %468 = vector.multi_reduction <maximumf>, %467, %cst_122 [1] : vector<128x128xf32> to vector<128xf32>
    %469 = vector.shape_cast %468 : vector<128xf32> to vector<128x1xf32>
    %470 = vector.broadcast %469 : vector<128x1xf32> to vector<128x128xf32>
    %471 = arith.subf %467, %470 : vector<128x128xf32>
    %472 = math.exp %471 : vector<128x128xf32>
    %cst_123 = arith.constant dense<0.000000e+00> : vector<128xf32>
    %473 = vector.multi_reduction <add>, %472, %cst_123 [1] : vector<128x128xf32> to vector<128xf32>
    %474 = vector.shape_cast %473 : vector<128xf32> to vector<128x1xf32>
    %475 = math.log %474 : vector<128x1xf32>
    %476 = arith.addf %475, %469 : vector<128x1xf32>
    %477 = vector.broadcast %476 : vector<128x1xf32> to vector<128x128xf32>
    %478 = arith.subf %467, %477 : vector<128x128xf32>
    %c0_124 = arith.constant 0 : index
    %c0_125 = arith.constant 0 : index
    %479 = vector.load %arg6[%c0_124, %c0_125] : memref<128x128xf32, #tpu.memory_space<vmem>>, vector<128x128xf32>
    tpu.vector_store %arg6[%c0_124, %c0_125], %478 {strides = array<i32>} : memref<128x128xf32, #tpu.memory_space<vmem>>, vector<128x128xf32>,
    return
  }
  func.func @transform_0(%arg0: i32) -> (i32, i32) {
    %c0_i32 = arith.constant 0 : i32
    %c0_i32_0 = arith.constant 0 : i32
    return %arg0, %c0_i32 : i32, i32
  }
  func.func @transform_1(%arg0: i32) -> (i32, i32) {
    %c0_i32 = arith.constant 0 : i32
    %c0_i32_0 = arith.constant 0 : i32
    return %arg0, %c0_i32 : i32, i32
  }
  func.func @transform_2(%arg0: i32) -> (i32, i32) {
    %c0_i32 = arith.constant 0 : i32
    %c0_i32_0 = arith.constant 0 : i32
    return %arg0, %c0_i32 : i32, i32
  }
  func.func @transform_3(%arg0: i32) -> (i32, i32) {
    %c0_i32 = arith.constant 0 : i32
    %c0_i32_0 = arith.constant 0 : i32
    %c0_i32_1 = arith.constant 0 : i32
    return %c0_i32, %c0_i32_0 : i32, i32
  }
  func.func @transform_4(%arg0: i32) -> i32 {
    %c0_i32 = arith.constant 0 : i32
    %c0_i32_0 = arith.constant 0 : i32
    return %c0_i32 : i32
  }
  func.func @transform_5(%arg0: i32) -> (i32, i32) {
    %c0_i32 = arith.constant 0 : i32
    %c0_i32_0 = arith.constant 0 : i32
    return %arg0, %c0_i32 : i32, i32
  }
}

</mosaic_0001>

<llo_original>
// kernel: particle_gnn_forward.1
$region0: #{particle_gnn_forward.1}
  #allocation0 [shape = 'u32[]', space=smem, size = 0x4, offset = 0x4, fixed_abs, tag = 'smem constant byte address 0x4 - core index']
  #allocation1 [shape = 'u32[72,128]{1,0:T(1,128)}', space=vmem, size = 0x9000, scoped, tag = 'internal scratch']
  %s0 = inlined_call_operand.vmem [shape: f32[512,4], index: 0, kind: input, shape index: {}]
  %s1 = inlined_call_operand.vmem [shape: f32[512,128], index: 1, kind: input, shape index: {}]
  %s2 = inlined_call_operand.vmem [shape: f32[512,128], index: 2, kind: input, shape index: {}]
  %s3 = inlined_call_operand.vmem [shape: f32[824,256], index: 3, kind: input, shape index: {}]
  %s4 = inlined_call_operand.vmem [shape: f32[12], index: 4, kind: input, shape index: {}]
  %s5 = inlined_call_operand.vmem [shape: f32[512,128], index: 5, kind: output, shape index: {}]
  %s6 = sld [smem:[#allocation0]]
  $region57: #{particle_gnn_forward.1} parent=0
    _
  %s8 = ssub.s32 1, %s6
  %s9 = scalar_select 0, %s8, %s6
  $region1: #{particle_gnn_forward.1} parent=0
    #allocation2 [shape = 'u8[512]{0}', space=smem, size = 0x200, scoped, tag = 'input window, operand 4, single buffered']
    #allocation3 [shape = 's32[2]{0}', space=sflag, size = 0x8, scoped, tag = 'scoped memory for particle_gnn_forward.1']
    %10 = vsyncpa [#allocation3], 0
    loop: start=0, step=1, limit=6
    $region2: #{particle_gnn_forward.1} parent=1 // loop_pre_header
      _
    $region3: #{particle_gnn_forward.1} parent=1 // loop_header
      %s12 = sphi 0, %s16
      %p13 = scmp.ge.s32.totalorder %s12, 6
      %s22 = sphi 0, %s24
      %s25 = sphi 0, %s22
      %s26 = sphi 0, %s25
      %s42 = sphi 0, %s26
      %s48 = sphi 0, %s50
      %s51 = sphi 0, %s48
      %s52 = sphi 0, %s51
      %s68 = sphi 0, %s52
      %s74 = sphi 0, %s76
      %s77 = sphi 0, %s74
      %s78 = sphi 0, %s77
      %s94 = sphi 0, %s78
      %s98 = sphi 0, %s98
      %s100 = sphi 0, %s98
      %s101 = sphi 0, %s100
      %s115 = sphi 0, %s101
      %s119 = sphi 0, %s119
      %s121 = sphi 0, %s119
      %s122 = sphi 0, %s121
      %s136 = sphi 0, %s122
      %s142 = sphi 0, %s144
      %s145 = sphi 0, %s142
      %s146 = sphi 0, %s145
      %s162 = sphi 0, %s146
    $region4: #{particle_gnn_forward.1} parent=1 // loop_header_branch
      %15 = sbr.rel (%p13) target = $region8
    $region5: #{particle_gnn_forward.1} parent=1 // loop_body
      %s17 = ssub.s32 %s12, 1
      %s18 = ssub.s32 %s12, 2
      %s19 = sadd.s32 %s12, 1
      %s20 = ssub.s32 %s12, %s19
      %p21 = scmp.eq.s32.totalorder %s20, 0
      %s23 = sadd.s32 %s22, 1
      %s24 = scalar_select %p21, %s22, %s23
      %p27 = pneg %p21
      %p28 = scmp.eq.s32.totalorder %s12, 3
      %p29 = por %p27, %p28
      %p30 = scmp.ne.s32.totalorder %s22, %s25
      %p31 = scmp.eq.s32.totalorder %s12, 0
      %p32 = por %p30, %p31
      %p33 = scmp.ne.s32.totalorder %s22, %s25
      %p34 = scmp.eq.s32.totalorder %s17, 3
      %p35 = por %p33, %p34
      %p36 = scmp.ne.s32.totalorder %s25, %s26
      %p37 = scmp.eq.s32.totalorder %s17, 0
      %p38 = por %p36, %p37
      %p39 = scmp.ne.s32.totalorder %s25, %s26
      %p40 = scmp.eq.s32.totalorder %s18, 3
      %p41 = por %p39, %p40
      %p43 = scmp.ne.s32.totalorder %s26, %s42
      %p44 = scmp.eq.s32.totalorder %s18, 0
      %p45 = por %p43, %p44
      %s46 = ssub.s32 %s12, %s19
      %p47 = scmp.eq.s32.totalorder %s46, 0
      %s49 = sadd.s32 %s48, 1
      %s50 = scalar_select %p47, %s48, %s49
      %p53 = pneg %p47
      %p54 = scmp.eq.s32.totalorder %s12, 3
      %p55 = por %p53, %p54
      %p56 = scmp.ne.s32.totalorder %s48, %s51
      %p57 = scmp.eq.s32.totalorder %s12, 0
      %p58 = por %p56, %p57
      %p59 = scmp.ne.s32.totalorder %s48, %s51
      %p60 = scmp.eq.s32.totalorder %s17, 3
      %p61 = por %p59, %p60
      %p62 = scmp.ne.s32.totalorder %s51, %s52
      %p63 = scmp.eq.s32.totalorder %s17, 0
      %p64 = por %p62, %p63
      %p65 = scmp.ne.s32.totalorder %s51, %s52
      %p66 = scmp.eq.s32.totalorder %s18, 3
      %p67 = por %p65, %p66
      %p69 = scmp.ne.s32.totalorder %s52, %s68
      %p70 = scmp.eq.s32.totalorder %s18, 0
      %p71 = por %p69, %p70
      %s72 = ssub.s32 %s12, %s19
      %p73 = scmp.eq.s32.totalorder %s72, 0
      %s75 = sadd.s32 %s74, 1
      %s76 = scalar_select %p73, %s74, %s75
      %p79 = pneg %p73
      %p80 = scmp.eq.s32.totalorder %s12, 3
      %p81 = por %p79, %p80
      %p82 = scmp.ne.s32.totalorder %s74, %s77
      %p83 = scmp.eq.s32.totalorder %s12, 0
      %p84 = por %p82, %p83
      %p85 = scmp.ne.s32.totalorder %s74, %s77
      %p86 = scmp.eq.s32.totalorder %s17, 3
      %p87 = por %p85, %p86
      %p88 = scmp.ne.s32.totalorder %s77, %s78
      %p89 = scmp.eq.s32.totalorder %s17, 0
      %p90 = por %p88, %p89
      %p91 = scmp.ne.s32.totalorder %s77, %s78
      %p92 = scmp.eq.s32.totalorder %s18, 3
      %p93 = por %p91, %p92
      %p95 = scmp.ne.s32.totalorder %s78, %s94
      %p96 = scmp.eq.s32.totalorder %s18, 0
      %p97 = por %p95, %p96
      %s99 = sadd.s32 %s98, 1
      %p102 = scmp.eq.s32.totalorder %s12, 3
      %p103 = scmp.ne.s32.totalorder %s98, %s100
      %p104 = scmp.eq.s32.totalorder %s12, 0
      %p105 = por %p103, %p104
      %p106 = scmp.ne.s32.totalorder %s98, %s100
      %p107 = scmp.eq.s32.totalorder %s17, 3
      %p108 = por %p106, %p107
      %p109 = scmp.ne.s32.totalorder %s100, %s101
      %p110 = scmp.eq.s32.totalorder %s17, 0
      %p111 = por %p109, %p110
      %p112 = scmp.ne.s32.totalorder %s100, %s101
      %p113 = scmp.eq.s32.totalorder %s18, 3
      %p114 = por %p112, %p113
      %p116 = scmp.ne.s32.totalorder %s101, %s115
      %p117 = scmp.eq.s32.totalorder %s18, 0
      %p118 = por %p116, %p117
      %s120 = sadd.s32 %s119, 1
      %p123 = scmp.eq.s32.totalorder %s12, 3
      %p124 = scmp.ne.s32.totalorder %s119, %s121
      %p125 = scmp.eq.s32.totalorder %s12, 0
      %p126 = por %p124, %p125
      %p127 = scmp.ne.s32.totalorder %s119, %s121
      %p128 = scmp.eq.s32.totalorder %s17, 3
      %p129 = por %p127, %p128
      %p130 = scmp.ne.s32.totalorder %s121, %s122
      %p131 = scmp.eq.s32.totalorder %s17, 0
      %p132 = por %p130, %p131
      %p133 = scmp.ne.s32.totalorder %s121, %s122
      %p134 = scmp.eq.s32.totalorder %s18, 3
      %p135 = por %p133, %p134
      %p137 = scmp.ne.s32.totalorder %s122, %s136
      %p138 = scmp.eq.s32.totalorder %s18, 0
      %p139 = por %p137, %p138
      %s140 = ssub.s32 %s12, %s19
      %p141 = scmp.eq.s32.totalorder %s140, 0
      %s143 = sadd.s32 %s142, 1
      %s144 = scalar_select %p141, %s142, %s143
      %p147 = pneg %p141
      %p148 = scmp.eq.s32.totalorder %s12, 3
      %p149 = por %p147, %p148
      %p150 = scmp.ne.s32.totalorder %s142, %s145
      %p151 = scmp.eq.s32.totalorder %s12, 0
      %p152 = por %p150, %p151
      %p153 = scmp.ne.s32.totalorder %s142, %s145
      %p154 = scmp.eq.s32.totalorder %s17, 3
      %p155 = por %p153, %p154
      %p156 = scmp.ne.s32.totalorder %s145, %s146
      %p157 = scmp.eq.s32.totalorder %s17, 0
      %p158 = por %p156, %p157
      %p159 = scmp.ne.s32.totalorder %s145, %s146
      %p160 = scmp.eq.s32.totalorder %s18, 3
      %p161 = por %p159, %p160
      %p163 = scmp.ne.s32.totalorder %s146, %s162
      %p164 = scmp.eq.s32.totalorder %s18, 0
      %p165 = por %p163, %p164
      %p166 = scmp.le.s32.totalorder 1, %s12
      %p167 = scmp.lt.s32.totalorder %s12, 5
      %p168 = pnand %p166, %p167
      %p169 = pneg %p168
      // Predicated region
      $region9: #{particle_gnn_forward.1} parent=5 // pred_check
        _
      $region10: #{particle_gnn_forward.1} parent=5 // pred_check_branch
        %171 = sbr.rel (%p168) target = $region12
      $region11: #{particle_gnn_forward.1} parent=5 // pred_region
        %s172 = ssub.s32 %s12, 1
        // Predicated region
        $region13: #{particle_gnn_forward.1} parent=11 // pred_check
          %p173 = pneg %p111
        $region14: #{particle_gnn_forward.1} parent=11 // pred_check_branch
          %175 = sbr.rel (%p173) target = $region16
        $region15: #{particle_gnn_forward.1} parent=11 // pred_region
          _
        $region16: #{particle_gnn_forward.1} parent=11 // pred_fallthru
          _
        // Predicated region
        $region17: #{particle_gnn_forward.1} parent=11 // pred_check
          %p176 = pneg %p132
        $region18: #{particle_gnn_forward.1} parent=11 // pred_check_branch
          %178 = sbr.rel (%p176) target = $region20
        $region19: #{particle_gnn_forward.1} parent=11 // pred_region
          %180 = vsyncadd [#allocation3], 0
          %s182 = sshll.u32 %s4, 4
          %s183 = int_to_ptr.vmem [resolvable:$true] %s182
          %185 = dma.vmem_to_smem %s183, 16, [#allocation2], [#allocation3]
        $region20: #{particle_gnn_forward.1} parent=11 // pred_fallthru
          _
      $region12: #{particle_gnn_forward.1} parent=5 // pred_fallthru
        _
      %p186 = scmp.lt.s32.totalorder %s12, 4
      // Predicated region
      $region21: #{particle_gnn_forward.1} parent=5 // pred_check
        %p187 = pneg %p186
      $region22: #{particle_gnn_forward.1} parent=5 // pred_check_branch
        %189 = sbr.rel (%p187) target = $region24
      $region23: #{particle_gnn_forward.1} parent=5 // pred_region
        // Predicated region
        $region25: #{particle_gnn_forward.1} parent=23 // pred_check
          %p190 = pneg %p32
        $region26: #{particle_gnn_forward.1} parent=23 // pred_check_branch
          %192 = sbr.rel (%p190) target = $region28
        $region27: #{particle_gnn_forward.1} parent=23 // pred_region
          %s193 = smul.u32 16, %s12
          %p194 = scmp.lt.s32.totalorder %s193, 63
          %s195 = scalar_select %p194, %s193, 63
          %s196 = smul.addr %s195, 8
          %s197 = scalar_lea.vmem %s0, %s196
          %s198 = smul.u32 16, %s12
        $region28: #{particle_gnn_forward.1} parent=23 // pred_fallthru
          _
        // Predicated region
        $region29: #{particle_gnn_forward.1} parent=23 // pred_check
          %p199 = pneg %p58
        $region30: #{particle_gnn_forward.1} parent=23 // pred_check_branch
          %201 = sbr.rel (%p199) target = $region32
        $region31: #{particle_gnn_forward.1} parent=23 // pred_region
          %s202 = smul.u32 16, %s12
          %p203 = scmp.lt.s32.totalorder %s202, 63
          %s204 = scalar_select %p203, %s202, 63
          %s205 = smul.addr %s204, 8
          %s206 = scalar_lea.vmem %s1, %s205
          %s207 = smul.u32 16, %s12
        $region32: #{particle_gnn_forward.1} parent=23 // pred_fallthru
          _
        // Predicated region
        $region33: #{particle_gnn_forward.1} parent=23 // pred_check
          %p208 = pneg %p84
        $region34: #{particle_gnn_forward.1} parent=23 // pred_check_branch
          %210 = sbr.rel (%p208) target = $region36
        $region35: #{particle_gnn_forward.1} parent=23 // pred_region
          %s211 = smul.u32 16, %s12
          %p212 = scmp.lt.s32.totalorder %s211, 63
          %s213 = scalar_select %p212, %s211, 63
          %s214 = smul.addr %s213, 8
          %s215 = scalar_lea.vmem %s2, %s214
          %s216 = smul.u32 16, %s12
        $region36: #{particle_gnn_forward.1} parent=23 // pred_fallthru
          _
      $region24: #{particle_gnn_forward.1} parent=5 // pred_fallthru
        _
      %p217 = scmp.le.s32.totalorder 1, %s12
      %p218 = scmp.lt.s32.totalorder %s12, 5
      %p219 = pnand %p217, %p218
      %p220 = pneg %p219
      // Predicated region
      $region37: #{particle_gnn_forward.1} parent=5 // pred_check
        _
      $region38: #{particle_gnn_forward.1} parent=5 // pred_check_branch
        %222 = sbr.rel (%p219) target = $region40
      $region39: #{particle_gnn_forward.1} parent=5 // pred_region
        %s223 = ssub.s32 %s12, 1
        // Predicated region
        $region41: #{particle_gnn_forward.1} parent=39 // pred_check
          %p224 = pneg %p132
        $region42: #{particle_gnn_forward.1} parent=39 // pred_check_branch
          %226 = sbr.rel (%p224) target = $region44
        $region43: #{particle_gnn_forward.1} parent=39 // pred_region
          %228 = dma.done [#allocation3], 16
        $region44: #{particle_gnn_forward.1} parent=39 // pred_fallthru
          _
        %229 = sfence
        %s230 = smul.u32 16, %s17
        %p231 = scmp.lt.s32.totalorder %s230, 63
        %s232 = scalar_select %p231, %s230, 63
        %s233 = smul.addr %s232, 8
        %s234 = scalar_lea.vmem %s0, %s233
        %p235 = pneg %p38
        %p236 = pneg %p35
        %s237 = smul.u32 16, %s17
        %p238 = scmp.lt.s32.totalorder %s237, 63
        %s239 = scalar_select %p238, %s237, 63
        %s240 = smul.addr %s239, 8
        %s241 = scalar_lea.vmem %s1, %s240
        %p242 = pneg %p64
        %p243 = pneg %p61
        %s244 = smul.u32 16, %s17
        %p245 = scmp.lt.s32.totalorder %s244, 63
        %s246 = scalar_select %p245, %s244, 63
        %s247 = smul.addr %s246, 8
        %s248 = scalar_lea.vmem %s2, %s247
        %p249 = pneg %p90
        %p250 = pneg %p87
        %p251 = pneg %p111
        %p252 = pneg %p108
        %p253 = pneg %p132
        %p254 = pneg %p129
        %p255 = pneg %p158
        %p256 = pneg %p155
        %s257 = smul.u32 16, %s17
        %p258 = scmp.lt.s32.totalorder %s257, 63
        %s259 = scalar_select %p258, %s257, 63
        %s260 = smul.addr %s259, 8
        %s261 = scalar_lea.vmem %s5, %s260
        %s262 = smul.u32 16, %s17
        %p263 = scmp.lt.s32.totalorder %s262, 63
        %s264 = scalar_select %p263, %s262, 63
        %s265 = smul.addr %s264, 8
        %s266 = scalar_lea.vmem %s0, %s265
        %s267 = smul.u32 16, %s17
        %s268 = smul.u32 16, %s17
        %p269 = scmp.lt.s32.totalorder %s268, 63
        %s270 = scalar_select %p269, %s268, 63
        %s271 = smul.addr %s270, 8
        %s272 = scalar_lea.vmem %s1, %s271
        %s273 = smul.u32 16, %s17
        %s274 = smul.u32 16, %s17
        %p275 = scmp.lt.s32.totalorder %s274, 63
        %s276 = scalar_select %p275, %s274, 63
        %s277 = smul.addr %s276, 8
        %s278 = scalar_lea.vmem %s2, %s277
        %s279 = smul.u32 16, %s17
        %s280 = smul.u32 16, %s17
        %p281 = scmp.lt.s32.totalorder %s280, 63
        %s282 = scalar_select %p281, %s280, 63
        %s283 = smul.addr %s282, 8
        %s284 = scalar_lea.vmem %s5, %s283
        %s285 = smul.u32 16, %s17
        %v286 = vld [vmem:[%s266] sm:$0xff]
        %v287 = vld [vmem:[%s266 + $0x8] sm:$0xff]
        %v288 = vld [vmem:[%s266 + $0x10] sm:$0xff]
        %v289 = vld [vmem:[%s266 + $0x18] sm:$0xff]
        %v290 = vld [vmem:[%s266 + $0x20] sm:$0xff]
        %v291 = vld [vmem:[%s266 + $0x28] sm:$0xff]
        %v292 = vld [vmem:[%s266 + $0x30] sm:$0xff]
        %v293 = vld [vmem:[%s266 + $0x38] sm:$0xff]
        %v294 = vld [vmem:[%s266 + $0x40] sm:$0xff]
        %v295 = vld [vmem:[%s266 + $0x48] sm:$0xff]
        %v296 = vld [vmem:[%s266 + $0x50] sm:$0xff]
        %v297 = vld [vmem:[%s266 + $0x58] sm:$0xff]
        %v298 = vld [vmem:[%s266 + $0x60] sm:$0xff]
        %v299 = vld [vmem:[%s266 + $0x68] sm:$0xff]
        %v300 = vld [vmem:[%s266 + $0x70] sm:$0xff]
        %v301 = vld [vmem:[%s266 + $0x78] sm:$0xff]
        %v302 = vld [vmem:[%s272] sm:$0xff]
        %v303 = vld [vmem:[%s272 + $0x8] sm:$0xff]
        %v304 = vld [vmem:[%s272 + $0x10] sm:$0xff]
        %v305 = vld [vmem:[%s272 + $0x18] sm:$0xff]
        %v306 = vld [vmem:[%s272 + $0x20] sm:$0xff]
        %v307 = vld [vmem:[%s272 + $0x28] sm:$0xff]
        %v308 = vld [vmem:[%s272 + $0x30] sm:$0xff]
        %v309 = vld [vmem:[%s272 + $0x38] sm:$0xff]
        %v310 = vld [vmem:[%s272 + $0x40] sm:$0xff]
        %v311 = vld [vmem:[%s272 + $0x48] sm:$0xff]
        %v312 = vld [vmem:[%s272 + $0x50] sm:$0xff]
        %v313 = vld [vmem:[%s272 + $0x58] sm:$0xff]
        %v314 = vld [vmem:[%s272 + $0x60] sm:$0xff]
        %v315 = vld [vmem:[%s272 + $0x68] sm:$0xff]
        %v316 = vld [vmem:[%s272 + $0x70] sm:$0xff]
        %v317 = vld [vmem:[%s272 + $0x78] sm:$0xff]
        %v318 = vld [vmem:[%s278] sm:$0xff]
        %v319 = vld [vmem:[%s278 + $0x8] sm:$0xff]
        %v320 = vld [vmem:[%s278 + $0x10] sm:$0xff]
        %v321 = vld [vmem:[%s278 + $0x18] sm:$0xff]
        %v322 = vld [vmem:[%s278 + $0x20] sm:$0xff]
        %v323 = vld [vmem:[%s278 + $0x28] sm:$0xff]
        %v324 = vld [vmem:[%s278 + $0x30] sm:$0xff]
        %v325 = vld [vmem:[%s278 + $0x38] sm:$0xff]
        %v326 = vld [vmem:[%s278 + $0x40] sm:$0xff]
        %v327 = vld [vmem:[%s278 + $0x48] sm:$0xff]
        %v328 = vld [vmem:[%s278 + $0x50] sm:$0xff]
        %v329 = vld [vmem:[%s278 + $0x58] sm:$0xff]
        %v330 = vld [vmem:[%s278 + $0x60] sm:$0xff]
        %v331 = vld [vmem:[%s278 + $0x68] sm:$0xff]
        %v332 = vld [vmem:[%s278 + $0x70] sm:$0xff]
        %v333 = vld [vmem:[%s278 + $0x78] sm:$0xff]
        %v334 = vld [vmem:[%s3] sm:$0xf]
        %v335 = vld [vmem:[%s3 + $0x650] ss:$0 sm:$0xff]
        %vm336 = vcmask 31744
        %v338 = vsel %vm336, %v286, 0
        %v341 = vsel %vm336, %v287, 0
        %v344 = vsel %vm336, %v288, 0
        %v347 = vsel %vm336, %v289, 0
        %v350 = vsel %vm336, %v290, 0
        %v353 = vsel %vm336, %v291, 0
        %v356 = vsel %vm336, %v292, 0
        %v359 = vsel %vm336, %v293, 0
        %v362 = vsel %vm336, %v294, 0
        %v365 = vsel %vm336, %v295, 0
        %v368 = vsel %vm336, %v296, 0
        %v371 = vsel %vm336, %v297, 0
        %v374 = vsel %vm336, %v298, 0
        %v377 = vsel %vm336, %v299, 0
        %v380 = vsel %vm336, %v300, 0
        %v383 = vsel %vm336, %v301, 0
        %vm385 = vcmask 1043456
        %v387 = vsel %vm385, %v334, 0
        %389 = vmatpush.msra.mxu0 0.0
        %390 = vmatpush.msra.mxu0 0.0
        %391 = vmatpush.msra.mxu0 0.0
        %392 = vmatpush.msra.mxu0 0.0
        %393 = vmatpush.msra.mxu0 0.0
        %394 = vmatpush.msra.mxu0 0.0
        %395 = vmatpush.msra.mxu0 0.0
        %396 = vmatpush.msra.mxu0 0.0
        %397 = vmatpush.msra.mxu0 0.0
        %398 = vmatpush.msra.mxu0 0.0
        %399 = vmatpush.msra.mxu0 0.0
        %400 = vmatpush.msra.mxu0 0.0
        %401 = vmatpush.msra.mxu0 0.0
        %402 = vmatpush.msra.mxu0 0.0
        %403 = vmatpush.msra.mxu0 0.0
        %404 = vmatpush.msra.mxu0 %v387
        %405 = vmatmul.f32.gmra.mxu0 %v338
        %v406 = vpop.f32.mrf.mxu0
        %v407 = vadd.f32 %v335, %v406
        %408 = vmatmul.f32.gmra.mxu0 %v341
        %v409 = vpop.f32.mrf.mxu0
        %v410 = vadd.f32 %v335, %v409
        %411 = vmatmul.f32.gmra.mxu0 %v344
        %v412 = vpop.f32.mrf.mxu0
        %v413 = vadd.f32 %v335, %v412
        %414 = vmatmul.f32.gmra.mxu0 %v347
        %v415 = vpop.f32.mrf.mxu0
        %v416 = vadd.f32 %v335, %v415
        %417 = vmatmul.f32.gmra.mxu0 %v350
        %v418 = vpop.f32.mrf.mxu0
        %v419 = vadd.f32 %v335, %v418
        %420 = vmatmul.f32.gmra.mxu0 %v353
        %v421 = vpop.f32.mrf.mxu0
        %v422 = vadd.f32 %v335, %v421
        %423 = vmatmul.f32.gmra.mxu0 %v356
        %v424 = vpop.f32.mrf.mxu0
        %v425 = vadd.f32 %v335, %v424
        %426 = vmatmul.f32.gmra.mxu0 %v359
        %v427 = vpop.f32.mrf.mxu0
        %v428 = vadd.f32 %v335, %v427
        %429 = vmatmul.f32.gmra.mxu0 %v362
        %v430 = vpop.f32.mrf.mxu0
        %v431 = vadd.f32 %v335, %v430
        %432 = vmatmul.f32.gmra.mxu0 %v365
        %v433 = vpop.f32.mrf.mxu0
        %v434 = vadd.f32 %v335, %v433
        %435 = vmatmul.f32.gmra.mxu0 %v368
        %v436 = vpop.f32.mrf.mxu0
        %v437 = vadd.f32 %v335, %v436
        %438 = vmatmul.f32.gmra.mxu0 %v371
        %v439 = vpop.f32.mrf.mxu0
        %v440 = vadd.f32 %v335, %v439
        %441 = vmatmul.f32.gmra.mxu0 %v374
        %v442 = vpop.f32.mrf.mxu0
        %v443 = vadd.f32 %v335, %v442
        %444 = vmatmul.f32.gmra.mxu0 %v377
        %v445 = vpop.f32.mrf.mxu0
        %v446 = vadd.f32 %v335, %v445
        %447 = vmatmul.f32.gmra.mxu0 %v380
        %v448 = vpop.f32.mrf.mxu0
        %v449 = vadd.f32 %v335, %v448
        %450 = vmatmul.f32.gmra.mxu0 %v383
        %v451 = vpop.f32.mrf.mxu0
        %v452 = vadd.f32 %v335, %v451
        %453 = vdwg.mxu0
        %v454 = vmax.f32 %v407, 0.0
        %v455 = vmax.f32 %v410, 0.0
        %v456 = vmax.f32 %v413, 0.0
        %v457 = vmax.f32 %v416, 0.0
        %v458 = vmax.f32 %v419, 0.0
        %v459 = vmax.f32 %v422, 0.0
        %v460 = vmax.f32 %v425, 0.0
        %v461 = vmax.f32 %v428, 0.0
        %v462 = vmax.f32 %v431, 0.0
        %v463 = vmax.f32 %v434, 0.0
        %v464 = vmax.f32 %v437, 0.0
        %v465 = vmax.f32 %v440, 0.0
        %v466 = vmax.f32 %v443, 0.0
        %v467 = vmax.f32 %v446, 0.0
        %v468 = vmax.f32 %v449, 0.0
        %v469 = vmax.f32 %v452, 0.0
        %v470 = vld [vmem:[%s3 + $0x10] sm:$0xff]
        %v471 = vld [vmem:[%s3 + $0x20] sm:$0xff]
        %v472 = vld [vmem:[%s3 + $0x30] sm:$0xff]
        %v473 = vld [vmem:[%s3 + $0x40] sm:$0xff]
        %vm474 = vcmask 261120
        %v476 = vsel %vm474, %v454, 0
        %v479 = vsel %vm474, %v455, 0
        %v482 = vsel %vm474, %v456, 0
        %v485 = vsel %vm474, %v457, 0
        %v488 = vsel %vm474, %v458, 0
        %v491 = vsel %vm474, %v459, 0
        %v494 = vsel %vm474, %v460, 0
        %v497 = vsel %vm474, %v461, 0
        %v500 = vsel %vm474, %v462, 0
        %v503 = vsel %vm474, %v463, 0
        %v506 = vsel %vm474, %v464, 0
        %v509 = vsel %vm474, %v465, 0
        %v512 = vsel %vm474, %v466, 0
        %v515 = vsel %vm474, %v467, 0
        %v518 = vsel %vm474, %v468, 0
        %v521 = vsel %vm474, %v469, 0
        %523 = vmatpush.msra.mxu0 0.0
        %524 = vmatpush.msra.mxu0 0.0
        %525 = vmatpush.msra.mxu0 0.0
        %526 = vmatpush.msra.mxu0 0.0
        %527 = vmatpush.msra.mxu0 0.0
        %528 = vmatpush.msra.mxu0 0.0
        %529 = vmatpush.msra.mxu0 0.0
        %530 = vmatpush.msra.mxu0 0.0
        %531 = vmatpush.msra.mxu0 0.0
        %532 = vmatpush.msra.mxu0 0.0
        %533 = vmatpush.msra.mxu0 0.0
        %534 = vmatpush.msra.mxu0 0.0
        %535 = vmatpush.msra.mxu0 %v473
        %536 = vmatpush.msra.mxu0 %v472
        %537 = vmatpush.msra.mxu0 %v471
        %538 = vmatpush.msra.mxu0 %v470
        %539 = vmatmul.f32.gmra.mxu0 %v476
        %v540 = vpop.f32.mrf.mxu0
        %v541 = vadd.f32 0.0, %v540
        %542 = vmatmul.f32.gmra.mxu0 %v479
        %v543 = vpop.f32.mrf.mxu0
        %v544 = vadd.f32 0.0, %v543
        %545 = vmatmul.f32.gmra.mxu0 %v482
        %v546 = vpop.f32.mrf.mxu0
        %v547 = vadd.f32 0.0, %v546
        %548 = vmatmul.f32.gmra.mxu0 %v485
        %v549 = vpop.f32.mrf.mxu0
        %v550 = vadd.f32 0.0, %v549
        %551 = vmatmul.f32.gmra.mxu0 %v488
        %v552 = vpop.f32.mrf.mxu0
        %v553 = vadd.f32 0.0, %v552
        %554 = vmatmul.f32.gmra.mxu0 %v491
        %v555 = vpop.f32.mrf.mxu0
        %v556 = vadd.f32 0.0, %v555
        %557 = vmatmul.f32.gmra.mxu0 %v494
        %v558 = vpop.f32.mrf.mxu0
        %v559 = vadd.f32 0.0, %v558
        %560 = vmatmul.f32.gmra.mxu0 %v497
        %v561 = vpop.f32.mrf.mxu0
        %v562 = vadd.f32 0.0, %v561
        %563 = vmatmul.f32.gmra.mxu0 %v500
        %v564 = vpop.f32.mrf.mxu0
        %v565 = vadd.f32 0.0, %v564
        %566 = vmatmul.f32.gmra.mxu0 %v503
        %v567 = vpop.f32.mrf.mxu0
        %v568 = vadd.f32 0.0, %v567
        %569 = vmatmul.f32.gmra.mxu0 %v506
        %v570 = vpop.f32.mrf.mxu0
        %v571 = vadd.f32 0.0, %v570
        %572 = vmatmul.f32.gmra.mxu0 %v509
        %v573 = vpop.f32.mrf.mxu0
        %v574 = vadd.f32 0.0, %v573
        %575 = vmatmul.f32.gmra.mxu0 %v512
        %v576 = vpop.f32.mrf.mxu0
        %v577 = vadd.f32 0.0, %v576
        %578 = vmatmul.f32.gmra.mxu0 %v515
        %v579 = vpop.f32.mrf.mxu0
        %v580 = vadd.f32 0.0, %v579
        %581 = vmatmul.f32.gmra.mxu0 %v518
        %v582 = vpop.f32.mrf.mxu0
        %v583 = vadd.f32 0.0, %v582
        %584 = vmatmul.f32.gmra.mxu0 %v521
        %v585 = vpop.f32.mrf.mxu0
        %v586 = vadd.f32 0.0, %v585
        %587 = vdwg.mxu0
        %v588 = vld [vmem:[%s3 + $0x50] sm:$0xff]
        %v589 = vld [vmem:[%s3 + $0x60] sm:$0xff]
        %v590 = vld [vmem:[%s3 + $0x70] sm:$0xff]
        %v591 = vld [vmem:[%s3 + $0x80] sm:$0xff]
        %v592 = vld [vmem:[%s3 + $0x90] sm:$0xff]
        %v593 = vld [vmem:[%s3 + $0xa0] sm:$0xff]
        %v594 = vld [vmem:[%s3 + $0xb0] sm:$0xff]
        %v595 = vld [vmem:[%s3 + $0xc0] sm:$0xff]
        %v596 = vld [vmem:[%s3 + $0xd0] sm:$0xff]
        %v597 = vld [vmem:[%s3 + $0xe0] sm:$0xff]
        %v598 = vld [vmem:[%s3 + $0xf0] sm:$0xff]
        %v599 = vld [vmem:[%s3 + $0x100] sm:$0xff]
        %v600 = vld [vmem:[%s3 + $0x110] sm:$0xff]
        %v601 = vld [vmem:[%s3 + $0x120] sm:$0xff]
        %v602 = vld [vmem:[%s3 + $0x130] sm:$0xff]
        %v603 = vld [vmem:[%s3 + $0x140] sm:$0xff]
        %604 = vmatpush.msra.mxu0 %v603
        %605 = vmatpush.msra.mxu0 %v602
        %606 = vmatpush.msra.mxu0 %v601
        %607 = vmatpush.msra.mxu0 %v600
        %608 = vmatpush.msra.mxu0 %v599
        %609 = vmatpush.msra.mxu0 %v598
        %610 = vmatpush.msra.mxu0 %v597
        %611 = vmatpush.msra.mxu0 %v596
        %612 = vmatpush.msra.mxu0 %v595
        %613 = vmatpush.msra.mxu0 %v594
        %614 = vmatpush.msra.mxu0 %v593
        %615 = vmatpush.msra.mxu0 %v592
        %616 = vmatpush.msra.mxu0 %v591
        %617 = vmatpush.msra.mxu0 %v590
        %618 = vmatpush.msra.mxu0 %v589
        %619 = vmatpush.msra.mxu0 %v588
        %620 = vmatmul.f32.gmra.mxu0 %v541
        %v621 = vpop.f32.mrf.mxu0
        %v622 = vadd.f32 0.0, %v621
        %623 = vmatmul.f32.gmra.mxu0 %v544
        %v624 = vpop.f32.mrf.mxu0
        %v625 = vadd.f32 0.0, %v624
        %626 = vmatmul.f32.gmra.mxu0 %v547
        %v627 = vpop.f32.mrf.mxu0
        %v628 = vadd.f32 0.0, %v627
        %629 = vmatmul.f32.gmra.mxu0 %v550
        %v630 = vpop.f32.mrf.mxu0
        %v631 = vadd.f32 0.0, %v630
        %632 = vmatmul.f32.gmra.mxu0 %v553
        %v633 = vpop.f32.mrf.mxu0
        %v634 = vadd.f32 0.0, %v633
        %635 = vmatmul.f32.gmra.mxu0 %v556
        %v636 = vpop.f32.mrf.mxu0
        %v637 = vadd.f32 0.0, %v636
        %638 = vmatmul.f32.gmra.mxu0 %v559
        %v639 = vpop.f32.mrf.mxu0
        %v640 = vadd.f32 0.0, %v639
        %641 = vmatmul.f32.gmra.mxu0 %v562
        %v642 = vpop.f32.mrf.mxu0
        %v643 = vadd.f32 0.0, %v642
        %644 = vmatmul.f32.gmra.mxu0 %v565
        %v645 = vpop.f32.mrf.mxu0
        %v646 = vadd.f32 0.0, %v645
        %647 = vmatmul.f32.gmra.mxu0 %v568
        %v648 = vpop.f32.mrf.mxu0
        %v649 = vadd.f32 0.0, %v648
        %650 = vmatmul.f32.gmra.mxu0 %v571
        %v651 = vpop.f32.mrf.mxu0
        %v652 = vadd.f32 0.0, %v651
        %653 = vmatmul.f32.gmra.mxu0 %v574
        %v654 = vpop.f32.mrf.mxu0
        %v655 = vadd.f32 0.0, %v654
        %656 = vmatmul.f32.gmra.mxu0 %v577
        %v657 = vpop.f32.mrf.mxu0
        %v658 = vadd.f32 0.0, %v657
        %659 = vmatmul.f32.gmra.mxu0 %v580
        %v660 = vpop.f32.mrf.mxu0
        %v661 = vadd.f32 0.0, %v660
        %662 = vmatmul.f32.gmra.mxu0 %v583
        %v663 = vpop.f32.mrf.mxu0
        %v664 = vadd.f32 0.0, %v663
        %665 = vmatmul.f32.gmra.mxu0 %v586
        %v666 = vpop.f32.mrf.mxu0
        %v667 = vadd.f32 0.0, %v666
        %668 = vdwg.mxu0
        %669 = vxpose.xlu0.b32.start [1/16] %v622, 128
        %670 = vxpose.xlu0.b32.cont [2/16] %v625, 128
        %671 = vxpose.xlu0.b32.cont [3/16] %v628, 128
        %672 = vxpose.xlu0.b32.cont [4/16] %v631, 128
        %673 = vxpose.xlu0.b32.cont [5/16] %v634, 128
        %674 = vxpose.xlu0.b32.cont [6/16] %v637, 128
        %675 = vxpose.xlu0.b32.cont [7/16] %v640, 128
        %676 = vxpose.xlu0.b32.cont [8/16] %v643, 128
        %677 = vxpose.xlu0.b32.cont [9/16] %v646, 128
        %678 = vxpose.xlu0.b32.cont [10/16] %v649, 128
        %679 = vxpose.xlu0.b32.cont [11/16] %v652, 128
        %680 = vxpose.xlu0.b32.cont [12/16] %v655, 128
        %681 = vxpose.xlu0.b32.cont [13/16] %v658, 128
        %682 = vxpose.xlu0.b32.cont [14/16] %v661, 128
        %683 = vxpose.xlu0.b32.cont [15/16] %v664, 128
        %684 = vxpose.xlu0.b32.end [16/16] %v667, 128
        %v685 = vpop.trf.xlu0
        %v686 = vpop.trf.xlu0
        %v687 = vpop.trf.xlu0
        %v688 = vpop.trf.xlu0
        %v689 = vpop.trf.xlu0
        %v690 = vpop.trf.xlu0
        %v691 = vpop.trf.xlu0
        %v692 = vpop.trf.xlu0
        %v693 = vpop.trf.xlu0
        %v694 = vpop.trf.xlu0
        %v695 = vpop.trf.xlu0
        %v696 = vpop.trf.xlu0
        %v697 = vpop.trf.xlu0
        %v698 = vpop.trf.xlu0
        %v699 = vpop.trf.xlu0
        %v700 = vpop.trf.xlu0
        %s701 = sld [smem:[#allocation2]]
        %703 = vset.pattern.permute.xlu0 4
        %704 = vperm.xlu0 %703, %v622
        %v705 = vpop.permute.xlu0 %704
        %708 = vset.pattern.permute.xlu0 4
        %709 = vperm.xlu0 %708, %v625
        %v710 = vpop.permute.xlu0 %709
        %713 = vset.pattern.permute.xlu0 4
        %714 = vperm.xlu0 %713, %v628
        %v715 = vpop.permute.xlu0 %714
        %718 = vset.pattern.permute.xlu0 4
        %719 = vperm.xlu0 %718, %v631
        %v720 = vpop.permute.xlu0 %719
        %723 = vset.pattern.permute.xlu0 4
        %724 = vperm.xlu0 %723, %v634
        %v725 = vpop.permute.xlu0 %724
        %728 = vset.pattern.permute.xlu0 4
        %729 = vperm.xlu0 %728, %v637
        %v730 = vpop.permute.xlu0 %729
        %733 = vset.pattern.permute.xlu0 4
        %734 = vperm.xlu0 %733, %v640
        %v735 = vpop.permute.xlu0 %734
        %738 = vset.pattern.permute.xlu0 4
        %739 = vperm.xlu0 %738, %v643
        %v740 = vpop.permute.xlu0 %739
        %743 = vset.pattern.permute.xlu0 4
        %744 = vperm.xlu0 %743, %v646
        %v745 = vpop.permute.xlu0 %744
        %748 = vset.pattern.permute.xlu0 4
        %749 = vperm.xlu0 %748, %v649
        %v750 = vpop.permute.xlu0 %749
        %753 = vset.pattern.permute.xlu0 4
        %754 = vperm.xlu0 %753, %v652
        %v755 = vpop.permute.xlu0 %754
        %758 = vset.pattern.permute.xlu0 4
        %759 = vperm.xlu0 %758, %v655
        %v760 = vpop.permute.xlu0 %759
        %763 = vset.pattern.permute.xlu0 4
        %764 = vperm.xlu0 %763, %v658
        %v765 = vpop.permute.xlu0 %764
        %768 = vset.pattern.permute.xlu0 4
        %769 = vperm.xlu0 %768, %v661
        %v770 = vpop.permute.xlu0 %769
        %773 = vset.pattern.permute.xlu0 4
        %774 = vperm.xlu0 %773, %v664
        %v775 = vpop.permute.xlu0 %774
        %778 = vset.pattern.permute.xlu0 4
        %779 = vperm.xlu0 %778, %v667
        %v780 = vpop.permute.xlu0 %779
        %v782 = vperm.slane %v685, 0
        %v783 = vadd.f32 %v705, %v782
        %v784 = vadd.f32 %v710, %v782
        %v785 = vadd.f32 %v715, %v782
        %v786 = vadd.f32 %v720, %v782
        %v787 = vadd.f32 %v725, %v782
        %v788 = vadd.f32 %v730, %v782
        %v789 = vadd.f32 %v735, %v782
        %v790 = vadd.f32 %v740, %v782
        %v791 = vadd.f32 %v745, %v782
        %v792 = vadd.f32 %v750, %v782
        %v793 = vadd.f32 %v755, %v782
        %v794 = vadd.f32 %v760, %v782
        %v795 = vadd.f32 %v765, %v782
        %v796 = vadd.f32 %v770, %v782
        %v797 = vadd.f32 %v775, %v782
        %v798 = vadd.f32 %v780, %v782
        %v799 = vstv %s701
        %v800 = vmul.f32 %v799, %v318
        %v801 = vmul.f32 %v799, %v319
        %v802 = vmul.f32 %v799, %v320
        %v803 = vmul.f32 %v799, %v321
        %v804 = vmul.f32 %v799, %v322
        %v805 = vmul.f32 %v799, %v323
        %v806 = vmul.f32 %v799, %v324
        %v807 = vmul.f32 %v799, %v325
        %v808 = vmul.f32 %v799, %v326
        %v809 = vmul.f32 %v799, %v327
        %v810 = vmul.f32 %v799, %v328
        %v811 = vmul.f32 %v799, %v329
        %v812 = vmul.f32 %v799, %v330
        %v813 = vmul.f32 %v799, %v331
        %v814 = vmul.f32 %v799, %v332
        %v815 = vmul.f32 %v799, %v333
        %v816 = vadd.f32 %v783, %v800
        %v817 = vadd.f32 %v784, %v801
        %v818 = vadd.f32 %v785, %v802
        %v819 = vadd.f32 %v786, %v803
        %v820 = vadd.f32 %v787, %v804
        %v821 = vadd.f32 %v788, %v805
        %v822 = vadd.f32 %v789, %v806
        %v823 = vadd.f32 %v790, %v807
        %v824 = vadd.f32 %v791, %v808
        %v825 = vadd.f32 %v792, %v809
        %v826 = vadd.f32 %v793, %v810
        %v827 = vadd.f32 %v794, %v811
        %v828 = vadd.f32 %v795, %v812
        %v829 = vadd.f32 %v796, %v813
        %v830 = vadd.f32 %v797, %v814
        %v831 = vadd.f32 %v798, %v815
        %v832 = vmul.f32 %v816, 0.2
        %v833 = vmul.f32 %v817, 0.2
        %v834 = vmul.f32 %v818, 0.2
        %v835 = vmul.f32 %v819, 0.2
        %v836 = vmul.f32 %v820, 0.2
        %v837 = vmul.f32 %v821, 0.2
        %v838 = vmul.f32 %v822, 0.2
        %v839 = vmul.f32 %v823, 0.2
        %v840 = vmul.f32 %v824, 0.2
        %v841 = vmul.f32 %v825, 0.2
        %v842 = vmul.f32 %v826, 0.2
        %v843 = vmul.f32 %v827, 0.2
        %v844 = vmul.f32 %v828, 0.2
        %v845 = vmul.f32 %v829, 0.2
        %v846 = vmul.f32 %v830, 0.2
        %v847 = vmul.f32 %v831, 0.2
        %v848 = vmax.f32 %v816, %v832
        %v849 = vmax.f32 %v817, %v833
        %v850 = vmax.f32 %v818, %v834
        %v851 = vmax.f32 %v819, %v835
        %v852 = vmax.f32 %v820, %v836
        %v853 = vmax.f32 %v821, %v837
        %v854 = vmax.f32 %v822, %v838
        %v855 = vmax.f32 %v823, %v839
        %v856 = vmax.f32 %v824, %v840
        %v857 = vmax.f32 %v825, %v841
        %v858 = vmax.f32 %v826, %v842
        %v859 = vmax.f32 %v827, %v843
        %v860 = vmax.f32 %v828, %v844
        %v861 = vmax.f32 %v829, %v845
        %v862 = vmax.f32 %v830, %v846
        %v863 = vmax.f32 %v831, %v847
        %v864 = vadd.f32 %v848, %v302
        %v865 = vadd.f32 %v849, %v303
        %v866 = vadd.f32 %v850, %v304
        %v867 = vadd.f32 %v851, %v305
        %v868 = vadd.f32 %v852, %v306
        %v869 = vadd.f32 %v853, %v307
        %v870 = vadd.f32 %v854, %v308
        %v871 = vadd.f32 %v855, %v309
        %v872 = vadd.f32 %v856, %v310
        %v873 = vadd.f32 %v857, %v311
        %v874 = vadd.f32 %v858, %v312
        %v875 = vadd.f32 %v859, %v313
        %v876 = vadd.f32 %v860, %v314
        %v877 = vadd.f32 %v861, %v315
        %v878 = vadd.f32 %v862, %v316
        %v879 = vadd.f32 %v863, %v317
        %880 = vmax.xlane.f32.xlu0 %v864
        %v881 = vpop.xlane.xlu0 %880
        %882 = vmax.xlane.f32.xlu0 %v865
        %v883 = vpop.xlane.xlu0 %882
        %884 = vmax.xlane.f32.xlu0 %v866
        %v885 = vpop.xlane.xlu0 %884
        %886 = vmax.xlane.f32.xlu0 %v867
        %v887 = vpop.xlane.xlu0 %886
        %888 = vmax.xlane.f32.xlu0 %v868
        %v889 = vpop.xlane.xlu0 %888
        %890 = vmax.xlane.f32.xlu0 %v869
        %v891 = vpop.xlane.xlu0 %890
        %892 = vmax.xlane.f32.xlu0 %v870
        %v893 = vpop.xlane.xlu0 %892
        %894 = vmax.xlane.f32.xlu0 %v871
        %v895 = vpop.xlane.xlu0 %894
        %896 = vmax.xlane.f32.xlu0 %v872
        %v897 = vpop.xlane.xlu0 %896
        %898 = vmax.xlane.f32.xlu0 %v873
        %v899 = vpop.xlane.xlu0 %898
        %900 = vmax.xlane.f32.xlu0 %v874
        %v901 = vpop.xlane.xlu0 %900
        %902 = vmax.xlane.f32.xlu0 %v875
        %v903 = vpop.xlane.xlu0 %902
        %904 = vmax.xlane.f32.xlu0 %v876
        %v905 = vpop.xlane.xlu0 %904
        %906 = vmax.xlane.f32.xlu0 %v877
        %v907 = vpop.xlane.xlu0 %906
        %908 = vmax.xlane.f32.xlu0 %v878
        %v909 = vpop.xlane.xlu0 %908
        %910 = vmax.xlane.f32.xlu0 %v879
        %v911 = vpop.xlane.xlu0 %910
        %v912 = vsub.f32 %v864, %v881
        %v913 = vsub.f32 %v865, %v883
        %v914 = vsub.f32 %v866, %v885
        %v915 = vsub.f32 %v867, %v887
        %v916 = vsub.f32 %v868, %v889
        %v917 = vsub.f32 %v869, %v891
        %v918 = vsub.f32 %v870, %v893
        %v919 = vsub.f32 %v871, %v895
        %v920 = vsub.f32 %v872, %v897
        %v921 = vsub.f32 %v873, %v899
        %v922 = vsub.f32 %v874, %v901
        %v923 = vsub.f32 %v875, %v903
        %v924 = vsub.f32 %v876, %v905
        %v925 = vsub.f32 %v877, %v907
        %v926 = vsub.f32 %v878, %v909
        %v927 = vsub.f32 %v879, %v911
        %v928 = vmul.f32 %v912, 1.442695
        %v929 = vpow.pop %v928
        %v930 = vmul.f32 %v913, 1.442695
        %v931 = vpow.pop %v930
        %v932 = vmul.f32 %v914, 1.442695
        %v933 = vpow.pop %v932
        %v934 = vmul.f32 %v915, 1.442695
        %v935 = vpow.pop %v934
        %v936 = vmul.f32 %v916, 1.442695
        %v937 = vpow.pop %v936
        %v938 = vmul.f32 %v917, 1.442695
        %v939 = vpow.pop %v938
        %v940 = vmul.f32 %v918, 1.442695
        %v941 = vpow.pop %v940
        %v942 = vmul.f32 %v919, 1.442695
        %v943 = vpow.pop %v942
        %v944 = vmul.f32 %v920, 1.442695
        %v945 = vpow.pop %v944
        %v946 = vmul.f32 %v921, 1.442695
        %v947 = vpow.pop %v946
        %v948 = vmul.f32 %v922, 1.442695
        %v949 = vpow.pop %v948
        %v950 = vmul.f32 %v923, 1.442695
        %v951 = vpow.pop %v950
        %v952 = vmul.f32 %v924, 1.442695
        %v953 = vpow.pop %v952
        %v954 = vmul.f32 %v925, 1.442695
        %v955 = vpow.pop %v954
        %v956 = vmul.f32 %v926, 1.442695
        %v957 = vpow.pop %v956
        %v958 = vmul.f32 %v927, 1.442695
        %v959 = vpow.pop %v958
        %960 = vmatpush.msra.mxu0 1.0
        %961 = vmatpush.msra.mxu0 1.0
        %962 = vmatpush.msra.mxu0 1.0
        %963 = vmatpush.msra.mxu0 1.0
        %964 = vmatpush.msra.mxu0 1.0
        %965 = vmatpush.msra.mxu0 1.0
        %966 = vmatpush.msra.mxu0 1.0
        %967 = vmatpush.msra.mxu0 1.0
        %968 = vmatpush.msra.mxu0 1.0
        %969 = vmatpush.msra.mxu0 1.0
        %970 = vmatpush.msra.mxu0 1.0
        %971 = vmatpush.msra.mxu0 1.0
        %972 = vmatpush.msra.mxu0 1.0
        %973 = vmatpush.msra.mxu0 1.0
        %974 = vmatpush.msra.mxu0 1.0
        %975 = vmatpush.msra.mxu0 1.0
        %976 = vmatmul.f32.gmra.mxu0 %v929
        %v977 = vpop.f32.mrf.mxu0
        %v978 = vadd.f32 0.0, %v977
        %979 = vmatmul.f32.gmra.mxu0 %v931
        %v980 = vpop.f32.mrf.mxu0
        %v981 = vadd.f32 0.0, %v980
        %982 = vmatmul.f32.gmra.mxu0 %v933
        %v983 = vpop.f32.mrf.mxu0
        %v984 = vadd.f32 0.0, %v983
        %985 = vmatmul.f32.gmra.mxu0 %v935
        %v986 = vpop.f32.mrf.mxu0
        %v987 = vadd.f32 0.0, %v986
        %988 = vmatmul.f32.gmra.mxu0 %v937
        %v989 = vpop.f32.mrf.mxu0
        %v990 = vadd.f32 0.0, %v989
        %991 = vmatmul.f32.gmra.mxu0 %v939
        %v992 = vpop.f32.mrf.mxu0
        %v993 = vadd.f32 0.0, %v992
        %994 = vmatmul.f32.gmra.mxu0 %v941
        %v995 = vpop.f32.mrf.mxu0
        %v996 = vadd.f32 0.0, %v995
        %997 = vmatmul.f32.gmra.mxu0 %v943
        %v998 = vpop.f32.mrf.mxu0
        %v999 = vadd.f32 0.0, %v998
        %1000 = vmatmul.f32.gmra.mxu0 %v945
        %v1001 = vpop.f32.mrf.mxu0
        %v1002 = vadd.f32 0.0, %v1001
        %1003 = vmatmul.f32.gmra.mxu0 %v947
        %v1004 = vpop.f32.mrf.mxu0
        %v1005 = vadd.f32 0.0, %v1004
        %1006 = vmatmul.f32.gmra.mxu0 %v949
        %v1007 = vpop.f32.mrf.mxu0
        %v1008 = vadd.f32 0.0, %v1007
        %1009 = vmatmul.f32.gmra.mxu0 %v951
        %v1010 = vpop.f32.mrf.mxu0
        %v1011 = vadd.f32 0.0, %v1010
        %1012 = vmatmul.f32.gmra.mxu0 %v953
        %v1013 = vpop.f32.mrf.mxu0
        %v1014 = vadd.f32 0.0, %v1013
        %1015 = vmatmul.f32.gmra.mxu0 %v955
        %v1016 = vpop.f32.mrf.mxu0
        %v1017 = vadd.f32 0.0, %v1016
        %1018 = vmatmul.f32.gmra.mxu0 %v957
        %v1019 = vpop.f32.mrf.mxu0
        %v1020 = vadd.f32 0.0, %v1019
        %1021 = vmatmul.f32.gmra.mxu0 %v959
        %v1022 = vpop.f32.mrf.mxu0
        %v1023 = vadd.f32 0.0, %v1022
        %1024 = vdwg.mxu0
        %1025 = vmatpush.msra.mxu0 %v586
        %1026 = vmatpush.msra.mxu0 %v583
        %1027 = vmatpush.msra.mxu0 %v580
        %1028 = vmatpush.msra.mxu0 %v577
        %1029 = vmatpush.msra.mxu0 %v574
        %1030 = vmatpush.msra.mxu0 %v571
        %1031 = vmatpush.msra.mxu0 %v568
        %1032 = vmatpush.msra.mxu0 %v565
        %1033 = vmatpush.msra.mxu0 %v562
        %1034 = vmatpush.msra.mxu0 %v559
        %1035 = vmatpush.msra.mxu0 %v556
        %1036 = vmatpush.msra.mxu0 %v553
        %1037 = vmatpush.msra.mxu0 %v550
        %1038 = vmatpush.msra.mxu0 %v547
        %1039 = vmatpush.msra.mxu0 %v544
        %1040 = vmatpush.msra.mxu0 %v541
        %1041 = vmatmul.f32.gmra.mxu0 %v929
        %v1042 = vpop.f32.mrf.mxu0
        %v1043 = vadd.f32 0.0, %v1042
        %1044 = vmatmul.f32.gmra.mxu0 %v931
        %v1045 = vpop.f32.mrf.mxu0
        %v1046 = vadd.f32 0.0, %v1045
        %1047 = vmatmul.f32.gmra.mxu0 %v933
        %v1048 = vpop.f32.mrf.mxu0
        %v1049 = vadd.f32 0.0, %v1048
        %1050 = vmatmul.f32.gmra.mxu0 %v935
        %v1051 = vpop.f32.mrf.mxu0
        %v1052 = vadd.f32 0.0, %v1051
        %1053 = vmatmul.f32.gmra.mxu0 %v937
        %v1054 = vpop.f32.mrf.mxu0
        %v1055 = vadd.f32 0.0, %v1054
        %1056 = vmatmul.f32.gmra.mxu0 %v939
        %v1057 = vpop.f32.mrf.mxu0
        %v1058 = vadd.f32 0.0, %v1057
        %1059 = vmatmul.f32.gmra.mxu0 %v941
        %v1060 = vpop.f32.mrf.mxu0
        %v1061 = vadd.f32 0.0, %v1060
        %1062 = vmatmul.f32.gmra.mxu0 %v943
        %v1063 = vpop.f32.mrf.mxu0
        %v1064 = vadd.f32 0.0, %v1063
        %1065 = vmatmul.f32.gmra.mxu0 %v945
        %v1066 = vpop.f32.mrf.mxu0
        %v1067 = vadd.f32 0.0, %v1066
        %1068 = vmatmul.f32.gmra.mxu0 %v947
        %v1069 = vpop.f32.mrf.mxu0
        %v1070 = vadd.f32 0.0, %v1069
        %1071 = vmatmul.f32.gmra.mxu0 %v949
        %v1072 = vpop.f32.mrf.mxu0
        %v1073 = vadd.f32 0.0, %v1072
        %1074 = vmatmul.f32.gmra.mxu0 %v951
        %v1075 = vpop.f32.mrf.mxu0
        %v1076 = vadd.f32 0.0, %v1075
        %1077 = vmatmul.f32.gmra.mxu0 %v953
        %v1078 = vpop.f32.mrf.mxu0
        %v1079 = vadd.f32 0.0, %v1078
        %1080 = vmatmul.f32.gmra.mxu0 %v955
        %v1081 = vpop.f32.mrf.mxu0
        %v1082 = vadd.f32 0.0, %v1081
        %1083 = vmatmul.f32.gmra.mxu0 %v957
        %v1084 = vpop.f32.mrf.mxu0
        %v1085 = vadd.f32 0.0, %v1084
        %1086 = vmatmul.f32.gmra.mxu0 %v959
        %v1087 = vpop.f32.mrf.mxu0
        %v1088 = vadd.f32 0.0, %v1087
        %1089 = vdwg.mxu0
        %v1090 = vrcp.pop %v978
        %v1091 = vrcp.pop %v981
        %v1092 = vrcp.pop %v984
        %v1093 = vrcp.pop %v987
        %v1094 = vrcp.pop %v990
        %v1095 = vrcp.pop %v993
        %v1096 = vrcp.pop %v996
        %v1097 = vrcp.pop %v999
        %v1098 = vrcp.pop %v1002
        %v1099 = vrcp.pop %v1005
        %v1100 = vrcp.pop %v1008
        %v1101 = vrcp.pop %v1011
        %v1102 = vrcp.pop %v1014
        %v1103 = vrcp.pop %v1017
        %v1104 = vrcp.pop %v1020
        %v1105 = vrcp.pop %v1023
        %1107 = vset.pattern.permute.xlu0 0
        %1108 = vperm.xlu0 %1107, %v1090
        %v1109 = vpop.permute.xlu0 %1108
        %1112 = vset.pattern.permute.xlu0 0
        %1113 = vperm.xlu0 %1112, %v1091
        %v1114 = vpop.permute.xlu0 %1113
        %1117 = vset.pattern.permute.xlu0 0
        %1118 = vperm.xlu0 %1117, %v1092
        %v1119 = vpop.permute.xlu0 %1118
        %1122 = vset.pattern.permute.xlu0 0
        %1123 = vperm.xlu0 %1122, %v1093
        %v1124 = vpop.permute.xlu0 %1123
        %1127 = vset.pattern.permute.xlu0 0
        %1128 = vperm.xlu0 %1127, %v1094
        %v1129 = vpop.permute.xlu0 %1128
        %1132 = vset.pattern.permute.xlu0 0
        %1133 = vperm.xlu0 %1132, %v1095
        %v1134 = vpop.permute.xlu0 %1133
        %1137 = vset.pattern.permute.xlu0 0
        %1138 = vperm.xlu0 %1137, %v1096
        %v1139 = vpop.permute.xlu0 %1138
        %1142 = vset.pattern.permute.xlu0 0
        %1143 = vperm.xlu0 %1142, %v1097
        %v1144 = vpop.permute.xlu0 %1143
        %1147 = vset.pattern.permute.xlu0 0
        %1148 = vperm.xlu0 %1147, %v1098
        %v1149 = vpop.permute.xlu0 %1148
        %1152 = vset.pattern.permute.xlu0 0
        %1153 = vperm.xlu0 %1152, %v1099
        %v1154 = vpop.permute.xlu0 %1153
        %1157 = vset.pattern.permute.xlu0 0
        %1158 = vperm.xlu0 %1157, %v1100
        %v1159 = vpop.permute.xlu0 %1158
        %1162 = vset.pattern.permute.xlu0 0
        %1163 = vperm.xlu0 %1162, %v1101
        %v1164 = vpop.permute.xlu0 %1163
        %1167 = vset.pattern.permute.xlu0 0
        %1168 = vperm.xlu0 %1167, %v1102
        %v1169 = vpop.permute.xlu0 %1168
        %1172 = vset.pattern.permute.xlu0 0
        %1173 = vperm.xlu0 %1172, %v1103
        %v1174 = vpop.permute.xlu0 %1173
        %1177 = vset.pattern.permute.xlu0 0
        %1178 = vperm.xlu0 %1177, %v1104
        %v1179 = vpop.permute.xlu0 %1178
        %1182 = vset.pattern.permute.xlu0 0
        %1183 = vperm.xlu0 %1182, %v1105
        %v1184 = vpop.permute.xlu0 %1183
        %v1186 = vmul.f32 %v1043, %v1109
        %v1187 = vmul.f32 %v1046, %v1114
        %v1188 = vmul.f32 %v1049, %v1119
        %v1189 = vmul.f32 %v1052, %v1124
        %v1190 = vmul.f32 %v1055, %v1129
        %v1191 = vmul.f32 %v1058, %v1134
        %v1192 = vmul.f32 %v1061, %v1139
        %v1193 = vmul.f32 %v1064, %v1144
        %v1194 = vmul.f32 %v1067, %v1149
        %v1195 = vmul.f32 %v1070, %v1154
        %v1196 = vmul.f32 %v1073, %v1159
        %v1197 = vmul.f32 %v1076, %v1164
        %v1198 = vmul.f32 %v1079, %v1169
        %v1199 = vmul.f32 %v1082, %v1174
        %v1200 = vmul.f32 %v1085, %v1179
        %v1201 = vmul.f32 %v1088, %v1184
        %s1202 = sld [smem:[#allocation2 + $0x1]]
        %1203 = vset.pattern.permute.xlu0 5
        %1204 = vperm.xlu0 %1203, %v622
        %v1205 = vpop.permute.xlu0 %1204
        %1207 = vset.pattern.permute.xlu0 5
        %1208 = vperm.xlu0 %1207, %v625
        %v1209 = vpop.permute.xlu0 %1208
        %1211 = vset.pattern.permute.xlu0 5
        %1212 = vperm.xlu0 %1211, %v628
        %v1213 = vpop.permute.xlu0 %1212
        %1215 = vset.pattern.permute.xlu0 5
        %1216 = vperm.xlu0 %1215, %v631
        %v1217 = vpop.permute.xlu0 %1216
        %1219 = vset.pattern.permute.xlu0 5
        %1220 = vperm.xlu0 %1219, %v634
        %v1221 = vpop.permute.xlu0 %1220
        %1223 = vset.pattern.permute.xlu0 5
        %1224 = vperm.xlu0 %1223, %v637
        %v1225 = vpop.permute.xlu0 %1224
        %1227 = vset.pattern.permute.xlu0 5
        %1228 = vperm.xlu0 %1227, %v640
        %v1229 = vpop.permute.xlu0 %1228
        %1231 = vset.pattern.permute.xlu0 5
        %1232 = vperm.xlu0 %1231, %v643
        %v1233 = vpop.permute.xlu0 %1232
        %1235 = vset.pattern.permute.xlu0 5
        %1236 = vperm.xlu0 %1235, %v646
        %v1237 = vpop.permute.xlu0 %1236
        %1239 = vset.pattern.permute.xlu0 5
        %1240 = vperm.xlu0 %1239, %v649
        %v1241 = vpop.permute.xlu0 %1240
        %1243 = vset.pattern.permute.xlu0 5
        %1244 = vperm.xlu0 %1243, %v652
        %v1245 = vpop.permute.xlu0 %1244
        %1247 = vset.pattern.permute.xlu0 5
        %1248 = vperm.xlu0 %1247, %v655
        %v1249 = vpop.permute.xlu0 %1248
        %1251 = vset.pattern.permute.xlu0 5
        %1252 = vperm.xlu0 %1251, %v658
        %v1253 = vpop.permute.xlu0 %1252
        %1255 = vset.pattern.permute.xlu0 5
        %1256 = vperm.xlu0 %1255, %v661
        %v1257 = vpop.permute.xlu0 %1256
        %1259 = vset.pattern.permute.xlu0 5
        %1260 = vperm.xlu0 %1259, %v664
        %v1261 = vpop.permute.xlu0 %1260
        %1263 = vset.pattern.permute.xlu0 5
        %1264 = vperm.xlu0 %1263, %v667
        %v1265 = vpop.permute.xlu0 %1264
        %v1267 = vperm.slane %v685, 1
        %v1268 = vadd.f32 %v1205, %v1267
        %v1269 = vadd.f32 %v1209, %v1267
        %v1270 = vadd.f32 %v1213, %v1267
        %v1271 = vadd.f32 %v1217, %v1267
        %v1272 = vadd.f32 %v1221, %v1267
        %v1273 = vadd.f32 %v1225, %v1267
        %v1274 = vadd.f32 %v1229, %v1267
        %v1275 = vadd.f32 %v1233, %v1267
        %v1276 = vadd.f32 %v1237, %v1267
        %v1277 = vadd.f32 %v1241, %v1267
        %v1278 = vadd.f32 %v1245, %v1267
        %v1279 = vadd.f32 %v1249, %v1267
        %v1280 = vadd.f32 %v1253, %v1267
        %v1281 = vadd.f32 %v1257, %v1267
        %v1282 = vadd.f32 %v1261, %v1267
        %v1283 = vadd.f32 %v1265, %v1267
        %v1284 = vstv %s1202
        %v1285 = vmul.f32 %v1284, %v318
        %v1286 = vmul.f32 %v1284, %v319
        %v1287 = vmul.f32 %v1284, %v320
        %v1288 = vmul.f32 %v1284, %v321
        %v1289 = vmul.f32 %v1284, %v322
        %v1290 = vmul.f32 %v1284, %v323
        %v1291 = vmul.f32 %v1284, %v324
        %v1292 = vmul.f32 %v1284, %v325
        %v1293 = vmul.f32 %v1284, %v326
        %v1294 = vmul.f32 %v1284, %v327
        %v1295 = vmul.f32 %v1284, %v328
        %v1296 = vmul.f32 %v1284, %v329
        %v1297 = vmul.f32 %v1284, %v330
        %v1298 = vmul.f32 %v1284, %v331
        %v1299 = vmul.f32 %v1284, %v332
        %v1300 = vmul.f32 %v1284, %v333
        %v1301 = vadd.f32 %v1268, %v1285
        %v1302 = vadd.f32 %v1269, %v1286
        %v1303 = vadd.f32 %v1270, %v1287
        %v1304 = vadd.f32 %v1271, %v1288
        %v1305 = vadd.f32 %v1272, %v1289
        %v1306 = vadd.f32 %v1273, %v1290
        %v1307 = vadd.f32 %v1274, %v1291
        %v1308 = vadd.f32 %v1275, %v1292
        %v1309 = vadd.f32 %v1276, %v1293
        %v1310 = vadd.f32 %v1277, %v1294
        %v1311 = vadd.f32 %v1278, %v1295
        %v1312 = vadd.f32 %v1279, %v1296
        %v1313 = vadd.f32 %v1280, %v1297
        %v1314 = vadd.f32 %v1281, %v1298
        %v1315 = vadd.f32 %v1282, %v1299
        %v1316 = vadd.f32 %v1283, %v1300
        %v1317 = vmul.f32 %v1301, 0.2
        %v1318 = vmul.f32 %v1302, 0.2
        %v1319 = vmul.f32 %v1303, 0.2
        %v1320 = vmul.f32 %v1304, 0.2
        %v1321 = vmul.f32 %v1305, 0.2
        %v1322 = vmul.f32 %v1306, 0.2
        %v1323 = vmul.f32 %v1307, 0.2
        %v1324 = vmul.f32 %v1308, 0.2
        %v1325 = vmul.f32 %v1309, 0.2
        %v1326 = vmul.f32 %v1310, 0.2
        %v1327 = vmul.f32 %v1311, 0.2
        %v1328 = vmul.f32 %v1312, 0.2
        %v1329 = vmul.f32 %v1313, 0.2
        %v1330 = vmul.f32 %v1314, 0.2
        %v1331 = vmul.f32 %v1315, 0.2
        %v1332 = vmul.f32 %v1316, 0.2
        %v1333 = vmax.f32 %v1301, %v1317
        %v1334 = vmax.f32 %v1302, %v1318
        %v1335 = vmax.f32 %v1303, %v1319
        %v1336 = vmax.f32 %v1304, %v1320
        %v1337 = vmax.f32 %v1305, %v1321
        %v1338 = vmax.f32 %v1306, %v1322
        %v1339 = vmax.f32 %v1307, %v1323
        %v1340 = vmax.f32 %v1308, %v1324
        %v1341 = vmax.f32 %v1309, %v1325
        %v1342 = vmax.f32 %v1310, %v1326
        %v1343 = vmax.f32 %v1311, %v1327
        %v1344 = vmax.f32 %v1312, %v1328
        %v1345 = vmax.f32 %v1313, %v1329
        %v1346 = vmax.f32 %v1314, %v1330
        %v1347 = vmax.f32 %v1315, %v1331
        %v1348 = vmax.f32 %v1316, %v1332
        %v1349 = vadd.f32 %v1333, %v302
        %v1350 = vadd.f32 %v1334, %v303
        %v1351 = vadd.f32 %v1335, %v304
        %v1352 = vadd.f32 %v1336, %v305
        %v1353 = vadd.f32 %v1337, %v306
        %v1354 = vadd.f32 %v1338, %v307
        %v1355 = vadd.f32 %v1339, %v308
        %v1356 = vadd.f32 %v1340, %v309
        %v1357 = vadd.f32 %v1341, %v310
        %v1358 = vadd.f32 %v1342, %v311
        %v1359 = vadd.f32 %v1343, %v312
        %v1360 = vadd.f32 %v1344, %v313
        %v1361 = vadd.f32 %v1345, %v314
        %v1362 = vadd.f32 %v1346, %v315
        %v1363 = vadd.f32 %v1347, %v316
        %v1364 = vadd.f32 %v1348, %v317
        %1365 = vmax.xlane.f32.xlu0 %v1349
        %v1366 = vpop.xlane.xlu0 %1365
        %1367 = vmax.xlane.f32.xlu0 %v1350
        %v1368 = vpop.xlane.xlu0 %1367
        %1369 = vmax.xlane.f32.xlu0 %v1351
        %v1370 = vpop.xlane.xlu0 %1369
        %1371 = vmax.xlane.f32.xlu0 %v1352
        %v1372 = vpop.xlane.xlu0 %1371
        %1373 = vmax.xlane.f32.xlu0 %v1353
        %v1374 = vpop.xlane.xlu0 %1373
        %1375 = vmax.xlane.f32.xlu0 %v1354
        %v1376 = vpop.xlane.xlu0 %1375
        %1377 = vmax.xlane.f32.xlu0 %v1355
        %v1378 = vpop.xlane.xlu0 %1377
        %1379 = vmax.xlane.f32.xlu0 %v1356
        %v1380 = vpop.xlane.xlu0 %1379
        %1381 = vmax.xlane.f32.xlu0 %v1357
        %v1382 = vpop.xlane.xlu0 %1381
        %1383 = vmax.xlane.f32.xlu0 %v1358
        %v1384 = vpop.xlane.xlu0 %1383
        %1385 = vmax.xlane.f32.xlu0 %v1359
        %v1386 = vpop.xlane.xlu0 %1385
        %1387 = vmax.xlane.f32.xlu0 %v1360
        %v1388 = vpop.xlane.xlu0 %1387
        %1389 = vmax.xlane.f32.xlu0 %v1361
        %v1390 = vpop.xlane.xlu0 %1389
        %1391 = vmax.xlane.f32.xlu0 %v1362
        %v1392 = vpop.xlane.xlu0 %1391
        %1393 = vmax.xlane.f32.xlu0 %v1363
        %v1394 = vpop.xlane.xlu0 %1393
        %1395 = vmax.xlane.f32.xlu0 %v1364
        %v1396 = vpop.xlane.xlu0 %1395
        %v1397 = vsub.f32 %v1349, %v1366
        %v1398 = vsub.f32 %v1350, %v1368
        %v1399 = vsub.f32 %v1351, %v1370
        %v1400 = vsub.f32 %v1352, %v1372
        %v1401 = vsub.f32 %v1353, %v1374
        %v1402 = vsub.f32 %v1354, %v1376
        %v1403 = vsub.f32 %v1355, %v1378
        %v1404 = vsub.f32 %v1356, %v1380
        %v1405 = vsub.f32 %v1357, %v1382
        %v1406 = vsub.f32 %v1358, %v1384
        %v1407 = vsub.f32 %v1359, %v1386
        %v1408 = vsub.f32 %v1360, %v1388
        %v1409 = vsub.f32 %v1361, %v1390
        %v1410 = vsub.f32 %v1362, %v1392
        %v1411 = vsub.f32 %v1363, %v1394
        %v1412 = vsub.f32 %v1364, %v1396
        %v1413 = vmul.f32 %v1397, 1.442695
        %v1414 = vpow.pop %v1413
        %v1415 = vmul.f32 %v1398, 1.442695
        %v1416 = vpow.pop %v1415
        %v1417 = vmul.f32 %v1399, 1.442695
        %v1418 = vpow.pop %v1417
        %v1419 = vmul.f32 %v1400, 1.442695
        %v1420 = vpow.pop %v1419
        %v1421 = vmul.f32 %v1401, 1.442695
        %v1422 = vpow.pop %v1421
        %v1423 = vmul.f32 %v1402, 1.442695
        %v1424 = vpow.pop %v1423
        %v1425 = vmul.f32 %v1403, 1.442695
        %v1426 = vpow.pop %v1425
        %v1427 = vmul.f32 %v1404, 1.442695
        %v1428 = vpow.pop %v1427
        %v1429 = vmul.f32 %v1405, 1.442695
        %v1430 = vpow.pop %v1429
        %v1431 = vmul.f32 %v1406, 1.442695
        %v1432 = vpow.pop %v1431
        %v1433 = vmul.f32 %v1407, 1.442695
        %v1434 = vpow.pop %v1433
        %v1435 = vmul.f32 %v1408, 1.442695
        %v1436 = vpow.pop %v1435
        %v1437 = vmul.f32 %v1409, 1.442695
        %v1438 = vpow.pop %v1437
        %v1439 = vmul.f32 %v1410, 1.442695
        %v1440 = vpow.pop %v1439
        %v1441 = vmul.f32 %v1411, 1.442695
        %v1442 = vpow.pop %v1441
        %v1443 = vmul.f32 %v1412, 1.442695
        %v1444 = vpow.pop %v1443
        %1445 = vmatpush.msra.mxu0 1.0
        %1446 = vmatpush.msra.mxu0 1.0
        %1447 = vmatpush.msra.mxu0 1.0
        %1448 = vmatpush.msra.mxu0 1.0
        %1449 = vmatpush.msra.mxu0 1.0
        %1450 = vmatpush.msra.mxu0 1.0
        %1451 = vmatpush.msra.mxu0 1.0
        %1452 = vmatpush.msra.mxu0 1.0
        %1453 = vmatpush.msra.mxu0 1.0
        %1454 = vmatpush.msra.mxu0 1.0
        %1455 = vmatpush.msra.mxu0 1.0
        %1456 = vmatpush.msra.mxu0 1.0
        %1457 = vmatpush.msra.mxu0 1.0
        %1458 = vmatpush.msra.mxu0 1.0
        %1459 = vmatpush.msra.mxu0 1.0
        %1460 = vmatpush.msra.mxu0 1.0
        %1461 = vmatmul.f32.gmra.mxu0 %v1414
        %v1462 = vpop.f32.mrf.mxu0
        %v1463 = vadd.f32 0.0, %v1462
        %1464 = vmatmul.f32.gmra.mxu0 %v1416
        %v1465 = vpop.f32.mrf.mxu0
        %v1466 = vadd.f32 0.0, %v1465
        %1467 = vmatmul.f32.gmra.mxu0 %v1418
        %v1468 = vpop.f32.mrf.mxu0
        %v1469 = vadd.f32 0.0, %v1468
        %1470 = vmatmul.f32.gmra.mxu0 %v1420
        %v1471 = vpop.f32.mrf.mxu0
        %v1472 = vadd.f32 0.0, %v1471
        %1473 = vmatmul.f32.gmra.mxu0 %v1422
        %v1474 = vpop.f32.mrf.mxu0
        %v1475 = vadd.f32 0.0, %v1474
        %1476 = vmatmul.f32.gmra.mxu0 %v1424
        %v1477 = vpop.f32.mrf.mxu0
        %v1478 = vadd.f32 0.0, %v1477
        %1479 = vmatmul.f32.gmra.mxu0 %v1426
        %v1480 = vpop.f32.mrf.mxu0
        %v1481 = vadd.f32 0.0, %v1480
        %1482 = vmatmul.f32.gmra.mxu0 %v1428
        %v1483 = vpop.f32.mrf.mxu0
        %v1484 = vadd.f32 0.0, %v1483
        %1485 = vmatmul.f32.gmra.mxu0 %v1430
        %v1486 = vpop.f32.mrf.mxu0
        %v1487 = vadd.f32 0.0, %v1486
        %1488 = vmatmul.f32.gmra.mxu0 %v1432
        %v1489 = vpop.f32.mrf.mxu0
        %v1490 = vadd.f32 0.0, %v1489
        %1491 = vmatmul.f32.gmra.mxu0 %v1434
        %v1492 = vpop.f32.mrf.mxu0
        %v1493 = vadd.f32 0.0, %v1492
        %1494 = vmatmul.f32.gmra.mxu0 %v1436
        %v1495 = vpop.f32.mrf.mxu0
        %v1496 = vadd.f32 0.0, %v1495
        %1497 = vmatmul.f32.gmra.mxu0 %v1438
        %v1498 = vpop.f32.mrf.mxu0
        %v1499 = vadd.f32 0.0, %v1498
        %1500 = vmatmul.f32.gmra.mxu0 %v1440
        %v1501 = vpop.f32.mrf.mxu0
        %v1502 = vadd.f32 0.0, %v1501
        %1503 = vmatmul.f32.gmra.mxu0 %v1442
        %v1504 = vpop.f32.mrf.mxu0
        %v1505 = vadd.f32 0.0, %v1504
        %1506 = vmatmul.f32.gmra.mxu0 %v1444
        %v1507 = vpop.f32.mrf.mxu0
        %v1508 = vadd.f32 0.0, %v1507
        %1509 = vdwg.mxu0
        %1526 = vrot.lane.b32.xlu0 %v541, 96
        %v1527 = vpop.permute.xlu0 %1526
        %1528 = vrot.lane.b32.xlu0 %v544, 96
        %v1529 = vpop.permute.xlu0 %1528
        %1530 = vrot.lane.b32.xlu0 %v547, 96
        %v1531 = vpop.permute.xlu0 %1530
        %1532 = vrot.lane.b32.xlu0 %v550, 96
        %v1533 = vpop.permute.xlu0 %1532
        %1534 = vrot.lane.b32.xlu0 %v553, 96
        %v1535 = vpop.permute.xlu0 %1534
        %1536 = vrot.lane.b32.xlu0 %v556, 96
        %v1537 = vpop.permute.xlu0 %1536
        %1538 = vrot.lane.b32.xlu0 %v559, 96
        %v1539 = vpop.permute.xlu0 %1538
        %1540 = vrot.lane.b32.xlu0 %v562, 96
        %v1541 = vpop.permute.xlu0 %1540
        %1542 = vrot.lane.b32.xlu0 %v565, 96
        %v1543 = vpop.permute.xlu0 %1542
        %1544 = vrot.lane.b32.xlu0 %v568, 96
        %v1545 = vpop.permute.xlu0 %1544
        %1546 = vrot.lane.b32.xlu0 %v571, 96
        %v1547 = vpop.permute.xlu0 %1546
        %1548 = vrot.lane.b32.xlu0 %v574, 96
        %v1549 = vpop.permute.xlu0 %1548
        %1550 = vrot.lane.b32.xlu0 %v577, 96
        %v1551 = vpop.permute.xlu0 %1550
        %1552 = vrot.lane.b32.xlu0 %v580, 96
        %v1553 = vpop.permute.xlu0 %1552
        %1554 = vrot.lane.b32.xlu0 %v583, 96
        %v1555 = vpop.permute.xlu0 %1554
        %1556 = vrot.lane.b32.xlu0 %v586, 96
        %v1557 = vpop.permute.xlu0 %1556
        %1574 = vmatpush.msra.mxu0 %v1557
        %1575 = vmatpush.msra.mxu0 %v1555
        %1576 = vmatpush.msra.mxu0 %v1553
        %1577 = vmatpush.msra.mxu0 %v1551
        %1578 = vmatpush.msra.mxu0 %v1549
        %1579 = vmatpush.msra.mxu0 %v1547
        %1580 = vmatpush.msra.mxu0 %v1545
        %1581 = vmatpush.msra.mxu0 %v1543
        %1582 = vmatpush.msra.mxu0 %v1541
        %1583 = vmatpush.msra.mxu0 %v1539
        %1584 = vmatpush.msra.mxu0 %v1537
        %1585 = vmatpush.msra.mxu0 %v1535
        %1586 = vmatpush.msra.mxu0 %v1533
        %1587 = vmatpush.msra.mxu0 %v1531
        %1588 = vmatpush.msra.mxu0 %v1529
        %1589 = vmatpush.msra.mxu0 %v1527
        %1590 = vmatmul.f32.gmra.mxu0 %v1414
        %v1591 = vpop.f32.mrf.mxu0
        %v1592 = vadd.f32 0.0, %v1591
        %1593 = vmatmul.f32.gmra.mxu0 %v1416
        %v1594 = vpop.f32.mrf.mxu0
        %v1595 = vadd.f32 0.0, %v1594
        %1596 = vmatmul.f32.gmra.mxu0 %v1418
        %v1597 = vpop.f32.mrf.mxu0
        %v1598 = vadd.f32 0.0, %v1597
        %1599 = vmatmul.f32.gmra.mxu0 %v1420
        %v1600 = vpop.f32.mrf.mxu0
        %v1601 = vadd.f32 0.0, %v1600
        %1602 = vmatmul.f32.gmra.mxu0 %v1422
        %v1603 = vpop.f32.mrf.mxu0
        %v1604 = vadd.f32 0.0, %v1603
        %1605 = vmatmul.f32.gmra.mxu0 %v1424
        %v1606 = vpop.f32.mrf.mxu0
        %v1607 = vadd.f32 0.0, %v1606
        %1608 = vmatmul.f32.gmra.mxu0 %v1426
        %v1609 = vpop.f32.mrf.mxu0
        %v1610 = vadd.f32 0.0, %v1609
        %1611 = vmatmul.f32.gmra.mxu0 %v1428
        %v1612 = vpop.f32.mrf.mxu0
        %v1613 = vadd.f32 0.0, %v1612
        %1614 = vmatmul.f32.gmra.mxu0 %v1430
        %v1615 = vpop.f32.mrf.mxu0
        %v1616 = vadd.f32 0.0, %v1615
        %1617 = vmatmul.f32.gmra.mxu0 %v1432
        %v1618 = vpop.f32.mrf.mxu0
        %v1619 = vadd.f32 0.0, %v1618
        %1620 = vmatmul.f32.gmra.mxu0 %v1434
        %v1621 = vpop.f32.mrf.mxu0
        %v1622 = vadd.f32 0.0, %v1621
        %1623 = vmatmul.f32.gmra.mxu0 %v1436
        %v1624 = vpop.f32.mrf.mxu0
        %v1625 = vadd.f32 0.0, %v1624
        %1626 = vmatmul.f32.gmra.mxu0 %v1438
        %v1627 = vpop.f32.mrf.mxu0
        %v1628 = vadd.f32 0.0, %v1627
        %1629 = vmatmul.f32.gmra.mxu0 %v1440
        %v1630 = vpop.f32.mrf.mxu0
        %v1631 = vadd.f32 0.0, %v1630
        %1632 = vmatmul.f32.gmra.mxu0 %v1442
        %v1633 = vpop.f32.mrf.mxu0
        %v1634 = vadd.f32 0.0, %v1633
        %1635 = vmatmul.f32.gmra.mxu0 %v1444
        %v1636 = vpop.f32.mrf.mxu0
        %v1637 = vadd.f32 0.0, %v1636
        %1638 = vdwg.mxu0
        %v1639 = vrcp.pop %v1463
        %v1640 = vrcp.pop %v1466
        %v1641 = vrcp.pop %v1469
        %v1642 = vrcp.pop %v1472
        %v1643 = vrcp.pop %v1475
        %v1644 = vrcp.pop %v1478
        %v1645 = vrcp.pop %v1481
        %v1646 = vrcp.pop %v1484
        %v1647 = vrcp.pop %v1487
        %v1648 = vrcp.pop %v1490
        %v1649 = vrcp.pop %v1493
        %v1650 = vrcp.pop %v1496
        %v1651 = vrcp.pop %v1499
        %v1652 = vrcp.pop %v1502
        %v1653 = vrcp.pop %v1505
        %v1654 = vrcp.pop %v1508
        %1656 = vset.pattern.permute.xlu0 0
        %1657 = vperm.xlu0 %1656, %v1639
        %v1658 = vpop.permute.xlu0 %1657
        %1661 = vset.pattern.permute.xlu0 0
        %1662 = vperm.xlu0 %1661, %v1640
        %v1663 = vpop.permute.xlu0 %1662
        %1666 = vset.pattern.permute.xlu0 0
        %1667 = vperm.xlu0 %1666, %v1641
        %v1668 = vpop.permute.xlu0 %1667
        %1671 = vset.pattern.permute.xlu0 0
        %1672 = vperm.xlu0 %1671, %v1642
        %v1673 = vpop.permute.xlu0 %1672
        %1676 = vset.pattern.permute.xlu0 0
        %1677 = vperm.xlu0 %1676, %v1643
        %v1678 = vpop.permute.xlu0 %1677
        %1681 = vset.pattern.permute.xlu0 0
        %1682 = vperm.xlu0 %1681, %v1644
        %v1683 = vpop.permute.xlu0 %1682
        %1686 = vset.pattern.permute.xlu0 0
        %1687 = vperm.xlu0 %1686, %v1645
        %v1688 = vpop.permute.xlu0 %1687
        %1691 = vset.pattern.permute.xlu0 0
        %1692 = vperm.xlu0 %1691, %v1646
        %v1693 = vpop.permute.xlu0 %1692
        %1696 = vset.pattern.permute.xlu0 0
        %1697 = vperm.xlu0 %1696, %v1647
        %v1698 = vpop.permute.xlu0 %1697
        %1701 = vset.pattern.permute.xlu0 0
        %1702 = vperm.xlu0 %1701, %v1648
        %v1703 = vpop.permute.xlu0 %1702
        %1706 = vset.pattern.permute.xlu0 0
        %1707 = vperm.xlu0 %1706, %v1649
        %v1708 = vpop.permute.xlu0 %1707
        %1711 = vset.pattern.permute.xlu0 0
        %1712 = vperm.xlu0 %1711, %v1650
        %v1713 = vpop.permute.xlu0 %1712
        %1716 = vset.pattern.permute.xlu0 0
        %1717 = vperm.xlu0 %1716, %v1651
        %v1718 = vpop.permute.xlu0 %1717
        %1721 = vset.pattern.permute.xlu0 0
        %1722 = vperm.xlu0 %1721, %v1652
        %v1723 = vpop.permute.xlu0 %1722
        %1726 = vset.pattern.permute.xlu0 0
        %1727 = vperm.xlu0 %1726, %v1653
        %v1728 = vpop.permute.xlu0 %1727
        %1731 = vset.pattern.permute.xlu0 0
        %1732 = vperm.xlu0 %1731, %v1654
        %v1733 = vpop.permute.xlu0 %1732
        %v1735 = vmul.f32 %v1592, %v1658
        %v1736 = vmul.f32 %v1595, %v1663
        %v1737 = vmul.f32 %v1598, %v1668
        %v1738 = vmul.f32 %v1601, %v1673
        %v1739 = vmul.f32 %v1604, %v1678
        %v1740 = vmul.f32 %v1607, %v1683
        %v1741 = vmul.f32 %v1610, %v1688
        %v1742 = vmul.f32 %v1613, %v1693
        %v1743 = vmul.f32 %v1616, %v1698
        %v1744 = vmul.f32 %v1619, %v1703
        %v1745 = vmul.f32 %v1622, %v1708
        %v1746 = vmul.f32 %v1625, %v1713
        %v1747 = vmul.f32 %v1628, %v1718
        %v1748 = vmul.f32 %v1631, %v1723
        %v1749 = vmul.f32 %v1634, %v1728
        %v1750 = vmul.f32 %v1637, %v1733
        %v1751 = vadd.f32 %v1186, %v1735
        %v1752 = vadd.f32 %v1187, %v1736
        %v1753 = vadd.f32 %v1188, %v1737
        %v1754 = vadd.f32 %v1189, %v1738
        %v1755 = vadd.f32 %v1190, %v1739
        %v1756 = vadd.f32 %v1191, %v1740
        %v1757 = vadd.f32 %v1192, %v1741
        %v1758 = vadd.f32 %v1193, %v1742
        %v1759 = vadd.f32 %v1194, %v1743
        %v1760 = vadd.f32 %v1195, %v1744
        %v1761 = vadd.f32 %v1196, %v1745
        %v1762 = vadd.f32 %v1197, %v1746
        %v1763 = vadd.f32 %v1198, %v1747
        %v1764 = vadd.f32 %v1199, %v1748
        %v1765 = vadd.f32 %v1200, %v1749
        %v1766 = vadd.f32 %v1201, %v1750
        %s1767 = sld [smem:[#allocation2 + $0x2]]
        %1768 = vset.pattern.permute.xlu0 6
        %1769 = vperm.xlu0 %1768, %v622
        %v1770 = vpop.permute.xlu0 %1769
        %1772 = vset.pattern.permute.xlu0 6
        %1773 = vperm.xlu0 %1772, %v625
        %v1774 = vpop.permute.xlu0 %1773
        %1776 = vset.pattern.permute.xlu0 6
        %1777 = vperm.xlu0 %1776, %v628
        %v1778 = vpop.permute.xlu0 %1777
        %1780 = vset.pattern.permute.xlu0 6
        %1781 = vperm.xlu0 %1780, %v631
        %v1782 = vpop.permute.xlu0 %1781
        %1784 = vset.pattern.permute.xlu0 6
        %1785 = vperm.xlu0 %1784, %v634
        %v1786 = vpop.permute.xlu0 %1785
        %1788 = vset.pattern.permute.xlu0 6
        %1789 = vperm.xlu0 %1788, %v637
        %v1790 = vpop.permute.xlu0 %1789
        %1792 = vset.pattern.permute.xlu0 6
        %1793 = vperm.xlu0 %1792, %v640
        %v1794 = vpop.permute.xlu0 %1793
        %1796 = vset.pattern.permute.xlu0 6
        %1797 = vperm.xlu0 %1796, %v643
        %v1798 = vpop.permute.xlu0 %1797
        %1800 = vset.pattern.permute.xlu0 6
        %1801 = vperm.xlu0 %1800, %v646
        %v1802 = vpop.permute.xlu0 %1801
        %1804 = vset.pattern.permute.xlu0 6
        %1805 = vperm.xlu0 %1804, %v649
        %v1806 = vpop.permute.xlu0 %1805
        %1808 = vset.pattern.permute.xlu0 6
        %1809 = vperm.xlu0 %1808, %v652
        %v1810 = vpop.permute.xlu0 %1809
        %1812 = vset.pattern.permute.xlu0 6
        %1813 = vperm.xlu0 %1812, %v655
        %v1814 = vpop.permute.xlu0 %1813
        %1816 = vset.pattern.permute.xlu0 6
        %1817 = vperm.xlu0 %1816, %v658
        %v1818 = vpop.permute.xlu0 %1817
        %1820 = vset.pattern.permute.xlu0 6
        %1821 = vperm.xlu0 %1820, %v661
        %v1822 = vpop.permute.xlu0 %1821
        %1824 = vset.pattern.permute.xlu0 6
        %1825 = vperm.xlu0 %1824, %v664
        %v1826 = vpop.permute.xlu0 %1825
        %1828 = vset.pattern.permute.xlu0 6
        %1829 = vperm.xlu0 %1828, %v667
        %v1830 = vpop.permute.xlu0 %1829
        %v1832 = vperm.slane %v685, 2
        %v1833 = vadd.f32 %v1770, %v1832
        %v1834 = vadd.f32 %v1774, %v1832
        %v1835 = vadd.f32 %v1778, %v1832
        %v1836 = vadd.f32 %v1782, %v1832
        %v1837 = vadd.f32 %v1786, %v1832
        %v1838 = vadd.f32 %v1790, %v1832
        %v1839 = vadd.f32 %v1794, %v1832
        %v1840 = vadd.f32 %v1798, %v1832
        %v1841 = vadd.f32 %v1802, %v1832
        %v1842 = vadd.f32 %v1806, %v1832
        %v1843 = vadd.f32 %v1810, %v1832
        %v1844 = vadd.f32 %v1814, %v1832
        %v1845 = vadd.f32 %v1818, %v1832
        %v1846 = vadd.f32 %v1822, %v1832
        %v1847 = vadd.f32 %v1826, %v1832
        %v1848 = vadd.f32 %v1830, %v1832
        %v1849 = vstv %s1767
        %v1850 = vmul.f32 %v1849, %v318
        %v1851 = vmul.f32 %v1849, %v319
        %v1852 = vmul.f32 %v1849, %v320
        %v1853 = vmul.f32 %v1849, %v321
        %v1854 = vmul.f32 %v1849, %v322
        %v1855 = vmul.f32 %v1849, %v323
        %v1856 = vmul.f32 %v1849, %v324
        %v1857 = vmul.f32 %v1849, %v325
        %v1858 = vmul.f32 %v1849, %v326
        %v1859 = vmul.f32 %v1849, %v327
        %v1860 = vmul.f32 %v1849, %v328
        %v1861 = vmul.f32 %v1849, %v329
        %v1862 = vmul.f32 %v1849, %v330
        %v1863 = vmul.f32 %v1849, %v331
        %v1864 = vmul.f32 %v1849, %v332
        %v1865 = vmul.f32 %v1849, %v333
        %v1866 = vadd.f32 %v1833, %v1850
        %v1867 = vadd.f32 %v1834, %v1851
        %v1868 = vadd.f32 %v1835, %v1852
        %v1869 = vadd.f32 %v1836, %v1853
        %v1870 = vadd.f32 %v1837, %v1854
        %v1871 = vadd.f32 %v1838, %v1855
        %v1872 = vadd.f32 %v1839, %v1856
        %v1873 = vadd.f32 %v1840, %v1857
        %v1874 = vadd.f32 %v1841, %v1858
        %v1875 = vadd.f32 %v1842, %v1859
        %v1876 = vadd.f32 %v1843, %v1860
        %v1877 = vadd.f32 %v1844, %v1861
        %v1878 = vadd.f32 %v1845, %v1862
        %v1879 = vadd.f32 %v1846, %v1863
        %v1880 = vadd.f32 %v1847, %v1864
        %v1881 = vadd.f32 %v1848, %v1865
        %v1882 = vmul.f32 %v1866, 0.2
        %v1883 = vmul.f32 %v1867, 0.2
        %v1884 = vmul.f32 %v1868, 0.2
        %v1885 = vmul.f32 %v1869, 0.2
        %v1886 = vmul.f32 %v1870, 0.2
        %v1887 = vmul.f32 %v1871, 0.2
        %v1888 = vmul.f32 %v1872, 0.2
        %v1889 = vmul.f32 %v1873, 0.2
        %v1890 = vmul.f32 %v1874, 0.2
        %v1891 = vmul.f32 %v1875, 0.2
        %v1892 = vmul.f32 %v1876, 0.2
        %v1893 = vmul.f32 %v1877, 0.2
        %v1894 = vmul.f32 %v1878, 0.2
        %v1895 = vmul.f32 %v1879, 0.2
        %v1896 = vmul.f32 %v1880, 0.2
        %v1897 = vmul.f32 %v1881, 0.2
        %v1898 = vmax.f32 %v1866, %v1882
        %v1899 = vmax.f32 %v1867, %v1883
        %v1900 = vmax.f32 %v1868, %v1884
        %v1901 = vmax.f32 %v1869, %v1885
        %v1902 = vmax.f32 %v1870, %v1886
        %v1903 = vmax.f32 %v1871, %v1887
        %v1904 = vmax.f32 %v1872, %v1888
        %v1905 = vmax.f32 %v1873, %v1889
        %v1906 = vmax.f32 %v1874, %v1890
        %v1907 = vmax.f32 %v1875, %v1891
        %v1908 = vmax.f32 %v1876, %v1892
        %v1909 = vmax.f32 %v1877, %v1893
        %v1910 = vmax.f32 %v1878, %v1894
        %v1911 = vmax.f32 %v1879, %v1895
        %v1912 = vmax.f32 %v1880, %v1896
        %v1913 = vmax.f32 %v1881, %v1897
        %v1914 = vadd.f32 %v1898, %v302
        %v1915 = vadd.f32 %v1899, %v303
        %v1916 = vadd.f32 %v1900, %v304
        %v1917 = vadd.f32 %v1901, %v305
        %v1918 = vadd.f32 %v1902, %v306
        %v1919 = vadd.f32 %v1903, %v307
        %v1920 = vadd.f32 %v1904, %v308
        %v1921 = vadd.f32 %v1905, %v309
        %v1922 = vadd.f32 %v1906, %v310
        %v1923 = vadd.f32 %v1907, %v311
        %v1924 = vadd.f32 %v1908, %v312
        %v1925 = vadd.f32 %v1909, %v313
        %v1926 = vadd.f32 %v1910, %v314
        %v1927 = vadd.f32 %v1911, %v315
        %v1928 = vadd.f32 %v1912, %v316
        %v1929 = vadd.f32 %v1913, %v317
        %1930 = vmax.xlane.f32.xlu0 %v1914
        %v1931 = vpop.xlane.xlu0 %1930
        %1932 = vmax.xlane.f32.xlu0 %v1915
        %v1933 = vpop.xlane.xlu0 %1932
        %1934 = vmax.xlane.f32.xlu0 %v1916
        %v1935 = vpop.xlane.xlu0 %1934
        %1936 = vmax.xlane.f32.xlu0 %v1917
        %v1937 = vpop.xlane.xlu0 %1936
        %1938 = vmax.xlane.f32.xlu0 %v1918
        %v1939 = vpop.xlane.xlu0 %1938
        %1940 = vmax.xlane.f32.xlu0 %v1919
        %v1941 = vpop.xlane.xlu0 %1940
        %1942 = vmax.xlane.f32.xlu0 %v1920
        %v1943 = vpop.xlane.xlu0 %1942
        %1944 = vmax.xlane.f32.xlu0 %v1921
        %v1945 = vpop.xlane.xlu0 %1944
        %1946 = vmax.xlane.f32.xlu0 %v1922
        %v1947 = vpop.xlane.xlu0 %1946
        %1948 = vmax.xlane.f32.xlu0 %v1923
        %v1949 = vpop.xlane.xlu0 %1948
        %1950 = vmax.xlane.f32.xlu0 %v1924
        %v1951 = vpop.xlane.xlu0 %1950
        %1952 = vmax.xlane.f32.xlu0 %v1925
        %v1953 = vpop.xlane.xlu0 %1952
        %1954 = vmax.xlane.f32.xlu0 %v1926
        %v1955 = vpop.xlane.xlu0 %1954
        %1956 = vmax.xlane.f32.xlu0 %v1927
        %v1957 = vpop.xlane.xlu0 %1956
        %1958 = vmax.xlane.f32.xlu0 %v1928
        %v1959 = vpop.xlane.xlu0 %1958
        %1960 = vmax.xlane.f32.xlu0 %v1929
        %v1961 = vpop.xlane.xlu0 %1960
        %v1962 = vsub.f32 %v1914, %v1931
        %v1963 = vsub.f32 %v1915, %v1933
        %v1964 = vsub.f32 %v1916, %v1935
        %v1965 = vsub.f32 %v1917, %v1937
        %v1966 = vsub.f32 %v1918, %v1939
        %v1967 = vsub.f32 %v1919, %v1941
        %v1968 = vsub.f32 %v1920, %v1943
        %v1969 = vsub.f32 %v1921, %v1945
        %v1970 = vsub.f32 %v1922, %v1947
        %v1971 = vsub.f32 %v1923, %v1949
        %v1972 = vsub.f32 %v1924, %v1951
        %v1973 = vsub.f32 %v1925, %v1953
        %v1974 = vsub.f32 %v1926, %v1955
        %v1975 = vsub.f32 %v1927, %v1957
        %v1976 = vsub.f32 %v1928, %v1959
        %v1977 = vsub.f32 %v1929, %v1961
        %v1978 = vmul.f32 %v1962, 1.442695
        %v1979 = vpow.pop %v1978
        %v1980 = vmul.f32 %v1963, 1.442695
        %v1981 = vpow.pop %v1980
        %v1982 = vmul.f32 %v1964, 1.442695
        %v1983 = vpow.pop %v1982
        %v1984 = vmul.f32 %v1965, 1.442695
        %v1985 = vpow.pop %v1984
        %v1986 = vmul.f32 %v1966, 1.442695
        %v1987 = vpow.pop %v1986
        %v1988 = vmul.f32 %v1967, 1.442695
        %v1989 = vpow.pop %v1988
        %v1990 = vmul.f32 %v1968, 1.442695
        %v1991 = vpow.pop %v1990
        %v1992 = vmul.f32 %v1969, 1.442695
        %v1993 = vpow.pop %v1992
        %v1994 = vmul.f32 %v1970, 1.442695
        %v1995 = vpow.pop %v1994
        %v1996 = vmul.f32 %v1971, 1.442695
        %v1997 = vpow.pop %v1996
        %v1998 = vmul.f32 %v1972, 1.442695
        %v1999 = vpow.pop %v1998
        %v2000 = vmul.f32 %v1973, 1.442695
        %v2001 = vpow.pop %v2000
        %v2002 = vmul.f32 %v1974, 1.442695
        %v2003 = vpow.pop %v2002
        %v2004 = vmul.f32 %v1975, 1.442695
        %v2005 = vpow.pop %v2004
        %v2006 = vmul.f32 %v1976, 1.442695
        %v2007 = vpow.pop %v2006
        %v2008 = vmul.f32 %v1977, 1.442695
        %v2009 = vpow.pop %v2008
        %2010 = vmatpush.msra.mxu0 1.0
        %2011 = vmatpush.msra.mxu0 1.0
        %2012 = vmatpush.msra.mxu0 1.0
        %2013 = vmatpush.msra.mxu0 1.0
        %2014 = vmatpush.msra.mxu0 1.0
        %2015 = vmatpush.msra.mxu0 1.0
        %2016 = vmatpush.msra.mxu0 1.0
        %2017 = vmatpush.msra.mxu0 1.0
        %2018 = vmatpush.msra.mxu0 1.0
        %2019 = vmatpush.msra.mxu0 1.0
        %2020 = vmatpush.msra.mxu0 1.0
        %2021 = vmatpush.msra.mxu0 1.0
        %2022 = vmatpush.msra.mxu0 1.0
        %2023 = vmatpush.msra.mxu0 1.0
        %2024 = vmatpush.msra.mxu0 1.0
        %2025 = vmatpush.msra.mxu0 1.0
        %2026 = vmatmul.f32.gmra.mxu0 %v1979
        %v2027 = vpop.f32.mrf.mxu0
        %v2028 = vadd.f32 0.0, %v2027
        %2029 = vmatmul.f32.gmra.mxu0 %v1981
        %v2030 = vpop.f32.mrf.mxu0
        %v2031 = vadd.f32 0.0, %v2030
        %2032 = vmatmul.f32.gmra.mxu0 %v1983
        %v2033 = vpop.f32.mrf.mxu0
        %v2034 = vadd.f32 0.0, %v2033
        %2035 = vmatmul.f32.gmra.mxu0 %v1985
        %v2036 = vpop.f32.mrf.mxu0
        %v2037 = vadd.f32 0.0, %v2036
        %2038 = vmatmul.f32.gmra.mxu0 %v1987
        %v2039 = vpop.f32.mrf.mxu0
        %v2040 = vadd.f32 0.0, %v2039
        %2041 = vmatmul.f32.gmra.mxu0 %v1989
        %v2042 = vpop.f32.mrf.mxu0
        %v2043 = vadd.f32 0.0, %v2042
        %2044 = vmatmul.f32.gmra.mxu0 %v1991
        %v2045 = vpop.f32.mrf.mxu0
        %v2046 = vadd.f32 0.0, %v2045
        %2047 = vmatmul.f32.gmra.mxu0 %v1993
        %v2048 = vpop.f32.mrf.mxu0
        %v2049 = vadd.f32 0.0, %v2048
        %2050 = vmatmul.f32.gmra.mxu0 %v1995
        %v2051 = vpop.f32.mrf.mxu0
        %v2052 = vadd.f32 0.0, %v2051
        %2053 = vmatmul.f32.gmra.mxu0 %v1997
        %v2054 = vpop.f32.mrf.mxu0
        %v2055 = vadd.f32 0.0, %v2054
        %2056 = vmatmul.f32.gmra.mxu0 %v1999
        %v2057 = vpop.f32.mrf.mxu0
        %v2058 = vadd.f32 0.0, %v2057
        %2059 = vmatmul.f32.gmra.mxu0 %v2001
        %v2060 = vpop.f32.mrf.mxu0
        %v2061 = vadd.f32 0.0, %v2060
        %2062 = vmatmul.f32.gmra.mxu0 %v2003
        %v2063 = vpop.f32.mrf.mxu0
        %v2064 = vadd.f32 0.0, %v2063
        %2065 = vmatmul.f32.gmra.mxu0 %v2005
        %v2066 = vpop.f32.mrf.mxu0
        %v2067 = vadd.f32 0.0, %v2066
        %2068 = vmatmul.f32.gmra.mxu0 %v2007
        %v2069 = vpop.f32.mrf.mxu0
        %v2070 = vadd.f32 0.0, %v2069
        %2071 = vmatmul.f32.gmra.mxu0 %v2009
        %v2072 = vpop.f32.mrf.mxu0
        %v2073 = vadd.f32 0.0, %v2072
        %2074 = vdwg.mxu0
        %2075 = vrot.lane.b32.xlu0 %v541, 64
        %v2076 = vpop.permute.xlu0 %2075
        %2077 = vrot.lane.b32.xlu0 %v544, 64
        %v2078 = vpop.permute.xlu0 %2077
        %2079 = vrot.lane.b32.xlu0 %v547, 64
        %v2080 = vpop.permute.xlu0 %2079
        %2081 = vrot.lane.b32.xlu0 %v550, 64
        %v2082 = vpop.permute.xlu0 %2081
        %2083 = vrot.lane.b32.xlu0 %v553, 64
        %v2084 = vpop.permute.xlu0 %2083
        %2085 = vrot.lane.b32.xlu0 %v556, 64
        %v2086 = vpop.permute.xlu0 %2085
        %2087 = vrot.lane.b32.xlu0 %v559, 64
        %v2088 = vpop.permute.xlu0 %2087
        %2089 = vrot.lane.b32.xlu0 %v562, 64
        %v2090 = vpop.permute.xlu0 %2089
        %2091 = vrot.lane.b32.xlu0 %v565, 64
        %v2092 = vpop.permute.xlu0 %2091
        %2093 = vrot.lane.b32.xlu0 %v568, 64
        %v2094 = vpop.permute.xlu0 %2093
        %2095 = vrot.lane.b32.xlu0 %v571, 64
        %v2096 = vpop.permute.xlu0 %2095
        %2097 = vrot.lane.b32.xlu0 %v574, 64
        %v2098 = vpop.permute.xlu0 %2097
        %2099 = vrot.lane.b32.xlu0 %v577, 64
        %v2100 = vpop.permute.xlu0 %2099
        %2101 = vrot.lane.b32.xlu0 %v580, 64
        %v2102 = vpop.permute.xlu0 %2101
        %2103 = vrot.lane.b32.xlu0 %v583, 64
        %v2104 = vpop.permute.xlu0 %2103
        %2105 = vrot.lane.b32.xlu0 %v586, 64
        %v2106 = vpop.permute.xlu0 %2105
        %2123 = vmatpush.msra.mxu0 %v2106
        %2124 = vmatpush.msra.mxu0 %v2104
        %2125 = vmatpush.msra.mxu0 %v2102
        %2126 = vmatpush.msra.mxu0 %v2100
        %2127 = vmatpush.msra.mxu0 %v2098
        %2128 = vmatpush.msra.mxu0 %v2096
        %2129 = vmatpush.msra.mxu0 %v2094
        %2130 = vmatpush.msra.mxu0 %v2092
        %2131 = vmatpush.msra.mxu0 %v2090
        %2132 = vmatpush.msra.mxu0 %v2088
        %2133 = vmatpush.msra.mxu0 %v2086
        %2134 = vmatpush.msra.mxu0 %v2084
        %2135 = vmatpush.msra.mxu0 %v2082
        %2136 = vmatpush.msra.mxu0 %v2080
        %2137 = vmatpush.msra.mxu0 %v2078
        %2138 = vmatpush.msra.mxu0 %v2076
        %2139 = vmatmul.f32.gmra.mxu0 %v1979
        %v2140 = vpop.f32.mrf.mxu0
        %v2141 = vadd.f32 0.0, %v2140
        %2142 = vmatmul.f32.gmra.mxu0 %v1981
        %v2143 = vpop.f32.mrf.mxu0
        %v2144 = vadd.f32 0.0, %v2143
        %2145 = vmatmul.f32.gmra.mxu0 %v1983
        %v2146 = vpop.f32.mrf.mxu0
        %v2147 = vadd.f32 0.0, %v2146
        %2148 = vmatmul.f32.gmra.mxu0 %v1985
        %v2149 = vpop.f32.mrf.mxu0
        %v2150 = vadd.f32 0.0, %v2149
        %2151 = vmatmul.f32.gmra.mxu0 %v1987
        %v2152 = vpop.f32.mrf.mxu0
        %v2153 = vadd.f32 0.0, %v2152
        %2154 = vmatmul.f32.gmra.mxu0 %v1989
        %v2155 = vpop.f32.mrf.mxu0
        %v2156 = vadd.f32 0.0, %v2155
        %2157 = vmatmul.f32.gmra.mxu0 %v1991
        %v2158 = vpop.f32.mrf.mxu0
        %v2159 = vadd.f32 0.0, %v2158
        %2160 = vmatmul.f32.gmra.mxu0 %v1993
        %v2161 = vpop.f32.mrf.mxu0
        %v2162 = vadd.f32 0.0, %v2161
        %2163 = vmatmul.f32.gmra.mxu0 %v1995
        %v2164 = vpop.f32.mrf.mxu0
        %v2165 = vadd.f32 0.0, %v2164
        %2166 = vmatmul.f32.gmra.mxu0 %v1997
        %v2167 = vpop.f32.mrf.mxu0
        %v2168 = vadd.f32 0.0, %v2167
        %2169 = vmatmul.f32.gmra.mxu0 %v1999
        %v2170 = vpop.f32.mrf.mxu0
        %v2171 = vadd.f32 0.0, %v2170
        %2172 = vmatmul.f32.gmra.mxu0 %v2001
        %v2173 = vpop.f32.mrf.mxu0
        %v2174 = vadd.f32 0.0, %v2173
        %2175 = vmatmul.f32.gmra.mxu0 %v2003
        %v2176 = vpop.f32.mrf.mxu0
        %v2177 = vadd.f32 0.0, %v2176
        %2178 = vmatmul.f32.gmra.mxu0 %v2005
        %v2179 = vpop.f32.mrf.mxu0
        %v2180 = vadd.f32 0.0, %v2179
        %2181 = vmatmul.f32.gmra.mxu0 %v2007
        %v2182 = vpop.f32.mrf.mxu0
        %v2183 = vadd.f32 0.0, %v2182
        %2184 = vmatmul.f32.gmra.mxu0 %v2009
        %v2185 = vpop.f32.mrf.mxu0
        %v2186 = vadd.f32 0.0, %v2185
        %2187 = vdwg.mxu0
        %v2188 = vrcp.pop %v2028
        %v2189 = vrcp.pop %v2031
        %v2190 = vrcp.pop %v2034
        %v2191 = vrcp.pop %v2037
        %v2192 = vrcp.pop %v2040
        %v2193 = vrcp.pop %v2043
        %v2194 = vrcp.pop %v2046
        %v2195 = vrcp.pop %v2049
        %v2196 = vrcp.pop %v2052
        %v2197 = vrcp.pop %v2055
        %v2198 = vrcp.pop %v2058
        %v2199 = vrcp.pop %v2061
        %v2200 = vrcp.pop %v2064
        %v2201 = vrcp.pop %v2067
        %v2202 = vrcp.pop %v2070
        %v2203 = vrcp.pop %v2073
        %2205 = vset.pattern.permute.xlu0 0
        %2206 = vperm.xlu0 %2205, %v2188
        %v2207 = vpop.permute.xlu0 %2206
        %2210 = vset.pattern.permute.xlu0 0
        %2211 = vperm.xlu0 %2210, %v2189
        %v2212 = vpop.permute.xlu0 %2211
        %2215 = vset.pattern.permute.xlu0 0
        %2216 = vperm.xlu0 %2215, %v2190
        %v2217 = vpop.permute.xlu0 %2216
        %2220 = vset.pattern.permute.xlu0 0
        %2221 = vperm.xlu0 %2220, %v2191
        %v2222 = vpop.permute.xlu0 %2221
        %2225 = vset.pattern.permute.xlu0 0
        %2226 = vperm.xlu0 %2225, %v2192
        %v2227 = vpop.permute.xlu0 %2226
        %2230 = vset.pattern.permute.xlu0 0
        %2231 = vperm.xlu0 %2230, %v2193
        %v2232 = vpop.permute.xlu0 %2231
        %2235 = vset.pattern.permute.xlu0 0
        %2236 = vperm.xlu0 %2235, %v2194
        %v2237 = vpop.permute.xlu0 %2236
        %2240 = vset.pattern.permute.xlu0 0
        %2241 = vperm.xlu0 %2240, %v2195
        %v2242 = vpop.permute.xlu0 %2241
        %2245 = vset.pattern.permute.xlu0 0
        %2246 = vperm.xlu0 %2245, %v2196
        %v2247 = vpop.permute.xlu0 %2246
        %2250 = vset.pattern.permute.xlu0 0
        %2251 = vperm.xlu0 %2250, %v2197
        %v2252 = vpop.permute.xlu0 %2251
        %2255 = vset.pattern.permute.xlu0 0
        %2256 = vperm.xlu0 %2255, %v2198
        %v2257 = vpop.permute.xlu0 %2256
        %2260 = vset.pattern.permute.xlu0 0
        %2261 = vperm.xlu0 %2260, %v2199
        %v2262 = vpop.permute.xlu0 %2261
        %2265 = vset.pattern.permute.xlu0 0
        %2266 = vperm.xlu0 %2265, %v2200
        %v2267 = vpop.permute.xlu0 %2266
        %2270 = vset.pattern.permute.xlu0 0
        %2271 = vperm.xlu0 %2270, %v2201
        %v2272 = vpop.permute.xlu0 %2271
        %2275 = vset.pattern.permute.xlu0 0
        %2276 = vperm.xlu0 %2275, %v2202
        %v2277 = vpop.permute.xlu0 %2276
        %2280 = vset.pattern.permute.xlu0 0
        %2281 = vperm.xlu0 %2280, %v2203
        %v2282 = vpop.permute.xlu0 %2281
        %v2284 = vmul.f32 %v2141, %v2207
        %v2285 = vmul.f32 %v2144, %v2212
        %v2286 = vmul.f32 %v2147, %v2217
        %v2287 = vmul.f32 %v2150, %v2222
        %v2288 = vmul.f32 %v2153, %v2227
        %v2289 = vmul.f32 %v2156, %v2232
        %v2290 = vmul.f32 %v2159, %v2237
        %v2291 = vmul.f32 %v2162, %v2242
        %v2292 = vmul.f32 %v2165, %v2247
        %v2293 = vmul.f32 %v2168, %v2252
        %v2294 = vmul.f32 %v2171, %v2257
        %v2295 = vmul.f32 %v2174, %v2262
        %v2296 = vmul.f32 %v2177, %v2267
        %v2297 = vmul.f32 %v2180, %v2272
        %v2298 = vmul.f32 %v2183, %v2277
        %v2299 = vmul.f32 %v2186, %v2282
        %v2300 = vadd.f32 %v1751, %v2284
        %v2301 = vadd.f32 %v1752, %v2285
        %v2302 = vadd.f32 %v1753, %v2286
        %v2303 = vadd.f32 %v1754, %v2287
        %v2304 = vadd.f32 %v1755, %v2288
        %v2305 = vadd.f32 %v1756, %v2289
        %v2306 = vadd.f32 %v1757, %v2290
        %v2307 = vadd.f32 %v1758, %v2291
        %v2308 = vadd.f32 %v1759, %v2292
        %v2309 = vadd.f32 %v1760, %v2293
        %v2310 = vadd.f32 %v1761, %v2294
        %v2311 = vadd.f32 %v1762, %v2295
        %v2312 = vadd.f32 %v1763, %v2296
        %v2313 = vadd.f32 %v1764, %v2297
        %v2314 = vadd.f32 %v1765, %v2298
        %v2315 = vadd.f32 %v1766, %v2299
        %s2316 = sld [smem:[#allocation2 + $0x3]]
        %2317 = vset.pattern.permute.xlu0 7
        %2318 = vperm.xlu0 %2317, %v622
        %v2319 = vpop.permute.xlu0 %2318
        %2321 = vset.pattern.permute.xlu0 7
        %2322 = vperm.xlu0 %2321, %v625
        %v2323 = vpop.permute.xlu0 %2322
        %2325 = vset.pattern.permute.xlu0 7
        %2326 = vperm.xlu0 %2325, %v628
        %v2327 = vpop.permute.xlu0 %2326
        %2329 = vset.pattern.permute.xlu0 7
        %2330 = vperm.xlu0 %2329, %v631
        %v2331 = vpop.permute.xlu0 %2330
        %2333 = vset.pattern.permute.xlu0 7
        %2334 = vperm.xlu0 %2333, %v634
        %v2335 = vpop.permute.xlu0 %2334
        %2337 = vset.pattern.permute.xlu0 7
        %2338 = vperm.xlu0 %2337, %v637
        %v2339 = vpop.permute.xlu0 %2338
        %2341 = vset.pattern.permute.xlu0 7
        %2342 = vperm.xlu0 %2341, %v640
        %v2343 = vpop.permute.xlu0 %2342
        %2345 = vset.pattern.permute.xlu0 7
        %2346 = vperm.xlu0 %2345, %v643
        %v2347 = vpop.permute.xlu0 %2346
        %2349 = vset.pattern.permute.xlu0 7
        %2350 = vperm.xlu0 %2349, %v646
        %v2351 = vpop.permute.xlu0 %2350
        %2353 = vset.pattern.permute.xlu0 7
        %2354 = vperm.xlu0 %2353, %v649
        %v2355 = vpop.permute.xlu0 %2354
        %2357 = vset.pattern.permute.xlu0 7
        %2358 = vperm.xlu0 %2357, %v652
        %v2359 = vpop.permute.xlu0 %2358
        %2361 = vset.pattern.permute.xlu0 7
        %2362 = vperm.xlu0 %2361, %v655
        %v2363 = vpop.permute.xlu0 %2362
        %2365 = vset.pattern.permute.xlu0 7
        %2366 = vperm.xlu0 %2365, %v658
        %v2367 = vpop.permute.xlu0 %2366
        %2369 = vset.pattern.permute.xlu0 7
        %2370 = vperm.xlu0 %2369, %v661
        %v2371 = vpop.permute.xlu0 %2370
        %2373 = vset.pattern.permute.xlu0 7
        %2374 = vperm.xlu0 %2373, %v664
        %v2375 = vpop.permute.xlu0 %2374
        %2377 = vset.pattern.permute.xlu0 7
        %2378 = vperm.xlu0 %2377, %v667
        %v2379 = vpop.permute.xlu0 %2378
        %v2381 = vperm.slane %v685, 3
        %v2382 = vadd.f32 %v2319, %v2381
        %v2383 = vadd.f32 %v2323, %v2381
        %v2384 = vadd.f32 %v2327, %v2381
        %v2385 = vadd.f32 %v2331, %v2381
        %v2386 = vadd.f32 %v2335, %v2381
        %v2387 = vadd.f32 %v2339, %v2381
        %v2388 = vadd.f32 %v2343, %v2381
        %v2389 = vadd.f32 %v2347, %v2381
        %v2390 = vadd.f32 %v2351, %v2381
        %v2391 = vadd.f32 %v2355, %v2381
        %v2392 = vadd.f32 %v2359, %v2381
        %v2393 = vadd.f32 %v2363, %v2381
        %v2394 = vadd.f32 %v2367, %v2381
        %v2395 = vadd.f32 %v2371, %v2381
        %v2396 = vadd.f32 %v2375, %v2381
        %v2397 = vadd.f32 %v2379, %v2381
        %v2398 = vstv %s2316
        %v2399 = vmul.f32 %v2398, %v318
        %v2400 = vmul.f32 %v2398, %v319
        %v2401 = vmul.f32 %v2398, %v320
        %v2402 = vmul.f32 %v2398, %v321
        %v2403 = vmul.f32 %v2398, %v322
        %v2404 = vmul.f32 %v2398, %v323
        %v2405 = vmul.f32 %v2398, %v324
        %v2406 = vmul.f32 %v2398, %v325
        %v2407 = vmul.f32 %v2398, %v326
        %v2408 = vmul.f32 %v2398, %v327
        %v2409 = vmul.f32 %v2398, %v328
        %v2410 = vmul.f32 %v2398, %v329
        %v2411 = vmul.f32 %v2398, %v330
        %v2412 = vmul.f32 %v2398, %v331
        %v2413 = vmul.f32 %v2398, %v332
        %v2414 = vmul.f32 %v2398, %v333
        %v2415 = vadd.f32 %v2382, %v2399
        %v2416 = vadd.f32 %v2383, %v2400
        %v2417 = vadd.f32 %v2384, %v2401
        %v2418 = vadd.f32 %v2385, %v2402
        %v2419 = vadd.f32 %v2386, %v2403
        %v2420 = vadd.f32 %v2387, %v2404
        %v2421 = vadd.f32 %v2388, %v2405
        %v2422 = vadd.f32 %v2389, %v2406
        %v2423 = vadd.f32 %v2390, %v2407
        %v2424 = vadd.f32 %v2391, %v2408
        %v2425 = vadd.f32 %v2392, %v2409
        %v2426 = vadd.f32 %v2393, %v2410
        %v2427 = vadd.f32 %v2394, %v2411
        %v2428 = vadd.f32 %v2395, %v2412
        %v2429 = vadd.f32 %v2396, %v2413
        %v2430 = vadd.f32 %v2397, %v2414
        %v2431 = vmul.f32 %v2415, 0.2
        %v2432 = vmul.f32 %v2416, 0.2
        %v2433 = vmul.f32 %v2417, 0.2
        %v2434 = vmul.f32 %v2418, 0.2
        %v2435 = vmul.f32 %v2419, 0.2
        %v2436 = vmul.f32 %v2420, 0.2
        %v2437 = vmul.f32 %v2421, 0.2
        %v2438 = vmul.f32 %v2422, 0.2
        %v2439 = vmul.f32 %v2423, 0.2
        %v2440 = vmul.f32 %v2424, 0.2
        %v2441 = vmul.f32 %v2425, 0.2
        %v2442 = vmul.f32 %v2426, 0.2
        %v2443 = vmul.f32 %v2427, 0.2
        %v2444 = vmul.f32 %v2428, 0.2
        %v2445 = vmul.f32 %v2429, 0.2
        %v2446 = vmul.f32 %v2430, 0.2
        %v2447 = vmax.f32 %v2415, %v2431
        %v2448 = vmax.f32 %v2416, %v2432
        %v2449 = vmax.f32 %v2417, %v2433
        %v2450 = vmax.f32 %v2418, %v2434
        %v2451 = vmax.f32 %v2419, %v2435
        %v2452 = vmax.f32 %v2420, %v2436
        %v2453 = vmax.f32 %v2421, %v2437
        %v2454 = vmax.f32 %v2422, %v2438
        %v2455 = vmax.f32 %v2423, %v2439
        %v2456 = vmax.f32 %v2424, %v2440
        %v2457 = vmax.f32 %v2425, %v2441
        %v2458 = vmax.f32 %v2426, %v2442
        %v2459 = vmax.f32 %v2427, %v2443
        %v2460 = vmax.f32 %v2428, %v2444
        %v2461 = vmax.f32 %v2429, %v2445
        %v2462 = vmax.f32 %v2430, %v2446
        %v2463 = vadd.f32 %v2447, %v302
        %v2464 = vadd.f32 %v2448, %v303
        %v2465 = vadd.f32 %v2449, %v304
        %v2466 = vadd.f32 %v2450, %v305
        %v2467 = vadd.f32 %v2451, %v306
        %v2468 = vadd.f32 %v2452, %v307
        %v2469 = vadd.f32 %v2453, %v308
        %v2470 = vadd.f32 %v2454, %v309
        %v2471 = vadd.f32 %v2455, %v310
        %v2472 = vadd.f32 %v2456, %v311
        %v2473 = vadd.f32 %v2457, %v312
        %v2474 = vadd.f32 %v2458, %v313
        %v2475 = vadd.f32 %v2459, %v314
        %v2476 = vadd.f32 %v2460, %v315
        %v2477 = vadd.f32 %v2461, %v316
        %v2478 = vadd.f32 %v2462, %v317
        %2479 = vmax.xlane.f32.xlu0 %v2463
        %v2480 = vpop.xlane.xlu0 %2479
        %2481 = vmax.xlane.f32.xlu0 %v2464
        %v2482 = vpop.xlane.xlu0 %2481
        %2483 = vmax.xlane.f32.xlu0 %v2465
        %v2484 = vpop.xlane.xlu0 %2483
        %2485 = vmax.xlane.f32.xlu0 %v2466
        %v2486 = vpop.xlane.xlu0 %2485
        %2487 = vmax.xlane.f32.xlu0 %v2467
        %v2488 = vpop.xlane.xlu0 %2487
        %2489 = vmax.xlane.f32.xlu0 %v2468
        %v2490 = vpop.xlane.xlu0 %2489
        %2491 = vmax.xlane.f32.xlu0 %v2469
        %v2492 = vpop.xlane.xlu0 %2491
        %2493 = vmax.xlane.f32.xlu0 %v2470
        %v2494 = vpop.xlane.xlu0 %2493
        %2495 = vmax.xlane.f32.xlu0 %v2471
        %v2496 = vpop.xlane.xlu0 %2495
        %2497 = vmax.xlane.f32.xlu0 %v2472
        %v2498 = vpop.xlane.xlu0 %2497
        %2499 = vmax.xlane.f32.xlu0 %v2473
        %v2500 = vpop.xlane.xlu0 %2499
        %2501 = vmax.xlane.f32.xlu0 %v2474
        %v2502 = vpop.xlane.xlu0 %2501
        %2503 = vmax.xlane.f32.xlu0 %v2475
        %v2504 = vpop.xlane.xlu0 %2503
        %2505 = vmax.xlane.f32.xlu0 %v2476
        %v2506 = vpop.xlane.xlu0 %2505
        %2507 = vmax.xlane.f32.xlu0 %v2477
        %v2508 = vpop.xlane.xlu0 %2507
        %2509 = vmax.xlane.f32.xlu0 %v2478
        %v2510 = vpop.xlane.xlu0 %2509
        %v2511 = vsub.f32 %v2463, %v2480
        %v2512 = vsub.f32 %v2464, %v2482
        %v2513 = vsub.f32 %v2465, %v2484
        %v2514 = vsub.f32 %v2466, %v2486
        %v2515 = vsub.f32 %v2467, %v2488
        %v2516 = vsub.f32 %v2468, %v2490
        %v2517 = vsub.f32 %v2469, %v2492
        %v2518 = vsub.f32 %v2470, %v2494
        %v2519 = vsub.f32 %v2471, %v2496
        %v2520 = vsub.f32 %v2472, %v2498
        %v2521 = vsub.f32 %v2473, %v2500
        %v2522 = vsub.f32 %v2474, %v2502
        %v2523 = vsub.f32 %v2475, %v2504
        %v2524 = vsub.f32 %v2476, %v2506
        %v2525 = vsub.f32 %v2477, %v2508
        %v2526 = vsub.f32 %v2478, %v2510
        %v2527 = vmul.f32 %v2511, 1.442695
        %v2528 = vpow.pop %v2527
        %v2529 = vmul.f32 %v2512, 1.442695
        %v2530 = vpow.pop %v2529
        %v2531 = vmul.f32 %v2513, 1.442695
        %v2532 = vpow.pop %v2531
        %v2533 = vmul.f32 %v2514, 1.442695
        %v2534 = vpow.pop %v2533
        %v2535 = vmul.f32 %v2515, 1.442695
        %v2536 = vpow.pop %v2535
        %v2537 = vmul.f32 %v2516, 1.442695
        %v2538 = vpow.pop %v2537
        %v2539 = vmul.f32 %v2517, 1.442695
        %v2540 = vpow.pop %v2539
        %v2541 = vmul.f32 %v2518, 1.442695
        %v2542 = vpow.pop %v2541
        %v2543 = vmul.f32 %v2519, 1.442695
        %v2544 = vpow.pop %v2543
        %v2545 = vmul.f32 %v2520, 1.442695
        %v2546 = vpow.pop %v2545
        %v2547 = vmul.f32 %v2521, 1.442695
        %v2548 = vpow.pop %v2547
        %v2549 = vmul.f32 %v2522, 1.442695
        %v2550 = vpow.pop %v2549
        %v2551 = vmul.f32 %v2523, 1.442695
        %v2552 = vpow.pop %v2551
        %v2553 = vmul.f32 %v2524, 1.442695
        %v2554 = vpow.pop %v2553
        %v2555 = vmul.f32 %v2525, 1.442695
        %v2556 = vpow.pop %v2555
        %v2557 = vmul.f32 %v2526, 1.442695
        %v2558 = vpow.pop %v2557
        %2559 = vmatpush.msra.mxu0 1.0
        %2560 = vmatpush.msra.mxu0 1.0
        %2561 = vmatpush.msra.mxu0 1.0
        %2562 = vmatpush.msra.mxu0 1.0
        %2563 = vmatpush.msra.mxu0 1.0
        %2564 = vmatpush.msra.mxu0 1.0
        %2565 = vmatpush.msra.mxu0 1.0
        %2566 = vmatpush.msra.mxu0 1.0
        %2567 = vmatpush.msra.mxu0 1.0
        %2568 = vmatpush.msra.mxu0 1.0
        %2569 = vmatpush.msra.mxu0 1.0
        %2570 = vmatpush.msra.mxu0 1.0
        %2571 = vmatpush.msra.mxu0 1.0
        %2572 = vmatpush.msra.mxu0 1.0
        %2573 = vmatpush.msra.mxu0 1.0
        %2574 = vmatpush.msra.mxu0 1.0
        %2575 = vmatmul.f32.gmra.mxu0 %v2528
        %v2576 = vpop.f32.mrf.mxu0
        %v2577 = vadd.f32 0.0, %v2576
        %2578 = vmatmul.f32.gmra.mxu0 %v2530
        %v2579 = vpop.f32.mrf.mxu0
        %v2580 = vadd.f32 0.0, %v2579
        %2581 = vmatmul.f32.gmra.mxu0 %v2532
        %v2582 = vpop.f32.mrf.mxu0
        %v2583 = vadd.f32 0.0, %v2582
        %2584 = vmatmul.f32.gmra.mxu0 %v2534
        %v2585 = vpop.f32.mrf.mxu0
        %v2586 = vadd.f32 0.0, %v2585
        %2587 = vmatmul.f32.gmra.mxu0 %v2536
        %v2588 = vpop.f32.mrf.mxu0
        %v2589 = vadd.f32 0.0, %v2588
        %2590 = vmatmul.f32.gmra.mxu0 %v2538
        %v2591 = vpop.f32.mrf.mxu0
        %v2592 = vadd.f32 0.0, %v2591
        %2593 = vmatmul.f32.gmra.mxu0 %v2540
        %v2594 = vpop.f32.mrf.mxu0
        %v2595 = vadd.f32 0.0, %v2594
        %2596 = vmatmul.f32.gmra.mxu0 %v2542
        %v2597 = vpop.f32.mrf.mxu0
        %v2598 = vadd.f32 0.0, %v2597
        %2599 = vmatmul.f32.gmra.mxu0 %v2544
        %v2600 = vpop.f32.mrf.mxu0
        %v2601 = vadd.f32 0.0, %v2600
        %2602 = vmatmul.f32.gmra.mxu0 %v2546
        %v2603 = vpop.f32.mrf.mxu0
        %v2604 = vadd.f32 0.0, %v2603
        %2605 = vmatmul.f32.gmra.mxu0 %v2548
        %v2606 = vpop.f32.mrf.mxu0
        %v2607 = vadd.f32 0.0, %v2606
        %2608 = vmatmul.f32.gmra.mxu0 %v2550
        %v2609 = vpop.f32.mrf.mxu0
        %v2610 = vadd.f32 0.0, %v2609
        %2611 = vmatmul.f32.gmra.mxu0 %v2552
        %v2612 = vpop.f32.mrf.mxu0
        %v2613 = vadd.f32 0.0, %v2612
        %2614 = vmatmul.f32.gmra.mxu0 %v2554
        %v2615 = vpop.f32.mrf.mxu0
        %v2616 = vadd.f32 0.0, %v2615
        %2617 = vmatmul.f32.gmra.mxu0 %v2556
        %v2618 = vpop.f32.mrf.mxu0
        %v2619 = vadd.f32 0.0, %v2618
        %2620 = vmatmul.f32.gmra.mxu0 %v2558
        %v2621 = vpop.f32.mrf.mxu0
        %v2622 = vadd.f32 0.0, %v2621
        %2623 = vdwg.mxu0
        %2624 = vrot.lane.b32.xlu0 %v541, 32
        %v2625 = vpop.permute.xlu0 %2624
        %2626 = vrot.lane.b32.xlu0 %v544, 32
        %v2627 = vpop.permute.xlu0 %2626
        %2628 = vrot.lane.b32.xlu0 %v547, 32
        %v2629 = vpop.permute.xlu0 %2628
        %2630 = vrot.lane.b32.xlu0 %v550, 32
        %v2631 = vpop.permute.xlu0 %2630
        %2632 = vrot.lane.b32.xlu0 %v553, 32
        %v2633 = vpop.permute.xlu0 %2632
        %2634 = vrot.lane.b32.xlu0 %v556, 32
        %v2635 = vpop.permute.xlu0 %2634
        %2636 = vrot.lane.b32.xlu0 %v559, 32
        %v2637 = vpop.permute.xlu0 %2636
        %2638 = vrot.lane.b32.xlu0 %v562, 32
        %v2639 = vpop.permute.xlu0 %2638
        %2640 = vrot.lane.b32.xlu0 %v565, 32
        %v2641 = vpop.permute.xlu0 %2640
        %2642 = vrot.lane.b32.xlu0 %v568, 32
        %v2643 = vpop.permute.xlu0 %2642
        %2644 = vrot.lane.b32.xlu0 %v571, 32
        %v2645 = vpop.permute.xlu0 %2644
        %2646 = vrot.lane.b32.xlu0 %v574, 32
        %v2647 = vpop.permute.xlu0 %2646
        %2648 = vrot.lane.b32.xlu0 %v577, 32
        %v2649 = vpop.permute.xlu0 %2648
        %2650 = vrot.lane.b32.xlu0 %v580, 32
        %v2651 = vpop.permute.xlu0 %2650
        %2652 = vrot.lane.b32.xlu0 %v583, 32
        %v2653 = vpop.permute.xlu0 %2652
        %2654 = vrot.lane.b32.xlu0 %v586, 32
        %v2655 = vpop.permute.xlu0 %2654
        %2672 = vmatpush.msra.mxu0 %v2655
        %2673 = vmatpush.msra.mxu0 %v2653
        %2674 = vmatpush.msra.mxu0 %v2651
        %2675 = vmatpush.msra.mxu0 %v2649
        %2676 = vmatpush.msra.mxu0 %v2647
        %2677 = vmatpush.msra.mxu0 %v2645
        %2678 = vmatpush.msra.mxu0 %v2643
        %2679 = vmatpush.msra.mxu0 %v2641
        %2680 = vmatpush.msra.mxu0 %v2639
        %2681 = vmatpush.msra.mxu0 %v2637
        %2682 = vmatpush.msra.mxu0 %v2635
        %2683 = vmatpush.msra.mxu0 %v2633
        %2684 = vmatpush.msra.mxu0 %v2631
        %2685 = vmatpush.msra.mxu0 %v2629
        %2686 = vmatpush.msra.mxu0 %v2627
        %2687 = vmatpush.msra.mxu0 %v2625
        %2688 = vmatmul.f32.gmra.mxu0 %v2528
        %v2689 = vpop.f32.mrf.mxu0
        %v2690 = vadd.f32 0.0, %v2689
        %2691 = vmatmul.f32.gmra.mxu0 %v2530
        %v2692 = vpop.f32.mrf.mxu0
        %v2693 = vadd.f32 0.0, %v2692
        %2694 = vmatmul.f32.gmra.mxu0 %v2532
        %v2695 = vpop.f32.mrf.mxu0
        %v2696 = vadd.f32 0.0, %v2695
        %2697 = vmatmul.f32.gmra.mxu0 %v2534
        %v2698 = vpop.f32.mrf.mxu0
        %v2699 = vadd.f32 0.0, %v2698
        %2700 = vmatmul.f32.gmra.mxu0 %v2536
        %v2701 = vpop.f32.mrf.mxu0
        %v2702 = vadd.f32 0.0, %v2701
        %2703 = vmatmul.f32.gmra.mxu0 %v2538
        %v2704 = vpop.f32.mrf.mxu0
        %v2705 = vadd.f32 0.0, %v2704
        %2706 = vmatmul.f32.gmra.mxu0 %v2540
        %v2707 = vpop.f32.mrf.mxu0
        %v2708 = vadd.f32 0.0, %v2707
        %2709 = vmatmul.f32.gmra.mxu0 %v2542
        %v2710 = vpop.f32.mrf.mxu0
        %v2711 = vadd.f32 0.0, %v2710
        %2712 = vmatmul.f32.gmra.mxu0 %v2544
        %v2713 = vpop.f32.mrf.mxu0
        %v2714 = vadd.f32 0.0, %v2713
        %2715 = vmatmul.f32.gmra.mxu0 %v2546
        %v2716 = vpop.f32.mrf.mxu0
        %v2717 = vadd.f32 0.0, %v2716
        %2718 = vmatmul.f32.gmra.mxu0 %v2548
        %v2719 = vpop.f32.mrf.mxu0
        %v2720 = vadd.f32 0.0, %v2719
        %2721 = vmatmul.f32.gmra.mxu0 %v2550
        %v2722 = vpop.f32.mrf.mxu0
        %v2723 = vadd.f32 0.0, %v2722
        %2724 = vmatmul.f32.gmra.mxu0 %v2552
        %v2725 = vpop.f32.mrf.mxu0
        %v2726 = vadd.f32 0.0, %v2725
        %2727 = vmatmul.f32.gmra.mxu0 %v2554
        %v2728 = vpop.f32.mrf.mxu0
        %v2729 = vadd.f32 0.0, %v2728
        %2730 = vmatmul.f32.gmra.mxu0 %v2556
        %v2731 = vpop.f32.mrf.mxu0
        %v2732 = vadd.f32 0.0, %v2731
        %2733 = vmatmul.f32.gmra.mxu0 %v2558
        %v2734 = vpop.f32.mrf.mxu0
        %v2735 = vadd.f32 0.0, %v2734
        %2736 = vdwg.mxu0
        %v2737 = vrcp.pop %v2577
        %v2738 = vrcp.pop %v2580
        %v2739 = vrcp.pop %v2583
        %v2740 = vrcp.pop %v2586
        %v2741 = vrcp.pop %v2589
        %v2742 = vrcp.pop %v2592
        %v2743 = vrcp.pop %v2595
        %v2744 = vrcp.pop %v2598
        %v2745 = vrcp.pop %v2601
        %v2746 = vrcp.pop %v2604
        %v2747 = vrcp.pop %v2607
        %v2748 = vrcp.pop %v2610
        %v2749 = vrcp.pop %v2613
        %v2750 = vrcp.pop %v2616
        %v2751 = vrcp.pop %v2619
        %v2752 = vrcp.pop %v2622
        %2754 = vset.pattern.permute.xlu0 0
        %2755 = vperm.xlu0 %2754, %v2737
        %v2756 = vpop.permute.xlu0 %2755
        %2759 = vset.pattern.permute.xlu0 0
        %2760 = vperm.xlu0 %2759, %v2738
        %v2761 = vpop.permute.xlu0 %2760
        %2764 = vset.pattern.permute.xlu0 0
        %2765 = vperm.xlu0 %2764, %v2739
        %v2766 = vpop.permute.xlu0 %2765
        %2769 = vset.pattern.permute.xlu0 0
        %2770 = vperm.xlu0 %2769, %v2740
        %v2771 = vpop.permute.xlu0 %2770
        %2774 = vset.pattern.permute.xlu0 0
        %2775 = vperm.xlu0 %2774, %v2741
        %v2776 = vpop.permute.xlu0 %2775
        %2779 = vset.pattern.permute.xlu0 0
        %2780 = vperm.xlu0 %2779, %v2742
        %v2781 = vpop.permute.xlu0 %2780
        %2784 = vset.pattern.permute.xlu0 0
        %2785 = vperm.xlu0 %2784, %v2743
        %v2786 = vpop.permute.xlu0 %2785
        %2789 = vset.pattern.permute.xlu0 0
        %2790 = vperm.xlu0 %2789, %v2744
        %v2791 = vpop.permute.xlu0 %2790
        %2794 = vset.pattern.permute.xlu0 0
        %2795 = vperm.xlu0 %2794, %v2745
        %v2796 = vpop.permute.xlu0 %2795
        %2799 = vset.pattern.permute.xlu0 0
        %2800 = vperm.xlu0 %2799, %v2746
        %v2801 = vpop.permute.xlu0 %2800
        %2804 = vset.pattern.permute.xlu0 0
        %2805 = vperm.xlu0 %2804, %v2747
        %v2806 = vpop.permute.xlu0 %2805
        %2809 = vset.pattern.permute.xlu0 0
        %2810 = vperm.xlu0 %2809, %v2748
        %v2811 = vpop.permute.xlu0 %2810
        %2814 = vset.pattern.permute.xlu0 0
        %2815 = vperm.xlu0 %2814, %v2749
        %v2816 = vpop.permute.xlu0 %2815
        %2819 = vset.pattern.permute.xlu0 0
        %2820 = vperm.xlu0 %2819, %v2750
        %v2821 = vpop.permute.xlu0 %2820
        %2824 = vset.pattern.permute.xlu0 0
        %2825 = vperm.xlu0 %2824, %v2751
        %v2826 = vpop.permute.xlu0 %2825
        %2829 = vset.pattern.permute.xlu0 0
        %2830 = vperm.xlu0 %2829, %v2752
        %v2831 = vpop.permute.xlu0 %2830
        %v2833 = vmul.f32 %v2690, %v2756
        %v2834 = vmul.f32 %v2693, %v2761
        %v2835 = vmul.f32 %v2696, %v2766
        %v2836 = vmul.f32 %v2699, %v2771
        %v2837 = vmul.f32 %v2702, %v2776
        %v2838 = vmul.f32 %v2705, %v2781
        %v2839 = vmul.f32 %v2708, %v2786
        %v2840 = vmul.f32 %v2711, %v2791
        %v2841 = vmul.f32 %v2714, %v2796
        %v2842 = vmul.f32 %v2717, %v2801
        %v2843 = vmul.f32 %v2720, %v2806
        %v2844 = vmul.f32 %v2723, %v2811
        %v2845 = vmul.f32 %v2726, %v2816
        %v2846 = vmul.f32 %v2729, %v2821
        %v2847 = vmul.f32 %v2732, %v2826
        %v2848 = vmul.f32 %v2735, %v2831
        %v2849 = vadd.f32 %v2300, %v2833
        %v2850 = vadd.f32 %v2301, %v2834
        %v2851 = vadd.f32 %v2302, %v2835
        %v2852 = vadd.f32 %v2303, %v2836
        %v2853 = vadd.f32 %v2304, %v2837
        %v2854 = vadd.f32 %v2305, %v2838
        %v2855 = vadd.f32 %v2306, %v2839
        %v2856 = vadd.f32 %v2307, %v2840
        %v2857 = vadd.f32 %v2308, %v2841
        %v2858 = vadd.f32 %v2309, %v2842
        %v2859 = vadd.f32 %v2310, %v2843
        %v2860 = vadd.f32 %v2311, %v2844
        %v2861 = vadd.f32 %v2312, %v2845
        %v2862 = vadd.f32 %v2313, %v2846
        %v2863 = vadd.f32 %v2314, %v2847
        %v2864 = vadd.f32 %v2315, %v2848
        %v2865 = vmul.f32 %v2849, 0.25
        %v2866 = vmul.f32 %v2850, 0.25
        %v2867 = vmul.f32 %v2851, 0.25
        %v2868 = vmul.f32 %v2852, 0.25
        %v2869 = vmul.f32 %v2853, 0.25
        %v2870 = vmul.f32 %v2854, 0.25
        %v2871 = vmul.f32 %v2855, 0.25
        %v2872 = vmul.f32 %v2856, 0.25
        %v2873 = vmul.f32 %v2857, 0.25
        %v2874 = vmul.f32 %v2858, 0.25
        %v2875 = vmul.f32 %v2859, 0.25
        %v2876 = vmul.f32 %v2860, 0.25
        %v2877 = vmul.f32 %v2861, 0.25
        %v2878 = vmul.f32 %v2862, 0.25
        %v2879 = vmul.f32 %v2863, 0.25
        %v2880 = vmul.f32 %v2864, 0.25
        %v2881 = vld [vmem:[%s3 + $0x651] ss:$0 sm:$0xff]
        %v2882 = vadd.f32 %v2865, %v2881
        %v2883 = vadd.f32 %v2866, %v2881
        %v2884 = vadd.f32 %v2867, %v2881
        %v2885 = vadd.f32 %v2868, %v2881
        %v2886 = vadd.f32 %v2869, %v2881
        %v2887 = vadd.f32 %v2870, %v2881
        %v2888 = vadd.f32 %v2871, %v2881
        %v2889 = vadd.f32 %v2872, %v2881
        %v2890 = vadd.f32 %v2873, %v2881
        %v2891 = vadd.f32 %v2874, %v2881
        %v2892 = vadd.f32 %v2875, %v2881
        %v2893 = vadd.f32 %v2876, %v2881
        %v2894 = vadd.f32 %v2877, %v2881
        %v2895 = vadd.f32 %v2878, %v2881
        %v2896 = vadd.f32 %v2879, %v2881
        %v2897 = vadd.f32 %v2880, %v2881
        %v2898 = vsel %vm474, %v2882, 0.0
        %2899 = vadd.xlane.f32.xlu0 %v2898
        %v2900 = vpop.xlane.xlu0 %2899
        %v2901 = vsel %vm474, %v2883, 0.0
        %2902 = vadd.xlane.f32.xlu0 %v2901
        %v2903 = vpop.xlane.xlu0 %2902
        %v2904 = vsel %vm474, %v2884, 0.0
        %2905 = vadd.xlane.f32.xlu0 %v2904
        %v2906 = vpop.xlane.xlu0 %2905
        %v2907 = vsel %vm474, %v2885, 0.0
        %2908 = vadd.xlane.f32.xlu0 %v2907
        %v2909 = vpop.xlane.xlu0 %2908
        %v2910 = vsel %vm474, %v2886, 0.0
        %2911 = vadd.xlane.f32.xlu0 %v2910
        %v2912 = vpop.xlane.xlu0 %2911
        %v2913 = vsel %vm474, %v2887, 0.0
        %2914 = vadd.xlane.f32.xlu0 %v2913
        %v2915 = vpop.xlane.xlu0 %2914
        %v2916 = vsel %vm474, %v2888, 0.0
        %2917 = vadd.xlane.f32.xlu0 %v2916
        %v2918 = vpop.xlane.xlu0 %2917
        %v2919 = vsel %vm474, %v2889, 0.0
        %2920 = vadd.xlane.f32.xlu0 %v2919
        %v2921 = vpop.xlane.xlu0 %2920
        %v2922 = vsel %vm474, %v2890, 0.0
        %2923 = vadd.xlane.f32.xlu0 %v2922
        %v2924 = vpop.xlane.xlu0 %2923
        %v2925 = vsel %vm474, %v2891, 0.0
        %2926 = vadd.xlane.f32.xlu0 %v2925
        %v2927 = vpop.xlane.xlu0 %2926
        %v2928 = vsel %vm474, %v2892, 0.0
        %2929 = vadd.xlane.f32.xlu0 %v2928
        %v2930 = vpop.xlane.xlu0 %2929
        %v2931 = vsel %vm474, %v2893, 0.0
        %2932 = vadd.xlane.f32.xlu0 %v2931
        %v2933 = vpop.xlane.xlu0 %2932
        %v2934 = vsel %vm474, %v2894, 0.0
        %2935 = vadd.xlane.f32.xlu0 %v2934
        %v2936 = vpop.xlane.xlu0 %2935
        %v2937 = vsel %vm474, %v2895, 0.0
        %2938 = vadd.xlane.f32.xlu0 %v2937
        %v2939 = vpop.xlane.xlu0 %2938
        %v2940 = vsel %vm474, %v2896, 0.0
        %2941 = vadd.xlane.f32.xlu0 %v2940
        %v2942 = vpop.xlane.xlu0 %2941
        %v2943 = vsel %vm474, %v2897, 0.0
        %2944 = vadd.xlane.f32.xlu0 %v2943
        %v2945 = vpop.xlane.xlu0 %2944
        %v2946 = vrcp.pop 32.0
        %v2947 = vmul.f32 32.0, %v2946
        %v2948 = vsub.f32 1.0, %v2947
        %v2949 = vmul.f32 %v2946, %v2948
        %v2950 = vadd.f32 %v2946, %v2949
        %vm2951 = vweird.f32 %v2946
        %v2952 = vsel %vm2951, %v2946, %v2950
        %v2953 = vmul.f32 %v2900, %v2952
        %v2954 = vmul.f32 %v2903, %v2952
        %v2955 = vmul.f32 %v2906, %v2952
        %v2956 = vmul.f32 %v2909, %v2952
        %v2957 = vmul.f32 %v2912, %v2952
        %v2958 = vmul.f32 %v2915, %v2952
        %v2959 = vmul.f32 %v2918, %v2952
        %v2960 = vmul.f32 %v2921, %v2952
        %v2961 = vmul.f32 %v2924, %v2952
        %v2962 = vmul.f32 %v2927, %v2952
        %v2963 = vmul.f32 %v2930, %v2952
        %v2964 = vmul.f32 %v2933, %v2952
        %v2965 = vmul.f32 %v2936, %v2952
        %v2966 = vmul.f32 %v2939, %v2952
        %v2967 = vmul.f32 %v2942, %v2952
        %v2968 = vmul.f32 %v2945, %v2952
        %v2969 = vsub.f32 %v2882, %v2953
        %v2970 = vsub.f32 %v2883, %v2954
        %v2971 = vsub.f32 %v2884, %v2955
        %v2972 = vsub.f32 %v2885, %v2956
        %v2973 = vsub.f32 %v2886, %v2957
        %v2974 = vsub.f32 %v2887, %v2958
        %v2975 = vsub.f32 %v2888, %v2959
        %v2976 = vsub.f32 %v2889, %v2960
        %v2977 = vsub.f32 %v2890, %v2961
        %v2978 = vsub.f32 %v2891, %v2962
        %v2979 = vsub.f32 %v2892, %v2963
        %v2980 = vsub.f32 %v2893, %v2964
        %v2981 = vsub.f32 %v2894, %v2965
        %v2982 = vsub.f32 %v2895, %v2966
        %v2983 = vsub.f32 %v2896, %v2967
        %v2984 = vsub.f32 %v2897, %v2968
        %v2985 = vmul.f32 %v2969, %v2969
        %v2986 = vmul.f32 %v2970, %v2970
        %v2987 = vmul.f32 %v2971, %v2971
        %v2988 = vmul.f32 %v2972, %v2972
        %v2989 = vmul.f32 %v2973, %v2973
        %v2990 = vmul.f32 %v2974, %v2974
        %v2991 = vmul.f32 %v2975, %v2975
        %v2992 = vmul.f32 %v2976, %v2976
        %v2993 = vmul.f32 %v2977, %v2977
        %v2994 = vmul.f32 %v2978, %v2978
        %v2995 = vmul.f32 %v2979, %v2979
        %v2996 = vmul.f32 %v2980, %v2980
        %v2997 = vmul.f32 %v2981, %v2981
        %v2998 = vmul.f32 %v2982, %v2982
        %v2999 = vmul.f32 %v2983, %v2983
        %v3000 = vmul.f32 %v2984, %v2984
        %v3001 = vsel %vm474, %v2985, 0.0
        %3002 = vadd.xlane.f32.xlu0 %v3001
        %v3003 = vpop.xlane.xlu0 %3002
        %v3004 = vsel %vm474, %v2986, 0.0
        %3005 = vadd.xlane.f32.xlu0 %v3004
        %v3006 = vpop.xlane.xlu0 %3005
        %v3007 = vsel %vm474, %v2987, 0.0
        %3008 = vadd.xlane.f32.xlu0 %v3007
        %v3009 = vpop.xlane.xlu0 %3008
        %v3010 = vsel %vm474, %v2988, 0.0
        %3011 = vadd.xlane.f32.xlu0 %v3010
        %v3012 = vpop.xlane.xlu0 %3011
        %v3013 = vsel %vm474, %v2989, 0.0
        %3014 = vadd.xlane.f32.xlu0 %v3013
        %v3015 = vpop.xlane.xlu0 %3014
        %v3016 = vsel %vm474, %v2990, 0.0
        %3017 = vadd.xlane.f32.xlu0 %v3016
        %v3018 = vpop.xlane.xlu0 %3017
        %v3019 = vsel %vm474, %v2991, 0.0
        %3020 = vadd.xlane.f32.xlu0 %v3019
        %v3021 = vpop.xlane.xlu0 %3020
        %v3022 = vsel %vm474, %v2992, 0.0
        %3023 = vadd.xlane.f32.xlu0 %v3022
        %v3024 = vpop.xlane.xlu0 %3023
        %v3025 = vsel %vm474, %v2993, 0.0
        %3026 = vadd.xlane.f32.xlu0 %v3025
        %v3027 = vpop.xlane.xlu0 %3026
        %v3028 = vsel %vm474, %v2994, 0.0
        %3029 = vadd.xlane.f32.xlu0 %v3028
        %v3030 = vpop.xlane.xlu0 %3029
        %v3031 = vsel %vm474, %v2995, 0.0
        %3032 = vadd.xlane.f32.xlu0 %v3031
        %v3033 = vpop.xlane.xlu0 %3032
        %v3034 = vsel %vm474, %v2996, 0.0
        %3035 = vadd.xlane.f32.xlu0 %v3034
        %v3036 = vpop.xlane.xlu0 %3035
        %v3037 = vsel %vm474, %v2997, 0.0
        %3038 = vadd.xlane.f32.xlu0 %v3037
        %v3039 = vpop.xlane.xlu0 %3038
        %v3040 = vsel %vm474, %v2998, 0.0
        %3041 = vadd.xlane.f32.xlu0 %v3040
        %v3042 = vpop.xlane.xlu0 %3041
        %v3043 = vsel %vm474, %v2999, 0.0
        %3044 = vadd.xlane.f32.xlu0 %v3043
        %v3045 = vpop.xlane.xlu0 %3044
        %v3046 = vsel %vm474, %v3000, 0.0
        %3047 = vadd.xlane.f32.xlu0 %v3046
        %v3048 = vpop.xlane.xlu0 %3047
        %v3049 = vmul.f32 %v3003, %v2952
        %v3050 = vmul.f32 %v3006, %v2952
        %v3051 = vmul.f32 %v3009, %v2952
        %v3052 = vmul.f32 %v3012, %v2952
        %v3053 = vmul.f32 %v3015, %v2952
        %v3054 = vmul.f32 %v3018, %v2952
        %v3055 = vmul.f32 %v3021, %v2952
        %v3056 = vmul.f32 %v3024, %v2952
        %v3057 = vmul.f32 %v3027, %v2952
        %v3058 = vmul.f32 %v3030, %v2952
        %v3059 = vmul.f32 %v3033, %v2952
        %v3060 = vmul.f32 %v3036, %v2952
        %v3061 = vmul.f32 %v3039, %v2952
        %v3062 = vmul.f32 %v3042, %v2952
        %v3063 = vmul.f32 %v3045, %v2952
        %v3064 = vmul.f32 %v3048, %v2952
        %v3065 = vadd.f32 %v3049, 1e-05
        %v3066 = vadd.f32 %v3050, 1e-05
        %v3067 = vadd.f32 %v3051, 1e-05
        %v3068 = vadd.f32 %v3052, 1e-05
        %v3069 = vadd.f32 %v3053, 1e-05
        %v3070 = vadd.f32 %v3054, 1e-05
        %v3071 = vadd.f32 %v3055, 1e-05
        %v3072 = vadd.f32 %v3056, 1e-05
        %v3073 = vadd.f32 %v3057, 1e-05
        %v3074 = vadd.f32 %v3058, 1e-05
        %v3075 = vadd.f32 %v3059, 1e-05
        %v3076 = vadd.f32 %v3060, 1e-05
        %v3077 = vadd.f32 %v3061, 1e-05
        %v3078 = vadd.f32 %v3062, 1e-05
        %v3079 = vadd.f32 %v3063, 1e-05
        %v3080 = vadd.f32 %v3064, 1e-05
        %v3081 = vrsqrt.pop %v3065
        %v3082 = vmul.f32 %v3081, %v3065
        %v3083 = vmul.f32 %v3082, %v3081
        %v3084 = vmul.f32 0.5, %v3083
        %v3085 = vsub.f32 1.5, %v3084
        %v3086 = vmul.f32 %v3081, %v3085
        %vm3087 = vweird.f32 %v3065
        %vm3088 = vweird.f32 %v3081
        %vm3089 = vmor %vm3087, %vm3088
        %v3090 = vsel %vm3089, %v3081, %v3086
        %v3091 = vrsqrt.pop %v3066
        %v3092 = vmul.f32 %v3091, %v3066
        %v3093 = vmul.f32 %v3092, %v3091
        %v3094 = vmul.f32 0.5, %v3093
        %v3095 = vsub.f32 1.5, %v3094
        %v3096 = vmul.f32 %v3091, %v3095
        %vm3097 = vweird.f32 %v3066
        %vm3098 = vweird.f32 %v3091
        %vm3099 = vmor %vm3097, %vm3098
        %v3100 = vsel %vm3099, %v3091, %v3096
        %v3101 = vrsqrt.pop %v3067
        %v3102 = vmul.f32 %v3101, %v3067
        %v3103 = vmul.f32 %v3102, %v3101
        %v3104 = vmul.f32 0.5, %v3103
        %v3105 = vsub.f32 1.5, %v3104
        %v3106 = vmul.f32 %v3101, %v3105
        %vm3107 = vweird.f32 %v3067
        %vm3108 = vweird.f32 %v3101
        %vm3109 = vmor %vm3107, %vm3108
        %v3110 = vsel %vm3109, %v3101, %v3106
        %v3111 = vrsqrt.pop %v3068
        %v3112 = vmul.f32 %v3111, %v3068
        %v3113 = vmul.f32 %v3112, %v3111
        %v3114 = vmul.f32 0.5, %v3113
        %v3115 = vsub.f32 1.5, %v3114
        %v3116 = vmul.f32 %v3111, %v3115
        %vm3117 = vweird.f32 %v3068
        %vm3118 = vweird.f32 %v3111
        %vm3119 = vmor %vm3117, %vm3118
        %v3120 = vsel %vm3119, %v3111, %v3116
        %v3121 = vrsqrt.pop %v3069
        %v3122 = vmul.f32 %v3121, %v3069
        %v3123 = vmul.f32 %v3122, %v3121
        %v3124 = vmul.f32 0.5, %v3123
        %v3125 = vsub.f32 1.5, %v3124
        %v3126 = vmul.f32 %v3121, %v3125
        %vm3127 = vweird.f32 %v3069
        %vm3128 = vweird.f32 %v3121
        %vm3129 = vmor %vm3127, %vm3128
        %v3130 = vsel %vm3129, %v3121, %v3126
        %v3131 = vrsqrt.pop %v3070
        %v3132 = vmul.f32 %v3131, %v3070
        %v3133 = vmul.f32 %v3132, %v3131
        %v3134 = vmul.f32 0.5, %v3133
        %v3135 = vsub.f32 1.5, %v3134
        %v3136 = vmul.f32 %v3131, %v3135
        %vm3137 = vweird.f32 %v3070
        %vm3138 = vweird.f32 %v3131
        %vm3139 = vmor %vm3137, %vm3138
        %v3140 = vsel %vm3139, %v3131, %v3136
        %v3141 = vrsqrt.pop %v3071
        %v3142 = vmul.f32 %v3141, %v3071
        %v3143 = vmul.f32 %v3142, %v3141
        %v3144 = vmul.f32 0.5, %v3143
        %v3145 = vsub.f32 1.5, %v3144
        %v3146 = vmul.f32 %v3141, %v3145
        %vm3147 = vweird.f32 %v3071
        %vm3148 = vweird.f32 %v3141
        %vm3149 = vmor %vm3147, %vm3148
        %v3150 = vsel %vm3149, %v3141, %v3146
        %v3151 = vrsqrt.pop %v3072
        %v3152 = vmul.f32 %v3151, %v3072
        %v3153 = vmul.f32 %v3152, %v3151
        %v3154 = vmul.f32 0.5, %v3153
        %v3155 = vsub.f32 1.5, %v3154
        %v3156 = vmul.f32 %v3151, %v3155
        %vm3157 = vweird.f32 %v3072
        %vm3158 = vweird.f32 %v3151
        %vm3159 = vmor %vm3157, %vm3158
        %v3160 = vsel %vm3159, %v3151, %v3156
        %v3161 = vrsqrt.pop %v3073
        %v3162 = vmul.f32 %v3161, %v3073
        %v3163 = vmul.f32 %v3162, %v3161
        %v3164 = vmul.f32 0.5, %v3163
        %v3165 = vsub.f32 1.5, %v3164
        %v3166 = vmul.f32 %v3161, %v3165
        %vm3167 = vweird.f32 %v3073
        %vm3168 = vweird.f32 %v3161
        %vm3169 = vmor %vm3167, %vm3168
        %v3170 = vsel %vm3169, %v3161, %v3166
        %v3171 = vrsqrt.pop %v3074
        %v3172 = vmul.f32 %v3171, %v3074
        %v3173 = vmul.f32 %v3172, %v3171
        %v3174 = vmul.f32 0.5, %v3173
        %v3175 = vsub.f32 1.5, %v3174
        %v3176 = vmul.f32 %v3171, %v3175
        %vm3177 = vweird.f32 %v3074
        %vm3178 = vweird.f32 %v3171
        %vm3179 = vmor %vm3177, %vm3178
        %v3180 = vsel %vm3179, %v3171, %v3176
        %v3181 = vrsqrt.pop %v3075
        %v3182 = vmul.f32 %v3181, %v3075
        %v3183 = vmul.f32 %v3182, %v3181
        %v3184 = vmul.f32 0.5, %v3183
        %v3185 = vsub.f32 1.5, %v3184
        %v3186 = vmul.f32 %v3181, %v3185
        %vm3187 = vweird.f32 %v3075
        %vm3188 = vweird.f32 %v3181
        %vm3189 = vmor %vm3187, %vm3188
        %v3190 = vsel %vm3189, %v3181, %v3186
        %v3191 = vrsqrt.pop %v3076
        %v3192 = vmul.f32 %v3191, %v3076
        %v3193 = vmul.f32 %v3192, %v3191
        %v3194 = vmul.f32 0.5, %v3193
        %v3195 = vsub.f32 1.5, %v3194
        %v3196 = vmul.f32 %v3191, %v3195
        %vm3197 = vweird.f32 %v3076
        %vm3198 = vweird.f32 %v3191
        %vm3199 = vmor %vm3197, %vm3198
        %v3200 = vsel %vm3199, %v3191, %v3196
        %v3201 = vrsqrt.pop %v3077
        %v3202 = vmul.f32 %v3201, %v3077
        %v3203 = vmul.f32 %v3202, %v3201
        %v3204 = vmul.f32 0.5, %v3203
        %v3205 = vsub.f32 1.5, %v3204
        %v3206 = vmul.f32 %v3201, %v3205
        %vm3207 = vweird.f32 %v3077
        %vm3208 = vweird.f32 %v3201
        %vm3209 = vmor %vm3207, %vm3208
        %v3210 = vsel %vm3209, %v3201, %v3206
        %v3211 = vrsqrt.pop %v3078
        %v3212 = vmul.f32 %v3211, %v3078
        %v3213 = vmul.f32 %v3212, %v3211
        %v3214 = vmul.f32 0.5, %v3213
        %v3215 = vsub.f32 1.5, %v3214
        %v3216 = vmul.f32 %v3211, %v3215
        %vm3217 = vweird.f32 %v3078
        %vm3218 = vweird.f32 %v3211
        %vm3219 = vmor %vm3217, %vm3218
        %v3220 = vsel %vm3219, %v3211, %v3216
        %v3221 = vrsqrt.pop %v3079
        %v3222 = vmul.f32 %v3221, %v3079
        %v3223 = vmul.f32 %v3222, %v3221
        %v3224 = vmul.f32 0.5, %v3223
        %v3225 = vsub.f32 1.5, %v3224
        %v3226 = vmul.f32 %v3221, %v3225
        %vm3227 = vweird.f32 %v3079
        %vm3228 = vweird.f32 %v3221
        %vm3229 = vmor %vm3227, %vm3228
        %v3230 = vsel %vm3229, %v3221, %v3226
        %v3231 = vrsqrt.pop %v3080
        %v3232 = vmul.f32 %v3231, %v3080
        %v3233 = vmul.f32 %v3232, %v3231
        %v3234 = vmul.f32 0.5, %v3233
        %v3235 = vsub.f32 1.5, %v3234
        %v3236 = vmul.f32 %v3231, %v3235
        %vm3237 = vweird.f32 %v3080
        %vm3238 = vweird.f32 %v3231
        %vm3239 = vmor %vm3237, %vm3238
        %v3240 = vsel %vm3239, %v3231, %v3236
        %v3241 = vmul.f32 %v2969, %v3090
        %v3242 = vmul.f32 %v2970, %v3100
        %v3243 = vmul.f32 %v2971, %v3110
        %v3244 = vmul.f32 %v2972, %v3120
        %v3245 = vmul.f32 %v2973, %v3130
        %v3246 = vmul.f32 %v2974, %v3140
        %v3247 = vmul.f32 %v2975, %v3150
        %v3248 = vmul.f32 %v2976, %v3160
        %v3249 = vmul.f32 %v2977, %v3170
        %v3250 = vmul.f32 %v2978, %v3180
        %v3251 = vmul.f32 %v2979, %v3190
        %v3252 = vmul.f32 %v2980, %v3200
        %v3253 = vmul.f32 %v2981, %v3210
        %v3254 = vmul.f32 %v2982, %v3220
        %v3255 = vmul.f32 %v2983, %v3230
        %v3256 = vmul.f32 %v2984, %v3240
        %v3257 = vld [vmem:[%s3 + $0x652] ss:$0 sm:$0xff]
        %v3258 = vmul.f32 %v3241, %v3257
        %v3259 = vmul.f32 %v3242, %v3257
        %v3260 = vmul.f32 %v3243, %v3257
        %v3261 = vmul.f32 %v3244, %v3257
        %v3262 = vmul.f32 %v3245, %v3257
        %v3263 = vmul.f32 %v3246, %v3257
        %v3264 = vmul.f32 %v3247, %v3257
        %v3265 = vmul.f32 %v3248, %v3257
        %v3266 = vmul.f32 %v3249, %v3257
        %v3267 = vmul.f32 %v3250, %v3257
        %v3268 = vmul.f32 %v3251, %v3257
        %v3269 = vmul.f32 %v3252, %v3257
        %v3270 = vmul.f32 %v3253, %v3257
        %v3271 = vmul.f32 %v3254, %v3257
        %v3272 = vmul.f32 %v3255, %v3257
        %v3273 = vmul.f32 %v3256, %v3257
        %v3274 = vld [vmem:[%s3 + $0x653] ss:$0 sm:$0xff]
        %v3275 = vadd.f32 %v3258, %v3274
        %v3276 = vadd.f32 %v3259, %v3274
        %v3277 = vadd.f32 %v3260, %v3274
        %v3278 = vadd.f32 %v3261, %v3274
        %v3279 = vadd.f32 %v3262, %v3274
        %v3280 = vadd.f32 %v3263, %v3274
        %v3281 = vadd.f32 %v3264, %v3274
        %v3282 = vadd.f32 %v3265, %v3274
        %v3283 = vadd.f32 %v3266, %v3274
        %v3284 = vadd.f32 %v3267, %v3274
        %v3285 = vadd.f32 %v3268, %v3274
        %v3286 = vadd.f32 %v3269, %v3274
        %v3287 = vadd.f32 %v3270, %v3274
        %v3288 = vadd.f32 %v3271, %v3274
        %v3289 = vadd.f32 %v3272, %v3274
        %v3290 = vadd.f32 %v3273, %v3274
        %v3291 = vadd.f32 %v3275, %v454
        %v3292 = vadd.f32 %v3276, %v455
        %v3293 = vadd.f32 %v3277, %v456
        %v3294 = vadd.f32 %v3278, %v457
        %v3295 = vadd.f32 %v3279, %v458
        %v3296 = vadd.f32 %v3280, %v459
        %v3297 = vadd.f32 %v3281, %v460
        %v3298 = vadd.f32 %v3282, %v461
        %v3299 = vadd.f32 %v3283, %v462
        %v3300 = vadd.f32 %v3284, %v463
        %v3301 = vadd.f32 %v3285, %v464
        %v3302 = vadd.f32 %v3286, %v465
        %v3303 = vadd.f32 %v3287, %v466
        %v3304 = vadd.f32 %v3288, %v467
        %v3305 = vadd.f32 %v3289, %v468
        %v3306 = vadd.f32 %v3290, %v469
        %v3307 = vmax.f32 %v3291, 0.0
        %v3308 = vmax.f32 %v3292, 0.0
        %v3309 = vmax.f32 %v3293, 0.0
        %v3310 = vmax.f32 %v3294, 0.0
        %v3311 = vmax.f32 %v3295, 0.0
        %v3312 = vmax.f32 %v3296, 0.0
        %v3313 = vmax.f32 %v3297, 0.0
        %v3314 = vmax.f32 %v3298, 0.0
        %v3315 = vmax.f32 %v3299, 0.0
        %v3316 = vmax.f32 %v3300, 0.0
        %v3317 = vmax.f32 %v3301, 0.0
        %v3318 = vmax.f32 %v3302, 0.0
        %v3319 = vmax.f32 %v3303, 0.0
        %v3320 = vmax.f32 %v3304, 0.0
        %v3321 = vmax.f32 %v3305, 0.0
        %v3322 = vmax.f32 %v3306, 0.0
        %v3323 = vld [vmem:[%s3 + $0x150] sm:$0xff]
        %v3324 = vld [vmem:[%s3 + $0x160] sm:$0xff]
        %v3325 = vld [vmem:[%s3 + $0x170] sm:$0xff]
        %v3326 = vld [vmem:[%s3 + $0x180] sm:$0xff]
        %v3327 = vld [vmem:[%s3 + $0x654] ss:$0 sm:$0xff]
        %v3329 = vsel %vm474, %v3307, 0
        %v3332 = vsel %vm474, %v3308, 0
        %v3335 = vsel %vm474, %v3309, 0
        %v3338 = vsel %vm474, %v3310, 0
        %v3341 = vsel %vm474, %v3311, 0
        %v3344 = vsel %vm474, %v3312, 0
        %v3347 = vsel %vm474, %v3313, 0
        %v3350 = vsel %vm474, %v3314, 0
        %v3353 = vsel %vm474, %v3315, 0
        %v3356 = vsel %vm474, %v3316, 0
        %v3359 = vsel %vm474, %v3317, 0
        %v3362 = vsel %vm474, %v3318, 0
        %v3365 = vsel %vm474, %v3319, 0
        %v3368 = vsel %vm474, %v3320, 0
        %v3371 = vsel %vm474, %v3321, 0
        %v3374 = vsel %vm474, %v3322, 0
        %3376 = vmatpush.msra.mxu0 0.0
        %3377 = vmatpush.msra.mxu0 0.0
        %3378 = vmatpush.msra.mxu0 0.0
        %3379 = vmatpush.msra.mxu0 0.0
        %3380 = vmatpush.msra.mxu0 0.0
        %3381 = vmatpush.msra.mxu0 0.0
        %3382 = vmatpush.msra.mxu0 0.0
        %3383 = vmatpush.msra.mxu0 0.0
        %3384 = vmatpush.msra.mxu0 0.0
        %3385 = vmatpush.msra.mxu0 0.0
        %3386 = vmatpush.msra.mxu0 0.0
        %3387 = vmatpush.msra.mxu0 0.0
        %3388 = vmatpush.msra.mxu0 %v3326
        %3389 = vmatpush.msra.mxu0 %v3325
        %3390 = vmatpush.msra.mxu0 %v3324
        %3391 = vmatpush.msra.mxu0 %v3323
        %3392 = vmatmul.f32.gmra.mxu0 %v3329
        %v3393 = vpop.f32.mrf.mxu0
        %v3394 = vadd.f32 %v3327, %v3393
        %3395 = vmatmul.f32.gmra.mxu0 %v3332
        %v3396 = vpop.f32.mrf.mxu0
        %v3397 = vadd.f32 %v3327, %v3396
        %3398 = vmatmul.f32.gmra.mxu0 %v3335
        %v3399 = vpop.f32.mrf.mxu0
        %v3400 = vadd.f32 %v3327, %v3399
        %3401 = vmatmul.f32.gmra.mxu0 %v3338
        %v3402 = vpop.f32.mrf.mxu0
        %v3403 = vadd.f32 %v3327, %v3402
        %3404 = vmatmul.f32.gmra.mxu0 %v3341
        %v3405 = vpop.f32.mrf.mxu0
        %v3406 = vadd.f32 %v3327, %v3405
        %3407 = vmatmul.f32.gmra.mxu0 %v3344
        %v3408 = vpop.f32.mrf.mxu0
        %v3409 = vadd.f32 %v3327, %v3408
        %3410 = vmatmul.f32.gmra.mxu0 %v3347
        %v3411 = vpop.f32.mrf.mxu0
        %v3412 = vadd.f32 %v3327, %v3411
        %3413 = vmatmul.f32.gmra.mxu0 %v3350
        %v3414 = vpop.f32.mrf.mxu0
        %v3415 = vadd.f32 %v3327, %v3414
        %3416 = vmatmul.f32.gmra.mxu0 %v3353
        %v3417 = vpop.f32.mrf.mxu0
        %v3418 = vadd.f32 %v3327, %v3417
        %3419 = vmatmul.f32.gmra.mxu0 %v3356
        %v3420 = vpop.f32.mrf.mxu0
        %v3421 = vadd.f32 %v3327, %v3420
        %3422 = vmatmul.f32.gmra.mxu0 %v3359
        %v3423 = vpop.f32.mrf.mxu0
        %v3424 = vadd.f32 %v3327, %v3423
        %3425 = vmatmul.f32.gmra.mxu0 %v3362
        %v3426 = vpop.f32.mrf.mxu0
        %v3427 = vadd.f32 %v3327, %v3426
        %3428 = vmatmul.f32.gmra.mxu0 %v3365
        %v3429 = vpop.f32.mrf.mxu0
        %v3430 = vadd.f32 %v3327, %v3429
        %3431 = vmatmul.f32.gmra.mxu0 %v3368
        %v3432 = vpop.f32.mrf.mxu0
        %v3433 = vadd.f32 %v3327, %v3432
        %3434 = vmatmul.f32.gmra.mxu0 %v3371
        %v3435 = vpop.f32.mrf.mxu0
        %v3436 = vadd.f32 %v3327, %v3435
        %3437 = vmatmul.f32.gmra.mxu0 %v3374
        %v3438 = vpop.f32.mrf.mxu0
        %v3439 = vadd.f32 %v3327, %v3438
        %3440 = vdwg.mxu0
        %v3441 = vld [vmem:[%s3 + $0x190] sm:$0xff]
        %v3442 = vld [vmem:[%s3 + $0x198] sm:$0xff]
        %v3443 = vld [vmem:[%s3 + $0x1a0] sm:$0xff]
        %v3444 = vld [vmem:[%s3 + $0x1a8] sm:$0xff]
        %v3445 = vld [vmem:[%s3 + $0x1b0] sm:$0xff]
        %v3446 = vld [vmem:[%s3 + $0x1b8] sm:$0xff]
        %v3447 = vld [vmem:[%s3 + $0x1c0] sm:$0xff]
        %v3448 = vld [vmem:[%s3 + $0x1c8] sm:$0xff]
        %3449 = vmatpush.msra.mxu0 0.0
        %3450 = vmatpush.msra.mxu0 0.0
        %3451 = vmatpush.msra.mxu0 0.0
        %3452 = vmatpush.msra.mxu0 0.0
        %3453 = vmatpush.msra.mxu0 0.0
        %3454 = vmatpush.msra.mxu0 0.0
        %3455 = vmatpush.msra.mxu0 0.0
        %3456 = vmatpush.msra.mxu0 0.0
        %3457 = vmatpush.msra.mxu0 0.0
        %3458 = vmatpush.msra.mxu0 0.0
        %3459 = vmatpush.msra.mxu0 0.0
        %3460 = vmatpush.msra.mxu0 0.0
        %3461 = vmatpush.msra.mxu0 %v3447
        %3462 = vmatpush.msra.mxu0 %v3445
        %3463 = vmatpush.msra.mxu0 %v3443
        %3464 = vmatpush.msra.mxu0 %v3441
        %3465 = vmatmul.f32.gmra.mxu0 %v3329
        %v3466 = vpop.f32.mrf.mxu0
        %v3467 = vadd.f32 0.0, %v3466
        %3468 = vmatmul.f32.gmra.mxu0 %v3332
        %v3469 = vpop.f32.mrf.mxu0
        %v3470 = vadd.f32 0.0, %v3469
        %3471 = vmatmul.f32.gmra.mxu0 %v3335
        %v3472 = vpop.f32.mrf.mxu0
        %v3473 = vadd.f32 0.0, %v3472
        %3474 = vmatmul.f32.gmra.mxu0 %v3338
        %v3475 = vpop.f32.mrf.mxu0
        %v3476 = vadd.f32 0.0, %v3475
        %3477 = vmatmul.f32.gmra.mxu0 %v3341
        %v3478 = vpop.f32.mrf.mxu0
        %v3479 = vadd.f32 0.0, %v3478
        %3480 = vmatmul.f32.gmra.mxu0 %v3344
        %v3481 = vpop.f32.mrf.mxu0
        %v3482 = vadd.f32 0.0, %v3481
        %3483 = vmatmul.f32.gmra.mxu0 %v3347
        %v3484 = vpop.f32.mrf.mxu0
        %v3485 = vadd.f32 0.0, %v3484
        %3486 = vmatmul.f32.gmra.mxu0 %v3350
        %v3487 = vpop.f32.mrf.mxu0
        %v3488 = vadd.f32 0.0, %v3487
        %3489 = vmatmul.f32.gmra.mxu0 %v3353
        %v3490 = vpop.f32.mrf.mxu0
        %v3491 = vadd.f32 0.0, %v3490
        %3492 = vmatmul.f32.gmra.mxu0 %v3356
        %v3493 = vpop.f32.mrf.mxu0
        %v3494 = vadd.f32 0.0, %v3493
        %3495 = vmatmul.f32.gmra.mxu0 %v3359
        %v3496 = vpop.f32.mrf.mxu0
        %v3497 = vadd.f32 0.0, %v3496
        %3498 = vmatmul.f32.gmra.mxu0 %v3362
        %v3499 = vpop.f32.mrf.mxu0
        %v3500 = vadd.f32 0.0, %v3499
        %3501 = vmatmul.f32.gmra.mxu0 %v3365
        %v3502 = vpop.f32.mrf.mxu0
        %v3503 = vadd.f32 0.0, %v3502
        %3504 = vmatmul.f32.gmra.mxu0 %v3368
        %v3505 = vpop.f32.mrf.mxu0
        %v3506 = vadd.f32 0.0, %v3505
        %3507 = vmatmul.f32.gmra.mxu0 %v3371
        %v3508 = vpop.f32.mrf.mxu0
        %v3509 = vadd.f32 0.0, %v3508
        %3510 = vmatmul.f32.gmra.mxu0 %v3374
        %v3511 = vpop.f32.mrf.mxu0
        %v3512 = vadd.f32 0.0, %v3511
        %3513 = vdwg.mxu0
        %3514 = vmatpush.msra.mxu0 0.0
        %3515 = vmatpush.msra.mxu0 0.0
        %3516 = vmatpush.msra.mxu0 0.0
        %3517 = vmatpush.msra.mxu0 0.0
        %3518 = vmatpush.msra.mxu0 0.0
        %3519 = vmatpush.msra.mxu0 0.0
        %3520 = vmatpush.msra.mxu0 0.0
        %3521 = vmatpush.msra.mxu0 0.0
        %3522 = vmatpush.msra.mxu0 0.0
        %3523 = vmatpush.msra.mxu0 0.0
        %3524 = vmatpush.msra.mxu0 0.0
        %3525 = vmatpush.msra.mxu0 0.0
        %3526 = vmatpush.msra.mxu0 %v3448
        %3527 = vmatpush.msra.mxu0 %v3446
        %3528 = vmatpush.msra.mxu0 %v3444
        %3529 = vmatpush.msra.mxu0 %v3442
        %3530 = vmatmul.f32.gmra.mxu0 %v3329
        %v3531 = vpop.f32.mrf.mxu0
        %v3532 = vadd.f32 0.0, %v3531
        %3533 = vmatmul.f32.gmra.mxu0 %v3332
        %v3534 = vpop.f32.mrf.mxu0
        %v3535 = vadd.f32 0.0, %v3534
        %3536 = vmatmul.f32.gmra.mxu0 %v3335
        %v3537 = vpop.f32.mrf.mxu0
        %v3538 = vadd.f32 0.0, %v3537
        %3539 = vmatmul.f32.gmra.mxu0 %v3338
        %v3540 = vpop.f32.mrf.mxu0
        %v3541 = vadd.f32 0.0, %v3540
        %3542 = vmatmul.f32.gmra.mxu0 %v3341
        %v3543 = vpop.f32.mrf.mxu0
        %v3544 = vadd.f32 0.0, %v3543
        %3545 = vmatmul.f32.gmra.mxu0 %v3344
        %v3546 = vpop.f32.mrf.mxu0
        %v3547 = vadd.f32 0.0, %v3546
        %3548 = vmatmul.f32.gmra.mxu0 %v3347
        %v3549 = vpop.f32.mrf.mxu0
        %v3550 = vadd.f32 0.0, %v3549
        %3551 = vmatmul.f32.gmra.mxu0 %v3350
        %v3552 = vpop.f32.mrf.mxu0
        %v3553 = vadd.f32 0.0, %v3552
        %3554 = vmatmul.f32.gmra.mxu0 %v3353
        %v3555 = vpop.f32.mrf.mxu0
        %v3556 = vadd.f32 0.0, %v3555
        %3557 = vmatmul.f32.gmra.mxu0 %v3356
        %v3558 = vpop.f32.mrf.mxu0
        %v3559 = vadd.f32 0.0, %v3558
        %3560 = vmatmul.f32.gmra.mxu0 %v3359
        %v3561 = vpop.f32.mrf.mxu0
        %v3562 = vadd.f32 0.0, %v3561
        %3563 = vmatmul.f32.gmra.mxu0 %v3362
        %v3564 = vpop.f32.mrf.mxu0
        %v3565 = vadd.f32 0.0, %v3564
        %3566 = vmatmul.f32.gmra.mxu0 %v3365
        %v3567 = vpop.f32.mrf.mxu0
        %v3568 = vadd.f32 0.0, %v3567
        %3569 = vmatmul.f32.gmra.mxu0 %v3368
        %v3570 = vpop.f32.mrf.mxu0
        %v3571 = vadd.f32 0.0, %v3570
        %3572 = vmatmul.f32.gmra.mxu0 %v3371
        %v3573 = vpop.f32.mrf.mxu0
        %v3574 = vadd.f32 0.0, %v3573
        %3575 = vmatmul.f32.gmra.mxu0 %v3374
        %v3576 = vpop.f32.mrf.mxu0
        %v3577 = vadd.f32 0.0, %v3576
        %3578 = vdwg.mxu0
        %v3579 = vld [vmem:[%s3 + $0x1d0] sm:$0xff]
        %v3580 = vld [vmem:[%s3 + $0x1e0] sm:$0xff]
        %v3581 = vld [vmem:[%s3 + $0x1f0] sm:$0xff]
        %v3582 = vld [vmem:[%s3 + $0x200] sm:$0xff]
        %v3583 = vld [vmem:[%s3 + $0x210] sm:$0xff]
        %v3584 = vld [vmem:[%s3 + $0x220] sm:$0xff]
        %v3585 = vld [vmem:[%s3 + $0x230] sm:$0xff]
        %v3586 = vld [vmem:[%s3 + $0x240] sm:$0xff]
        %v3587 = vld [vmem:[%s3 + $0x250] sm:$0xff]
        %v3588 = vld [vmem:[%s3 + $0x260] sm:$0xff]
        %v3589 = vld [vmem:[%s3 + $0x270] sm:$0xff]
        %v3590 = vld [vmem:[%s3 + $0x280] sm:$0xff]
        %v3591 = vld [vmem:[%s3 + $0x290] sm:$0xff]
        %v3592 = vld [vmem:[%s3 + $0x2a0] sm:$0xff]
        %v3593 = vld [vmem:[%s3 + $0x2b0] sm:$0xff]
        %v3594 = vld [vmem:[%s3 + $0x2c0] sm:$0xff]
        %v3595 = vld [vmem:[%s3 + $0x2d0] sm:$0xff]
        %v3596 = vld [vmem:[%s3 + $0x2e0] sm:$0xff]
        %v3597 = vld [vmem:[%s3 + $0x2f0] sm:$0xff]
        %v3598 = vld [vmem:[%s3 + $0x300] sm:$0xff]
        %v3599 = vld [vmem:[%s3 + $0x310] sm:$0xff]
        %v3600 = vld [vmem:[%s3 + $0x320] sm:$0xff]
        %v3601 = vld [vmem:[%s3 + $0x330] sm:$0xff]
        %v3602 = vld [vmem:[%s3 + $0x340] sm:$0xff]
        %v3603 = vld [vmem:[%s3 + $0x350] sm:$0xff]
        %v3604 = vld [vmem:[%s3 + $0x360] sm:$0xff]
        %v3605 = vld [vmem:[%s3 + $0x370] sm:$0xff]
        %v3606 = vld [vmem:[%s3 + $0x380] sm:$0xff]
        %v3607 = vld [vmem:[%s3 + $0x390] sm:$0xff]
        %v3608 = vld [vmem:[%s3 + $0x3a0] sm:$0xff]
        %v3609 = vld [vmem:[%s3 + $0x3b0] sm:$0xff]
        %v3610 = vld [vmem:[%s3 + $0x3c0] sm:$0xff]
        %3611 = vmatpush.msra.mxu0 %v3594
        %3612 = vmatpush.msra.mxu0 %v3593
        %3613 = vmatpush.msra.mxu0 %v3592
        %3614 = vmatpush.msra.mxu0 %v3591
        %3615 = vmatpush.msra.mxu0 %v3590
        %3616 = vmatpush.msra.mxu0 %v3589
        %3617 = vmatpush.msra.mxu0 %v3588
        %3618 = vmatpush.msra.mxu0 %v3587
        %3619 = vmatpush.msra.mxu0 %v3586
        %3620 = vmatpush.msra.mxu0 %v3585
        %3621 = vmatpush.msra.mxu0 %v3584
        %3622 = vmatpush.msra.mxu0 %v3583
        %3623 = vmatpush.msra.mxu0 %v3582
        %3624 = vmatpush.msra.mxu0 %v3581
        %3625 = vmatpush.msra.mxu0 %v3580
        %3626 = vmatpush.msra.mxu0 %v3579
        %3627 = vmatmul.f32.gmra.mxu0 %v3467
        %v3628 = vpop.f32.mrf.mxu0
        %v3629 = vadd.f32 0.0, %v3628
        %3630 = vmatmul.f32.gmra.mxu0 %v3470
        %v3631 = vpop.f32.mrf.mxu0
        %v3632 = vadd.f32 0.0, %v3631
        %3633 = vmatmul.f32.gmra.mxu0 %v3473
        %v3634 = vpop.f32.mrf.mxu0
        %v3635 = vadd.f32 0.0, %v3634
        %3636 = vmatmul.f32.gmra.mxu0 %v3476
        %v3637 = vpop.f32.mrf.mxu0
        %v3638 = vadd.f32 0.0, %v3637
        %3639 = vmatmul.f32.gmra.mxu0 %v3479
        %v3640 = vpop.f32.mrf.mxu0
        %v3641 = vadd.f32 0.0, %v3640
        %3642 = vmatmul.f32.gmra.mxu0 %v3482
        %v3643 = vpop.f32.mrf.mxu0
        %v3644 = vadd.f32 0.0, %v3643
        %3645 = vmatmul.f32.gmra.mxu0 %v3485
        %v3646 = vpop.f32.mrf.mxu0
        %v3647 = vadd.f32 0.0, %v3646
        %3648 = vmatmul.f32.gmra.mxu0 %v3488
        %v3649 = vpop.f32.mrf.mxu0
        %v3650 = vadd.f32 0.0, %v3649
        %3651 = vmatmul.f32.gmra.mxu0 %v3491
        %v3652 = vpop.f32.mrf.mxu0
        %v3653 = vadd.f32 0.0, %v3652
        %3654 = vmatmul.f32.gmra.mxu0 %v3494
        %v3655 = vpop.f32.mrf.mxu0
        %v3656 = vadd.f32 0.0, %v3655
        %3657 = vmatmul.f32.gmra.mxu0 %v3497
        %v3658 = vpop.f32.mrf.mxu0
        %v3659 = vadd.f32 0.0, %v3658
        %3660 = vmatmul.f32.gmra.mxu0 %v3500
        %v3661 = vpop.f32.mrf.mxu0
        %v3662 = vadd.f32 0.0, %v3661
        %3663 = vmatmul.f32.gmra.mxu0 %v3503
        %v3664 = vpop.f32.mrf.mxu0
        %v3665 = vadd.f32 0.0, %v3664
        %3666 = vmatmul.f32.gmra.mxu0 %v3506
        %v3667 = vpop.f32.mrf.mxu0
        %v3668 = vadd.f32 0.0, %v3667
        %3669 = vmatmul.f32.gmra.mxu0 %v3509
        %v3670 = vpop.f32.mrf.mxu0
        %v3671 = vadd.f32 0.0, %v3670
        %3672 = vmatmul.f32.gmra.mxu0 %v3512
        %v3673 = vpop.f32.mrf.mxu0
        %v3674 = vadd.f32 0.0, %v3673
        %3675 = vdwg.mxu0
        %3676 = vmatpush.msra.mxu0 %v3610
        %3677 = vmatpush.msra.mxu0 %v3609
        %3678 = vmatpush.msra.mxu0 %v3608
        %3679 = vmatpush.msra.mxu0 %v3607
        %3680 = vmatpush.msra.mxu0 %v3606
        %3681 = vmatpush.msra.mxu0 %v3605
        %3682 = vmatpush.msra.mxu0 %v3604
        %3683 = vmatpush.msra.mxu0 %v3603
        %3684 = vmatpush.msra.mxu0 %v3602
        %3685 = vmatpush.msra.mxu0 %v3601
        %3686 = vmatpush.msra.mxu0 %v3600
        %3687 = vmatpush.msra.mxu0 %v3599
        %3688 = vmatpush.msra.mxu0 %v3598
        %3689 = vmatpush.msra.mxu0 %v3597
        %3690 = vmatpush.msra.mxu0 %v3596
        %3691 = vmatpush.msra.mxu0 %v3595
        %3692 = vmatmul.f32.gmra.mxu0 %v3532
        %v3693 = vpop.f32.mrf.mxu0
        %v3694 = vadd.f32 %v3629, %v3693
        %3695 = vmatmul.f32.gmra.mxu0 %v3535
        %v3696 = vpop.f32.mrf.mxu0
        %v3697 = vadd.f32 %v3632, %v3696
        %3698 = vmatmul.f32.gmra.mxu0 %v3538
        %v3699 = vpop.f32.mrf.mxu0
        %v3700 = vadd.f32 %v3635, %v3699
        %3701 = vmatmul.f32.gmra.mxu0 %v3541
        %v3702 = vpop.f32.mrf.mxu0
        %v3703 = vadd.f32 %v3638, %v3702
        %3704 = vmatmul.f32.gmra.mxu0 %v3544
        %v3705 = vpop.f32.mrf.mxu0
        %v3706 = vadd.f32 %v3641, %v3705
        %3707 = vmatmul.f32.gmra.mxu0 %v3547
        %v3708 = vpop.f32.mrf.mxu0
        %v3709 = vadd.f32 %v3644, %v3708
        %3710 = vmatmul.f32.gmra.mxu0 %v3550
        %v3711 = vpop.f32.mrf.mxu0
        %v3712 = vadd.f32 %v3647, %v3711
        %3713 = vmatmul.f32.gmra.mxu0 %v3553
        %v3714 = vpop.f32.mrf.mxu0
        %v3715 = vadd.f32 %v3650, %v3714
        %3716 = vmatmul.f32.gmra.mxu0 %v3556
        %v3717 = vpop.f32.mrf.mxu0
        %v3718 = vadd.f32 %v3653, %v3717
        %3719 = vmatmul.f32.gmra.mxu0 %v3559
        %v3720 = vpop.f32.mrf.mxu0
        %v3721 = vadd.f32 %v3656, %v3720
        %3722 = vmatmul.f32.gmra.mxu0 %v3562
        %v3723 = vpop.f32.mrf.mxu0
        %v3724 = vadd.f32 %v3659, %v3723
        %3725 = vmatmul.f32.gmra.mxu0 %v3565
        %v3726 = vpop.f32.mrf.mxu0
        %v3727 = vadd.f32 %v3662, %v3726
        %3728 = vmatmul.f32.gmra.mxu0 %v3568
        %v3729 = vpop.f32.mrf.mxu0
        %v3730 = vadd.f32 %v3665, %v3729
        %3731 = vmatmul.f32.gmra.mxu0 %v3571
        %v3732 = vpop.f32.mrf.mxu0
        %v3733 = vadd.f32 %v3668, %v3732
        %3734 = vmatmul.f32.gmra.mxu0 %v3574
        %v3735 = vpop.f32.mrf.mxu0
        %v3736 = vadd.f32 %v3671, %v3735
        %3737 = vmatmul.f32.gmra.mxu0 %v3577
        %v3738 = vpop.f32.mrf.mxu0
        %v3739 = vadd.f32 %v3674, %v3738
        %3740 = vdwg.mxu0
        %3741 = vxpose.xlu0.b32.start [1/16] %v3694, 128
        %3742 = vxpose.xlu0.b32.cont [2/16] %v3697, 128
        %3743 = vxpose.xlu0.b32.cont [3/16] %v3700, 128
        %3744 = vxpose.xlu0.b32.cont [4/16] %v3703, 128
        %3745 = vxpose.xlu0.b32.cont [5/16] %v3706, 128
        %3746 = vxpose.xlu0.b32.cont [6/16] %v3709, 128
        %3747 = vxpose.xlu0.b32.cont [7/16] %v3712, 128
        %3748 = vxpose.xlu0.b32.cont [8/16] %v3715, 128
        %3749 = vxpose.xlu0.b32.cont [9/16] %v3718, 128
        %3750 = vxpose.xlu0.b32.cont [10/16] %v3721, 128
        %3751 = vxpose.xlu0.b32.cont [11/16] %v3724, 128
        %3752 = vxpose.xlu0.b32.cont [12/16] %v3727, 128
        %3753 = vxpose.xlu0.b32.cont [13/16] %v3730, 128
        %3754 = vxpose.xlu0.b32.cont [14/16] %v3733, 128
        %3755 = vxpose.xlu0.b32.cont [15/16] %v3736, 128
        %3756 = vxpose.xlu0.b32.end [16/16] %v3739, 128
        %v3757 = vpop.trf.xlu0
        %v3758 = vpop.trf.xlu0
        %v3759 = vpop.trf.xlu0
        %v3760 = vpop.trf.xlu0
        %v3761 = vpop.trf.xlu0
        %v3762 = vpop.trf.xlu0
        %v3763 = vpop.trf.xlu0
        %v3764 = vpop.trf.xlu0
        %v3765 = vpop.trf.xlu0
        %v3766 = vpop.trf.xlu0
        %v3767 = vpop.trf.xlu0
        %v3768 = vpop.trf.xlu0
        %v3769 = vpop.trf.xlu0
        %v3770 = vpop.trf.xlu0
        %v3771 = vpop.trf.xlu0
        %v3772 = vpop.trf.xlu0
        %s3773 = sld [smem:[#allocation2 + $0x4]]
        %3775 = vset.pattern.permute.xlu0 4
        %3776 = vperm.xlu0 %3775, %v3694
        %v3777 = vpop.permute.xlu0 %3776
        %3780 = vset.pattern.permute.xlu0 4
        %3781 = vperm.xlu0 %3780, %v3697
        %v3782 = vpop.permute.xlu0 %3781
        %3785 = vset.pattern.permute.xlu0 4
        %3786 = vperm.xlu0 %3785, %v3700
        %v3787 = vpop.permute.xlu0 %3786
        %3790 = vset.pattern.permute.xlu0 4
        %3791 = vperm.xlu0 %3790, %v3703
        %v3792 = vpop.permute.xlu0 %3791
        %3795 = vset.pattern.permute.xlu0 4
        %3796 = vperm.xlu0 %3795, %v3706
        %v3797 = vpop.permute.xlu0 %3796
        %3800 = vset.pattern.permute.xlu0 4
        %3801 = vperm.xlu0 %3800, %v3709
        %v3802 = vpop.permute.xlu0 %3801
        %3805 = vset.pattern.permute.xlu0 4
        %3806 = vperm.xlu0 %3805, %v3712
        %v3807 = vpop.permute.xlu0 %3806
        %3810 = vset.pattern.permute.xlu0 4
        %3811 = vperm.xlu0 %3810, %v3715
        %v3812 = vpop.permute.xlu0 %3811
        %3815 = vset.pattern.permute.xlu0 4
        %3816 = vperm.xlu0 %3815, %v3718
        %v3817 = vpop.permute.xlu0 %3816
        %3820 = vset.pattern.permute.xlu0 4
        %3821 = vperm.xlu0 %3820, %v3721
        %v3822 = vpop.permute.xlu0 %3821
        %3825 = vset.pattern.permute.xlu0 4
        %3826 = vperm.xlu0 %3825, %v3724
        %v3827 = vpop.permute.xlu0 %3826
        %3830 = vset.pattern.permute.xlu0 4
        %3831 = vperm.xlu0 %3830, %v3727
        %v3832 = vpop.permute.xlu0 %3831
        %3835 = vset.pattern.permute.xlu0 4
        %3836 = vperm.xlu0 %3835, %v3730
        %v3837 = vpop.permute.xlu0 %3836
        %3840 = vset.pattern.permute.xlu0 4
        %3841 = vperm.xlu0 %3840, %v3733
        %v3842 = vpop.permute.xlu0 %3841
        %3845 = vset.pattern.permute.xlu0 4
        %3846 = vperm.xlu0 %3845, %v3736
        %v3847 = vpop.permute.xlu0 %3846
        %3850 = vset.pattern.permute.xlu0 4
        %3851 = vperm.xlu0 %3850, %v3739
        %v3852 = vpop.permute.xlu0 %3851
        %v3854 = vperm.slane %v3757, 0
        %v3855 = vadd.f32 %v3777, %v3854
        %v3856 = vadd.f32 %v3782, %v3854
        %v3857 = vadd.f32 %v3787, %v3854
        %v3858 = vadd.f32 %v3792, %v3854
        %v3859 = vadd.f32 %v3797, %v3854
        %v3860 = vadd.f32 %v3802, %v3854
        %v3861 = vadd.f32 %v3807, %v3854
        %v3862 = vadd.f32 %v3812, %v3854
        %v3863 = vadd.f32 %v3817, %v3854
        %v3864 = vadd.f32 %v3822, %v3854
        %v3865 = vadd.f32 %v3827, %v3854
        %v3866 = vadd.f32 %v3832, %v3854
        %v3867 = vadd.f32 %v3837, %v3854
        %v3868 = vadd.f32 %v3842, %v3854
        %v3869 = vadd.f32 %v3847, %v3854
        %v3870 = vadd.f32 %v3852, %v3854
        %v3871 = vstv %s3773
        %v3872 = vmul.f32 %v3871, %v318
        %v3873 = vmul.f32 %v3871, %v319
        %v3874 = vmul.f32 %v3871, %v320
        %v3875 = vmul.f32 %v3871, %v321
        %v3876 = vmul.f32 %v3871, %v322
        %v3877 = vmul.f32 %v3871, %v323
        %v3878 = vmul.f32 %v3871, %v324
        %v3879 = vmul.f32 %v3871, %v325
        %v3880 = vmul.f32 %v3871, %v326
        %v3881 = vmul.f32 %v3871, %v327
        %v3882 = vmul.f32 %v3871, %v328
        %v3883 = vmul.f32 %v3871, %v329
        %v3884 = vmul.f32 %v3871, %v330
        %v3885 = vmul.f32 %v3871, %v331
        %v3886 = vmul.f32 %v3871, %v332
        %v3887 = vmul.f32 %v3871, %v333
        %v3888 = vadd.f32 %v3855, %v3872
        %v3889 = vadd.f32 %v3856, %v3873
        %v3890 = vadd.f32 %v3857, %v3874
        %v3891 = vadd.f32 %v3858, %v3875
        %v3892 = vadd.f32 %v3859, %v3876
        %v3893 = vadd.f32 %v3860, %v3877
        %v3894 = vadd.f32 %v3861, %v3878
        %v3895 = vadd.f32 %v3862, %v3879
        %v3896 = vadd.f32 %v3863, %v3880
        %v3897 = vadd.f32 %v3864, %v3881
        %v3898 = vadd.f32 %v3865, %v3882
        %v3899 = vadd.f32 %v3866, %v3883
        %v3900 = vadd.f32 %v3867, %v3884
        %v3901 = vadd.f32 %v3868, %v3885
        %v3902 = vadd.f32 %v3869, %v3886
        %v3903 = vadd.f32 %v3870, %v3887
        %v3904 = vmul.f32 %v3888, 0.2
        %v3905 = vmul.f32 %v3889, 0.2
        %v3906 = vmul.f32 %v3890, 0.2
        %v3907 = vmul.f32 %v3891, 0.2
        %v3908 = vmul.f32 %v3892, 0.2
        %v3909 = vmul.f32 %v3893, 0.2
        %v3910 = vmul.f32 %v3894, 0.2
        %v3911 = vmul.f32 %v3895, 0.2
        %v3912 = vmul.f32 %v3896, 0.2
        %v3913 = vmul.f32 %v3897, 0.2
        %v3914 = vmul.f32 %v3898, 0.2
        %v3915 = vmul.f32 %v3899, 0.2
        %v3916 = vmul.f32 %v3900, 0.2
        %v3917 = vmul.f32 %v3901, 0.2
        %v3918 = vmul.f32 %v3902, 0.2
        %v3919 = vmul.f32 %v3903, 0.2
        %v3920 = vmax.f32 %v3888, %v3904
        %v3921 = vmax.f32 %v3889, %v3905
        %v3922 = vmax.f32 %v3890, %v3906
        %v3923 = vmax.f32 %v3891, %v3907
        %v3924 = vmax.f32 %v3892, %v3908
        %v3925 = vmax.f32 %v3893, %v3909
        %v3926 = vmax.f32 %v3894, %v3910
        %v3927 = vmax.f32 %v3895, %v3911
        %v3928 = vmax.f32 %v3896, %v3912
        %v3929 = vmax.f32 %v3897, %v3913
        %v3930 = vmax.f32 %v3898, %v3914
        %v3931 = vmax.f32 %v3899, %v3915
        %v3932 = vmax.f32 %v3900, %v3916
        %v3933 = vmax.f32 %v3901, %v3917
        %v3934 = vmax.f32 %v3902, %v3918
        %v3935 = vmax.f32 %v3903, %v3919
        %v3936 = vadd.f32 %v3920, %v302
        %v3937 = vadd.f32 %v3921, %v303
        %v3938 = vadd.f32 %v3922, %v304
        %v3939 = vadd.f32 %v3923, %v305
        %v3940 = vadd.f32 %v3924, %v306
        %v3941 = vadd.f32 %v3925, %v307
        %v3942 = vadd.f32 %v3926, %v308
        %v3943 = vadd.f32 %v3927, %v309
        %v3944 = vadd.f32 %v3928, %v310
        %v3945 = vadd.f32 %v3929, %v311
        %v3946 = vadd.f32 %v3930, %v312
        %v3947 = vadd.f32 %v3931, %v313
        %v3948 = vadd.f32 %v3932, %v314
        %v3949 = vadd.f32 %v3933, %v315
        %v3950 = vadd.f32 %v3934, %v316
        %v3951 = vadd.f32 %v3935, %v317
        %3952 = vmax.xlane.f32.xlu0 %v3936
        %v3953 = vpop.xlane.xlu0 %3952
        %3954 = vmax.xlane.f32.xlu0 %v3937
        %v3955 = vpop.xlane.xlu0 %3954
        %3956 = vmax.xlane.f32.xlu0 %v3938
        %v3957 = vpop.xlane.xlu0 %3956
        %3958 = vmax.xlane.f32.xlu0 %v3939
        %v3959 = vpop.xlane.xlu0 %3958
        %3960 = vmax.xlane.f32.xlu0 %v3940
        %v3961 = vpop.xlane.xlu0 %3960
        %3962 = vmax.xlane.f32.xlu0 %v3941
        %v3963 = vpop.xlane.xlu0 %3962
        %3964 = vmax.xlane.f32.xlu0 %v3942
        %v3965 = vpop.xlane.xlu0 %3964
        %3966 = vmax.xlane.f32.xlu0 %v3943
        %v3967 = vpop.xlane.xlu0 %3966
        %3968 = vmax.xlane.f32.xlu0 %v3944
        %v3969 = vpop.xlane.xlu0 %3968
        %3970 = vmax.xlane.f32.xlu0 %v3945
        %v3971 = vpop.xlane.xlu0 %3970
        %3972 = vmax.xlane.f32.xlu0 %v3946
        %v3973 = vpop.xlane.xlu0 %3972
        %3974 = vmax.xlane.f32.xlu0 %v3947
        %v3975 = vpop.xlane.xlu0 %3974
        %3976 = vmax.xlane.f32.xlu0 %v3948
        %v3977 = vpop.xlane.xlu0 %3976
        %3978 = vmax.xlane.f32.xlu0 %v3949
        %v3979 = vpop.xlane.xlu0 %3978
        %3980 = vmax.xlane.f32.xlu0 %v3950
        %v3981 = vpop.xlane.xlu0 %3980
        %3982 = vmax.xlane.f32.xlu0 %v3951
        %v3983 = vpop.xlane.xlu0 %3982
        %v3984 = vsub.f32 %v3936, %v3953
        %v3985 = vsub.f32 %v3937, %v3955
        %v3986 = vsub.f32 %v3938, %v3957
        %v3987 = vsub.f32 %v3939, %v3959
        %v3988 = vsub.f32 %v3940, %v3961
        %v3989 = vsub.f32 %v3941, %v3963
        %v3990 = vsub.f32 %v3942, %v3965
        %v3991 = vsub.f32 %v3943, %v3967
        %v3992 = vsub.f32 %v3944, %v3969
        %v3993 = vsub.f32 %v3945, %v3971
        %v3994 = vsub.f32 %v3946, %v3973
        %v3995 = vsub.f32 %v3947, %v3975
        %v3996 = vsub.f32 %v3948, %v3977
        %v3997 = vsub.f32 %v3949, %v3979
        %v3998 = vsub.f32 %v3950, %v3981
        %v3999 = vsub.f32 %v3951, %v3983
        %v4000 = vmul.f32 %v3984, 1.442695
        %v4001 = vpow.pop %v4000
        %v4002 = vmul.f32 %v3985, 1.442695
        %v4003 = vpow.pop %v4002
        %v4004 = vmul.f32 %v3986, 1.442695
        %v4005 = vpow.pop %v4004
        %v4006 = vmul.f32 %v3987, 1.442695
        %v4007 = vpow.pop %v4006
        %v4008 = vmul.f32 %v3988, 1.442695
        %v4009 = vpow.pop %v4008
        %v4010 = vmul.f32 %v3989, 1.442695
        %v4011 = vpow.pop %v4010
        %v4012 = vmul.f32 %v3990, 1.442695
        %v4013 = vpow.pop %v4012
        %v4014 = vmul.f32 %v3991, 1.442695
        %v4015 = vpow.pop %v4014
        %v4016 = vmul.f32 %v3992, 1.442695
        %v4017 = vpow.pop %v4016
        %v4018 = vmul.f32 %v3993, 1.442695
        %v4019 = vpow.pop %v4018
        %v4020 = vmul.f32 %v3994, 1.442695
        %v4021 = vpow.pop %v4020
        %v4022 = vmul.f32 %v3995, 1.442695
        %v4023 = vpow.pop %v4022
        %v4024 = vmul.f32 %v3996, 1.442695
        %v4025 = vpow.pop %v4024
        %v4026 = vmul.f32 %v3997, 1.442695
        %v4027 = vpow.pop %v4026
        %v4028 = vmul.f32 %v3998, 1.442695
        %v4029 = vpow.pop %v4028
        %v4030 = vmul.f32 %v3999, 1.442695
        %v4031 = vpow.pop %v4030
        %4032 = vmatpush.msra.mxu0 1.0
        %4033 = vmatpush.msra.mxu0 1.0
        %4034 = vmatpush.msra.mxu0 1.0
        %4035 = vmatpush.msra.mxu0 1.0
        %4036 = vmatpush.msra.mxu0 1.0
        %4037 = vmatpush.msra.mxu0 1.0
        %4038 = vmatpush.msra.mxu0 1.0
        %4039 = vmatpush.msra.mxu0 1.0
        %4040 = vmatpush.msra.mxu0 1.0
        %4041 = vmatpush.msra.mxu0 1.0
        %4042 = vmatpush.msra.mxu0 1.0
        %4043 = vmatpush.msra.mxu0 1.0
        %4044 = vmatpush.msra.mxu0 1.0
        %4045 = vmatpush.msra.mxu0 1.0
        %4046 = vmatpush.msra.mxu0 1.0
        %4047 = vmatpush.msra.mxu0 1.0
        %4048 = vmatmul.f32.gmra.mxu0 %v4001
        %v4049 = vpop.f32.mrf.mxu0
        %v4050 = vadd.f32 0.0, %v4049
        %4051 = vmatmul.f32.gmra.mxu0 %v4003
        %v4052 = vpop.f32.mrf.mxu0
        %v4053 = vadd.f32 0.0, %v4052
        %4054 = vmatmul.f32.gmra.mxu0 %v4005
        %v4055 = vpop.f32.mrf.mxu0
        %v4056 = vadd.f32 0.0, %v4055
        %4057 = vmatmul.f32.gmra.mxu0 %v4007
        %v4058 = vpop.f32.mrf.mxu0
        %v4059 = vadd.f32 0.0, %v4058
        %4060 = vmatmul.f32.gmra.mxu0 %v4009
        %v4061 = vpop.f32.mrf.mxu0
        %v4062 = vadd.f32 0.0, %v4061
        %4063 = vmatmul.f32.gmra.mxu0 %v4011
        %v4064 = vpop.f32.mrf.mxu0
        %v4065 = vadd.f32 0.0, %v4064
        %4066 = vmatmul.f32.gmra.mxu0 %v4013
        %v4067 = vpop.f32.mrf.mxu0
        %v4068 = vadd.f32 0.0, %v4067
        %4069 = vmatmul.f32.gmra.mxu0 %v4015
        %v4070 = vpop.f32.mrf.mxu0
        %v4071 = vadd.f32 0.0, %v4070
        %4072 = vmatmul.f32.gmra.mxu0 %v4017
        %v4073 = vpop.f32.mrf.mxu0
        %v4074 = vadd.f32 0.0, %v4073
        %4075 = vmatmul.f32.gmra.mxu0 %v4019
        %v4076 = vpop.f32.mrf.mxu0
        %v4077 = vadd.f32 0.0, %v4076
        %4078 = vmatmul.f32.gmra.mxu0 %v4021
        %v4079 = vpop.f32.mrf.mxu0
        %v4080 = vadd.f32 0.0, %v4079
        %4081 = vmatmul.f32.gmra.mxu0 %v4023
        %v4082 = vpop.f32.mrf.mxu0
        %v4083 = vadd.f32 0.0, %v4082
        %4084 = vmatmul.f32.gmra.mxu0 %v4025
        %v4085 = vpop.f32.mrf.mxu0
        %v4086 = vadd.f32 0.0, %v4085
        %4087 = vmatmul.f32.gmra.mxu0 %v4027
        %v4088 = vpop.f32.mrf.mxu0
        %v4089 = vadd.f32 0.0, %v4088
        %4090 = vmatmul.f32.gmra.mxu0 %v4029
        %v4091 = vpop.f32.mrf.mxu0
        %v4092 = vadd.f32 0.0, %v4091
        %4093 = vmatmul.f32.gmra.mxu0 %v4031
        %v4094 = vpop.f32.mrf.mxu0
        %v4095 = vadd.f32 0.0, %v4094
        %4096 = vdwg.mxu0
        %4097 = vmatpush.msra.mxu0 %v3512
        %4098 = vmatpush.msra.mxu0 %v3509
        %4099 = vmatpush.msra.mxu0 %v3506
        %4100 = vmatpush.msra.mxu0 %v3503
        %4101 = vmatpush.msra.mxu0 %v3500
        %4102 = vmatpush.msra.mxu0 %v3497
        %4103 = vmatpush.msra.mxu0 %v3494
        %4104 = vmatpush.msra.mxu0 %v3491
        %4105 = vmatpush.msra.mxu0 %v3488
        %4106 = vmatpush.msra.mxu0 %v3485
        %4107 = vmatpush.msra.mxu0 %v3482
        %4108 = vmatpush.msra.mxu0 %v3479
        %4109 = vmatpush.msra.mxu0 %v3476
        %4110 = vmatpush.msra.mxu0 %v3473
        %4111 = vmatpush.msra.mxu0 %v3470
        %4112 = vmatpush.msra.mxu0 %v3467
        %4113 = vmatmul.f32.gmra.mxu0 %v4001
        %v4114 = vpop.f32.mrf.mxu0
        %v4115 = vadd.f32 0.0, %v4114
        %4116 = vmatmul.f32.gmra.mxu0 %v4003
        %v4117 = vpop.f32.mrf.mxu0
        %v4118 = vadd.f32 0.0, %v4117
        %4119 = vmatmul.f32.gmra.mxu0 %v4005
        %v4120 = vpop.f32.mrf.mxu0
        %v4121 = vadd.f32 0.0, %v4120
        %4122 = vmatmul.f32.gmra.mxu0 %v4007
        %v4123 = vpop.f32.mrf.mxu0
        %v4124 = vadd.f32 0.0, %v4123
        %4125 = vmatmul.f32.gmra.mxu0 %v4009
        %v4126 = vpop.f32.mrf.mxu0
        %v4127 = vadd.f32 0.0, %v4126
        %4128 = vmatmul.f32.gmra.mxu0 %v4011
        %v4129 = vpop.f32.mrf.mxu0
        %v4130 = vadd.f32 0.0, %v4129
        %4131 = vmatmul.f32.gmra.mxu0 %v4013
        %v4132 = vpop.f32.mrf.mxu0
        %v4133 = vadd.f32 0.0, %v4132
        %4134 = vmatmul.f32.gmra.mxu0 %v4015
        %v4135 = vpop.f32.mrf.mxu0
        %v4136 = vadd.f32 0.0, %v4135
        %4137 = vmatmul.f32.gmra.mxu0 %v4017
        %v4138 = vpop.f32.mrf.mxu0
        %v4139 = vadd.f32 0.0, %v4138
        %4140 = vmatmul.f32.gmra.mxu0 %v4019
        %v4141 = vpop.f32.mrf.mxu0
        %v4142 = vadd.f32 0.0, %v4141
        %4143 = vmatmul.f32.gmra.mxu0 %v4021
        %v4144 = vpop.f32.mrf.mxu0
        %v4145 = vadd.f32 0.0, %v4144
        %4146 = vmatmul.f32.gmra.mxu0 %v4023
        %v4147 = vpop.f32.mrf.mxu0
        %v4148 = vadd.f32 0.0, %v4147
        %4149 = vmatmul.f32.gmra.mxu0 %v4025
        %v4150 = vpop.f32.mrf.mxu0
        %v4151 = vadd.f32 0.0, %v4150
        %4152 = vmatmul.f32.gmra.mxu0 %v4027
        %v4153 = vpop.f32.mrf.mxu0
        %v4154 = vadd.f32 0.0, %v4153
        %4155 = vmatmul.f32.gmra.mxu0 %v4029
        %v4156 = vpop.f32.mrf.mxu0
        %v4157 = vadd.f32 0.0, %v4156
        %4158 = vmatmul.f32.gmra.mxu0 %v4031
        %v4159 = vpop.f32.mrf.mxu0
        %v4160 = vadd.f32 0.0, %v4159
        %4161 = vdwg.mxu0
        %v4162 = vrcp.pop %v4050
        %v4163 = vrcp.pop %v4053
        %v4164 = vrcp.pop %v4056
        %v4165 = vrcp.pop %v4059
        %v4166 = vrcp.pop %v4062
        %v4167 = vrcp.pop %v4065
        %v4168 = vrcp.pop %v4068
        %v4169 = vrcp.pop %v4071
        %v4170 = vrcp.pop %v4074
        %v4171 = vrcp.pop %v4077
        %v4172 = vrcp.pop %v4080
        %v4173 = vrcp.pop %v4083
        %v4174 = vrcp.pop %v4086
        %v4175 = vrcp.pop %v4089
        %v4176 = vrcp.pop %v4092
        %v4177 = vrcp.pop %v4095
        %4179 = vset.pattern.permute.xlu0 0
        %4180 = vperm.xlu0 %4179, %v4162
        %v4181 = vpop.permute.xlu0 %4180
        %4184 = vset.pattern.permute.xlu0 0
        %4185 = vperm.xlu0 %4184, %v4163
        %v4186 = vpop.permute.xlu0 %4185
        %4189 = vset.pattern.permute.xlu0 0
        %4190 = vperm.xlu0 %4189, %v4164
        %v4191 = vpop.permute.xlu0 %4190
        %4194 = vset.pattern.permute.xlu0 0
        %4195 = vperm.xlu0 %4194, %v4165
        %v4196 = vpop.permute.xlu0 %4195
        %4199 = vset.pattern.permute.xlu0 0
        %4200 = vperm.xlu0 %4199, %v4166
        %v4201 = vpop.permute.xlu0 %4200
        %4204 = vset.pattern.permute.xlu0 0
        %4205 = vperm.xlu0 %4204, %v4167
        %v4206 = vpop.permute.xlu0 %4205
        %4209 = vset.pattern.permute.xlu0 0
        %4210 = vperm.xlu0 %4209, %v4168
        %v4211 = vpop.permute.xlu0 %4210
        %4214 = vset.pattern.permute.xlu0 0
        %4215 = vperm.xlu0 %4214, %v4169
        %v4216 = vpop.permute.xlu0 %4215
        %4219 = vset.pattern.permute.xlu0 0
        %4220 = vperm.xlu0 %4219, %v4170
        %v4221 = vpop.permute.xlu0 %4220
        %4224 = vset.pattern.permute.xlu0 0
        %4225 = vperm.xlu0 %4224, %v4171
        %v4226 = vpop.permute.xlu0 %4225
        %4229 = vset.pattern.permute.xlu0 0
        %4230 = vperm.xlu0 %4229, %v4172
        %v4231 = vpop.permute.xlu0 %4230
        %4234 = vset.pattern.permute.xlu0 0
        %4235 = vperm.xlu0 %4234, %v4173
        %v4236 = vpop.permute.xlu0 %4235
        %4239 = vset.pattern.permute.xlu0 0
        %4240 = vperm.xlu0 %4239, %v4174
        %v4241 = vpop.permute.xlu0 %4240
        %4244 = vset.pattern.permute.xlu0 0
        %4245 = vperm.xlu0 %4244, %v4175
        %v4246 = vpop.permute.xlu0 %4245
        %4249 = vset.pattern.permute.xlu0 0
        %4250 = vperm.xlu0 %4249, %v4176
        %v4251 = vpop.permute.xlu0 %4250
        %4254 = vset.pattern.permute.xlu0 0
        %4255 = vperm.xlu0 %4254, %v4177
        %v4256 = vpop.permute.xlu0 %4255
        %v4258 = vmul.f32 %v4115, %v4181
        %v4259 = vmul.f32 %v4118, %v4186
        %v4260 = vmul.f32 %v4121, %v4191
        %v4261 = vmul.f32 %v4124, %v4196
        %v4262 = vmul.f32 %v4127, %v4201
        %v4263 = vmul.f32 %v4130, %v4206
        %v4264 = vmul.f32 %v4133, %v4211
        %v4265 = vmul.f32 %v4136, %v4216
        %v4266 = vmul.f32 %v4139, %v4221
        %v4267 = vmul.f32 %v4142, %v4226
        %v4268 = vmul.f32 %v4145, %v4231
        %v4269 = vmul.f32 %v4148, %v4236
        %v4270 = vmul.f32 %v4151, %v4241
        %v4271 = vmul.f32 %v4154, %v4246
        %v4272 = vmul.f32 %v4157, %v4251
        %v4273 = vmul.f32 %v4160, %v4256
        %s4274 = sld [smem:[#allocation2 + $0x5]]
        %4275 = vset.pattern.permute.xlu0 5
        %4276 = vperm.xlu0 %4275, %v3694
        %v4277 = vpop.permute.xlu0 %4276
        %4279 = vset.pattern.permute.xlu0 5
        %4280 = vperm.xlu0 %4279, %v3697
        %v4281 = vpop.permute.xlu0 %4280
        %4283 = vset.pattern.permute.xlu0 5
        %4284 = vperm.xlu0 %4283, %v3700
        %v4285 = vpop.permute.xlu0 %4284
        %4287 = vset.pattern.permute.xlu0 5
        %4288 = vperm.xlu0 %4287, %v3703
        %v4289 = vpop.permute.xlu0 %4288
        %4291 = vset.pattern.permute.xlu0 5
        %4292 = vperm.xlu0 %4291, %v3706
        %v4293 = vpop.permute.xlu0 %4292
        %4295 = vset.pattern.permute.xlu0 5
        %4296 = vperm.xlu0 %4295, %v3709
        %v4297 = vpop.permute.xlu0 %4296
        %4299 = vset.pattern.permute.xlu0 5
        %4300 = vperm.xlu0 %4299, %v3712
        %v4301 = vpop.permute.xlu0 %4300
        %4303 = vset.pattern.permute.xlu0 5
        %4304 = vperm.xlu0 %4303, %v3715
        %v4305 = vpop.permute.xlu0 %4304
        %4307 = vset.pattern.permute.xlu0 5
        %4308 = vperm.xlu0 %4307, %v3718
        %v4309 = vpop.permute.xlu0 %4308
        %4311 = vset.pattern.permute.xlu0 5
        %4312 = vperm.xlu0 %4311, %v3721
        %v4313 = vpop.permute.xlu0 %4312
        %4315 = vset.pattern.permute.xlu0 5
        %4316 = vperm.xlu0 %4315, %v3724
        %v4317 = vpop.permute.xlu0 %4316
        %4319 = vset.pattern.permute.xlu0 5
        %4320 = vperm.xlu0 %4319, %v3727
        %v4321 = vpop.permute.xlu0 %4320
        %4323 = vset.pattern.permute.xlu0 5
        %4324 = vperm.xlu0 %4323, %v3730
        %v4325 = vpop.permute.xlu0 %4324
        %4327 = vset.pattern.permute.xlu0 5
        %4328 = vperm.xlu0 %4327, %v3733
        %v4329 = vpop.permute.xlu0 %4328
        %4331 = vset.pattern.permute.xlu0 5
        %4332 = vperm.xlu0 %4331, %v3736
        %v4333 = vpop.permute.xlu0 %4332
        %4335 = vset.pattern.permute.xlu0 5
        %4336 = vperm.xlu0 %4335, %v3739
        %v4337 = vpop.permute.xlu0 %4336
        %v4339 = vperm.slane %v3757, 1
        %v4340 = vadd.f32 %v4277, %v4339
        %v4341 = vadd.f32 %v4281, %v4339
        %v4342 = vadd.f32 %v4285, %v4339
        %v4343 = vadd.f32 %v4289, %v4339
        %v4344 = vadd.f32 %v4293, %v4339
        %v4345 = vadd.f32 %v4297, %v4339
        %v4346 = vadd.f32 %v4301, %v4339
        %v4347 = vadd.f32 %v4305, %v4339
        %v4348 = vadd.f32 %v4309, %v4339
        %v4349 = vadd.f32 %v4313, %v4339
        %v4350 = vadd.f32 %v4317, %v4339
        %v4351 = vadd.f32 %v4321, %v4339
        %v4352 = vadd.f32 %v4325, %v4339
        %v4353 = vadd.f32 %v4329, %v4339
        %v4354 = vadd.f32 %v4333, %v4339
        %v4355 = vadd.f32 %v4337, %v4339
        %v4356 = vstv %s4274
        %v4357 = vmul.f32 %v4356, %v318
        %v4358 = vmul.f32 %v4356, %v319
        %v4359 = vmul.f32 %v4356, %v320
        %v4360 = vmul.f32 %v4356, %v321
        %v4361 = vmul.f32 %v4356, %v322
        %v4362 = vmul.f32 %v4356, %v323
        %v4363 = vmul.f32 %v4356, %v324
        %v4364 = vmul.f32 %v4356, %v325
        %v4365 = vmul.f32 %v4356, %v326
        %v4366 = vmul.f32 %v4356, %v327
        %v4367 = vmul.f32 %v4356, %v328
        %v4368 = vmul.f32 %v4356, %v329
        %v4369 = vmul.f32 %v4356, %v330
        %v4370 = vmul.f32 %v4356, %v331
        %v4371 = vmul.f32 %v4356, %v332
        %v4372 = vmul.f32 %v4356, %v333
        %v4373 = vadd.f32 %v4340, %v4357
        %v4374 = vadd.f32 %v4341, %v4358
        %v4375 = vadd.f32 %v4342, %v4359
        %v4376 = vadd.f32 %v4343, %v4360
        %v4377 = vadd.f32 %v4344, %v4361
        %v4378 = vadd.f32 %v4345, %v4362
        %v4379 = vadd.f32 %v4346, %v4363
        %v4380 = vadd.f32 %v4347, %v4364
        %v4381 = vadd.f32 %v4348, %v4365
        %v4382 = vadd.f32 %v4349, %v4366
        %v4383 = vadd.f32 %v4350, %v4367
        %v4384 = vadd.f32 %v4351, %v4368
        %v4385 = vadd.f32 %v4352, %v4369
        %v4386 = vadd.f32 %v4353, %v4370
        %v4387 = vadd.f32 %v4354, %v4371
        %v4388 = vadd.f32 %v4355, %v4372
        %v4389 = vmul.f32 %v4373, 0.2
        %v4390 = vmul.f32 %v4374, 0.2
        %v4391 = vmul.f32 %v4375, 0.2
        %v4392 = vmul.f32 %v4376, 0.2
        %v4393 = vmul.f32 %v4377, 0.2
        %v4394 = vmul.f32 %v4378, 0.2
        %v4395 = vmul.f32 %v4379, 0.2
        %v4396 = vmul.f32 %v4380, 0.2
        %v4397 = vmul.f32 %v4381, 0.2
        %v4398 = vmul.f32 %v4382, 0.2
        %v4399 = vmul.f32 %v4383, 0.2
        %v4400 = vmul.f32 %v4384, 0.2
        %v4401 = vmul.f32 %v4385, 0.2
        %v4402 = vmul.f32 %v4386, 0.2
        %v4403 = vmul.f32 %v4387, 0.2
        %v4404 = vmul.f32 %v4388, 0.2
        %v4405 = vmax.f32 %v4373, %v4389
        %v4406 = vmax.f32 %v4374, %v4390
        %v4407 = vmax.f32 %v4375, %v4391
        %v4408 = vmax.f32 %v4376, %v4392
        %v4409 = vmax.f32 %v4377, %v4393
        %v4410 = vmax.f32 %v4378, %v4394
        %v4411 = vmax.f32 %v4379, %v4395
        %v4412 = vmax.f32 %v4380, %v4396
        %v4413 = vmax.f32 %v4381, %v4397
        %v4414 = vmax.f32 %v4382, %v4398
        %v4415 = vmax.f32 %v4383, %v4399
        %v4416 = vmax.f32 %v4384, %v4400
        %v4417 = vmax.f32 %v4385, %v4401
        %v4418 = vmax.f32 %v4386, %v4402
        %v4419 = vmax.f32 %v4387, %v4403
        %v4420 = vmax.f32 %v4388, %v4404
        %v4421 = vadd.f32 %v4405, %v302
        %v4422 = vadd.f32 %v4406, %v303
        %v4423 = vadd.f32 %v4407, %v304
        %v4424 = vadd.f32 %v4408, %v305
        %v4425 = vadd.f32 %v4409, %v306
        %v4426 = vadd.f32 %v4410, %v307
        %v4427 = vadd.f32 %v4411, %v308
        %v4428 = vadd.f32 %v4412, %v309
        %v4429 = vadd.f32 %v4413, %v310
        %v4430 = vadd.f32 %v4414, %v311
        %v4431 = vadd.f32 %v4415, %v312
        %v4432 = vadd.f32 %v4416, %v313
        %v4433 = vadd.f32 %v4417, %v314
        %v4434 = vadd.f32 %v4418, %v315
        %v4435 = vadd.f32 %v4419, %v316
        %v4436 = vadd.f32 %v4420, %v317
        %4437 = vmax.xlane.f32.xlu0 %v4421
        %v4438 = vpop.xlane.xlu0 %4437
        %4439 = vmax.xlane.f32.xlu0 %v4422
        %v4440 = vpop.xlane.xlu0 %4439
        %4441 = vmax.xlane.f32.xlu0 %v4423
        %v4442 = vpop.xlane.xlu0 %4441
        %4443 = vmax.xlane.f32.xlu0 %v4424
        %v4444 = vpop.xlane.xlu0 %4443
        %4445 = vmax.xlane.f32.xlu0 %v4425
        %v4446 = vpop.xlane.xlu0 %4445
        %4447 = vmax.xlane.f32.xlu0 %v4426
        %v4448 = vpop.xlane.xlu0 %4447
        %4449 = vmax.xlane.f32.xlu0 %v4427
        %v4450 = vpop.xlane.xlu0 %4449
        %4451 = vmax.xlane.f32.xlu0 %v4428
        %v4452 = vpop.xlane.xlu0 %4451
        %4453 = vmax.xlane.f32.xlu0 %v4429
        %v4454 = vpop.xlane.xlu0 %4453
        %4455 = vmax.xlane.f32.xlu0 %v4430
        %v4456 = vpop.xlane.xlu0 %4455
        %4457 = vmax.xlane.f32.xlu0 %v4431
        %v4458 = vpop.xlane.xlu0 %4457
        %4459 = vmax.xlane.f32.xlu0 %v4432
        %v4460 = vpop.xlane.xlu0 %4459
        %4461 = vmax.xlane.f32.xlu0 %v4433
        %v4462 = vpop.xlane.xlu0 %4461
        %4463 = vmax.xlane.f32.xlu0 %v4434
        %v4464 = vpop.xlane.xlu0 %4463
        %4465 = vmax.xlane.f32.xlu0 %v4435
        %v4466 = vpop.xlane.xlu0 %4465
        %4467 = vmax.xlane.f32.xlu0 %v4436
        %v4468 = vpop.xlane.xlu0 %4467
        %v4469 = vsub.f32 %v4421, %v4438
        %v4470 = vsub.f32 %v4422, %v4440
        %v4471 = vsub.f32 %v4423, %v4442
        %v4472 = vsub.f32 %v4424, %v4444
        %v4473 = vsub.f32 %v4425, %v4446
        %v4474 = vsub.f32 %v4426, %v4448
        %v4475 = vsub.f32 %v4427, %v4450
        %v4476 = vsub.f32 %v4428, %v4452
        %v4477 = vsub.f32 %v4429, %v4454
        %v4478 = vsub.f32 %v4430, %v4456
        %v4479 = vsub.f32 %v4431, %v4458
        %v4480 = vsub.f32 %v4432, %v4460
        %v4481 = vsub.f32 %v4433, %v4462
        %v4482 = vsub.f32 %v4434, %v4464
        %v4483 = vsub.f32 %v4435, %v4466
        %v4484 = vsub.f32 %v4436, %v4468
        %v4485 = vmul.f32 %v4469, 1.442695
        %v4486 = vpow.pop %v4485
        %v4487 = vmul.f32 %v4470, 1.442695
        %v4488 = vpow.pop %v4487
        %v4489 = vmul.f32 %v4471, 1.442695
        %v4490 = vpow.pop %v4489
        %v4491 = vmul.f32 %v4472, 1.442695
        %v4492 = vpow.pop %v4491
        %v4493 = vmul.f32 %v4473, 1.442695
        %v4494 = vpow.pop %v4493
        %v4495 = vmul.f32 %v4474, 1.442695
        %v4496 = vpow.pop %v4495
        %v4497 = vmul.f32 %v4475, 1.442695
        %v4498 = vpow.pop %v4497
        %v4499 = vmul.f32 %v4476, 1.442695
        %v4500 = vpow.pop %v4499
        %v4501 = vmul.f32 %v4477, 1.442695
        %v4502 = vpow.pop %v4501
        %v4503 = vmul.f32 %v4478, 1.442695
        %v4504 = vpow.pop %v4503
        %v4505 = vmul.f32 %v4479, 1.442695
        %v4506 = vpow.pop %v4505
        %v4507 = vmul.f32 %v4480, 1.442695
        %v4508 = vpow.pop %v4507
        %v4509 = vmul.f32 %v4481, 1.442695
        %v4510 = vpow.pop %v4509
        %v4511 = vmul.f32 %v4482, 1.442695
        %v4512 = vpow.pop %v4511
        %v4513 = vmul.f32 %v4483, 1.442695
        %v4514 = vpow.pop %v4513
        %v4515 = vmul.f32 %v4484, 1.442695
        %v4516 = vpow.pop %v4515
        %4517 = vmatpush.msra.mxu0 1.0
        %4518 = vmatpush.msra.mxu0 1.0
        %4519 = vmatpush.msra.mxu0 1.0
        %4520 = vmatpush.msra.mxu0 1.0
        %4521 = vmatpush.msra.mxu0 1.0
        %4522 = vmatpush.msra.mxu0 1.0
        %4523 = vmatpush.msra.mxu0 1.0
        %4524 = vmatpush.msra.mxu0 1.0
        %4525 = vmatpush.msra.mxu0 1.0
        %4526 = vmatpush.msra.mxu0 1.0
        %4527 = vmatpush.msra.mxu0 1.0
        %4528 = vmatpush.msra.mxu0 1.0
        %4529 = vmatpush.msra.mxu0 1.0
        %4530 = vmatpush.msra.mxu0 1.0
        %4531 = vmatpush.msra.mxu0 1.0
        %4532 = vmatpush.msra.mxu0 1.0
        %4533 = vmatmul.f32.gmra.mxu0 %v4486
        %v4534 = vpop.f32.mrf.mxu0
        %v4535 = vadd.f32 0.0, %v4534
        %4536 = vmatmul.f32.gmra.mxu0 %v4488
        %v4537 = vpop.f32.mrf.mxu0
        %v4538 = vadd.f32 0.0, %v4537
        %4539 = vmatmul.f32.gmra.mxu0 %v4490
        %v4540 = vpop.f32.mrf.mxu0
        %v4541 = vadd.f32 0.0, %v4540
        %4542 = vmatmul.f32.gmra.mxu0 %v4492
        %v4543 = vpop.f32.mrf.mxu0
        %v4544 = vadd.f32 0.0, %v4543
        %4545 = vmatmul.f32.gmra.mxu0 %v4494
        %v4546 = vpop.f32.mrf.mxu0
        %v4547 = vadd.f32 0.0, %v4546
        %4548 = vmatmul.f32.gmra.mxu0 %v4496
        %v4549 = vpop.f32.mrf.mxu0
        %v4550 = vadd.f32 0.0, %v4549
        %4551 = vmatmul.f32.gmra.mxu0 %v4498
        %v4552 = vpop.f32.mrf.mxu0
        %v4553 = vadd.f32 0.0, %v4552
        %4554 = vmatmul.f32.gmra.mxu0 %v4500
        %v4555 = vpop.f32.mrf.mxu0
        %v4556 = vadd.f32 0.0, %v4555
        %4557 = vmatmul.f32.gmra.mxu0 %v4502
        %v4558 = vpop.f32.mrf.mxu0
        %v4559 = vadd.f32 0.0, %v4558
        %4560 = vmatmul.f32.gmra.mxu0 %v4504
        %v4561 = vpop.f32.mrf.mxu0
        %v4562 = vadd.f32 0.0, %v4561
        %4563 = vmatmul.f32.gmra.mxu0 %v4506
        %v4564 = vpop.f32.mrf.mxu0
        %v4565 = vadd.f32 0.0, %v4564
        %4566 = vmatmul.f32.gmra.mxu0 %v4508
        %v4567 = vpop.f32.mrf.mxu0
        %v4568 = vadd.f32 0.0, %v4567
        %4569 = vmatmul.f32.gmra.mxu0 %v4510
        %v4570 = vpop.f32.mrf.mxu0
        %v4571 = vadd.f32 0.0, %v4570
        %4572 = vmatmul.f32.gmra.mxu0 %v4512
        %v4573 = vpop.f32.mrf.mxu0
        %v4574 = vadd.f32 0.0, %v4573
        %4575 = vmatmul.f32.gmra.mxu0 %v4514
        %v4576 = vpop.f32.mrf.mxu0
        %v4577 = vadd.f32 0.0, %v4576
        %4578 = vmatmul.f32.gmra.mxu0 %v4516
        %v4579 = vpop.f32.mrf.mxu0
        %v4580 = vadd.f32 0.0, %v4579
        %4581 = vdwg.mxu0
        %4598 = vrot.lane.b32.xlu0 %v3467, 64
        %v4599 = vpop.permute.xlu0 %4598
        %4600 = vrot.lane.b32.xlu0 %v3470, 64
        %v4601 = vpop.permute.xlu0 %4600
        %4602 = vrot.lane.b32.xlu0 %v3473, 64
        %v4603 = vpop.permute.xlu0 %4602
        %4604 = vrot.lane.b32.xlu0 %v3476, 64
        %v4605 = vpop.permute.xlu0 %4604
        %4606 = vrot.lane.b32.xlu0 %v3479, 64
        %v4607 = vpop.permute.xlu0 %4606
        %4608 = vrot.lane.b32.xlu0 %v3482, 64
        %v4609 = vpop.permute.xlu0 %4608
        %4610 = vrot.lane.b32.xlu0 %v3485, 64
        %v4611 = vpop.permute.xlu0 %4610
        %4612 = vrot.lane.b32.xlu0 %v3488, 64
        %v4613 = vpop.permute.xlu0 %4612
        %4614 = vrot.lane.b32.xlu0 %v3491, 64
        %v4615 = vpop.permute.xlu0 %4614
        %4616 = vrot.lane.b32.xlu0 %v3494, 64
        %v4617 = vpop.permute.xlu0 %4616
        %4618 = vrot.lane.b32.xlu0 %v3497, 64
        %v4619 = vpop.permute.xlu0 %4618
        %4620 = vrot.lane.b32.xlu0 %v3500, 64
        %v4621 = vpop.permute.xlu0 %4620
        %4622 = vrot.lane.b32.xlu0 %v3503, 64
        %v4623 = vpop.permute.xlu0 %4622
        %4624 = vrot.lane.b32.xlu0 %v3506, 64
        %v4625 = vpop.permute.xlu0 %4624
        %4626 = vrot.lane.b32.xlu0 %v3509, 64
        %v4627 = vpop.permute.xlu0 %4626
        %4628 = vrot.lane.b32.xlu0 %v3512, 64
        %v4629 = vpop.permute.xlu0 %4628
        %4646 = vmatpush.msra.mxu0 %v4629
        %4647 = vmatpush.msra.mxu0 %v4627
        %4648 = vmatpush.msra.mxu0 %v4625
        %4649 = vmatpush.msra.mxu0 %v4623
        %4650 = vmatpush.msra.mxu0 %v4621
        %4651 = vmatpush.msra.mxu0 %v4619
        %4652 = vmatpush.msra.mxu0 %v4617
        %4653 = vmatpush.msra.mxu0 %v4615
        %4654 = vmatpush.msra.mxu0 %v4613
        %4655 = vmatpush.msra.mxu0 %v4611
        %4656 = vmatpush.msra.mxu0 %v4609
        %4657 = vmatpush.msra.mxu0 %v4607
        %4658 = vmatpush.msra.mxu0 %v4605
        %4659 = vmatpush.msra.mxu0 %v4603
        %4660 = vmatpush.msra.mxu0 %v4601
        %4661 = vmatpush.msra.mxu0 %v4599
        %4662 = vmatmul.f32.gmra.mxu0 %v4486
        %v4663 = vpop.f32.mrf.mxu0
        %v4664 = vadd.f32 0.0, %v4663
        %4665 = vmatmul.f32.gmra.mxu0 %v4488
        %v4666 = vpop.f32.mrf.mxu0
        %v4667 = vadd.f32 0.0, %v4666
        %4668 = vmatmul.f32.gmra.mxu0 %v4490
        %v4669 = vpop.f32.mrf.mxu0
        %v4670 = vadd.f32 0.0, %v4669
        %4671 = vmatmul.f32.gmra.mxu0 %v4492
        %v4672 = vpop.f32.mrf.mxu0
        %v4673 = vadd.f32 0.0, %v4672
        %4674 = vmatmul.f32.gmra.mxu0 %v4494
        %v4675 = vpop.f32.mrf.mxu0
        %v4676 = vadd.f32 0.0, %v4675
        %4677 = vmatmul.f32.gmra.mxu0 %v4496
        %v4678 = vpop.f32.mrf.mxu0
        %v4679 = vadd.f32 0.0, %v4678
        %4680 = vmatmul.f32.gmra.mxu0 %v4498
        %v4681 = vpop.f32.mrf.mxu0
        %v4682 = vadd.f32 0.0, %v4681
        %4683 = vmatmul.f32.gmra.mxu0 %v4500
        %v4684 = vpop.f32.mrf.mxu0
        %v4685 = vadd.f32 0.0, %v4684
        %4686 = vmatmul.f32.gmra.mxu0 %v4502
        %v4687 = vpop.f32.mrf.mxu0
        %v4688 = vadd.f32 0.0, %v4687
        %4689 = vmatmul.f32.gmra.mxu0 %v4504
        %v4690 = vpop.f32.mrf.mxu0
        %v4691 = vadd.f32 0.0, %v4690
        %4692 = vmatmul.f32.gmra.mxu0 %v4506
        %v4693 = vpop.f32.mrf.mxu0
        %v4694 = vadd.f32 0.0, %v4693
        %4695 = vmatmul.f32.gmra.mxu0 %v4508
        %v4696 = vpop.f32.mrf.mxu0
        %v4697 = vadd.f32 0.0, %v4696
        %4698 = vmatmul.f32.gmra.mxu0 %v4510
        %v4699 = vpop.f32.mrf.mxu0
        %v4700 = vadd.f32 0.0, %v4699
        %4701 = vmatmul.f32.gmra.mxu0 %v4512
        %v4702 = vpop.f32.mrf.mxu0
        %v4703 = vadd.f32 0.0, %v4702
        %4704 = vmatmul.f32.gmra.mxu0 %v4514
        %v4705 = vpop.f32.mrf.mxu0
        %v4706 = vadd.f32 0.0, %v4705
        %4707 = vmatmul.f32.gmra.mxu0 %v4516
        %v4708 = vpop.f32.mrf.mxu0
        %v4709 = vadd.f32 0.0, %v4708
        %4710 = vdwg.mxu0
        %v4711 = vrcp.pop %v4535
        %v4712 = vrcp.pop %v4538
        %v4713 = vrcp.pop %v4541
        %v4714 = vrcp.pop %v4544
        %v4715 = vrcp.pop %v4547
        %v4716 = vrcp.pop %v4550
        %v4717 = vrcp.pop %v4553
        %v4718 = vrcp.pop %v4556
        %v4719 = vrcp.pop %v4559
        %v4720 = vrcp.pop %v4562
        %v4721 = vrcp.pop %v4565
        %v4722 = vrcp.pop %v4568
        %v4723 = vrcp.pop %v4571
        %v4724 = vrcp.pop %v4574
        %v4725 = vrcp.pop %v4577
        %v4726 = vrcp.pop %v4580
        %4728 = vset.pattern.permute.xlu0 0
        %4729 = vperm.xlu0 %4728, %v4711
        %v4730 = vpop.permute.xlu0 %4729
        %4733 = vset.pattern.permute.xlu0 0
        %4734 = vperm.xlu0 %4733, %v4712
        %v4735 = vpop.permute.xlu0 %4734
        %4738 = vset.pattern.permute.xlu0 0
        %4739 = vperm.xlu0 %4738, %v4713
        %v4740 = vpop.permute.xlu0 %4739
        %4743 = vset.pattern.permute.xlu0 0
        %4744 = vperm.xlu0 %4743, %v4714
        %v4745 = vpop.permute.xlu0 %4744
        %4748 = vset.pattern.permute.xlu0 0
        %4749 = vperm.xlu0 %4748, %v4715
        %v4750 = vpop.permute.xlu0 %4749
        %4753 = vset.pattern.permute.xlu0 0
        %4754 = vperm.xlu0 %4753, %v4716
        %v4755 = vpop.permute.xlu0 %4754
        %4758 = vset.pattern.permute.xlu0 0
        %4759 = vperm.xlu0 %4758, %v4717
        %v4760 = vpop.permute.xlu0 %4759
        %4763 = vset.pattern.permute.xlu0 0
        %4764 = vperm.xlu0 %4763, %v4718
        %v4765 = vpop.permute.xlu0 %4764
        %4768 = vset.pattern.permute.xlu0 0
        %4769 = vperm.xlu0 %4768, %v4719
        %v4770 = vpop.permute.xlu0 %4769
        %4773 = vset.pattern.permute.xlu0 0
        %4774 = vperm.xlu0 %4773, %v4720
        %v4775 = vpop.permute.xlu0 %4774
        %4778 = vset.pattern.permute.xlu0 0
        %4779 = vperm.xlu0 %4778, %v4721
        %v4780 = vpop.permute.xlu0 %4779
        %4783 = vset.pattern.permute.xlu0 0
        %4784 = vperm.xlu0 %4783, %v4722
        %v4785 = vpop.permute.xlu0 %4784
        %4788 = vset.pattern.permute.xlu0 0
        %4789 = vperm.xlu0 %4788, %v4723
        %v4790 = vpop.permute.xlu0 %4789
        %4793 = vset.pattern.permute.xlu0 0
        %4794 = vperm.xlu0 %4793, %v4724
        %v4795 = vpop.permute.xlu0 %4794
        %4798 = vset.pattern.permute.xlu0 0
        %4799 = vperm.xlu0 %4798, %v4725
        %v4800 = vpop.permute.xlu0 %4799
        %4803 = vset.pattern.permute.xlu0 0
        %4804 = vperm.xlu0 %4803, %v4726
        %v4805 = vpop.permute.xlu0 %4804
        %v4807 = vmul.f32 %v4664, %v4730
        %v4808 = vmul.f32 %v4667, %v4735
        %v4809 = vmul.f32 %v4670, %v4740
        %v4810 = vmul.f32 %v4673, %v4745
        %v4811 = vmul.f32 %v4676, %v4750
        %v4812 = vmul.f32 %v4679, %v4755
        %v4813 = vmul.f32 %v4682, %v4760
        %v4814 = vmul.f32 %v4685, %v4765
        %v4815 = vmul.f32 %v4688, %v4770
        %v4816 = vmul.f32 %v4691, %v4775
        %v4817 = vmul.f32 %v4694, %v4780
        %v4818 = vmul.f32 %v4697, %v4785
        %v4819 = vmul.f32 %v4700, %v4790
        %v4820 = vmul.f32 %v4703, %v4795
        %v4821 = vmul.f32 %v4706, %v4800
        %v4822 = vmul.f32 %v4709, %v4805
        %v4823 = vadd.f32 %v4258, %v4807
        %v4824 = vadd.f32 %v4259, %v4808
        %v4825 = vadd.f32 %v4260, %v4809
        %v4826 = vadd.f32 %v4261, %v4810
        %v4827 = vadd.f32 %v4262, %v4811
        %v4828 = vadd.f32 %v4263, %v4812
        %v4829 = vadd.f32 %v4264, %v4813
        %v4830 = vadd.f32 %v4265, %v4814
        %v4831 = vadd.f32 %v4266, %v4815
        %v4832 = vadd.f32 %v4267, %v4816
        %v4833 = vadd.f32 %v4268, %v4817
        %v4834 = vadd.f32 %v4269, %v4818
        %v4835 = vadd.f32 %v4270, %v4819
        %v4836 = vadd.f32 %v4271, %v4820
        %v4837 = vadd.f32 %v4272, %v4821
        %v4838 = vadd.f32 %v4273, %v4822
        %s4839 = sld [smem:[#allocation2 + $0x6]]
        %4840 = vset.pattern.permute.xlu0 6
        %4841 = vperm.xlu0 %4840, %v3694
        %v4842 = vpop.permute.xlu0 %4841
        %4844 = vset.pattern.permute.xlu0 6
        %4845 = vperm.xlu0 %4844, %v3697
        %v4846 = vpop.permute.xlu0 %4845
        %4848 = vset.pattern.permute.xlu0 6
        %4849 = vperm.xlu0 %4848, %v3700
        %v4850 = vpop.permute.xlu0 %4849
        %4852 = vset.pattern.permute.xlu0 6
        %4853 = vperm.xlu0 %4852, %v3703
        %v4854 = vpop.permute.xlu0 %4853
        %4856 = vset.pattern.permute.xlu0 6
        %4857 = vperm.xlu0 %4856, %v3706
        %v4858 = vpop.permute.xlu0 %4857
        %4860 = vset.pattern.permute.xlu0 6
        %4861 = vperm.xlu0 %4860, %v3709
        %v4862 = vpop.permute.xlu0 %4861
        %4864 = vset.pattern.permute.xlu0 6
        %4865 = vperm.xlu0 %4864, %v3712
        %v4866 = vpop.permute.xlu0 %4865
        %4868 = vset.pattern.permute.xlu0 6
        %4869 = vperm.xlu0 %4868, %v3715
        %v4870 = vpop.permute.xlu0 %4869
        %4872 = vset.pattern.permute.xlu0 6
        %4873 = vperm.xlu0 %4872, %v3718
        %v4874 = vpop.permute.xlu0 %4873
        %4876 = vset.pattern.permute.xlu0 6
        %4877 = vperm.xlu0 %4876, %v3721
        %v4878 = vpop.permute.xlu0 %4877
        %4880 = vset.pattern.permute.xlu0 6
        %4881 = vperm.xlu0 %4880, %v3724
        %v4882 = vpop.permute.xlu0 %4881
        %4884 = vset.pattern.permute.xlu0 6
        %4885 = vperm.xlu0 %4884, %v3727
        %v4886 = vpop.permute.xlu0 %4885
        %4888 = vset.pattern.permute.xlu0 6
        %4889 = vperm.xlu0 %4888, %v3730
        %v4890 = vpop.permute.xlu0 %4889
        %4892 = vset.pattern.permute.xlu0 6
        %4893 = vperm.xlu0 %4892, %v3733
        %v4894 = vpop.permute.xlu0 %4893
        %4896 = vset.pattern.permute.xlu0 6
        %4897 = vperm.xlu0 %4896, %v3736
        %v4898 = vpop.permute.xlu0 %4897
        %4900 = vset.pattern.permute.xlu0 6
        %4901 = vperm.xlu0 %4900, %v3739
        %v4902 = vpop.permute.xlu0 %4901
        %v4904 = vperm.slane %v3757, 2
        %v4905 = vadd.f32 %v4842, %v4904
        %v4906 = vadd.f32 %v4846, %v4904
        %v4907 = vadd.f32 %v4850, %v4904
        %v4908 = vadd.f32 %v4854, %v4904
        %v4909 = vadd.f32 %v4858, %v4904
        %v4910 = vadd.f32 %v4862, %v4904
        %v4911 = vadd.f32 %v4866, %v4904
        %v4912 = vadd.f32 %v4870, %v4904
        %v4913 = vadd.f32 %v4874, %v4904
        %v4914 = vadd.f32 %v4878, %v4904
        %v4915 = vadd.f32 %v4882, %v4904
        %v4916 = vadd.f32 %v4886, %v4904
        %v4917 = vadd.f32 %v4890, %v4904
        %v4918 = vadd.f32 %v4894, %v4904
        %v4919 = vadd.f32 %v4898, %v4904
        %v4920 = vadd.f32 %v4902, %v4904
        %v4921 = vstv %s4839
        %v4922 = vmul.f32 %v4921, %v318
        %v4923 = vmul.f32 %v4921, %v319
        %v4924 = vmul.f32 %v4921, %v320
        %v4925 = vmul.f32 %v4921, %v321
        %v4926 = vmul.f32 %v4921, %v322
        %v4927 = vmul.f32 %v4921, %v323
        %v4928 = vmul.f32 %v4921, %v324
        %v4929 = vmul.f32 %v4921, %v325
        %v4930 = vmul.f32 %v4921, %v326
        %v4931 = vmul.f32 %v4921, %v327
        %v4932 = vmul.f32 %v4921, %v328
        %v4933 = vmul.f32 %v4921, %v329
        %v4934 = vmul.f32 %v4921, %v330
        %v4935 = vmul.f32 %v4921, %v331
        %v4936 = vmul.f32 %v4921, %v332
        %v4937 = vmul.f32 %v4921, %v333
        %v4938 = vadd.f32 %v4905, %v4922
        %v4939 = vadd.f32 %v4906, %v4923
        %v4940 = vadd.f32 %v4907, %v4924
        %v4941 = vadd.f32 %v4908, %v4925
        %v4942 = vadd.f32 %v4909, %v4926
        %v4943 = vadd.f32 %v4910, %v4927
        %v4944 = vadd.f32 %v4911, %v4928
        %v4945 = vadd.f32 %v4912, %v4929
        %v4946 = vadd.f32 %v4913, %v4930
        %v4947 = vadd.f32 %v4914, %v4931
        %v4948 = vadd.f32 %v4915, %v4932
        %v4949 = vadd.f32 %v4916, %v4933
        %v4950 = vadd.f32 %v4917, %v4934
        %v4951 = vadd.f32 %v4918, %v4935
        %v4952 = vadd.f32 %v4919, %v4936
        %v4953 = vadd.f32 %v4920, %v4937
        %v4954 = vmul.f32 %v4938, 0.2
        %v4955 = vmul.f32 %v4939, 0.2
        %v4956 = vmul.f32 %v4940, 0.2
        %v4957 = vmul.f32 %v4941, 0.2
        %v4958 = vmul.f32 %v4942, 0.2
        %v4959 = vmul.f32 %v4943, 0.2
        %v4960 = vmul.f32 %v4944, 0.2
        %v4961 = vmul.f32 %v4945, 0.2
        %v4962 = vmul.f32 %v4946, 0.2
        %v4963 = vmul.f32 %v4947, 0.2
        %v4964 = vmul.f32 %v4948, 0.2
        %v4965 = vmul.f32 %v4949, 0.2
        %v4966 = vmul.f32 %v4950, 0.2
        %v4967 = vmul.f32 %v4951, 0.2
        %v4968 = vmul.f32 %v4952, 0.2
        %v4969 = vmul.f32 %v4953, 0.2
        %v4970 = vmax.f32 %v4938, %v4954
        %v4971 = vmax.f32 %v4939, %v4955
        %v4972 = vmax.f32 %v4940, %v4956
        %v4973 = vmax.f32 %v4941, %v4957
        %v4974 = vmax.f32 %v4942, %v4958
        %v4975 = vmax.f32 %v4943, %v4959
        %v4976 = vmax.f32 %v4944, %v4960
        %v4977 = vmax.f32 %v4945, %v4961
        %v4978 = vmax.f32 %v4946, %v4962
        %v4979 = vmax.f32 %v4947, %v4963
        %v4980 = vmax.f32 %v4948, %v4964
        %v4981 = vmax.f32 %v4949, %v4965
        %v4982 = vmax.f32 %v4950, %v4966
        %v4983 = vmax.f32 %v4951, %v4967
        %v4984 = vmax.f32 %v4952, %v4968
        %v4985 = vmax.f32 %v4953, %v4969
        %v4986 = vadd.f32 %v4970, %v302
        %v4987 = vadd.f32 %v4971, %v303
        %v4988 = vadd.f32 %v4972, %v304
        %v4989 = vadd.f32 %v4973, %v305
        %v4990 = vadd.f32 %v4974, %v306
        %v4991 = vadd.f32 %v4975, %v307
        %v4992 = vadd.f32 %v4976, %v308
        %v4993 = vadd.f32 %v4977, %v309
        %v4994 = vadd.f32 %v4978, %v310
        %v4995 = vadd.f32 %v4979, %v311
        %v4996 = vadd.f32 %v4980, %v312
        %v4997 = vadd.f32 %v4981, %v313
        %v4998 = vadd.f32 %v4982, %v314
        %v4999 = vadd.f32 %v4983, %v315
        %v5000 = vadd.f32 %v4984, %v316
        %v5001 = vadd.f32 %v4985, %v317
        %5002 = vmax.xlane.f32.xlu0 %v4986
        %v5003 = vpop.xlane.xlu0 %5002
        %5004 = vmax.xlane.f32.xlu0 %v4987
        %v5005 = vpop.xlane.xlu0 %5004
        %5006 = vmax.xlane.f32.xlu0 %v4988
        %v5007 = vpop.xlane.xlu0 %5006
        %5008 = vmax.xlane.f32.xlu0 %v4989
        %v5009 = vpop.xlane.xlu0 %5008
        %5010 = vmax.xlane.f32.xlu0 %v4990
        %v5011 = vpop.xlane.xlu0 %5010
        %5012 = vmax.xlane.f32.xlu0 %v4991
        %v5013 = vpop.xlane.xlu0 %5012
        %5014 = vmax.xlane.f32.xlu0 %v4992
        %v5015 = vpop.xlane.xlu0 %5014
        %5016 = vmax.xlane.f32.xlu0 %v4993
        %v5017 = vpop.xlane.xlu0 %5016
        %5018 = vmax.xlane.f32.xlu0 %v4994
        %v5019 = vpop.xlane.xlu0 %5018
        %5020 = vmax.xlane.f32.xlu0 %v4995
        %v5021 = vpop.xlane.xlu0 %5020
        %5022 = vmax.xlane.f32.xlu0 %v4996
        %v5023 = vpop.xlane.xlu0 %5022
        %5024 = vmax.xlane.f32.xlu0 %v4997
        %v5025 = vpop.xlane.xlu0 %5024
        %5026 = vmax.xlane.f32.xlu0 %v4998
        %v5027 = vpop.xlane.xlu0 %5026
        %5028 = vmax.xlane.f32.xlu0 %v4999
        %v5029 = vpop.xlane.xlu0 %5028
        %5030 = vmax.xlane.f32.xlu0 %v5000
        %v5031 = vpop.xlane.xlu0 %5030
        %5032 = vmax.xlane.f32.xlu0 %v5001
        %v5033 = vpop.xlane.xlu0 %5032
        %v5034 = vsub.f32 %v4986, %v5003
        %v5035 = vsub.f32 %v4987, %v5005
        %v5036 = vsub.f32 %v4988, %v5007
        %v5037 = vsub.f32 %v4989, %v5009
        %v5038 = vsub.f32 %v4990, %v5011
        %v5039 = vsub.f32 %v4991, %v5013
        %v5040 = vsub.f32 %v4992, %v5015
        %v5041 = vsub.f32 %v4993, %v5017
        %v5042 = vsub.f32 %v4994, %v5019
        %v5043 = vsub.f32 %v4995, %v5021
        %v5044 = vsub.f32 %v4996, %v5023
        %v5045 = vsub.f32 %v4997, %v5025
        %v5046 = vsub.f32 %v4998, %v5027
        %v5047 = vsub.f32 %v4999, %v5029
        %v5048 = vsub.f32 %v5000, %v5031
        %v5049 = vsub.f32 %v5001, %v5033
        %v5050 = vmul.f32 %v5034, 1.442695
        %v5051 = vpow.pop %v5050
        %v5052 = vmul.f32 %v5035, 1.442695
        %v5053 = vpow.pop %v5052
        %v5054 = vmul.f32 %v5036, 1.442695
        %v5055 = vpow.pop %v5054
        %v5056 = vmul.f32 %v5037, 1.442695
        %v5057 = vpow.pop %v5056
        %v5058 = vmul.f32 %v5038, 1.442695
        %v5059 = vpow.pop %v5058
        %v5060 = vmul.f32 %v5039, 1.442695
        %v5061 = vpow.pop %v5060
        %v5062 = vmul.f32 %v5040, 1.442695
        %v5063 = vpow.pop %v5062
        %v5064 = vmul.f32 %v5041, 1.442695
        %v5065 = vpow.pop %v5064
        %v5066 = vmul.f32 %v5042, 1.442695
        %v5067 = vpow.pop %v5066
        %v5068 = vmul.f32 %v5043, 1.442695
        %v5069 = vpow.pop %v5068
        %v5070 = vmul.f32 %v5044, 1.442695
        %v5071 = vpow.pop %v5070
        %v5072 = vmul.f32 %v5045, 1.442695
        %v5073 = vpow.pop %v5072
        %v5074 = vmul.f32 %v5046, 1.442695
        %v5075 = vpow.pop %v5074
        %v5076 = vmul.f32 %v5047, 1.442695
        %v5077 = vpow.pop %v5076
        %v5078 = vmul.f32 %v5048, 1.442695
        %v5079 = vpow.pop %v5078
        %v5080 = vmul.f32 %v5049, 1.442695
        %v5081 = vpow.pop %v5080
        %5082 = vmatpush.msra.mxu0 1.0
        %5083 = vmatpush.msra.mxu0 1.0
        %5084 = vmatpush.msra.mxu0 1.0
        %5085 = vmatpush.msra.mxu0 1.0
        %5086 = vmatpush.msra.mxu0 1.0
        %5087 = vmatpush.msra.mxu0 1.0
        %5088 = vmatpush.msra.mxu0 1.0
        %5089 = vmatpush.msra.mxu0 1.0
        %5090 = vmatpush.msra.mxu0 1.0
        %5091 = vmatpush.msra.mxu0 1.0
        %5092 = vmatpush.msra.mxu0 1.0
        %5093 = vmatpush.msra.mxu0 1.0
        %5094 = vmatpush.msra.mxu0 1.0
        %5095 = vmatpush.msra.mxu0 1.0
        %5096 = vmatpush.msra.mxu0 1.0
        %5097 = vmatpush.msra.mxu0 1.0
        %5098 = vmatmul.f32.gmra.mxu0 %v5051
        %v5099 = vpop.f32.mrf.mxu0
        %v5100 = vadd.f32 0.0, %v5099
        %5101 = vmatmul.f32.gmra.mxu0 %v5053
        %v5102 = vpop.f32.mrf.mxu0
        %v5103 = vadd.f32 0.0, %v5102
        %5104 = vmatmul.f32.gmra.mxu0 %v5055
        %v5105 = vpop.f32.mrf.mxu0
        %v5106 = vadd.f32 0.0, %v5105
        %5107 = vmatmul.f32.gmra.mxu0 %v5057
        %v5108 = vpop.f32.mrf.mxu0
        %v5109 = vadd.f32 0.0, %v5108
        %5110 = vmatmul.f32.gmra.mxu0 %v5059
        %v5111 = vpop.f32.mrf.mxu0
        %v5112 = vadd.f32 0.0, %v5111
        %5113 = vmatmul.f32.gmra.mxu0 %v5061
        %v5114 = vpop.f32.mrf.mxu0
        %v5115 = vadd.f32 0.0, %v5114
        %5116 = vmatmul.f32.gmra.mxu0 %v5063
        %v5117 = vpop.f32.mrf.mxu0
        %v5118 = vadd.f32 0.0, %v5117
        %5119 = vmatmul.f32.gmra.mxu0 %v5065
        %v5120 = vpop.f32.mrf.mxu0
        %v5121 = vadd.f32 0.0, %v5120
        %5122 = vmatmul.f32.gmra.mxu0 %v5067
        %v5123 = vpop.f32.mrf.mxu0
        %v5124 = vadd.f32 0.0, %v5123
        %5125 = vmatmul.f32.gmra.mxu0 %v5069
        %v5126 = vpop.f32.mrf.mxu0
        %v5127 = vadd.f32 0.0, %v5126
        %5128 = vmatmul.f32.gmra.mxu0 %v5071
        %v5129 = vpop.f32.mrf.mxu0
        %v5130 = vadd.f32 0.0, %v5129
        %5131 = vmatmul.f32.gmra.mxu0 %v5073
        %v5132 = vpop.f32.mrf.mxu0
        %v5133 = vadd.f32 0.0, %v5132
        %5134 = vmatmul.f32.gmra.mxu0 %v5075
        %v5135 = vpop.f32.mrf.mxu0
        %v5136 = vadd.f32 0.0, %v5135
        %5137 = vmatmul.f32.gmra.mxu0 %v5077
        %v5138 = vpop.f32.mrf.mxu0
        %v5139 = vadd.f32 0.0, %v5138
        %5140 = vmatmul.f32.gmra.mxu0 %v5079
        %v5141 = vpop.f32.mrf.mxu0
        %v5142 = vadd.f32 0.0, %v5141
        %5143 = vmatmul.f32.gmra.mxu0 %v5081
        %v5144 = vpop.f32.mrf.mxu0
        %v5145 = vadd.f32 0.0, %v5144
        %5146 = vdwg.mxu0
        %5147 = vmatpush.msra.mxu0 %v3577
        %5148 = vmatpush.msra.mxu0 %v3574
        %5149 = vmatpush.msra.mxu0 %v3571
        %5150 = vmatpush.msra.mxu0 %v3568
        %5151 = vmatpush.msra.mxu0 %v3565
        %5152 = vmatpush.msra.mxu0 %v3562
        %5153 = vmatpush.msra.mxu0 %v3559
        %5154 = vmatpush.msra.mxu0 %v3556
        %5155 = vmatpush.msra.mxu0 %v3553
        %5156 = vmatpush.msra.mxu0 %v3550
        %5157 = vmatpush.msra.mxu0 %v3547
        %5158 = vmatpush.msra.mxu0 %v3544
        %5159 = vmatpush.msra.mxu0 %v3541
        %5160 = vmatpush.msra.mxu0 %v3538
        %5161 = vmatpush.msra.mxu0 %v3535
        %5162 = vmatpush.msra.mxu0 %v3532
        %5163 = vmatmul.f32.gmra.mxu0 %v5051
        %v5164 = vpop.f32.mrf.mxu0
        %v5165 = vadd.f32 0.0, %v5164
        %5166 = vmatmul.f32.gmra.mxu0 %v5053
        %v5167 = vpop.f32.mrf.mxu0
        %v5168 = vadd.f32 0.0, %v5167
        %5169 = vmatmul.f32.gmra.mxu0 %v5055
        %v5170 = vpop.f32.mrf.mxu0
        %v5171 = vadd.f32 0.0, %v5170
        %5172 = vmatmul.f32.gmra.mxu0 %v5057
        %v5173 = vpop.f32.mrf.mxu0
        %v5174 = vadd.f32 0.0, %v5173
        %5175 = vmatmul.f32.gmra.mxu0 %v5059
        %v5176 = vpop.f32.mrf.mxu0
        %v5177 = vadd.f32 0.0, %v5176
        %5178 = vmatmul.f32.gmra.mxu0 %v5061
        %v5179 = vpop.f32.mrf.mxu0
        %v5180 = vadd.f32 0.0, %v5179
        %5181 = vmatmul.f32.gmra.mxu0 %v5063
        %v5182 = vpop.f32.mrf.mxu0
        %v5183 = vadd.f32 0.0, %v5182
        %5184 = vmatmul.f32.gmra.mxu0 %v5065
        %v5185 = vpop.f32.mrf.mxu0
        %v5186 = vadd.f32 0.0, %v5185
        %5187 = vmatmul.f32.gmra.mxu0 %v5067
        %v5188 = vpop.f32.mrf.mxu0
        %v5189 = vadd.f32 0.0, %v5188
        %5190 = vmatmul.f32.gmra.mxu0 %v5069
        %v5191 = vpop.f32.mrf.mxu0
        %v5192 = vadd.f32 0.0, %v5191
        %5193 = vmatmul.f32.gmra.mxu0 %v5071
        %v5194 = vpop.f32.mrf.mxu0
        %v5195 = vadd.f32 0.0, %v5194
        %5196 = vmatmul.f32.gmra.mxu0 %v5073
        %v5197 = vpop.f32.mrf.mxu0
        %v5198 = vadd.f32 0.0, %v5197
        %5199 = vmatmul.f32.gmra.mxu0 %v5075
        %v5200 = vpop.f32.mrf.mxu0
        %v5201 = vadd.f32 0.0, %v5200
        %5202 = vmatmul.f32.gmra.mxu0 %v5077
        %v5203 = vpop.f32.mrf.mxu0
        %v5204 = vadd.f32 0.0, %v5203
        %5205 = vmatmul.f32.gmra.mxu0 %v5079
        %v5206 = vpop.f32.mrf.mxu0
        %v5207 = vadd.f32 0.0, %v5206
        %5208 = vmatmul.f32.gmra.mxu0 %v5081
        %v5209 = vpop.f32.mrf.mxu0
        %v5210 = vadd.f32 0.0, %v5209
        %5211 = vdwg.mxu0
        %v5212 = vrcp.pop %v5100
        %v5213 = vrcp.pop %v5103
        %v5214 = vrcp.pop %v5106
        %v5215 = vrcp.pop %v5109
        %v5216 = vrcp.pop %v5112
        %v5217 = vrcp.pop %v5115
        %v5218 = vrcp.pop %v5118
        %v5219 = vrcp.pop %v5121
        %v5220 = vrcp.pop %v5124
        %v5221 = vrcp.pop %v5127
        %v5222 = vrcp.pop %v5130
        %v5223 = vrcp.pop %v5133
        %v5224 = vrcp.pop %v5136
        %v5225 = vrcp.pop %v5139
        %v5226 = vrcp.pop %v5142
        %v5227 = vrcp.pop %v5145
        %5229 = vset.pattern.permute.xlu0 0
        %5230 = vperm.xlu0 %5229, %v5212
        %v5231 = vpop.permute.xlu0 %5230
        %5234 = vset.pattern.permute.xlu0 0
        %5235 = vperm.xlu0 %5234, %v5213
        %v5236 = vpop.permute.xlu0 %5235
        %5239 = vset.pattern.permute.xlu0 0
        %5240 = vperm.xlu0 %5239, %v5214
        %v5241 = vpop.permute.xlu0 %5240
        %5244 = vset.pattern.permute.xlu0 0
        %5245 = vperm.xlu0 %5244, %v5215
        %v5246 = vpop.permute.xlu0 %5245
        %5249 = vset.pattern.permute.xlu0 0
        %5250 = vperm.xlu0 %5249, %v5216
        %v5251 = vpop.permute.xlu0 %5250
        %5254 = vset.pattern.permute.xlu0 0
        %5255 = vperm.xlu0 %5254, %v5217
        %v5256 = vpop.permute.xlu0 %5255
        %5259 = vset.pattern.permute.xlu0 0
        %5260 = vperm.xlu0 %5259, %v5218
        %v5261 = vpop.permute.xlu0 %5260
        %5264 = vset.pattern.permute.xlu0 0
        %5265 = vperm.xlu0 %5264, %v5219
        %v5266 = vpop.permute.xlu0 %5265
        %5269 = vset.pattern.permute.xlu0 0
        %5270 = vperm.xlu0 %5269, %v5220
        %v5271 = vpop.permute.xlu0 %5270
        %5274 = vset.pattern.permute.xlu0 0
        %5275 = vperm.xlu0 %5274, %v5221
        %v5276 = vpop.permute.xlu0 %5275
        %5279 = vset.pattern.permute.xlu0 0
        %5280 = vperm.xlu0 %5279, %v5222
        %v5281 = vpop.permute.xlu0 %5280
        %5284 = vset.pattern.permute.xlu0 0
        %5285 = vperm.xlu0 %5284, %v5223
        %v5286 = vpop.permute.xlu0 %5285
        %5289 = vset.pattern.permute.xlu0 0
        %5290 = vperm.xlu0 %5289, %v5224
        %v5291 = vpop.permute.xlu0 %5290
        %5294 = vset.pattern.permute.xlu0 0
        %5295 = vperm.xlu0 %5294, %v5225
        %v5296 = vpop.permute.xlu0 %5295
        %5299 = vset.pattern.permute.xlu0 0
        %5300 = vperm.xlu0 %5299, %v5226
        %v5301 = vpop.permute.xlu0 %5300
        %5304 = vset.pattern.permute.xlu0 0
        %5305 = vperm.xlu0 %5304, %v5227
        %v5306 = vpop.permute.xlu0 %5305
        %v5308 = vmul.f32 %v5165, %v5231
        %v5309 = vmul.f32 %v5168, %v5236
        %v5310 = vmul.f32 %v5171, %v5241
        %v5311 = vmul.f32 %v5174, %v5246
        %v5312 = vmul.f32 %v5177, %v5251
        %v5313 = vmul.f32 %v5180, %v5256
        %v5314 = vmul.f32 %v5183, %v5261
        %v5315 = vmul.f32 %v5186, %v5266
        %v5316 = vmul.f32 %v5189, %v5271
        %v5317 = vmul.f32 %v5192, %v5276
        %v5318 = vmul.f32 %v5195, %v5281
        %v5319 = vmul.f32 %v5198, %v5286
        %v5320 = vmul.f32 %v5201, %v5291
        %v5321 = vmul.f32 %v5204, %v5296
        %v5322 = vmul.f32 %v5207, %v5301
        %v5323 = vmul.f32 %v5210, %v5306
        %v5324 = vadd.f32 %v4823, %v5308
        %v5325 = vadd.f32 %v4824, %v5309
        %v5326 = vadd.f32 %v4825, %v5310
        %v5327 = vadd.f32 %v4826, %v5311
        %v5328 = vadd.f32 %v4827, %v5312
        %v5329 = vadd.f32 %v4828, %v5313
        %v5330 = vadd.f32 %v4829, %v5314
        %v5331 = vadd.f32 %v4830, %v5315
        %v5332 = vadd.f32 %v4831, %v5316
        %v5333 = vadd.f32 %v4832, %v5317
        %v5334 = vadd.f32 %v4833, %v5318
        %v5335 = vadd.f32 %v4834, %v5319
        %v5336 = vadd.f32 %v4835, %v5320
        %v5337 = vadd.f32 %v4836, %v5321
        %v5338 = vadd.f32 %v4837, %v5322
        %v5339 = vadd.f32 %v4838, %v5323
        %s5340 = sld [smem:[#allocation2 + $0x7]]
        %5341 = vset.pattern.permute.xlu0 7
        %5342 = vperm.xlu0 %5341, %v3694
        %v5343 = vpop.permute.xlu0 %5342
        %5345 = vset.pattern.permute.xlu0 7
        %5346 = vperm.xlu0 %5345, %v3697
        %v5347 = vpop.permute.xlu0 %5346
        %5349 = vset.pattern.permute.xlu0 7
        %5350 = vperm.xlu0 %5349, %v3700
        %v5351 = vpop.permute.xlu0 %5350
        %5353 = vset.pattern.permute.xlu0 7
        %5354 = vperm.xlu0 %5353, %v3703
        %v5355 = vpop.permute.xlu0 %5354
        %5357 = vset.pattern.permute.xlu0 7
        %5358 = vperm.xlu0 %5357, %v3706
        %v5359 = vpop.permute.xlu0 %5358
        %5361 = vset.pattern.permute.xlu0 7
        %5362 = vperm.xlu0 %5361, %v3709
        %v5363 = vpop.permute.xlu0 %5362
        %5365 = vset.pattern.permute.xlu0 7
        %5366 = vperm.xlu0 %5365, %v3712
        %v5367 = vpop.permute.xlu0 %5366
        %5369 = vset.pattern.permute.xlu0 7
        %5370 = vperm.xlu0 %5369, %v3715
        %v5371 = vpop.permute.xlu0 %5370
        %5373 = vset.pattern.permute.xlu0 7
        %5374 = vperm.xlu0 %5373, %v3718
        %v5375 = vpop.permute.xlu0 %5374
        %5377 = vset.pattern.permute.xlu0 7
        %5378 = vperm.xlu0 %5377, %v3721
        %v5379 = vpop.permute.xlu0 %5378
        %5381 = vset.pattern.permute.xlu0 7
        %5382 = vperm.xlu0 %5381, %v3724
        %v5383 = vpop.permute.xlu0 %5382
        %5385 = vset.pattern.permute.xlu0 7
        %5386 = vperm.xlu0 %5385, %v3727
        %v5387 = vpop.permute.xlu0 %5386
        %5389 = vset.pattern.permute.xlu0 7
        %5390 = vperm.xlu0 %5389, %v3730
        %v5391 = vpop.permute.xlu0 %5390
        %5393 = vset.pattern.permute.xlu0 7
        %5394 = vperm.xlu0 %5393, %v3733
        %v5395 = vpop.permute.xlu0 %5394
        %5397 = vset.pattern.permute.xlu0 7
        %5398 = vperm.xlu0 %5397, %v3736
        %v5399 = vpop.permute.xlu0 %5398
        %5401 = vset.pattern.permute.xlu0 7
        %5402 = vperm.xlu0 %5401, %v3739
        %v5403 = vpop.permute.xlu0 %5402
        %v5405 = vperm.slane %v3757, 3
        %v5406 = vadd.f32 %v5343, %v5405
        %v5407 = vadd.f32 %v5347, %v5405
        %v5408 = vadd.f32 %v5351, %v5405
        %v5409 = vadd.f32 %v5355, %v5405
        %v5410 = vadd.f32 %v5359, %v5405
        %v5411 = vadd.f32 %v5363, %v5405
        %v5412 = vadd.f32 %v5367, %v5405
        %v5413 = vadd.f32 %v5371, %v5405
        %v5414 = vadd.f32 %v5375, %v5405
        %v5415 = vadd.f32 %v5379, %v5405
        %v5416 = vadd.f32 %v5383, %v5405
        %v5417 = vadd.f32 %v5387, %v5405
        %v5418 = vadd.f32 %v5391, %v5405
        %v5419 = vadd.f32 %v5395, %v5405
        %v5420 = vadd.f32 %v5399, %v5405
        %v5421 = vadd.f32 %v5403, %v5405
        %v5422 = vstv %s5340
        %v5423 = vmul.f32 %v5422, %v318
        %v5424 = vmul.f32 %v5422, %v319
        %v5425 = vmul.f32 %v5422, %v320
        %v5426 = vmul.f32 %v5422, %v321
        %v5427 = vmul.f32 %v5422, %v322
        %v5428 = vmul.f32 %v5422, %v323
        %v5429 = vmul.f32 %v5422, %v324
        %v5430 = vmul.f32 %v5422, %v325
        %v5431 = vmul.f32 %v5422, %v326
        %v5432 = vmul.f32 %v5422, %v327
        %v5433 = vmul.f32 %v5422, %v328
        %v5434 = vmul.f32 %v5422, %v329
        %v5435 = vmul.f32 %v5422, %v330
        %v5436 = vmul.f32 %v5422, %v331
        %v5437 = vmul.f32 %v5422, %v332
        %v5438 = vmul.f32 %v5422, %v333
        %v5439 = vadd.f32 %v5406, %v5423
        %v5440 = vadd.f32 %v5407, %v5424
        %v5441 = vadd.f32 %v5408, %v5425
        %v5442 = vadd.f32 %v5409, %v5426
        %v5443 = vadd.f32 %v5410, %v5427
        %v5444 = vadd.f32 %v5411, %v5428
        %v5445 = vadd.f32 %v5412, %v5429
        %v5446 = vadd.f32 %v5413, %v5430
        %v5447 = vadd.f32 %v5414, %v5431
        %v5448 = vadd.f32 %v5415, %v5432
        %v5449 = vadd.f32 %v5416, %v5433
        %v5450 = vadd.f32 %v5417, %v5434
        %v5451 = vadd.f32 %v5418, %v5435
        %v5452 = vadd.f32 %v5419, %v5436
        %v5453 = vadd.f32 %v5420, %v5437
        %v5454 = vadd.f32 %v5421, %v5438
        %v5455 = vmul.f32 %v5439, 0.2
        %v5456 = vmul.f32 %v5440, 0.2
        %v5457 = vmul.f32 %v5441, 0.2
        %v5458 = vmul.f32 %v5442, 0.2
        %v5459 = vmul.f32 %v5443, 0.2
        %v5460 = vmul.f32 %v5444, 0.2
        %v5461 = vmul.f32 %v5445, 0.2
        %v5462 = vmul.f32 %v5446, 0.2
        %v5463 = vmul.f32 %v5447, 0.2
        %v5464 = vmul.f32 %v5448, 0.2
        %v5465 = vmul.f32 %v5449, 0.2
        %v5466 = vmul.f32 %v5450, 0.2
        %v5467 = vmul.f32 %v5451, 0.2
        %v5468 = vmul.f32 %v5452, 0.2
        %v5469 = vmul.f32 %v5453, 0.2
        %v5470 = vmul.f32 %v5454, 0.2
        %v5471 = vmax.f32 %v5439, %v5455
        %v5472 = vmax.f32 %v5440, %v5456
        %v5473 = vmax.f32 %v5441, %v5457
        %v5474 = vmax.f32 %v5442, %v5458
        %v5475 = vmax.f32 %v5443, %v5459
        %v5476 = vmax.f32 %v5444, %v5460
        %v5477 = vmax.f32 %v5445, %v5461
        %v5478 = vmax.f32 %v5446, %v5462
        %v5479 = vmax.f32 %v5447, %v5463
        %v5480 = vmax.f32 %v5448, %v5464
        %v5481 = vmax.f32 %v5449, %v5465
        %v5482 = vmax.f32 %v5450, %v5466
        %v5483 = vmax.f32 %v5451, %v5467
        %v5484 = vmax.f32 %v5452, %v5468
        %v5485 = vmax.f32 %v5453, %v5469
        %v5486 = vmax.f32 %v5454, %v5470
        %v5487 = vadd.f32 %v5471, %v302
        %v5488 = vadd.f32 %v5472, %v303
        %v5489 = vadd.f32 %v5473, %v304
        %v5490 = vadd.f32 %v5474, %v305
        %v5491 = vadd.f32 %v5475, %v306
        %v5492 = vadd.f32 %v5476, %v307
        %v5493 = vadd.f32 %v5477, %v308
        %v5494 = vadd.f32 %v5478, %v309
        %v5495 = vadd.f32 %v5479, %v310
        %v5496 = vadd.f32 %v5480, %v311
        %v5497 = vadd.f32 %v5481, %v312
        %v5498 = vadd.f32 %v5482, %v313
        %v5499 = vadd.f32 %v5483, %v314
        %v5500 = vadd.f32 %v5484, %v315
        %v5501 = vadd.f32 %v5485, %v316
        %v5502 = vadd.f32 %v5486, %v317
        %5503 = vmax.xlane.f32.xlu0 %v5487
        %v5504 = vpop.xlane.xlu0 %5503
        %5505 = vmax.xlane.f32.xlu0 %v5488
        %v5506 = vpop.xlane.xlu0 %5505
        %5507 = vmax.xlane.f32.xlu0 %v5489
        %v5508 = vpop.xlane.xlu0 %5507
        %5509 = vmax.xlane.f32.xlu0 %v5490
        %v5510 = vpop.xlane.xlu0 %5509
        %5511 = vmax.xlane.f32.xlu0 %v5491
        %v5512 = vpop.xlane.xlu0 %5511
        %5513 = vmax.xlane.f32.xlu0 %v5492
        %v5514 = vpop.xlane.xlu0 %5513
        %5515 = vmax.xlane.f32.xlu0 %v5493
        %v5516 = vpop.xlane.xlu0 %5515
        %5517 = vmax.xlane.f32.xlu0 %v5494
        %v5518 = vpop.xlane.xlu0 %5517
        %5519 = vmax.xlane.f32.xlu0 %v5495
        %v5520 = vpop.xlane.xlu0 %5519
        %5521 = vmax.xlane.f32.xlu0 %v5496
        %v5522 = vpop.xlane.xlu0 %5521
        %5523 = vmax.xlane.f32.xlu0 %v5497
        %v5524 = vpop.xlane.xlu0 %5523
        %5525 = vmax.xlane.f32.xlu0 %v5498
        %v5526 = vpop.xlane.xlu0 %5525
        %5527 = vmax.xlane.f32.xlu0 %v5499
        %v5528 = vpop.xlane.xlu0 %5527
        %5529 = vmax.xlane.f32.xlu0 %v5500
        %v5530 = vpop.xlane.xlu0 %5529
        %5531 = vmax.xlane.f32.xlu0 %v5501
        %v5532 = vpop.xlane.xlu0 %5531
        %5533 = vmax.xlane.f32.xlu0 %v5502
        %v5534 = vpop.xlane.xlu0 %5533
        %v5535 = vsub.f32 %v5487, %v5504
        %v5536 = vsub.f32 %v5488, %v5506
        %v5537 = vsub.f32 %v5489, %v5508
        %v5538 = vsub.f32 %v5490, %v5510
        %v5539 = vsub.f32 %v5491, %v5512
        %v5540 = vsub.f32 %v5492, %v5514
        %v5541 = vsub.f32 %v5493, %v5516
        %v5542 = vsub.f32 %v5494, %v5518
        %v5543 = vsub.f32 %v5495, %v5520
        %v5544 = vsub.f32 %v5496, %v5522
        %v5545 = vsub.f32 %v5497, %v5524
        %v5546 = vsub.f32 %v5498, %v5526
        %v5547 = vsub.f32 %v5499, %v5528
        %v5548 = vsub.f32 %v5500, %v5530
        %v5549 = vsub.f32 %v5501, %v5532
        %v5550 = vsub.f32 %v5502, %v5534
        %v5551 = vmul.f32 %v5535, 1.442695
        %v5552 = vpow.pop %v5551
        %v5553 = vmul.f32 %v5536, 1.442695
        %v5554 = vpow.pop %v5553
        %v5555 = vmul.f32 %v5537, 1.442695
        %v5556 = vpow.pop %v5555
        %v5557 = vmul.f32 %v5538, 1.442695
        %v5558 = vpow.pop %v5557
        %v5559 = vmul.f32 %v5539, 1.442695
        %v5560 = vpow.pop %v5559
        %v5561 = vmul.f32 %v5540, 1.442695
        %v5562 = vpow.pop %v5561
        %v5563 = vmul.f32 %v5541, 1.442695
        %v5564 = vpow.pop %v5563
        %v5565 = vmul.f32 %v5542, 1.442695
        %v5566 = vpow.pop %v5565
        %v5567 = vmul.f32 %v5543, 1.442695
        %v5568 = vpow.pop %v5567
        %v5569 = vmul.f32 %v5544, 1.442695
        %v5570 = vpow.pop %v5569
        %v5571 = vmul.f32 %v5545, 1.442695
        %v5572 = vpow.pop %v5571
        %v5573 = vmul.f32 %v5546, 1.442695
        %v5574 = vpow.pop %v5573
        %v5575 = vmul.f32 %v5547, 1.442695
        %v5576 = vpow.pop %v5575
        %v5577 = vmul.f32 %v5548, 1.442695
        %v5578 = vpow.pop %v5577
        %v5579 = vmul.f32 %v5549, 1.442695
        %v5580 = vpow.pop %v5579
        %v5581 = vmul.f32 %v5550, 1.442695
        %v5582 = vpow.pop %v5581
        %5583 = vmatpush.msra.mxu0 1.0
        %5584 = vmatpush.msra.mxu0 1.0
        %5585 = vmatpush.msra.mxu0 1.0
        %5586 = vmatpush.msra.mxu0 1.0
        %5587 = vmatpush.msra.mxu0 1.0
        %5588 = vmatpush.msra.mxu0 1.0
        %5589 = vmatpush.msra.mxu0 1.0
        %5590 = vmatpush.msra.mxu0 1.0
        %5591 = vmatpush.msra.mxu0 1.0
        %5592 = vmatpush.msra.mxu0 1.0
        %5593 = vmatpush.msra.mxu0 1.0
        %5594 = vmatpush.msra.mxu0 1.0
        %5595 = vmatpush.msra.mxu0 1.0
        %5596 = vmatpush.msra.mxu0 1.0
        %5597 = vmatpush.msra.mxu0 1.0
        %5598 = vmatpush.msra.mxu0 1.0
        %5599 = vmatmul.f32.gmra.mxu0 %v5552
        %v5600 = vpop.f32.mrf.mxu0
        %v5601 = vadd.f32 0.0, %v5600
        %5602 = vmatmul.f32.gmra.mxu0 %v5554
        %v5603 = vpop.f32.mrf.mxu0
        %v5604 = vadd.f32 0.0, %v5603
        %5605 = vmatmul.f32.gmra.mxu0 %v5556
        %v5606 = vpop.f32.mrf.mxu0
        %v5607 = vadd.f32 0.0, %v5606
        %5608 = vmatmul.f32.gmra.mxu0 %v5558
        %v5609 = vpop.f32.mrf.mxu0
        %v5610 = vadd.f32 0.0, %v5609
        %5611 = vmatmul.f32.gmra.mxu0 %v5560
        %v5612 = vpop.f32.mrf.mxu0
        %v5613 = vadd.f32 0.0, %v5612
        %5614 = vmatmul.f32.gmra.mxu0 %v5562
        %v5615 = vpop.f32.mrf.mxu0
        %v5616 = vadd.f32 0.0, %v5615
        %5617 = vmatmul.f32.gmra.mxu0 %v5564
        %v5618 = vpop.f32.mrf.mxu0
        %v5619 = vadd.f32 0.0, %v5618
        %5620 = vmatmul.f32.gmra.mxu0 %v5566
        %v5621 = vpop.f32.mrf.mxu0
        %v5622 = vadd.f32 0.0, %v5621
        %5623 = vmatmul.f32.gmra.mxu0 %v5568
        %v5624 = vpop.f32.mrf.mxu0
        %v5625 = vadd.f32 0.0, %v5624
        %5626 = vmatmul.f32.gmra.mxu0 %v5570
        %v5627 = vpop.f32.mrf.mxu0
        %v5628 = vadd.f32 0.0, %v5627
        %5629 = vmatmul.f32.gmra.mxu0 %v5572
        %v5630 = vpop.f32.mrf.mxu0
        %v5631 = vadd.f32 0.0, %v5630
        %5632 = vmatmul.f32.gmra.mxu0 %v5574
        %v5633 = vpop.f32.mrf.mxu0
        %v5634 = vadd.f32 0.0, %v5633
        %5635 = vmatmul.f32.gmra.mxu0 %v5576
        %v5636 = vpop.f32.mrf.mxu0
        %v5637 = vadd.f32 0.0, %v5636
        %5638 = vmatmul.f32.gmra.mxu0 %v5578
        %v5639 = vpop.f32.mrf.mxu0
        %v5640 = vadd.f32 0.0, %v5639
        %5641 = vmatmul.f32.gmra.mxu0 %v5580
        %v5642 = vpop.f32.mrf.mxu0
        %v5643 = vadd.f32 0.0, %v5642
        %5644 = vmatmul.f32.gmra.mxu0 %v5582
        %v5645 = vpop.f32.mrf.mxu0
        %v5646 = vadd.f32 0.0, %v5645
        %5647 = vdwg.mxu0
        %5664 = vrot.lane.b32.xlu0 %v3532, 64
        %v5665 = vpop.permute.xlu0 %5664
        %5666 = vrot.lane.b32.xlu0 %v3535, 64
        %v5667 = vpop.permute.xlu0 %5666
        %5668 = vrot.lane.b32.xlu0 %v3538, 64
        %v5669 = vpop.permute.xlu0 %5668
        %5670 = vrot.lane.b32.xlu0 %v3541, 64
        %v5671 = vpop.permute.xlu0 %5670
        %5672 = vrot.lane.b32.xlu0 %v3544, 64
        %v5673 = vpop.permute.xlu0 %5672
        %5674 = vrot.lane.b32.xlu0 %v3547, 64
        %v5675 = vpop.permute.xlu0 %5674
        %5676 = vrot.lane.b32.xlu0 %v3550, 64
        %v5677 = vpop.permute.xlu0 %5676
        %5678 = vrot.lane.b32.xlu0 %v3553, 64
        %v5679 = vpop.permute.xlu0 %5678
        %5680 = vrot.lane.b32.xlu0 %v3556, 64
        %v5681 = vpop.permute.xlu0 %5680
        %5682 = vrot.lane.b32.xlu0 %v3559, 64
        %v5683 = vpop.permute.xlu0 %5682
        %5684 = vrot.lane.b32.xlu0 %v3562, 64
        %v5685 = vpop.permute.xlu0 %5684
        %5686 = vrot.lane.b32.xlu0 %v3565, 64
        %v5687 = vpop.permute.xlu0 %5686
        %5688 = vrot.lane.b32.xlu0 %v3568, 64
        %v5689 = vpop.permute.xlu0 %5688
        %5690 = vrot.lane.b32.xlu0 %v3571, 64
        %v5691 = vpop.permute.xlu0 %5690
        %5692 = vrot.lane.b32.xlu0 %v3574, 64
        %v5693 = vpop.permute.xlu0 %5692
        %5694 = vrot.lane.b32.xlu0 %v3577, 64
        %v5695 = vpop.permute.xlu0 %5694
        %5712 = vmatpush.msra.mxu0 %v5695
        %5713 = vmatpush.msra.mxu0 %v5693
        %5714 = vmatpush.msra.mxu0 %v5691
        %5715 = vmatpush.msra.mxu0 %v5689
        %5716 = vmatpush.msra.mxu0 %v5687
        %5717 = vmatpush.msra.mxu0 %v5685
        %5718 = vmatpush.msra.mxu0 %v5683
        %5719 = vmatpush.msra.mxu0 %v5681
        %5720 = vmatpush.msra.mxu0 %v5679
        %5721 = vmatpush.msra.mxu0 %v5677
        %5722 = vmatpush.msra.mxu0 %v5675
        %5723 = vmatpush.msra.mxu0 %v5673
        %5724 = vmatpush.msra.mxu0 %v5671
        %5725 = vmatpush.msra.mxu0 %v5669
        %5726 = vmatpush.msra.mxu0 %v5667
        %5727 = vmatpush.msra.mxu0 %v5665
        %5728 = vmatmul.f32.gmra.mxu0 %v5552
        %v5729 = vpop.f32.mrf.mxu0
        %v5730 = vadd.f32 0.0, %v5729
        %5731 = vmatmul.f32.gmra.mxu0 %v5554
        %v5732 = vpop.f32.mrf.mxu0
        %v5733 = vadd.f32 0.0, %v5732
        %5734 = vmatmul.f32.gmra.mxu0 %v5556
        %v5735 = vpop.f32.mrf.mxu0
        %v5736 = vadd.f32 0.0, %v5735
        %5737 = vmatmul.f32.gmra.mxu0 %v5558
        %v5738 = vpop.f32.mrf.mxu0
        %v5739 = vadd.f32 0.0, %v5738
        %5740 = vmatmul.f32.gmra.mxu0 %v5560
        %v5741 = vpop.f32.mrf.mxu0
        %v5742 = vadd.f32 0.0, %v5741
        %5743 = vmatmul.f32.gmra.mxu0 %v5562
        %v5744 = vpop.f32.mrf.mxu0
        %v5745 = vadd.f32 0.0, %v5744
        %5746 = vmatmul.f32.gmra.mxu0 %v5564
        %v5747 = vpop.f32.mrf.mxu0
        %v5748 = vadd.f32 0.0, %v5747
        %5749 = vmatmul.f32.gmra.mxu0 %v5566
        %v5750 = vpop.f32.mrf.mxu0
        %v5751 = vadd.f32 0.0, %v5750
        %5752 = vmatmul.f32.gmra.mxu0 %v5568
        %v5753 = vpop.f32.mrf.mxu0
        %v5754 = vadd.f32 0.0, %v5753
        %5755 = vmatmul.f32.gmra.mxu0 %v5570
        %v5756 = vpop.f32.mrf.mxu0
        %v5757 = vadd.f32 0.0, %v5756
        %5758 = vmatmul.f32.gmra.mxu0 %v5572
        %v5759 = vpop.f32.mrf.mxu0
        %v5760 = vadd.f32 0.0, %v5759
        %5761 = vmatmul.f32.gmra.mxu0 %v5574
        %v5762 = vpop.f32.mrf.mxu0
        %v5763 = vadd.f32 0.0, %v5762
        %5764 = vmatmul.f32.gmra.mxu0 %v5576
        %v5765 = vpop.f32.mrf.mxu0
        %v5766 = vadd.f32 0.0, %v5765
        %5767 = vmatmul.f32.gmra.mxu0 %v5578
        %v5768 = vpop.f32.mrf.mxu0
        %v5769 = vadd.f32 0.0, %v5768
        %5770 = vmatmul.f32.gmra.mxu0 %v5580
        %v5771 = vpop.f32.mrf.mxu0
        %v5772 = vadd.f32 0.0, %v5771
        %5773 = vmatmul.f32.gmra.mxu0 %v5582
        %v5774 = vpop.f32.mrf.mxu0
        %v5775 = vadd.f32 0.0, %v5774
        %5776 = vdwg.mxu0
        %v5777 = vrcp.pop %v5601
        %v5778 = vrcp.pop %v5604
        %v5779 = vrcp.pop %v5607
        %v5780 = vrcp.pop %v5610
        %v5781 = vrcp.pop %v5613
        %v5782 = vrcp.pop %v5616
        %v5783 = vrcp.pop %v5619
        %v5784 = vrcp.pop %v5622
        %v5785 = vrcp.pop %v5625
        %v5786 = vrcp.pop %v5628
        %v5787 = vrcp.pop %v5631
        %v5788 = vrcp.pop %v5634
        %v5789 = vrcp.pop %v5637
        %v5790 = vrcp.pop %v5640
        %v5791 = vrcp.pop %v5643
        %v5792 = vrcp.pop %v5646
        %5794 = vset.pattern.permute.xlu0 0
        %5795 = vperm.xlu0 %5794, %v5777
        %v5796 = vpop.permute.xlu0 %5795
        %5799 = vset.pattern.permute.xlu0 0
        %5800 = vperm.xlu0 %5799, %v5778
        %v5801 = vpop.permute.xlu0 %5800
        %5804 = vset.pattern.permute.xlu0 0
        %5805 = vperm.xlu0 %5804, %v5779
        %v5806 = vpop.permute.xlu0 %5805
        %5809 = vset.pattern.permute.xlu0 0
        %5810 = vperm.xlu0 %5809, %v5780
        %v5811 = vpop.permute.xlu0 %5810
        %5814 = vset.pattern.permute.xlu0 0
        %5815 = vperm.xlu0 %5814, %v5781
        %v5816 = vpop.permute.xlu0 %5815
        %5819 = vset.pattern.permute.xlu0 0
        %5820 = vperm.xlu0 %5819, %v5782
        %v5821 = vpop.permute.xlu0 %5820
        %5824 = vset.pattern.permute.xlu0 0
        %5825 = vperm.xlu0 %5824, %v5783
        %v5826 = vpop.permute.xlu0 %5825
        %5829 = vset.pattern.permute.xlu0 0
        %5830 = vperm.xlu0 %5829, %v5784
        %v5831 = vpop.permute.xlu0 %5830
        %5834 = vset.pattern.permute.xlu0 0
        %5835 = vperm.xlu0 %5834, %v5785
        %v5836 = vpop.permute.xlu0 %5835
        %5839 = vset.pattern.permute.xlu0 0
        %5840 = vperm.xlu0 %5839, %v5786
        %v5841 = vpop.permute.xlu0 %5840
        %5844 = vset.pattern.permute.xlu0 0
        %5845 = vperm.xlu0 %5844, %v5787
        %v5846 = vpop.permute.xlu0 %5845
        %5849 = vset.pattern.permute.xlu0 0
        %5850 = vperm.xlu0 %5849, %v5788
        %v5851 = vpop.permute.xlu0 %5850
        %5854 = vset.pattern.permute.xlu0 0
        %5855 = vperm.xlu0 %5854, %v5789
        %v5856 = vpop.permute.xlu0 %5855
        %5859 = vset.pattern.permute.xlu0 0
        %5860 = vperm.xlu0 %5859, %v5790
        %v5861 = vpop.permute.xlu0 %5860
        %5864 = vset.pattern.permute.xlu0 0
        %5865 = vperm.xlu0 %5864, %v5791
        %v5866 = vpop.permute.xlu0 %5865
        %5869 = vset.pattern.permute.xlu0 0
        %5870 = vperm.xlu0 %5869, %v5792
        %v5871 = vpop.permute.xlu0 %5870
        %v5873 = vmul.f32 %v5730, %v5796
        %v5874 = vmul.f32 %v5733, %v5801
        %v5875 = vmul.f32 %v5736, %v5806
        %v5876 = vmul.f32 %v5739, %v5811
        %v5877 = vmul.f32 %v5742, %v5816
        %v5878 = vmul.f32 %v5745, %v5821
        %v5879 = vmul.f32 %v5748, %v5826
        %v5880 = vmul.f32 %v5751, %v5831
        %v5881 = vmul.f32 %v5754, %v5836
        %v5882 = vmul.f32 %v5757, %v5841
        %v5883 = vmul.f32 %v5760, %v5846
        %v5884 = vmul.f32 %v5763, %v5851
        %v5885 = vmul.f32 %v5766, %v5856
        %v5886 = vmul.f32 %v5769, %v5861
        %v5887 = vmul.f32 %v5772, %v5866
        %v5888 = vmul.f32 %v5775, %v5871
        %v5889 = vadd.f32 %v5324, %v5873
        %v5890 = vadd.f32 %v5325, %v5874
        %v5891 = vadd.f32 %v5326, %v5875
        %v5892 = vadd.f32 %v5327, %v5876
        %v5893 = vadd.f32 %v5328, %v5877
        %v5894 = vadd.f32 %v5329, %v5878
        %v5895 = vadd.f32 %v5330, %v5879
        %v5896 = vadd.f32 %v5331, %v5880
        %v5897 = vadd.f32 %v5332, %v5881
        %v5898 = vadd.f32 %v5333, %v5882
        %v5899 = vadd.f32 %v5334, %v5883
        %v5900 = vadd.f32 %v5335, %v5884
        %v5901 = vadd.f32 %v5336, %v5885
        %v5902 = vadd.f32 %v5337, %v5886
        %v5903 = vadd.f32 %v5338, %v5887
        %v5904 = vadd.f32 %v5339, %v5888
        %v5905 = vmul.f32 %v5889, 0.25
        %v5906 = vmul.f32 %v5890, 0.25
        %v5907 = vmul.f32 %v5891, 0.25
        %v5908 = vmul.f32 %v5892, 0.25
        %v5909 = vmul.f32 %v5893, 0.25
        %v5910 = vmul.f32 %v5894, 0.25
        %v5911 = vmul.f32 %v5895, 0.25
        %v5912 = vmul.f32 %v5896, 0.25
        %v5913 = vmul.f32 %v5897, 0.25
        %v5914 = vmul.f32 %v5898, 0.25
        %v5915 = vmul.f32 %v5899, 0.25
        %v5916 = vmul.f32 %v5900, 0.25
        %v5917 = vmul.f32 %v5901, 0.25
        %v5918 = vmul.f32 %v5902, 0.25
        %v5919 = vmul.f32 %v5903, 0.25
        %v5920 = vmul.f32 %v5904, 0.25
        %v5921 = vld [vmem:[%s3 + $0x655] ss:$0 sm:$0xff]
        %v5922 = vadd.f32 %v5905, %v5921
        %v5923 = vadd.f32 %v5906, %v5921
        %v5924 = vadd.f32 %v5907, %v5921
        %v5925 = vadd.f32 %v5908, %v5921
        %v5926 = vadd.f32 %v5909, %v5921
        %v5927 = vadd.f32 %v5910, %v5921
        %v5928 = vadd.f32 %v5911, %v5921
        %v5929 = vadd.f32 %v5912, %v5921
        %v5930 = vadd.f32 %v5913, %v5921
        %v5931 = vadd.f32 %v5914, %v5921
        %v5932 = vadd.f32 %v5915, %v5921
        %v5933 = vadd.f32 %v5916, %v5921
        %v5934 = vadd.f32 %v5917, %v5921
        %v5935 = vadd.f32 %v5918, %v5921
        %v5936 = vadd.f32 %v5919, %v5921
        %v5937 = vadd.f32 %v5920, %v5921
        %vm5938 = vcmask 523264
        %v5939 = vsel %vm5938, %v5922, 0.0
        %5940 = vadd.xlane.f32.xlu0 %v5939
        %v5941 = vpop.xlane.xlu0 %5940
        %v5942 = vsel %vm5938, %v5923, 0.0
        %5943 = vadd.xlane.f32.xlu0 %v5942
        %v5944 = vpop.xlane.xlu0 %5943
        %v5945 = vsel %vm5938, %v5924, 0.0
        %5946 = vadd.xlane.f32.xlu0 %v5945
        %v5947 = vpop.xlane.xlu0 %5946
        %v5948 = vsel %vm5938, %v5925, 0.0
        %5949 = vadd.xlane.f32.xlu0 %v5948
        %v5950 = vpop.xlane.xlu0 %5949
        %v5951 = vsel %vm5938, %v5926, 0.0
        %5952 = vadd.xlane.f32.xlu0 %v5951
        %v5953 = vpop.xlane.xlu0 %5952
        %v5954 = vsel %vm5938, %v5927, 0.0
        %5955 = vadd.xlane.f32.xlu0 %v5954
        %v5956 = vpop.xlane.xlu0 %5955
        %v5957 = vsel %vm5938, %v5928, 0.0
        %5958 = vadd.xlane.f32.xlu0 %v5957
        %v5959 = vpop.xlane.xlu0 %5958
        %v5960 = vsel %vm5938, %v5929, 0.0
        %5961 = vadd.xlane.f32.xlu0 %v5960
        %v5962 = vpop.xlane.xlu0 %5961
        %v5963 = vsel %vm5938, %v5930, 0.0
        %5964 = vadd.xlane.f32.xlu0 %v5963
        %v5965 = vpop.xlane.xlu0 %5964
        %v5966 = vsel %vm5938, %v5931, 0.0
        %5967 = vadd.xlane.f32.xlu0 %v5966
        %v5968 = vpop.xlane.xlu0 %5967
        %v5969 = vsel %vm5938, %v5932, 0.0
        %5970 = vadd.xlane.f32.xlu0 %v5969
        %v5971 = vpop.xlane.xlu0 %5970
        %v5972 = vsel %vm5938, %v5933, 0.0
        %5973 = vadd.xlane.f32.xlu0 %v5972
        %v5974 = vpop.xlane.xlu0 %5973
        %v5975 = vsel %vm5938, %v5934, 0.0
        %5976 = vadd.xlane.f32.xlu0 %v5975
        %v5977 = vpop.xlane.xlu0 %5976
        %v5978 = vsel %vm5938, %v5935, 0.0
        %5979 = vadd.xlane.f32.xlu0 %v5978
        %v5980 = vpop.xlane.xlu0 %5979
        %v5981 = vsel %vm5938, %v5936, 0.0
        %5982 = vadd.xlane.f32.xlu0 %v5981
        %v5983 = vpop.xlane.xlu0 %5982
        %v5984 = vsel %vm5938, %v5937, 0.0
        %5985 = vadd.xlane.f32.xlu0 %v5984
        %v5986 = vpop.xlane.xlu0 %5985
        %v5987 = vrcp.pop 64.0
        %v5988 = vmul.f32 64.0, %v5987
        %v5989 = vsub.f32 1.0, %v5988
        %v5990 = vmul.f32 %v5987, %v5989
        %v5991 = vadd.f32 %v5987, %v5990
        %vm5992 = vweird.f32 %v5987
        %v5993 = vsel %vm5992, %v5987, %v5991
        %v5994 = vmul.f32 %v5941, %v5993
        %v5995 = vmul.f32 %v5944, %v5993
        %v5996 = vmul.f32 %v5947, %v5993
        %v5997 = vmul.f32 %v5950, %v5993
        %v5998 = vmul.f32 %v5953, %v5993
        %v5999 = vmul.f32 %v5956, %v5993
        %v6000 = vmul.f32 %v5959, %v5993
        %v6001 = vmul.f32 %v5962, %v5993
        %v6002 = vmul.f32 %v5965, %v5993
        %v6003 = vmul.f32 %v5968, %v5993
        %v6004 = vmul.f32 %v5971, %v5993
        %v6005 = vmul.f32 %v5974, %v5993
        %v6006 = vmul.f32 %v5977, %v5993
        %v6007 = vmul.f32 %v5980, %v5993
        %v6008 = vmul.f32 %v5983, %v5993
        %v6009 = vmul.f32 %v5986, %v5993
        %v6010 = vsub.f32 %v5922, %v5994
        %v6011 = vsub.f32 %v5923, %v5995
        %v6012 = vsub.f32 %v5924, %v5996
        %v6013 = vsub.f32 %v5925, %v5997
        %v6014 = vsub.f32 %v5926, %v5998
        %v6015 = vsub.f32 %v5927, %v5999
        %v6016 = vsub.f32 %v5928, %v6000
        %v6017 = vsub.f32 %v5929, %v6001
        %v6018 = vsub.f32 %v5930, %v6002
        %v6019 = vsub.f32 %v5931, %v6003
        %v6020 = vsub.f32 %v5932, %v6004
        %v6021 = vsub.f32 %v5933, %v6005
        %v6022 = vsub.f32 %v5934, %v6006
        %v6023 = vsub.f32 %v5935, %v6007
        %v6024 = vsub.f32 %v5936, %v6008
        %v6025 = vsub.f32 %v5937, %v6009
        %v6026 = vmul.f32 %v6010, %v6010
        %v6027 = vmul.f32 %v6011, %v6011
        %v6028 = vmul.f32 %v6012, %v6012
        %v6029 = vmul.f32 %v6013, %v6013
        %v6030 = vmul.f32 %v6014, %v6014
        %v6031 = vmul.f32 %v6015, %v6015
        %v6032 = vmul.f32 %v6016, %v6016
        %v6033 = vmul.f32 %v6017, %v6017
        %v6034 = vmul.f32 %v6018, %v6018
        %v6035 = vmul.f32 %v6019, %v6019
        %v6036 = vmul.f32 %v6020, %v6020
        %v6037 = vmul.f32 %v6021, %v6021
        %v6038 = vmul.f32 %v6022, %v6022
        %v6039 = vmul.f32 %v6023, %v6023
        %v6040 = vmul.f32 %v6024, %v6024
        %v6041 = vmul.f32 %v6025, %v6025
        %v6042 = vsel %vm5938, %v6026, 0.0
        %6043 = vadd.xlane.f32.xlu0 %v6042
        %v6044 = vpop.xlane.xlu0 %6043
        %v6045 = vsel %vm5938, %v6027, 0.0
        %6046 = vadd.xlane.f32.xlu0 %v6045
        %v6047 = vpop.xlane.xlu0 %6046
        %v6048 = vsel %vm5938, %v6028, 0.0
        %6049 = vadd.xlane.f32.xlu0 %v6048
        %v6050 = vpop.xlane.xlu0 %6049
        %v6051 = vsel %vm5938, %v6029, 0.0
        %6052 = vadd.xlane.f32.xlu0 %v6051
        %v6053 = vpop.xlane.xlu0 %6052
        %v6054 = vsel %vm5938, %v6030, 0.0
        %6055 = vadd.xlane.f32.xlu0 %v6054
        %v6056 = vpop.xlane.xlu0 %6055
        %v6057 = vsel %vm5938, %v6031, 0.0
        %6058 = vadd.xlane.f32.xlu0 %v6057
        %v6059 = vpop.xlane.xlu0 %6058
        %v6060 = vsel %vm5938, %v6032, 0.0
        %6061 = vadd.xlane.f32.xlu0 %v6060
        %v6062 = vpop.xlane.xlu0 %6061
        %v6063 = vsel %vm5938, %v6033, 0.0
        %6064 = vadd.xlane.f32.xlu0 %v6063
        %v6065 = vpop.xlane.xlu0 %6064
        %v6066 = vsel %vm5938, %v6034, 0.0
        %6067 = vadd.xlane.f32.xlu0 %v6066
        %v6068 = vpop.xlane.xlu0 %6067
        %v6069 = vsel %vm5938, %v6035, 0.0
        %6070 = vadd.xlane.f32.xlu0 %v6069
        %v6071 = vpop.xlane.xlu0 %6070
        %v6072 = vsel %vm5938, %v6036, 0.0
        %6073 = vadd.xlane.f32.xlu0 %v6072
        %v6074 = vpop.xlane.xlu0 %6073
        %v6075 = vsel %vm5938, %v6037, 0.0
        %6076 = vadd.xlane.f32.xlu0 %v6075
        %v6077 = vpop.xlane.xlu0 %6076
        %v6078 = vsel %vm5938, %v6038, 0.0
        %6079 = vadd.xlane.f32.xlu0 %v6078
        %v6080 = vpop.xlane.xlu0 %6079
        %v6081 = vsel %vm5938, %v6039, 0.0
        %6082 = vadd.xlane.f32.xlu0 %v6081
        %v6083 = vpop.xlane.xlu0 %6082
        %v6084 = vsel %vm5938, %v6040, 0.0
        %6085 = vadd.xlane.f32.xlu0 %v6084
        %v6086 = vpop.xlane.xlu0 %6085
        %v6087 = vsel %vm5938, %v6041, 0.0
        %6088 = vadd.xlane.f32.xlu0 %v6087
        %v6089 = vpop.xlane.xlu0 %6088
        %v6090 = vmul.f32 %v6044, %v5993
        %v6091 = vmul.f32 %v6047, %v5993
        %v6092 = vmul.f32 %v6050, %v5993
        %v6093 = vmul.f32 %v6053, %v5993
        %v6094 = vmul.f32 %v6056, %v5993
        %v6095 = vmul.f32 %v6059, %v5993
        %v6096 = vmul.f32 %v6062, %v5993
        %v6097 = vmul.f32 %v6065, %v5993
        %v6098 = vmul.f32 %v6068, %v5993
        %v6099 = vmul.f32 %v6071, %v5993
        %v6100 = vmul.f32 %v6074, %v5993
        %v6101 = vmul.f32 %v6077, %v5993
        %v6102 = vmul.f32 %v6080, %v5993
        %v6103 = vmul.f32 %v6083, %v5993
        %v6104 = vmul.f32 %v6086, %v5993
        %v6105 = vmul.f32 %v6089, %v5993
        %v6106 = vadd.f32 %v6090, 1e-05
        %v6107 = vadd.f32 %v6091, 1e-05
        %v6108 = vadd.f32 %v6092, 1e-05
        %v6109 = vadd.f32 %v6093, 1e-05
        %v6110 = vadd.f32 %v6094, 1e-05
        %v6111 = vadd.f32 %v6095, 1e-05
        %v6112 = vadd.f32 %v6096, 1e-05
        %v6113 = vadd.f32 %v6097, 1e-05
        %v6114 = vadd.f32 %v6098, 1e-05
        %v6115 = vadd.f32 %v6099, 1e-05
        %v6116 = vadd.f32 %v6100, 1e-05
        %v6117 = vadd.f32 %v6101, 1e-05
        %v6118 = vadd.f32 %v6102, 1e-05
        %v6119 = vadd.f32 %v6103, 1e-05
        %v6120 = vadd.f32 %v6104, 1e-05
        %v6121 = vadd.f32 %v6105, 1e-05
        %v6122 = vrsqrt.pop %v6106
        %v6123 = vmul.f32 %v6122, %v6106
        %v6124 = vmul.f32 %v6123, %v6122
        %v6125 = vmul.f32 0.5, %v6124
        %v6126 = vsub.f32 1.5, %v6125
        %v6127 = vmul.f32 %v6122, %v6126
        %vm6128 = vweird.f32 %v6106
        %vm6129 = vweird.f32 %v6122
        %vm6130 = vmor %vm6128, %vm6129
        %v6131 = vsel %vm6130, %v6122, %v6127
        %v6132 = vrsqrt.pop %v6107
        %v6133 = vmul.f32 %v6132, %v6107
        %v6134 = vmul.f32 %v6133, %v6132
        %v6135 = vmul.f32 0.5, %v6134
        %v6136 = vsub.f32 1.5, %v6135
        %v6137 = vmul.f32 %v6132, %v6136
        %vm6138 = vweird.f32 %v6107
        %vm6139 = vweird.f32 %v6132
        %vm6140 = vmor %vm6138, %vm6139
        %v6141 = vsel %vm6140, %v6132, %v6137
        %v6142 = vrsqrt.pop %v6108
        %v6143 = vmul.f32 %v6142, %v6108
        %v6144 = vmul.f32 %v6143, %v6142
        %v6145 = vmul.f32 0.5, %v6144
        %v6146 = vsub.f32 1.5, %v6145
        %v6147 = vmul.f32 %v6142, %v6146
        %vm6148 = vweird.f32 %v6108
        %vm6149 = vweird.f32 %v6142
        %vm6150 = vmor %vm6148, %vm6149
        %v6151 = vsel %vm6150, %v6142, %v6147
        %v6152 = vrsqrt.pop %v6109
        %v6153 = vmul.f32 %v6152, %v6109
        %v6154 = vmul.f32 %v6153, %v6152
        %v6155 = vmul.f32 0.5, %v6154
        %v6156 = vsub.f32 1.5, %v6155
        %v6157 = vmul.f32 %v6152, %v6156
        %vm6158 = vweird.f32 %v6109
        %vm6159 = vweird.f32 %v6152
        %vm6160 = vmor %vm6158, %vm6159
        %v6161 = vsel %vm6160, %v6152, %v6157
        %v6162 = vrsqrt.pop %v6110
        %v6163 = vmul.f32 %v6162, %v6110
        %v6164 = vmul.f32 %v6163, %v6162
        %v6165 = vmul.f32 0.5, %v6164
        %v6166 = vsub.f32 1.5, %v6165
        %v6167 = vmul.f32 %v6162, %v6166
        %vm6168 = vweird.f32 %v6110
        %vm6169 = vweird.f32 %v6162
        %vm6170 = vmor %vm6168, %vm6169
        %v6171 = vsel %vm6170, %v6162, %v6167
        %v6172 = vrsqrt.pop %v6111
        %v6173 = vmul.f32 %v6172, %v6111
        %v6174 = vmul.f32 %v6173, %v6172
        %v6175 = vmul.f32 0.5, %v6174
        %v6176 = vsub.f32 1.5, %v6175
        %v6177 = vmul.f32 %v6172, %v6176
        %vm6178 = vweird.f32 %v6111
        %vm6179 = vweird.f32 %v6172
        %vm6180 = vmor %vm6178, %vm6179
        %v6181 = vsel %vm6180, %v6172, %v6177
        %v6182 = vrsqrt.pop %v6112
        %v6183 = vmul.f32 %v6182, %v6112
        %v6184 = vmul.f32 %v6183, %v6182
        %v6185 = vmul.f32 0.5, %v6184
        %v6186 = vsub.f32 1.5, %v6185
        %v6187 = vmul.f32 %v6182, %v6186
        %vm6188 = vweird.f32 %v6112
        %vm6189 = vweird.f32 %v6182
        %vm6190 = vmor %vm6188, %vm6189
        %v6191 = vsel %vm6190, %v6182, %v6187
        %v6192 = vrsqrt.pop %v6113
        %v6193 = vmul.f32 %v6192, %v6113
        %v6194 = vmul.f32 %v6193, %v6192
        %v6195 = vmul.f32 0.5, %v6194
        %v6196 = vsub.f32 1.5, %v6195
        %v6197 = vmul.f32 %v6192, %v6196
        %vm6198 = vweird.f32 %v6113
        %vm6199 = vweird.f32 %v6192
        %vm6200 = vmor %vm6198, %vm6199
        %v6201 = vsel %vm6200, %v6192, %v6197
        %v6202 = vrsqrt.pop %v6114
        %v6203 = vmul.f32 %v6202, %v6114
        %v6204 = vmul.f32 %v6203, %v6202
        %v6205 = vmul.f32 0.5, %v6204
        %v6206 = vsub.f32 1.5, %v6205
        %v6207 = vmul.f32 %v6202, %v6206
        %vm6208 = vweird.f32 %v6114
        %vm6209 = vweird.f32 %v6202
        %vm6210 = vmor %vm6208, %vm6209
        %v6211 = vsel %vm6210, %v6202, %v6207
        %v6212 = vrsqrt.pop %v6115
        %v6213 = vmul.f32 %v6212, %v6115
        %v6214 = vmul.f32 %v6213, %v6212
        %v6215 = vmul.f32 0.5, %v6214
        %v6216 = vsub.f32 1.5, %v6215
        %v6217 = vmul.f32 %v6212, %v6216
        %vm6218 = vweird.f32 %v6115
        %vm6219 = vweird.f32 %v6212
        %vm6220 = vmor %vm6218, %vm6219
        %v6221 = vsel %vm6220, %v6212, %v6217
        %v6222 = vrsqrt.pop %v6116
        %v6223 = vmul.f32 %v6222, %v6116
        %v6224 = vmul.f32 %v6223, %v6222
        %v6225 = vmul.f32 0.5, %v6224
        %v6226 = vsub.f32 1.5, %v6225
        %v6227 = vmul.f32 %v6222, %v6226
        %vm6228 = vweird.f32 %v6116
        %vm6229 = vweird.f32 %v6222
        %vm6230 = vmor %vm6228, %vm6229
        %v6231 = vsel %vm6230, %v6222, %v6227
        %v6232 = vrsqrt.pop %v6117
        %v6233 = vmul.f32 %v6232, %v6117
        %v6234 = vmul.f32 %v6233, %v6232
        %v6235 = vmul.f32 0.5, %v6234
        %v6236 = vsub.f32 1.5, %v6235
        %v6237 = vmul.f32 %v6232, %v6236
        %vm6238 = vweird.f32 %v6117
        %vm6239 = vweird.f32 %v6232
        %vm6240 = vmor %vm6238, %vm6239
        %v6241 = vsel %vm6240, %v6232, %v6237
        %v6242 = vrsqrt.pop %v6118
        %v6243 = vmul.f32 %v6242, %v6118
        %v6244 = vmul.f32 %v6243, %v6242
        %v6245 = vmul.f32 0.5, %v6244
        %v6246 = vsub.f32 1.5, %v6245
        %v6247 = vmul.f32 %v6242, %v6246
        %vm6248 = vweird.f32 %v6118
        %vm6249 = vweird.f32 %v6242
        %vm6250 = vmor %vm6248, %vm6249
        %v6251 = vsel %vm6250, %v6242, %v6247
        %v6252 = vrsqrt.pop %v6119
        %v6253 = vmul.f32 %v6252, %v6119
        %v6254 = vmul.f32 %v6253, %v6252
        %v6255 = vmul.f32 0.5, %v6254
        %v6256 = vsub.f32 1.5, %v6255
        %v6257 = vmul.f32 %v6252, %v6256
        %vm6258 = vweird.f32 %v6119
        %vm6259 = vweird.f32 %v6252
        %vm6260 = vmor %vm6258, %vm6259
        %v6261 = vsel %vm6260, %v6252, %v6257
        %v6262 = vrsqrt.pop %v6120
        %v6263 = vmul.f32 %v6262, %v6120
        %v6264 = vmul.f32 %v6263, %v6262
        %v6265 = vmul.f32 0.5, %v6264
        %v6266 = vsub.f32 1.5, %v6265
        %v6267 = vmul.f32 %v6262, %v6266
        %vm6268 = vweird.f32 %v6120
        %vm6269 = vweird.f32 %v6262
        %vm6270 = vmor %vm6268, %vm6269
        %v6271 = vsel %vm6270, %v6262, %v6267
        %v6272 = vrsqrt.pop %v6121
        %v6273 = vmul.f32 %v6272, %v6121
        %v6274 = vmul.f32 %v6273, %v6272
        %v6275 = vmul.f32 0.5, %v6274
        %v6276 = vsub.f32 1.5, %v6275
        %v6277 = vmul.f32 %v6272, %v6276
        %vm6278 = vweird.f32 %v6121
        %vm6279 = vweird.f32 %v6272
        %vm6280 = vmor %vm6278, %vm6279
        %v6281 = vsel %vm6280, %v6272, %v6277
        %v6282 = vmul.f32 %v6010, %v6131
        %v6283 = vmul.f32 %v6011, %v6141
        %v6284 = vmul.f32 %v6012, %v6151
        %v6285 = vmul.f32 %v6013, %v6161
        %v6286 = vmul.f32 %v6014, %v6171
        %v6287 = vmul.f32 %v6015, %v6181
        %v6288 = vmul.f32 %v6016, %v6191
        %v6289 = vmul.f32 %v6017, %v6201
        %v6290 = vmul.f32 %v6018, %v6211
        %v6291 = vmul.f32 %v6019, %v6221
        %v6292 = vmul.f32 %v6020, %v6231
        %v6293 = vmul.f32 %v6021, %v6241
        %v6294 = vmul.f32 %v6022, %v6251
        %v6295 = vmul.f32 %v6023, %v6261
        %v6296 = vmul.f32 %v6024, %v6271
        %v6297 = vmul.f32 %v6025, %v6281
        %v6298 = vld [vmem:[%s3 + $0x656] ss:$0 sm:$0xff]
        %v6299 = vmul.f32 %v6282, %v6298
        %v6300 = vmul.f32 %v6283, %v6298
        %v6301 = vmul.f32 %v6284, %v6298
        %v6302 = vmul.f32 %v6285, %v6298
        %v6303 = vmul.f32 %v6286, %v6298
        %v6304 = vmul.f32 %v6287, %v6298
        %v6305 = vmul.f32 %v6288, %v6298
        %v6306 = vmul.f32 %v6289, %v6298
        %v6307 = vmul.f32 %v6290, %v6298
        %v6308 = vmul.f32 %v6291, %v6298
        %v6309 = vmul.f32 %v6292, %v6298
        %v6310 = vmul.f32 %v6293, %v6298
        %v6311 = vmul.f32 %v6294, %v6298
        %v6312 = vmul.f32 %v6295, %v6298
        %v6313 = vmul.f32 %v6296, %v6298
        %v6314 = vmul.f32 %v6297, %v6298
        %v6315 = vld [vmem:[%s3 + $0x657] ss:$0 sm:$0xff]
        %v6316 = vadd.f32 %v6299, %v6315
        %v6317 = vadd.f32 %v6300, %v6315
        %v6318 = vadd.f32 %v6301, %v6315
        %v6319 = vadd.f32 %v6302, %v6315
        %v6320 = vadd.f32 %v6303, %v6315
        %v6321 = vadd.f32 %v6304, %v6315
        %v6322 = vadd.f32 %v6305, %v6315
        %v6323 = vadd.f32 %v6306, %v6315
        %v6324 = vadd.f32 %v6307, %v6315
        %v6325 = vadd.f32 %v6308, %v6315
        %v6326 = vadd.f32 %v6309, %v6315
        %v6327 = vadd.f32 %v6310, %v6315
        %v6328 = vadd.f32 %v6311, %v6315
        %v6329 = vadd.f32 %v6312, %v6315
        %v6330 = vadd.f32 %v6313, %v6315
        %v6331 = vadd.f32 %v6314, %v6315
        %v6332 = vadd.f32 %v6316, %v3394
        %v6333 = vadd.f32 %v6317, %v3397
        %v6334 = vadd.f32 %v6318, %v3400
        %v6335 = vadd.f32 %v6319, %v3403
        %v6336 = vadd.f32 %v6320, %v3406
        %v6337 = vadd.f32 %v6321, %v3409
        %v6338 = vadd.f32 %v6322, %v3412
        %v6339 = vadd.f32 %v6323, %v3415
        %v6340 = vadd.f32 %v6324, %v3418
        %v6341 = vadd.f32 %v6325, %v3421
        %v6342 = vadd.f32 %v6326, %v3424
        %v6343 = vadd.f32 %v6327, %v3427
        %v6344 = vadd.f32 %v6328, %v3430
        %v6345 = vadd.f32 %v6329, %v3433
        %v6346 = vadd.f32 %v6330, %v3436
        %v6347 = vadd.f32 %v6331, %v3439
        %v6348 = vmax.f32 %v6332, 0.0
        %v6349 = vmax.f32 %v6333, 0.0
        %v6350 = vmax.f32 %v6334, 0.0
        %v6351 = vmax.f32 %v6335, 0.0
        %v6352 = vmax.f32 %v6336, 0.0
        %v6353 = vmax.f32 %v6337, 0.0
        %v6354 = vmax.f32 %v6338, 0.0
        %v6355 = vmax.f32 %v6339, 0.0
        %v6356 = vmax.f32 %v6340, 0.0
        %v6357 = vmax.f32 %v6341, 0.0
        %v6358 = vmax.f32 %v6342, 0.0
        %v6359 = vmax.f32 %v6343, 0.0
        %v6360 = vmax.f32 %v6344, 0.0
        %v6361 = vmax.f32 %v6345, 0.0
        %v6362 = vmax.f32 %v6346, 0.0
        %v6363 = vmax.f32 %v6347, 0.0
        %v6364 = vld [vmem:[%s3 + $0x3d0] sm:$0xff]
        %v6365 = vld [vmem:[%s3 + $0x3e0] sm:$0xff]
        %v6366 = vld [vmem:[%s3 + $0x3f0] sm:$0xff]
        %v6367 = vld [vmem:[%s3 + $0x400] sm:$0xff]
        %v6368 = vld [vmem:[%s3 + $0x410] sm:$0xff]
        %v6369 = vld [vmem:[%s3 + $0x420] sm:$0xff]
        %v6370 = vld [vmem:[%s3 + $0x430] sm:$0xff]
        %v6371 = vld [vmem:[%s3 + $0x440] sm:$0xff]
        %v6372 = vld [vmem:[%s3 + $0x660] ss:$0 sm:$0xff]
        %v6374 = vsel %vm5938, %v6348, 0
        %v6377 = vsel %vm5938, %v6349, 0
        %v6380 = vsel %vm5938, %v6350, 0
        %v6383 = vsel %vm5938, %v6351, 0
        %v6386 = vsel %vm5938, %v6352, 0
        %v6389 = vsel %vm5938, %v6353, 0
        %v6392 = vsel %vm5938, %v6354, 0
        %v6395 = vsel %vm5938, %v6355, 0
        %v6398 = vsel %vm5938, %v6356, 0
        %v6401 = vsel %vm5938, %v6357, 0
        %v6404 = vsel %vm5938, %v6358, 0
        %v6407 = vsel %vm5938, %v6359, 0
        %v6410 = vsel %vm5938, %v6360, 0
        %v6413 = vsel %vm5938, %v6361, 0
        %v6416 = vsel %vm5938, %v6362, 0
        %v6419 = vsel %vm5938, %v6363, 0
        %6421 = vmatpush.msra.mxu0 0.0
        %6422 = vmatpush.msra.mxu0 0.0
        %6423 = vmatpush.msra.mxu0 0.0
        %6424 = vmatpush.msra.mxu0 0.0
        %6425 = vmatpush.msra.mxu0 0.0
        %6426 = vmatpush.msra.mxu0 0.0
        %6427 = vmatpush.msra.mxu0 0.0
        %6428 = vmatpush.msra.mxu0 0.0
        %6429 = vmatpush.msra.mxu0 %v6371
        %6430 = vmatpush.msra.mxu0 %v6370
        %6431 = vmatpush.msra.mxu0 %v6369
        %6432 = vmatpush.msra.mxu0 %v6368
        %6433 = vmatpush.msra.mxu0 %v6367
        %6434 = vmatpush.msra.mxu0 %v6366
        %6435 = vmatpush.msra.mxu0 %v6365
        %6436 = vmatpush.msra.mxu0 %v6364
        %6437 = vmatmul.f32.gmra.mxu0 %v6374
        %v6438 = vpop.f32.mrf.mxu0
        %v6439 = vadd.f32 %v6372, %v6438
        %6440 = vmatmul.f32.gmra.mxu0 %v6377
        %v6441 = vpop.f32.mrf.mxu0
        %v6442 = vadd.f32 %v6372, %v6441
        %6443 = vmatmul.f32.gmra.mxu0 %v6380
        %v6444 = vpop.f32.mrf.mxu0
        %v6445 = vadd.f32 %v6372, %v6444
        %6446 = vmatmul.f32.gmra.mxu0 %v6383
        %v6447 = vpop.f32.mrf.mxu0
        %v6448 = vadd.f32 %v6372, %v6447
        %6449 = vmatmul.f32.gmra.mxu0 %v6386
        %v6450 = vpop.f32.mrf.mxu0
        %v6451 = vadd.f32 %v6372, %v6450
        %6452 = vmatmul.f32.gmra.mxu0 %v6389
        %v6453 = vpop.f32.mrf.mxu0
        %v6454 = vadd.f32 %v6372, %v6453
        %6455 = vmatmul.f32.gmra.mxu0 %v6392
        %v6456 = vpop.f32.mrf.mxu0
        %v6457 = vadd.f32 %v6372, %v6456
        %6458 = vmatmul.f32.gmra.mxu0 %v6395
        %v6459 = vpop.f32.mrf.mxu0
        %v6460 = vadd.f32 %v6372, %v6459
        %6461 = vmatmul.f32.gmra.mxu0 %v6398
        %v6462 = vpop.f32.mrf.mxu0
        %v6463 = vadd.f32 %v6372, %v6462
        %6464 = vmatmul.f32.gmra.mxu0 %v6401
        %v6465 = vpop.f32.mrf.mxu0
        %v6466 = vadd.f32 %v6372, %v6465
        %6467 = vmatmul.f32.gmra.mxu0 %v6404
        %v6468 = vpop.f32.mrf.mxu0
        %v6469 = vadd.f32 %v6372, %v6468
        %6470 = vmatmul.f32.gmra.mxu0 %v6407
        %v6471 = vpop.f32.mrf.mxu0
        %v6472 = vadd.f32 %v6372, %v6471
        %6473 = vmatmul.f32.gmra.mxu0 %v6410
        %v6474 = vpop.f32.mrf.mxu0
        %v6475 = vadd.f32 %v6372, %v6474
        %6476 = vmatmul.f32.gmra.mxu0 %v6413
        %v6477 = vpop.f32.mrf.mxu0
        %v6478 = vadd.f32 %v6372, %v6477
        %6479 = vmatmul.f32.gmra.mxu0 %v6416
        %v6480 = vpop.f32.mrf.mxu0
        %v6481 = vadd.f32 %v6372, %v6480
        %6482 = vmatmul.f32.gmra.mxu0 %v6419
        %v6483 = vpop.f32.mrf.mxu0
        %v6484 = vadd.f32 %v6372, %v6483
        %6485 = vdwg.mxu0
        %v6486 = vld [vmem:[%s3 + $0x450] sm:$0xff]
        %v6487 = vld [vmem:[%s3 + $0x460] sm:$0xff]
        %v6488 = vld [vmem:[%s3 + $0x470] sm:$0xff]
        %v6489 = vld [vmem:[%s3 + $0x480] sm:$0xff]
        %v6490 = vld [vmem:[%s3 + $0x490] sm:$0xff]
        %v6491 = vld [vmem:[%s3 + $0x4a0] sm:$0xff]
        %v6492 = vld [vmem:[%s3 + $0x4b0] sm:$0xff]
        %v6493 = vld [vmem:[%s3 + $0x4c0] sm:$0xff]
        %6494 = vmatpush.msra.mxu0 0.0
        %6495 = vmatpush.msra.mxu0 0.0
        %6496 = vmatpush.msra.mxu0 0.0
        %6497 = vmatpush.msra.mxu0 0.0
        %6498 = vmatpush.msra.mxu0 0.0
        %6499 = vmatpush.msra.mxu0 0.0
        %6500 = vmatpush.msra.mxu0 0.0
        %6501 = vmatpush.msra.mxu0 0.0
        %6502 = vmatpush.msra.mxu0 %v6493
        %6503 = vmatpush.msra.mxu0 %v6492
        %6504 = vmatpush.msra.mxu0 %v6491
        %6505 = vmatpush.msra.mxu0 %v6490
        %6506 = vmatpush.msra.mxu0 %v6489
        %6507 = vmatpush.msra.mxu0 %v6488
        %6508 = vmatpush.msra.mxu0 %v6487
        %6509 = vmatpush.msra.mxu0 %v6486
        %6510 = vmatmul.f32.gmra.mxu0 %v6374
        %v6511 = vpop.f32.mrf.mxu0
        %v6512 = vadd.f32 0.0, %v6511
        %6513 = vmatmul.f32.gmra.mxu0 %v6377
        %v6514 = vpop.f32.mrf.mxu0
        %v6515 = vadd.f32 0.0, %v6514
        %6516 = vmatmul.f32.gmra.mxu0 %v6380
        %v6517 = vpop.f32.mrf.mxu0
        %v6518 = vadd.f32 0.0, %v6517
        %6519 = vmatmul.f32.gmra.mxu0 %v6383
        %v6520 = vpop.f32.mrf.mxu0
        %v6521 = vadd.f32 0.0, %v6520
        %6522 = vmatmul.f32.gmra.mxu0 %v6386
        %v6523 = vpop.f32.mrf.mxu0
        %v6524 = vadd.f32 0.0, %v6523
        %6525 = vmatmul.f32.gmra.mxu0 %v6389
        %v6526 = vpop.f32.mrf.mxu0
        %v6527 = vadd.f32 0.0, %v6526
        %6528 = vmatmul.f32.gmra.mxu0 %v6392
        %v6529 = vpop.f32.mrf.mxu0
        %v6530 = vadd.f32 0.0, %v6529
        %6531 = vmatmul.f32.gmra.mxu0 %v6395
        %v6532 = vpop.f32.mrf.mxu0
        %v6533 = vadd.f32 0.0, %v6532
        %6534 = vmatmul.f32.gmra.mxu0 %v6398
        %v6535 = vpop.f32.mrf.mxu0
        %v6536 = vadd.f32 0.0, %v6535
        %6537 = vmatmul.f32.gmra.mxu0 %v6401
        %v6538 = vpop.f32.mrf.mxu0
        %v6539 = vadd.f32 0.0, %v6538
        %6540 = vmatmul.f32.gmra.mxu0 %v6404
        %v6541 = vpop.f32.mrf.mxu0
        %v6542 = vadd.f32 0.0, %v6541
        %6543 = vmatmul.f32.gmra.mxu0 %v6407
        %v6544 = vpop.f32.mrf.mxu0
        %v6545 = vadd.f32 0.0, %v6544
        %6546 = vmatmul.f32.gmra.mxu0 %v6410
        %v6547 = vpop.f32.mrf.mxu0
        %v6548 = vadd.f32 0.0, %v6547
        %6549 = vmatmul.f32.gmra.mxu0 %v6413
        %v6550 = vpop.f32.mrf.mxu0
        %v6551 = vadd.f32 0.0, %v6550
        %6552 = vmatmul.f32.gmra.mxu0 %v6416
        %v6553 = vpop.f32.mrf.mxu0
        %v6554 = vadd.f32 0.0, %v6553
        %6555 = vmatmul.f32.gmra.mxu0 %v6419
        %v6556 = vpop.f32.mrf.mxu0
        %v6557 = vadd.f32 0.0, %v6556
        %6558 = vdwg.mxu0
        %v6559 = vld [vmem:[%s3 + $0x4d0] sm:$0xff]
        %v6560 = vld [vmem:[%s3 + $0x4e0] sm:$0xff]
        %v6561 = vld [vmem:[%s3 + $0x4f0] sm:$0xff]
        %v6562 = vld [vmem:[%s3 + $0x500] sm:$0xff]
        %v6563 = vld [vmem:[%s3 + $0x510] sm:$0xff]
        %v6564 = vld [vmem:[%s3 + $0x520] sm:$0xff]
        %v6565 = vld [vmem:[%s3 + $0x530] sm:$0xff]
        %v6566 = vld [vmem:[%s3 + $0x540] sm:$0xff]
        %v6567 = vld [vmem:[%s3 + $0x550] sm:$0xff]
        %v6568 = vld [vmem:[%s3 + $0x560] sm:$0xff]
        %v6569 = vld [vmem:[%s3 + $0x570] sm:$0xff]
        %v6570 = vld [vmem:[%s3 + $0x580] sm:$0xff]
        %v6571 = vld [vmem:[%s3 + $0x590] sm:$0xff]
        %v6572 = vld [vmem:[%s3 + $0x5a0] sm:$0xff]
        %v6573 = vld [vmem:[%s3 + $0x5b0] sm:$0xff]
        %v6574 = vld [vmem:[%s3 + $0x5c0] sm:$0xff]
        %6575 = vmatpush.msra.mxu0 %v6574
        %6576 = vmatpush.msra.mxu0 %v6573
        %6577 = vmatpush.msra.mxu0 %v6572
        %6578 = vmatpush.msra.mxu0 %v6571
        %6579 = vmatpush.msra.mxu0 %v6570
        %6580 = vmatpush.msra.mxu0 %v6569
        %6581 = vmatpush.msra.mxu0 %v6568
        %6582 = vmatpush.msra.mxu0 %v6567
        %6583 = vmatpush.msra.mxu0 %v6566
        %6584 = vmatpush.msra.mxu0 %v6565
        %6585 = vmatpush.msra.mxu0 %v6564
        %6586 = vmatpush.msra.mxu0 %v6563
        %6587 = vmatpush.msra.mxu0 %v6562
        %6588 = vmatpush.msra.mxu0 %v6561
        %6589 = vmatpush.msra.mxu0 %v6560
        %6590 = vmatpush.msra.mxu0 %v6559
        %6591 = vmatmul.f32.gmra.mxu0 %v6512
        %v6592 = vpop.f32.mrf.mxu0
        %v6593 = vadd.f32 0.0, %v6592
        %6594 = vmatmul.f32.gmra.mxu0 %v6515
        %v6595 = vpop.f32.mrf.mxu0
        %v6596 = vadd.f32 0.0, %v6595
        %6597 = vmatmul.f32.gmra.mxu0 %v6518
        %v6598 = vpop.f32.mrf.mxu0
        %v6599 = vadd.f32 0.0, %v6598
        %6600 = vmatmul.f32.gmra.mxu0 %v6521
        %v6601 = vpop.f32.mrf.mxu0
        %v6602 = vadd.f32 0.0, %v6601
        %6603 = vmatmul.f32.gmra.mxu0 %v6524
        %v6604 = vpop.f32.mrf.mxu0
        %v6605 = vadd.f32 0.0, %v6604
        %6606 = vmatmul.f32.gmra.mxu0 %v6527
        %v6607 = vpop.f32.mrf.mxu0
        %v6608 = vadd.f32 0.0, %v6607
        %6609 = vmatmul.f32.gmra.mxu0 %v6530
        %v6610 = vpop.f32.mrf.mxu0
        %v6611 = vadd.f32 0.0, %v6610
        %6612 = vmatmul.f32.gmra.mxu0 %v6533
        %v6613 = vpop.f32.mrf.mxu0
        %v6614 = vadd.f32 0.0, %v6613
        %6615 = vmatmul.f32.gmra.mxu0 %v6536
        %v6616 = vpop.f32.mrf.mxu0
        %v6617 = vadd.f32 0.0, %v6616
        %6618 = vmatmul.f32.gmra.mxu0 %v6539
        %v6619 = vpop.f32.mrf.mxu0
        %v6620 = vadd.f32 0.0, %v6619
        %6621 = vmatmul.f32.gmra.mxu0 %v6542
        %v6622 = vpop.f32.mrf.mxu0
        %v6623 = vadd.f32 0.0, %v6622
        %6624 = vmatmul.f32.gmra.mxu0 %v6545
        %v6625 = vpop.f32.mrf.mxu0
        %v6626 = vadd.f32 0.0, %v6625
        %6627 = vmatmul.f32.gmra.mxu0 %v6548
        %v6628 = vpop.f32.mrf.mxu0
        %v6629 = vadd.f32 0.0, %v6628
        %6630 = vmatmul.f32.gmra.mxu0 %v6551
        %v6631 = vpop.f32.mrf.mxu0
        %v6632 = vadd.f32 0.0, %v6631
        %6633 = vmatmul.f32.gmra.mxu0 %v6554
        %v6634 = vpop.f32.mrf.mxu0
        %v6635 = vadd.f32 0.0, %v6634
        %6636 = vmatmul.f32.gmra.mxu0 %v6557
        %v6637 = vpop.f32.mrf.mxu0
        %v6638 = vadd.f32 0.0, %v6637
        %6639 = vdwg.mxu0
        %6640 = vxpose.xlu0.b32.start [1/16] %v6593, 128
        %6641 = vxpose.xlu0.b32.cont [2/16] %v6596, 128
        %6642 = vxpose.xlu0.b32.cont [3/16] %v6599, 128
        %6643 = vxpose.xlu0.b32.cont [4/16] %v6602, 128
        %6644 = vxpose.xlu0.b32.cont [5/16] %v6605, 128
        %6645 = vxpose.xlu0.b32.cont [6/16] %v6608, 128
        %6646 = vxpose.xlu0.b32.cont [7/16] %v6611, 128
        %6647 = vxpose.xlu0.b32.cont [8/16] %v6614, 128
        %6648 = vxpose.xlu0.b32.cont [9/16] %v6617, 128
        %6649 = vxpose.xlu0.b32.cont [10/16] %v6620, 128
        %6650 = vxpose.xlu0.b32.cont [11/16] %v6623, 128
        %6651 = vxpose.xlu0.b32.cont [12/16] %v6626, 128
        %6652 = vxpose.xlu0.b32.cont [13/16] %v6629, 128
        %6653 = vxpose.xlu0.b32.cont [14/16] %v6632, 128
        %6654 = vxpose.xlu0.b32.cont [15/16] %v6635, 128
        %6655 = vxpose.xlu0.b32.end [16/16] %v6638, 128
        %v6656 = vpop.trf.xlu0
        %v6657 = vpop.trf.xlu0
        %v6658 = vpop.trf.xlu0
        %v6659 = vpop.trf.xlu0
        %v6660 = vpop.trf.xlu0
        %v6661 = vpop.trf.xlu0
        %v6662 = vpop.trf.xlu0
        %v6663 = vpop.trf.xlu0
        %v6664 = vpop.trf.xlu0
        %v6665 = vpop.trf.xlu0
        %v6666 = vpop.trf.xlu0
        %v6667 = vpop.trf.xlu0
        %v6668 = vpop.trf.xlu0
        %v6669 = vpop.trf.xlu0
        %v6670 = vpop.trf.xlu0
        %v6671 = vpop.trf.xlu0
        %s6672 = sld [smem:[#allocation2 + $0x8]]
        %6674 = vset.pattern.permute.xlu0 4
        %6675 = vperm.xlu0 %6674, %v6593
        %v6676 = vpop.permute.xlu0 %6675
        %6679 = vset.pattern.permute.xlu0 4
        %6680 = vperm.xlu0 %6679, %v6596
        %v6681 = vpop.permute.xlu0 %6680
        %6684 = vset.pattern.permute.xlu0 4
        %6685 = vperm.xlu0 %6684, %v6599
        %v6686 = vpop.permute.xlu0 %6685
        %6689 = vset.pattern.permute.xlu0 4
        %6690 = vperm.xlu0 %6689, %v6602
        %v6691 = vpop.permute.xlu0 %6690
        %6694 = vset.pattern.permute.xlu0 4
        %6695 = vperm.xlu0 %6694, %v6605
        %v6696 = vpop.permute.xlu0 %6695
        %6699 = vset.pattern.permute.xlu0 4
        %6700 = vperm.xlu0 %6699, %v6608
        %v6701 = vpop.permute.xlu0 %6700
        %6704 = vset.pattern.permute.xlu0 4
        %6705 = vperm.xlu0 %6704, %v6611
        %v6706 = vpop.permute.xlu0 %6705
        %6709 = vset.pattern.permute.xlu0 4
        %6710 = vperm.xlu0 %6709, %v6614
        %v6711 = vpop.permute.xlu0 %6710
        %6714 = vset.pattern.permute.xlu0 4
        %6715 = vperm.xlu0 %6714, %v6617
        %v6716 = vpop.permute.xlu0 %6715
        %6719 = vset.pattern.permute.xlu0 4
        %6720 = vperm.xlu0 %6719, %v6620
        %v6721 = vpop.permute.xlu0 %6720
        %6724 = vset.pattern.permute.xlu0 4
        %6725 = vperm.xlu0 %6724, %v6623
        %v6726 = vpop.permute.xlu0 %6725
        %6729 = vset.pattern.permute.xlu0 4
        %6730 = vperm.xlu0 %6729, %v6626
        %v6731 = vpop.permute.xlu0 %6730
        %6734 = vset.pattern.permute.xlu0 4
        %6735 = vperm.xlu0 %6734, %v6629
        %v6736 = vpop.permute.xlu0 %6735
        %6739 = vset.pattern.permute.xlu0 4
        %6740 = vperm.xlu0 %6739, %v6632
        %v6741 = vpop.permute.xlu0 %6740
        %6744 = vset.pattern.permute.xlu0 4
        %6745 = vperm.xlu0 %6744, %v6635
        %v6746 = vpop.permute.xlu0 %6745
        %6749 = vset.pattern.permute.xlu0 4
        %6750 = vperm.xlu0 %6749, %v6638
        %v6751 = vpop.permute.xlu0 %6750
        %v6753 = vperm.slane %v6656, 0
        %v6754 = vadd.f32 %v6676, %v6753
        %v6755 = vadd.f32 %v6681, %v6753
        %v6756 = vadd.f32 %v6686, %v6753
        %v6757 = vadd.f32 %v6691, %v6753
        %v6758 = vadd.f32 %v6696, %v6753
        %v6759 = vadd.f32 %v6701, %v6753
        %v6760 = vadd.f32 %v6706, %v6753
        %v6761 = vadd.f32 %v6711, %v6753
        %v6762 = vadd.f32 %v6716, %v6753
        %v6763 = vadd.f32 %v6721, %v6753
        %v6764 = vadd.f32 %v6726, %v6753
        %v6765 = vadd.f32 %v6731, %v6753
        %v6766 = vadd.f32 %v6736, %v6753
        %v6767 = vadd.f32 %v6741, %v6753
        %v6768 = vadd.f32 %v6746, %v6753
        %v6769 = vadd.f32 %v6751, %v6753
        %v6770 = vstv %s6672
        %v6771 = vmul.f32 %v6770, %v318
        %v6772 = vmul.f32 %v6770, %v319
        %v6773 = vmul.f32 %v6770, %v320
        %v6774 = vmul.f32 %v6770, %v321
        %v6775 = vmul.f32 %v6770, %v322
        %v6776 = vmul.f32 %v6770, %v323
        %v6777 = vmul.f32 %v6770, %v324
        %v6778 = vmul.f32 %v6770, %v325
        %v6779 = vmul.f32 %v6770, %v326
        %v6780 = vmul.f32 %v6770, %v327
        %v6781 = vmul.f32 %v6770, %v328
        %v6782 = vmul.f32 %v6770, %v329
        %v6783 = vmul.f32 %v6770, %v330
        %v6784 = vmul.f32 %v6770, %v331
        %v6785 = vmul.f32 %v6770, %v332
        %v6786 = vmul.f32 %v6770, %v333
        %v6787 = vadd.f32 %v6754, %v6771
        %v6788 = vadd.f32 %v6755, %v6772
        %v6789 = vadd.f32 %v6756, %v6773
        %v6790 = vadd.f32 %v6757, %v6774
        %v6791 = vadd.f32 %v6758, %v6775
        %v6792 = vadd.f32 %v6759, %v6776
        %v6793 = vadd.f32 %v6760, %v6777
        %v6794 = vadd.f32 %v6761, %v6778
        %v6795 = vadd.f32 %v6762, %v6779
        %v6796 = vadd.f32 %v6763, %v6780
        %v6797 = vadd.f32 %v6764, %v6781
        %v6798 = vadd.f32 %v6765, %v6782
        %v6799 = vadd.f32 %v6766, %v6783
        %v6800 = vadd.f32 %v6767, %v6784
        %v6801 = vadd.f32 %v6768, %v6785
        %v6802 = vadd.f32 %v6769, %v6786
        %v6803 = vmul.f32 %v6787, 0.2
        %v6804 = vmul.f32 %v6788, 0.2
        %v6805 = vmul.f32 %v6789, 0.2
        %v6806 = vmul.f32 %v6790, 0.2
        %v6807 = vmul.f32 %v6791, 0.2
        %v6808 = vmul.f32 %v6792, 0.2
        %v6809 = vmul.f32 %v6793, 0.2
        %v6810 = vmul.f32 %v6794, 0.2
        %v6811 = vmul.f32 %v6795, 0.2
        %v6812 = vmul.f32 %v6796, 0.2
        %v6813 = vmul.f32 %v6797, 0.2
        %v6814 = vmul.f32 %v6798, 0.2
        %v6815 = vmul.f32 %v6799, 0.2
        %v6816 = vmul.f32 %v6800, 0.2
        %v6817 = vmul.f32 %v6801, 0.2
        %v6818 = vmul.f32 %v6802, 0.2
        %v6819 = vmax.f32 %v6787, %v6803
        %v6820 = vmax.f32 %v6788, %v6804
        %v6821 = vmax.f32 %v6789, %v6805
        %v6822 = vmax.f32 %v6790, %v6806
        %v6823 = vmax.f32 %v6791, %v6807
        %v6824 = vmax.f32 %v6792, %v6808
        %v6825 = vmax.f32 %v6793, %v6809
        %v6826 = vmax.f32 %v6794, %v6810
        %v6827 = vmax.f32 %v6795, %v6811
        %v6828 = vmax.f32 %v6796, %v6812
        %v6829 = vmax.f32 %v6797, %v6813
        %v6830 = vmax.f32 %v6798, %v6814
        %v6831 = vmax.f32 %v6799, %v6815
        %v6832 = vmax.f32 %v6800, %v6816
        %v6833 = vmax.f32 %v6801, %v6817
        %v6834 = vmax.f32 %v6802, %v6818
        %v6835 = vadd.f32 %v6819, %v302
        %v6836 = vadd.f32 %v6820, %v303
        %v6837 = vadd.f32 %v6821, %v304
        %v6838 = vadd.f32 %v6822, %v305
        %v6839 = vadd.f32 %v6823, %v306
        %v6840 = vadd.f32 %v6824, %v307
        %v6841 = vadd.f32 %v6825, %v308
        %v6842 = vadd.f32 %v6826, %v309
        %v6843 = vadd.f32 %v6827, %v310
        %v6844 = vadd.f32 %v6828, %v311
        %v6845 = vadd.f32 %v6829, %v312
        %v6846 = vadd.f32 %v6830, %v313
        %v6847 = vadd.f32 %v6831, %v314
        %v6848 = vadd.f32 %v6832, %v315
        %v6849 = vadd.f32 %v6833, %v316
        %v6850 = vadd.f32 %v6834, %v317
        %6851 = vmax.xlane.f32.xlu0 %v6835
        %v6852 = vpop.xlane.xlu0 %6851
        %6853 = vmax.xlane.f32.xlu0 %v6836
        %v6854 = vpop.xlane.xlu0 %6853
        %6855 = vmax.xlane.f32.xlu0 %v6837
        %v6856 = vpop.xlane.xlu0 %6855
        %6857 = vmax.xlane.f32.xlu0 %v6838
        %v6858 = vpop.xlane.xlu0 %6857
        %6859 = vmax.xlane.f32.xlu0 %v6839
        %v6860 = vpop.xlane.xlu0 %6859
        %6861 = vmax.xlane.f32.xlu0 %v6840
        %v6862 = vpop.xlane.xlu0 %6861
        %6863 = vmax.xlane.f32.xlu0 %v6841
        %v6864 = vpop.xlane.xlu0 %6863
        %6865 = vmax.xlane.f32.xlu0 %v6842
        %v6866 = vpop.xlane.xlu0 %6865
        %6867 = vmax.xlane.f32.xlu0 %v6843
        %v6868 = vpop.xlane.xlu0 %6867
        %6869 = vmax.xlane.f32.xlu0 %v6844
        %v6870 = vpop.xlane.xlu0 %6869
        %6871 = vmax.xlane.f32.xlu0 %v6845
        %v6872 = vpop.xlane.xlu0 %6871
        %6873 = vmax.xlane.f32.xlu0 %v6846
        %v6874 = vpop.xlane.xlu0 %6873
        %6875 = vmax.xlane.f32.xlu0 %v6847
        %v6876 = vpop.xlane.xlu0 %6875
        %6877 = vmax.xlane.f32.xlu0 %v6848
        %v6878 = vpop.xlane.xlu0 %6877
        %6879 = vmax.xlane.f32.xlu0 %v6849
        %v6880 = vpop.xlane.xlu0 %6879
        %6881 = vmax.xlane.f32.xlu0 %v6850
        %v6882 = vpop.xlane.xlu0 %6881
        %v6883 = vsub.f32 %v6835, %v6852
        %v6884 = vsub.f32 %v6836, %v6854
        %v6885 = vsub.f32 %v6837, %v6856
        %v6886 = vsub.f32 %v6838, %v6858
        %v6887 = vsub.f32 %v6839, %v6860
        %v6888 = vsub.f32 %v6840, %v6862
        %v6889 = vsub.f32 %v6841, %v6864
        %v6890 = vsub.f32 %v6842, %v6866
        %v6891 = vsub.f32 %v6843, %v6868
        %v6892 = vsub.f32 %v6844, %v6870
        %v6893 = vsub.f32 %v6845, %v6872
        %v6894 = vsub.f32 %v6846, %v6874
        %v6895 = vsub.f32 %v6847, %v6876
        %v6896 = vsub.f32 %v6848, %v6878
        %v6897 = vsub.f32 %v6849, %v6880
        %v6898 = vsub.f32 %v6850, %v6882
        %v6899 = vmul.f32 %v6883, 1.442695
        %v6900 = vpow.pop %v6899
        %v6901 = vmul.f32 %v6884, 1.442695
        %v6902 = vpow.pop %v6901
        %v6903 = vmul.f32 %v6885, 1.442695
        %v6904 = vpow.pop %v6903
        %v6905 = vmul.f32 %v6886, 1.442695
        %v6906 = vpow.pop %v6905
        %v6907 = vmul.f32 %v6887, 1.442695
        %v6908 = vpow.pop %v6907
        %v6909 = vmul.f32 %v6888, 1.442695
        %v6910 = vpow.pop %v6909
        %v6911 = vmul.f32 %v6889, 1.442695
        %v6912 = vpow.pop %v6911
        %v6913 = vmul.f32 %v6890, 1.442695
        %v6914 = vpow.pop %v6913
        %v6915 = vmul.f32 %v6891, 1.442695
        %v6916 = vpow.pop %v6915
        %v6917 = vmul.f32 %v6892, 1.442695
        %v6918 = vpow.pop %v6917
        %v6919 = vmul.f32 %v6893, 1.442695
        %v6920 = vpow.pop %v6919
        %v6921 = vmul.f32 %v6894, 1.442695
        %v6922 = vpow.pop %v6921
        %v6923 = vmul.f32 %v6895, 1.442695
        %v6924 = vpow.pop %v6923
        %v6925 = vmul.f32 %v6896, 1.442695
        %v6926 = vpow.pop %v6925
        %v6927 = vmul.f32 %v6897, 1.442695
        %v6928 = vpow.pop %v6927
        %v6929 = vmul.f32 %v6898, 1.442695
        %v6930 = vpow.pop %v6929
        %6931 = vmatpush.msra.mxu0 1.0
        %6932 = vmatpush.msra.mxu0 1.0
        %6933 = vmatpush.msra.mxu0 1.0
        %6934 = vmatpush.msra.mxu0 1.0
        %6935 = vmatpush.msra.mxu0 1.0
        %6936 = vmatpush.msra.mxu0 1.0
        %6937 = vmatpush.msra.mxu0 1.0
        %6938 = vmatpush.msra.mxu0 1.0
        %6939 = vmatpush.msra.mxu0 1.0
        %6940 = vmatpush.msra.mxu0 1.0
        %6941 = vmatpush.msra.mxu0 1.0
        %6942 = vmatpush.msra.mxu0 1.0
        %6943 = vmatpush.msra.mxu0 1.0
        %6944 = vmatpush.msra.mxu0 1.0
        %6945 = vmatpush.msra.mxu0 1.0
        %6946 = vmatpush.msra.mxu0 1.0
        %6947 = vmatmul.f32.gmra.mxu0 %v6900
        %v6948 = vpop.f32.mrf.mxu0
        %v6949 = vadd.f32 0.0, %v6948
        %6950 = vmatmul.f32.gmra.mxu0 %v6902
        %v6951 = vpop.f32.mrf.mxu0
        %v6952 = vadd.f32 0.0, %v6951
        %6953 = vmatmul.f32.gmra.mxu0 %v6904
        %v6954 = vpop.f32.mrf.mxu0
        %v6955 = vadd.f32 0.0, %v6954
        %6956 = vmatmul.f32.gmra.mxu0 %v6906
        %v6957 = vpop.f32.mrf.mxu0
        %v6958 = vadd.f32 0.0, %v6957
        %6959 = vmatmul.f32.gmra.mxu0 %v6908
        %v6960 = vpop.f32.mrf.mxu0
        %v6961 = vadd.f32 0.0, %v6960
        %6962 = vmatmul.f32.gmra.mxu0 %v6910
        %v6963 = vpop.f32.mrf.mxu0
        %v6964 = vadd.f32 0.0, %v6963
        %6965 = vmatmul.f32.gmra.mxu0 %v6912
        %v6966 = vpop.f32.mrf.mxu0
        %v6967 = vadd.f32 0.0, %v6966
        %6968 = vmatmul.f32.gmra.mxu0 %v6914
        %v6969 = vpop.f32.mrf.mxu0
        %v6970 = vadd.f32 0.0, %v6969
        %6971 = vmatmul.f32.gmra.mxu0 %v6916
        %v6972 = vpop.f32.mrf.mxu0
        %v6973 = vadd.f32 0.0, %v6972
        %6974 = vmatmul.f32.gmra.mxu0 %v6918
        %v6975 = vpop.f32.mrf.mxu0
        %v6976 = vadd.f32 0.0, %v6975
        %6977 = vmatmul.f32.gmra.mxu0 %v6920
        %v6978 = vpop.f32.mrf.mxu0
        %v6979 = vadd.f32 0.0, %v6978
        %6980 = vmatmul.f32.gmra.mxu0 %v6922
        %v6981 = vpop.f32.mrf.mxu0
        %v6982 = vadd.f32 0.0, %v6981
        %6983 = vmatmul.f32.gmra.mxu0 %v6924
        %v6984 = vpop.f32.mrf.mxu0
        %v6985 = vadd.f32 0.0, %v6984
        %6986 = vmatmul.f32.gmra.mxu0 %v6926
        %v6987 = vpop.f32.mrf.mxu0
        %v6988 = vadd.f32 0.0, %v6987
        %6989 = vmatmul.f32.gmra.mxu0 %v6928
        %v6990 = vpop.f32.mrf.mxu0
        %v6991 = vadd.f32 0.0, %v6990
        %6992 = vmatmul.f32.gmra.mxu0 %v6930
        %v6993 = vpop.f32.mrf.mxu0
        %v6994 = vadd.f32 0.0, %v6993
        %6995 = vdwg.mxu0
        %6996 = vmatpush.msra.mxu0 %v6557
        %6997 = vmatpush.msra.mxu0 %v6554
        %6998 = vmatpush.msra.mxu0 %v6551
        %6999 = vmatpush.msra.mxu0 %v6548
        %7000 = vmatpush.msra.mxu0 %v6545
        %7001 = vmatpush.msra.mxu0 %v6542
        %7002 = vmatpush.msra.mxu0 %v6539
        %7003 = vmatpush.msra.mxu0 %v6536
        %7004 = vmatpush.msra.mxu0 %v6533
        %7005 = vmatpush.msra.mxu0 %v6530
        %7006 = vmatpush.msra.mxu0 %v6527
        %7007 = vmatpush.msra.mxu0 %v6524
        %7008 = vmatpush.msra.mxu0 %v6521
        %7009 = vmatpush.msra.mxu0 %v6518
        %7010 = vmatpush.msra.mxu0 %v6515
        %7011 = vmatpush.msra.mxu0 %v6512
        %7012 = vmatmul.f32.gmra.mxu0 %v6900
        %v7013 = vpop.f32.mrf.mxu0
        %v7014 = vadd.f32 0.0, %v7013
        %7015 = vmatmul.f32.gmra.mxu0 %v6902
        %v7016 = vpop.f32.mrf.mxu0
        %v7017 = vadd.f32 0.0, %v7016
        %7018 = vmatmul.f32.gmra.mxu0 %v6904
        %v7019 = vpop.f32.mrf.mxu0
        %v7020 = vadd.f32 0.0, %v7019
        %7021 = vmatmul.f32.gmra.mxu0 %v6906
        %v7022 = vpop.f32.mrf.mxu0
        %v7023 = vadd.f32 0.0, %v7022
        %7024 = vmatmul.f32.gmra.mxu0 %v6908
        %v7025 = vpop.f32.mrf.mxu0
        %v7026 = vadd.f32 0.0, %v7025
        %7027 = vmatmul.f32.gmra.mxu0 %v6910
        %v7028 = vpop.f32.mrf.mxu0
        %v7029 = vadd.f32 0.0, %v7028
        %7030 = vmatmul.f32.gmra.mxu0 %v6912
        %v7031 = vpop.f32.mrf.mxu0
        %v7032 = vadd.f32 0.0, %v7031
        %7033 = vmatmul.f32.gmra.mxu0 %v6914
        %v7034 = vpop.f32.mrf.mxu0
        %v7035 = vadd.f32 0.0, %v7034
        %7036 = vmatmul.f32.gmra.mxu0 %v6916
        %v7037 = vpop.f32.mrf.mxu0
        %v7038 = vadd.f32 0.0, %v7037
        %7039 = vmatmul.f32.gmra.mxu0 %v6918
        %v7040 = vpop.f32.mrf.mxu0
        %v7041 = vadd.f32 0.0, %v7040
        %7042 = vmatmul.f32.gmra.mxu0 %v6920
        %v7043 = vpop.f32.mrf.mxu0
        %v7044 = vadd.f32 0.0, %v7043
        %7045 = vmatmul.f32.gmra.mxu0 %v6922
        %v7046 = vpop.f32.mrf.mxu0
        %v7047 = vadd.f32 0.0, %v7046
        %7048 = vmatmul.f32.gmra.mxu0 %v6924
        %v7049 = vpop.f32.mrf.mxu0
        %v7050 = vadd.f32 0.0, %v7049
        %7051 = vmatmul.f32.gmra.mxu0 %v6926
        %v7052 = vpop.f32.mrf.mxu0
        %v7053 = vadd.f32 0.0, %v7052
        %7054 = vmatmul.f32.gmra.mxu0 %v6928
        %v7055 = vpop.f32.mrf.mxu0
        %v7056 = vadd.f32 0.0, %v7055
        %7057 = vmatmul.f32.gmra.mxu0 %v6930
        %v7058 = vpop.f32.mrf.mxu0
        %v7059 = vadd.f32 0.0, %v7058
        %7060 = vdwg.mxu0
        %v7061 = vrcp.pop %v6949
        %v7062 = vrcp.pop %v6952
        %v7063 = vrcp.pop %v6955
        %v7064 = vrcp.pop %v6958
        %v7065 = vrcp.pop %v6961
        %v7066 = vrcp.pop %v6964
        %v7067 = vrcp.pop %v6967
        %v7068 = vrcp.pop %v6970
        %v7069 = vrcp.pop %v6973
        %v7070 = vrcp.pop %v6976
        %v7071 = vrcp.pop %v6979
        %v7072 = vrcp.pop %v6982
        %v7073 = vrcp.pop %v6985
        %v7074 = vrcp.pop %v6988
        %v7075 = vrcp.pop %v6991
        %v7076 = vrcp.pop %v6994
        %7078 = vset.pattern.permute.xlu0 0
        %7079 = vperm.xlu0 %7078, %v7061
        %v7080 = vpop.permute.xlu0 %7079
        %7083 = vset.pattern.permute.xlu0 0
        %7084 = vperm.xlu0 %7083, %v7062
        %v7085 = vpop.permute.xlu0 %7084
        %7088 = vset.pattern.permute.xlu0 0
        %7089 = vperm.xlu0 %7088, %v7063
        %v7090 = vpop.permute.xlu0 %7089
        %7093 = vset.pattern.permute.xlu0 0
        %7094 = vperm.xlu0 %7093, %v7064
        %v7095 = vpop.permute.xlu0 %7094
        %7098 = vset.pattern.permute.xlu0 0
        %7099 = vperm.xlu0 %7098, %v7065
        %v7100 = vpop.permute.xlu0 %7099
        %7103 = vset.pattern.permute.xlu0 0
        %7104 = vperm.xlu0 %7103, %v7066
        %v7105 = vpop.permute.xlu0 %7104
        %7108 = vset.pattern.permute.xlu0 0
        %7109 = vperm.xlu0 %7108, %v7067
        %v7110 = vpop.permute.xlu0 %7109
        %7113 = vset.pattern.permute.xlu0 0
        %7114 = vperm.xlu0 %7113, %v7068
        %v7115 = vpop.permute.xlu0 %7114
        %7118 = vset.pattern.permute.xlu0 0
        %7119 = vperm.xlu0 %7118, %v7069
        %v7120 = vpop.permute.xlu0 %7119
        %7123 = vset.pattern.permute.xlu0 0
        %7124 = vperm.xlu0 %7123, %v7070
        %v7125 = vpop.permute.xlu0 %7124
        %7128 = vset.pattern.permute.xlu0 0
        %7129 = vperm.xlu0 %7128, %v7071
        %v7130 = vpop.permute.xlu0 %7129
        %7133 = vset.pattern.permute.xlu0 0
        %7134 = vperm.xlu0 %7133, %v7072
        %v7135 = vpop.permute.xlu0 %7134
        %7138 = vset.pattern.permute.xlu0 0
        %7139 = vperm.xlu0 %7138, %v7073
        %v7140 = vpop.permute.xlu0 %7139
        %7143 = vset.pattern.permute.xlu0 0
        %7144 = vperm.xlu0 %7143, %v7074
        %v7145 = vpop.permute.xlu0 %7144
        %7148 = vset.pattern.permute.xlu0 0
        %7149 = vperm.xlu0 %7148, %v7075
        %v7150 = vpop.permute.xlu0 %7149
        %7153 = vset.pattern.permute.xlu0 0
        %7154 = vperm.xlu0 %7153, %v7076
        %v7155 = vpop.permute.xlu0 %7154
        %v7157 = vmul.f32 %v7014, %v7080
        %v7158 = vmul.f32 %v7017, %v7085
        %v7159 = vmul.f32 %v7020, %v7090
        %v7160 = vmul.f32 %v7023, %v7095
        %v7161 = vmul.f32 %v7026, %v7100
        %v7162 = vmul.f32 %v7029, %v7105
        %v7163 = vmul.f32 %v7032, %v7110
        %v7164 = vmul.f32 %v7035, %v7115
        %v7165 = vmul.f32 %v7038, %v7120
        %v7166 = vmul.f32 %v7041, %v7125
        %v7167 = vmul.f32 %v7044, %v7130
        %v7168 = vmul.f32 %v7047, %v7135
        %v7169 = vmul.f32 %v7050, %v7140
        %v7170 = vmul.f32 %v7053, %v7145
        %v7171 = vmul.f32 %v7056, %v7150
        %v7172 = vmul.f32 %v7059, %v7155
        %s7173 = sld [smem:[#allocation2 + $0x9]]
        %7174 = vset.pattern.permute.xlu0 5
        %7175 = vperm.xlu0 %7174, %v6593
        %v7176 = vpop.permute.xlu0 %7175
        %7178 = vset.pattern.permute.xlu0 5
        %7179 = vperm.xlu0 %7178, %v6596
        %v7180 = vpop.permute.xlu0 %7179
        %7182 = vset.pattern.permute.xlu0 5
        %7183 = vperm.xlu0 %7182, %v6599
        %v7184 = vpop.permute.xlu0 %7183
        %7186 = vset.pattern.permute.xlu0 5
        %7187 = vperm.xlu0 %7186, %v6602
        %v7188 = vpop.permute.xlu0 %7187
        %7190 = vset.pattern.permute.xlu0 5
        %7191 = vperm.xlu0 %7190, %v6605
        %v7192 = vpop.permute.xlu0 %7191
        %7194 = vset.pattern.permute.xlu0 5
        %7195 = vperm.xlu0 %7194, %v6608
        %v7196 = vpop.permute.xlu0 %7195
        %7198 = vset.pattern.permute.xlu0 5
        %7199 = vperm.xlu0 %7198, %v6611
        %v7200 = vpop.permute.xlu0 %7199
        %7202 = vset.pattern.permute.xlu0 5
        %7203 = vperm.xlu0 %7202, %v6614
        %v7204 = vpop.permute.xlu0 %7203
        %7206 = vset.pattern.permute.xlu0 5
        %7207 = vperm.xlu0 %7206, %v6617
        %v7208 = vpop.permute.xlu0 %7207
        %7210 = vset.pattern.permute.xlu0 5
        %7211 = vperm.xlu0 %7210, %v6620
        %v7212 = vpop.permute.xlu0 %7211
        %7214 = vset.pattern.permute.xlu0 5
        %7215 = vperm.xlu0 %7214, %v6623
        %v7216 = vpop.permute.xlu0 %7215
        %7218 = vset.pattern.permute.xlu0 5
        %7219 = vperm.xlu0 %7218, %v6626
        %v7220 = vpop.permute.xlu0 %7219
        %7222 = vset.pattern.permute.xlu0 5
        %7223 = vperm.xlu0 %7222, %v6629
        %v7224 = vpop.permute.xlu0 %7223
        %7226 = vset.pattern.permute.xlu0 5
        %7227 = vperm.xlu0 %7226, %v6632
        %v7228 = vpop.permute.xlu0 %7227
        %7230 = vset.pattern.permute.xlu0 5
        %7231 = vperm.xlu0 %7230, %v6635
        %v7232 = vpop.permute.xlu0 %7231
        %7234 = vset.pattern.permute.xlu0 5
        %7235 = vperm.xlu0 %7234, %v6638
        %v7236 = vpop.permute.xlu0 %7235
        %v7238 = vperm.slane %v6656, 1
        %v7239 = vadd.f32 %v7176, %v7238
        %v7240 = vadd.f32 %v7180, %v7238
        %v7241 = vadd.f32 %v7184, %v7238
        %v7242 = vadd.f32 %v7188, %v7238
        %v7243 = vadd.f32 %v7192, %v7238
        %v7244 = vadd.f32 %v7196, %v7238
        %v7245 = vadd.f32 %v7200, %v7238
        %v7246 = vadd.f32 %v7204, %v7238
        %v7247 = vadd.f32 %v7208, %v7238
        %v7248 = vadd.f32 %v7212, %v7238
        %v7249 = vadd.f32 %v7216, %v7238
        %v7250 = vadd.f32 %v7220, %v7238
        %v7251 = vadd.f32 %v7224, %v7238
        %v7252 = vadd.f32 %v7228, %v7238
        %v7253 = vadd.f32 %v7232, %v7238
        %v7254 = vadd.f32 %v7236, %v7238
        %v7255 = vstv %s7173
        %v7256 = vmul.f32 %v7255, %v318
        %v7257 = vmul.f32 %v7255, %v319
        %v7258 = vmul.f32 %v7255, %v320
        %v7259 = vmul.f32 %v7255, %v321
        %v7260 = vmul.f32 %v7255, %v322
        %v7261 = vmul.f32 %v7255, %v323
        %v7262 = vmul.f32 %v7255, %v324
        %v7263 = vmul.f32 %v7255, %v325
        %v7264 = vmul.f32 %v7255, %v326
        %v7265 = vmul.f32 %v7255, %v327
        %v7266 = vmul.f32 %v7255, %v328
        %v7267 = vmul.f32 %v7255, %v329
        %v7268 = vmul.f32 %v7255, %v330
        %v7269 = vmul.f32 %v7255, %v331
        %v7270 = vmul.f32 %v7255, %v332
        %v7271 = vmul.f32 %v7255, %v333
        %v7272 = vadd.f32 %v7239, %v7256
        %v7273 = vadd.f32 %v7240, %v7257
        %v7274 = vadd.f32 %v7241, %v7258
        %v7275 = vadd.f32 %v7242, %v7259
        %v7276 = vadd.f32 %v7243, %v7260
        %v7277 = vadd.f32 %v7244, %v7261
        %v7278 = vadd.f32 %v7245, %v7262
        %v7279 = vadd.f32 %v7246, %v7263
        %v7280 = vadd.f32 %v7247, %v7264
        %v7281 = vadd.f32 %v7248, %v7265
        %v7282 = vadd.f32 %v7249, %v7266
        %v7283 = vadd.f32 %v7250, %v7267
        %v7284 = vadd.f32 %v7251, %v7268
        %v7285 = vadd.f32 %v7252, %v7269
        %v7286 = vadd.f32 %v7253, %v7270
        %v7287 = vadd.f32 %v7254, %v7271
        %v7288 = vmul.f32 %v7272, 0.2
        %v7289 = vmul.f32 %v7273, 0.2
        %v7290 = vmul.f32 %v7274, 0.2
        %v7291 = vmul.f32 %v7275, 0.2
        %v7292 = vmul.f32 %v7276, 0.2
        %v7293 = vmul.f32 %v7277, 0.2
        %v7294 = vmul.f32 %v7278, 0.2
        %v7295 = vmul.f32 %v7279, 0.2
        %v7296 = vmul.f32 %v7280, 0.2
        %v7297 = vmul.f32 %v7281, 0.2
        %v7298 = vmul.f32 %v7282, 0.2
        %v7299 = vmul.f32 %v7283, 0.2
        %v7300 = vmul.f32 %v7284, 0.2
        %v7301 = vmul.f32 %v7285, 0.2
        %v7302 = vmul.f32 %v7286, 0.2
        %v7303 = vmul.f32 %v7287, 0.2
        %v7304 = vmax.f32 %v7272, %v7288
        %v7305 = vmax.f32 %v7273, %v7289
        %v7306 = vmax.f32 %v7274, %v7290
        %v7307 = vmax.f32 %v7275, %v7291
        %v7308 = vmax.f32 %v7276, %v7292
        %v7309 = vmax.f32 %v7277, %v7293
        %v7310 = vmax.f32 %v7278, %v7294
        %v7311 = vmax.f32 %v7279, %v7295
        %v7312 = vmax.f32 %v7280, %v7296
        %v7313 = vmax.f32 %v7281, %v7297
        %v7314 = vmax.f32 %v7282, %v7298
        %v7315 = vmax.f32 %v7283, %v7299
        %v7316 = vmax.f32 %v7284, %v7300
        %v7317 = vmax.f32 %v7285, %v7301
        %v7318 = vmax.f32 %v7286, %v7302
        %v7319 = vmax.f32 %v7287, %v7303
        %v7320 = vadd.f32 %v7304, %v302
        %v7321 = vadd.f32 %v7305, %v303
        %v7322 = vadd.f32 %v7306, %v304
        %v7323 = vadd.f32 %v7307, %v305
        %v7324 = vadd.f32 %v7308, %v306
        %v7325 = vadd.f32 %v7309, %v307
        %v7326 = vadd.f32 %v7310, %v308
        %v7327 = vadd.f32 %v7311, %v309
        %v7328 = vadd.f32 %v7312, %v310
        %v7329 = vadd.f32 %v7313, %v311
        %v7330 = vadd.f32 %v7314, %v312
        %v7331 = vadd.f32 %v7315, %v313
        %v7332 = vadd.f32 %v7316, %v314
        %v7333 = vadd.f32 %v7317, %v315
        %v7334 = vadd.f32 %v7318, %v316
        %v7335 = vadd.f32 %v7319, %v317
        %7336 = vmax.xlane.f32.xlu0 %v7320
        %v7337 = vpop.xlane.xlu0 %7336
        %7338 = vmax.xlane.f32.xlu0 %v7321
        %v7339 = vpop.xlane.xlu0 %7338
        %7340 = vmax.xlane.f32.xlu0 %v7322
        %v7341 = vpop.xlane.xlu0 %7340
        %7342 = vmax.xlane.f32.xlu0 %v7323
        %v7343 = vpop.xlane.xlu0 %7342
        %7344 = vmax.xlane.f32.xlu0 %v7324
        %v7345 = vpop.xlane.xlu0 %7344
        %7346 = vmax.xlane.f32.xlu0 %v7325
        %v7347 = vpop.xlane.xlu0 %7346
        %7348 = vmax.xlane.f32.xlu0 %v7326
        %v7349 = vpop.xlane.xlu0 %7348
        %7350 = vmax.xlane.f32.xlu0 %v7327
        %v7351 = vpop.xlane.xlu0 %7350
        %7352 = vmax.xlane.f32.xlu0 %v7328
        %v7353 = vpop.xlane.xlu0 %7352
        %7354 = vmax.xlane.f32.xlu0 %v7329
        %v7355 = vpop.xlane.xlu0 %7354
        %7356 = vmax.xlane.f32.xlu0 %v7330
        %v7357 = vpop.xlane.xlu0 %7356
        %7358 = vmax.xlane.f32.xlu0 %v7331
        %v7359 = vpop.xlane.xlu0 %7358
        %7360 = vmax.xlane.f32.xlu0 %v7332
        %v7361 = vpop.xlane.xlu0 %7360
        %7362 = vmax.xlane.f32.xlu0 %v7333
        %v7363 = vpop.xlane.xlu0 %7362
        %7364 = vmax.xlane.f32.xlu0 %v7334
        %v7365 = vpop.xlane.xlu0 %7364
        %7366 = vmax.xlane.f32.xlu0 %v7335
        %v7367 = vpop.xlane.xlu0 %7366
        %v7368 = vsub.f32 %v7320, %v7337
        %v7369 = vsub.f32 %v7321, %v7339
        %v7370 = vsub.f32 %v7322, %v7341
        %v7371 = vsub.f32 %v7323, %v7343
        %v7372 = vsub.f32 %v7324, %v7345
        %v7373 = vsub.f32 %v7325, %v7347
        %v7374 = vsub.f32 %v7326, %v7349
        %v7375 = vsub.f32 %v7327, %v7351
        %v7376 = vsub.f32 %v7328, %v7353
        %v7377 = vsub.f32 %v7329, %v7355
        %v7378 = vsub.f32 %v7330, %v7357
        %v7379 = vsub.f32 %v7331, %v7359
        %v7380 = vsub.f32 %v7332, %v7361
        %v7381 = vsub.f32 %v7333, %v7363
        %v7382 = vsub.f32 %v7334, %v7365
        %v7383 = vsub.f32 %v7335, %v7367
        %v7384 = vmul.f32 %v7368, 1.442695
        %v7385 = vpow.pop %v7384
        %v7386 = vmul.f32 %v7369, 1.442695
        %v7387 = vpow.pop %v7386
        %v7388 = vmul.f32 %v7370, 1.442695
        %v7389 = vpow.pop %v7388
        %v7390 = vmul.f32 %v7371, 1.442695
        %v7391 = vpow.pop %v7390
        %v7392 = vmul.f32 %v7372, 1.442695
        %v7393 = vpow.pop %v7392
        %v7394 = vmul.f32 %v7373, 1.442695
        %v7395 = vpow.pop %v7394
        %v7396 = vmul.f32 %v7374, 1.442695
        %v7397 = vpow.pop %v7396
        %v7398 = vmul.f32 %v7375, 1.442695
        %v7399 = vpow.pop %v7398
        %v7400 = vmul.f32 %v7376, 1.442695
        %v7401 = vpow.pop %v7400
        %v7402 = vmul.f32 %v7377, 1.442695
        %v7403 = vpow.pop %v7402
        %v7404 = vmul.f32 %v7378, 1.442695
        %v7405 = vpow.pop %v7404
        %v7406 = vmul.f32 %v7379, 1.442695
        %v7407 = vpow.pop %v7406
        %v7408 = vmul.f32 %v7380, 1.442695
        %v7409 = vpow.pop %v7408
        %v7410 = vmul.f32 %v7381, 1.442695
        %v7411 = vpow.pop %v7410
        %v7412 = vmul.f32 %v7382, 1.442695
        %v7413 = vpow.pop %v7412
        %v7414 = vmul.f32 %v7383, 1.442695
        %v7415 = vpow.pop %v7414
        %7416 = vmatpush.msra.mxu0 1.0
        %7417 = vmatpush.msra.mxu0 1.0
        %7418 = vmatpush.msra.mxu0 1.0
        %7419 = vmatpush.msra.mxu0 1.0
        %7420 = vmatpush.msra.mxu0 1.0
        %7421 = vmatpush.msra.mxu0 1.0
        %7422 = vmatpush.msra.mxu0 1.0
        %7423 = vmatpush.msra.mxu0 1.0
        %7424 = vmatpush.msra.mxu0 1.0
        %7425 = vmatpush.msra.mxu0 1.0
        %7426 = vmatpush.msra.mxu0 1.0
        %7427 = vmatpush.msra.mxu0 1.0
        %7428 = vmatpush.msra.mxu0 1.0
        %7429 = vmatpush.msra.mxu0 1.0
        %7430 = vmatpush.msra.mxu0 1.0
        %7431 = vmatpush.msra.mxu0 1.0
        %7432 = vmatmul.f32.gmra.mxu0 %v7385
        %v7433 = vpop.f32.mrf.mxu0
        %v7434 = vadd.f32 0.0, %v7433
        %7435 = vmatmul.f32.gmra.mxu0 %v7387
        %v7436 = vpop.f32.mrf.mxu0
        %v7437 = vadd.f32 0.0, %v7436
        %7438 = vmatmul.f32.gmra.mxu0 %v7389
        %v7439 = vpop.f32.mrf.mxu0
        %v7440 = vadd.f32 0.0, %v7439
        %7441 = vmatmul.f32.gmra.mxu0 %v7391
        %v7442 = vpop.f32.mrf.mxu0
        %v7443 = vadd.f32 0.0, %v7442
        %7444 = vmatmul.f32.gmra.mxu0 %v7393
        %v7445 = vpop.f32.mrf.mxu0
        %v7446 = vadd.f32 0.0, %v7445
        %7447 = vmatmul.f32.gmra.mxu0 %v7395
        %v7448 = vpop.f32.mrf.mxu0
        %v7449 = vadd.f32 0.0, %v7448
        %7450 = vmatmul.f32.gmra.mxu0 %v7397
        %v7451 = vpop.f32.mrf.mxu0
        %v7452 = vadd.f32 0.0, %v7451
        %7453 = vmatmul.f32.gmra.mxu0 %v7399
        %v7454 = vpop.f32.mrf.mxu0
        %v7455 = vadd.f32 0.0, %v7454
        %7456 = vmatmul.f32.gmra.mxu0 %v7401
        %v7457 = vpop.f32.mrf.mxu0
        %v7458 = vadd.f32 0.0, %v7457
        %7459 = vmatmul.f32.gmra.mxu0 %v7403
        %v7460 = vpop.f32.mrf.mxu0
        %v7461 = vadd.f32 0.0, %v7460
        %7462 = vmatmul.f32.gmra.mxu0 %v7405
        %v7463 = vpop.f32.mrf.mxu0
        %v7464 = vadd.f32 0.0, %v7463
        %7465 = vmatmul.f32.gmra.mxu0 %v7407
        %v7466 = vpop.f32.mrf.mxu0
        %v7467 = vadd.f32 0.0, %v7466
        %7468 = vmatmul.f32.gmra.mxu0 %v7409
        %v7469 = vpop.f32.mrf.mxu0
        %v7470 = vadd.f32 0.0, %v7469
        %7471 = vmatmul.f32.gmra.mxu0 %v7411
        %v7472 = vpop.f32.mrf.mxu0
        %v7473 = vadd.f32 0.0, %v7472
        %7474 = vmatmul.f32.gmra.mxu0 %v7413
        %v7475 = vpop.f32.mrf.mxu0
        %v7476 = vadd.f32 0.0, %v7475
        %7477 = vmatmul.f32.gmra.mxu0 %v7415
        %v7478 = vpop.f32.mrf.mxu0
        %v7479 = vadd.f32 0.0, %v7478
        %7480 = vdwg.mxu0
        %7497 = vrot.lane.b32.xlu0 %v6512, 96
        %v7498 = vpop.permute.xlu0 %7497
        %7499 = vrot.lane.b32.xlu0 %v6515, 96
        %v7500 = vpop.permute.xlu0 %7499
        %7501 = vrot.lane.b32.xlu0 %v6518, 96
        %v7502 = vpop.permute.xlu0 %7501
        %7503 = vrot.lane.b32.xlu0 %v6521, 96
        %v7504 = vpop.permute.xlu0 %7503
        %7505 = vrot.lane.b32.xlu0 %v6524, 96
        %v7506 = vpop.permute.xlu0 %7505
        %7507 = vrot.lane.b32.xlu0 %v6527, 96
        %v7508 = vpop.permute.xlu0 %7507
        %7509 = vrot.lane.b32.xlu0 %v6530, 96
        %v7510 = vpop.permute.xlu0 %7509
        %7511 = vrot.lane.b32.xlu0 %v6533, 96
        %v7512 = vpop.permute.xlu0 %7511
        %7513 = vrot.lane.b32.xlu0 %v6536, 96
        %v7514 = vpop.permute.xlu0 %7513
        %7515 = vrot.lane.b32.xlu0 %v6539, 96
        %v7516 = vpop.permute.xlu0 %7515
        %7517 = vrot.lane.b32.xlu0 %v6542, 96
        %v7518 = vpop.permute.xlu0 %7517
        %7519 = vrot.lane.b32.xlu0 %v6545, 96
        %v7520 = vpop.permute.xlu0 %7519
        %7521 = vrot.lane.b32.xlu0 %v6548, 96
        %v7522 = vpop.permute.xlu0 %7521
        %7523 = vrot.lane.b32.xlu0 %v6551, 96
        %v7524 = vpop.permute.xlu0 %7523
        %7525 = vrot.lane.b32.xlu0 %v6554, 96
        %v7526 = vpop.permute.xlu0 %7525
        %7527 = vrot.lane.b32.xlu0 %v6557, 96
        %v7528 = vpop.permute.xlu0 %7527
        %7545 = vmatpush.msra.mxu0 %v7528
        %7546 = vmatpush.msra.mxu0 %v7526
        %7547 = vmatpush.msra.mxu0 %v7524
        %7548 = vmatpush.msra.mxu0 %v7522
        %7549 = vmatpush.msra.mxu0 %v7520
        %7550 = vmatpush.msra.mxu0 %v7518
        %7551 = vmatpush.msra.mxu0 %v7516
        %7552 = vmatpush.msra.mxu0 %v7514
        %7553 = vmatpush.msra.mxu0 %v7512
        %7554 = vmatpush.msra.mxu0 %v7510
        %7555 = vmatpush.msra.mxu0 %v7508
        %7556 = vmatpush.msra.mxu0 %v7506
        %7557 = vmatpush.msra.mxu0 %v7504
        %7558 = vmatpush.msra.mxu0 %v7502
        %7559 = vmatpush.msra.mxu0 %v7500
        %7560 = vmatpush.msra.mxu0 %v7498
        %7561 = vmatmul.f32.gmra.mxu0 %v7385
        %v7562 = vpop.f32.mrf.mxu0
        %v7563 = vadd.f32 0.0, %v7562
        %7564 = vmatmul.f32.gmra.mxu0 %v7387
        %v7565 = vpop.f32.mrf.mxu0
        %v7566 = vadd.f32 0.0, %v7565
        %7567 = vmatmul.f32.gmra.mxu0 %v7389
        %v7568 = vpop.f32.mrf.mxu0
        %v7569 = vadd.f32 0.0, %v7568
        %7570 = vmatmul.f32.gmra.mxu0 %v7391
        %v7571 = vpop.f32.mrf.mxu0
        %v7572 = vadd.f32 0.0, %v7571
        %7573 = vmatmul.f32.gmra.mxu0 %v7393
        %v7574 = vpop.f32.mrf.mxu0
        %v7575 = vadd.f32 0.0, %v7574
        %7576 = vmatmul.f32.gmra.mxu0 %v7395
        %v7577 = vpop.f32.mrf.mxu0
        %v7578 = vadd.f32 0.0, %v7577
        %7579 = vmatmul.f32.gmra.mxu0 %v7397
        %v7580 = vpop.f32.mrf.mxu0
        %v7581 = vadd.f32 0.0, %v7580
        %7582 = vmatmul.f32.gmra.mxu0 %v7399
        %v7583 = vpop.f32.mrf.mxu0
        %v7584 = vadd.f32 0.0, %v7583
        %7585 = vmatmul.f32.gmra.mxu0 %v7401
        %v7586 = vpop.f32.mrf.mxu0
        %v7587 = vadd.f32 0.0, %v7586
        %7588 = vmatmul.f32.gmra.mxu0 %v7403
        %v7589 = vpop.f32.mrf.mxu0
        %v7590 = vadd.f32 0.0, %v7589
        %7591 = vmatmul.f32.gmra.mxu0 %v7405
        %v7592 = vpop.f32.mrf.mxu0
        %v7593 = vadd.f32 0.0, %v7592
        %7594 = vmatmul.f32.gmra.mxu0 %v7407
        %v7595 = vpop.f32.mrf.mxu0
        %v7596 = vadd.f32 0.0, %v7595
        %7597 = vmatmul.f32.gmra.mxu0 %v7409
        %v7598 = vpop.f32.mrf.mxu0
        %v7599 = vadd.f32 0.0, %v7598
        %7600 = vmatmul.f32.gmra.mxu0 %v7411
        %v7601 = vpop.f32.mrf.mxu0
        %v7602 = vadd.f32 0.0, %v7601
        %7603 = vmatmul.f32.gmra.mxu0 %v7413
        %v7604 = vpop.f32.mrf.mxu0
        %v7605 = vadd.f32 0.0, %v7604
        %7606 = vmatmul.f32.gmra.mxu0 %v7415
        %v7607 = vpop.f32.mrf.mxu0
        %v7608 = vadd.f32 0.0, %v7607
        %7609 = vdwg.mxu0
        %v7610 = vrcp.pop %v7434
        %v7611 = vrcp.pop %v7437
        %v7612 = vrcp.pop %v7440
        %v7613 = vrcp.pop %v7443
        %v7614 = vrcp.pop %v7446
        %v7615 = vrcp.pop %v7449
        %v7616 = vrcp.pop %v7452
        %v7617 = vrcp.pop %v7455
        %v7618 = vrcp.pop %v7458
        %v7619 = vrcp.pop %v7461
        %v7620 = vrcp.pop %v7464
        %v7621 = vrcp.pop %v7467
        %v7622 = vrcp.pop %v7470
        %v7623 = vrcp.pop %v7473
        %v7624 = vrcp.pop %v7476
        %v7625 = vrcp.pop %v7479
        %7627 = vset.pattern.permute.xlu0 0
        %7628 = vperm.xlu0 %7627, %v7610
        %v7629 = vpop.permute.xlu0 %7628
        %7632 = vset.pattern.permute.xlu0 0
        %7633 = vperm.xlu0 %7632, %v7611
        %v7634 = vpop.permute.xlu0 %7633
        %7637 = vset.pattern.permute.xlu0 0
        %7638 = vperm.xlu0 %7637, %v7612
        %v7639 = vpop.permute.xlu0 %7638
        %7642 = vset.pattern.permute.xlu0 0
        %7643 = vperm.xlu0 %7642, %v7613
        %v7644 = vpop.permute.xlu0 %7643
        %7647 = vset.pattern.permute.xlu0 0
        %7648 = vperm.xlu0 %7647, %v7614
        %v7649 = vpop.permute.xlu0 %7648
        %7652 = vset.pattern.permute.xlu0 0
        %7653 = vperm.xlu0 %7652, %v7615
        %v7654 = vpop.permute.xlu0 %7653
        %7657 = vset.pattern.permute.xlu0 0
        %7658 = vperm.xlu0 %7657, %v7616
        %v7659 = vpop.permute.xlu0 %7658
        %7662 = vset.pattern.permute.xlu0 0
        %7663 = vperm.xlu0 %7662, %v7617
        %v7664 = vpop.permute.xlu0 %7663
        %7667 = vset.pattern.permute.xlu0 0
        %7668 = vperm.xlu0 %7667, %v7618
        %v7669 = vpop.permute.xlu0 %7668
        %7672 = vset.pattern.permute.xlu0 0
        %7673 = vperm.xlu0 %7672, %v7619
        %v7674 = vpop.permute.xlu0 %7673
        %7677 = vset.pattern.permute.xlu0 0
        %7678 = vperm.xlu0 %7677, %v7620
        %v7679 = vpop.permute.xlu0 %7678
        %7682 = vset.pattern.permute.xlu0 0
        %7683 = vperm.xlu0 %7682, %v7621
        %v7684 = vpop.permute.xlu0 %7683
        %7687 = vset.pattern.permute.xlu0 0
        %7688 = vperm.xlu0 %7687, %v7622
        %v7689 = vpop.permute.xlu0 %7688
        %7692 = vset.pattern.permute.xlu0 0
        %7693 = vperm.xlu0 %7692, %v7623
        %v7694 = vpop.permute.xlu0 %7693
        %7697 = vset.pattern.permute.xlu0 0
        %7698 = vperm.xlu0 %7697, %v7624
        %v7699 = vpop.permute.xlu0 %7698
        %7702 = vset.pattern.permute.xlu0 0
        %7703 = vperm.xlu0 %7702, %v7625
        %v7704 = vpop.permute.xlu0 %7703
        %v7706 = vmul.f32 %v7563, %v7629
        %v7707 = vmul.f32 %v7566, %v7634
        %v7708 = vmul.f32 %v7569, %v7639
        %v7709 = vmul.f32 %v7572, %v7644
        %v7710 = vmul.f32 %v7575, %v7649
        %v7711 = vmul.f32 %v7578, %v7654
        %v7712 = vmul.f32 %v7581, %v7659
        %v7713 = vmul.f32 %v7584, %v7664
        %v7714 = vmul.f32 %v7587, %v7669
        %v7715 = vmul.f32 %v7590, %v7674
        %v7716 = vmul.f32 %v7593, %v7679
        %v7717 = vmul.f32 %v7596, %v7684
        %v7718 = vmul.f32 %v7599, %v7689
        %v7719 = vmul.f32 %v7602, %v7694
        %v7720 = vmul.f32 %v7605, %v7699
        %v7721 = vmul.f32 %v7608, %v7704
        %v7722 = vadd.f32 %v7157, %v7706
        %v7723 = vadd.f32 %v7158, %v7707
        %v7724 = vadd.f32 %v7159, %v7708
        %v7725 = vadd.f32 %v7160, %v7709
        %v7726 = vadd.f32 %v7161, %v7710
        %v7727 = vadd.f32 %v7162, %v7711
        %v7728 = vadd.f32 %v7163, %v7712
        %v7729 = vadd.f32 %v7164, %v7713
        %v7730 = vadd.f32 %v7165, %v7714
        %v7731 = vadd.f32 %v7166, %v7715
        %v7732 = vadd.f32 %v7167, %v7716
        %v7733 = vadd.f32 %v7168, %v7717
        %v7734 = vadd.f32 %v7169, %v7718
        %v7735 = vadd.f32 %v7170, %v7719
        %v7736 = vadd.f32 %v7171, %v7720
        %v7737 = vadd.f32 %v7172, %v7721
        %s7738 = sld [smem:[#allocation2 + $0xa]]
        %7739 = vset.pattern.permute.xlu0 6
        %7740 = vperm.xlu0 %7739, %v6593
        %v7741 = vpop.permute.xlu0 %7740
        %7743 = vset.pattern.permute.xlu0 6
        %7744 = vperm.xlu0 %7743, %v6596
        %v7745 = vpop.permute.xlu0 %7744
        %7747 = vset.pattern.permute.xlu0 6
        %7748 = vperm.xlu0 %7747, %v6599
        %v7749 = vpop.permute.xlu0 %7748
        %7751 = vset.pattern.permute.xlu0 6
        %7752 = vperm.xlu0 %7751, %v6602
        %v7753 = vpop.permute.xlu0 %7752
        %7755 = vset.pattern.permute.xlu0 6
        %7756 = vperm.xlu0 %7755, %v6605
        %v7757 = vpop.permute.xlu0 %7756
        %7759 = vset.pattern.permute.xlu0 6
        %7760 = vperm.xlu0 %7759, %v6608
        %v7761 = vpop.permute.xlu0 %7760
        %7763 = vset.pattern.permute.xlu0 6
        %7764 = vperm.xlu0 %7763, %v6611
        %v7765 = vpop.permute.xlu0 %7764
        %7767 = vset.pattern.permute.xlu0 6
        %7768 = vperm.xlu0 %7767, %v6614
        %v7769 = vpop.permute.xlu0 %7768
        %7771 = vset.pattern.permute.xlu0 6
        %7772 = vperm.xlu0 %7771, %v6617
        %v7773 = vpop.permute.xlu0 %7772
        %7775 = vset.pattern.permute.xlu0 6
        %7776 = vperm.xlu0 %7775, %v6620
        %v7777 = vpop.permute.xlu0 %7776
        %7779 = vset.pattern.permute.xlu0 6
        %7780 = vperm.xlu0 %7779, %v6623
        %v7781 = vpop.permute.xlu0 %7780
        %7783 = vset.pattern.permute.xlu0 6
        %7784 = vperm.xlu0 %7783, %v6626
        %v7785 = vpop.permute.xlu0 %7784
        %7787 = vset.pattern.permute.xlu0 6
        %7788 = vperm.xlu0 %7787, %v6629
        %v7789 = vpop.permute.xlu0 %7788
        %7791 = vset.pattern.permute.xlu0 6
        %7792 = vperm.xlu0 %7791, %v6632
        %v7793 = vpop.permute.xlu0 %7792
        %7795 = vset.pattern.permute.xlu0 6
        %7796 = vperm.xlu0 %7795, %v6635
        %v7797 = vpop.permute.xlu0 %7796
        %7799 = vset.pattern.permute.xlu0 6
        %7800 = vperm.xlu0 %7799, %v6638
        %v7801 = vpop.permute.xlu0 %7800
        %v7803 = vperm.slane %v6656, 2
        %v7804 = vadd.f32 %v7741, %v7803
        %v7805 = vadd.f32 %v7745, %v7803
        %v7806 = vadd.f32 %v7749, %v7803
        %v7807 = vadd.f32 %v7753, %v7803
        %v7808 = vadd.f32 %v7757, %v7803
        %v7809 = vadd.f32 %v7761, %v7803
        %v7810 = vadd.f32 %v7765, %v7803
        %v7811 = vadd.f32 %v7769, %v7803
        %v7812 = vadd.f32 %v7773, %v7803
        %v7813 = vadd.f32 %v7777, %v7803
        %v7814 = vadd.f32 %v7781, %v7803
        %v7815 = vadd.f32 %v7785, %v7803
        %v7816 = vadd.f32 %v7789, %v7803
        %v7817 = vadd.f32 %v7793, %v7803
        %v7818 = vadd.f32 %v7797, %v7803
        %v7819 = vadd.f32 %v7801, %v7803
        %v7820 = vstv %s7738
        %v7821 = vmul.f32 %v7820, %v318
        %v7822 = vmul.f32 %v7820, %v319
        %v7823 = vmul.f32 %v7820, %v320
        %v7824 = vmul.f32 %v7820, %v321
        %v7825 = vmul.f32 %v7820, %v322
        %v7826 = vmul.f32 %v7820, %v323
        %v7827 = vmul.f32 %v7820, %v324
        %v7828 = vmul.f32 %v7820, %v325
        %v7829 = vmul.f32 %v7820, %v326
        %v7830 = vmul.f32 %v7820, %v327
        %v7831 = vmul.f32 %v7820, %v328
        %v7832 = vmul.f32 %v7820, %v329
        %v7833 = vmul.f32 %v7820, %v330
        %v7834 = vmul.f32 %v7820, %v331
        %v7835 = vmul.f32 %v7820, %v332
        %v7836 = vmul.f32 %v7820, %v333
        %v7837 = vadd.f32 %v7804, %v7821
        %v7838 = vadd.f32 %v7805, %v7822
        %v7839 = vadd.f32 %v7806, %v7823
        %v7840 = vadd.f32 %v7807, %v7824
        %v7841 = vadd.f32 %v7808, %v7825
        %v7842 = vadd.f32 %v7809, %v7826
        %v7843 = vadd.f32 %v7810, %v7827
        %v7844 = vadd.f32 %v7811, %v7828
        %v7845 = vadd.f32 %v7812, %v7829
        %v7846 = vadd.f32 %v7813, %v7830
        %v7847 = vadd.f32 %v7814, %v7831
        %v7848 = vadd.f32 %v7815, %v7832
        %v7849 = vadd.f32 %v7816, %v7833
        %v7850 = vadd.f32 %v7817, %v7834
        %v7851 = vadd.f32 %v7818, %v7835
        %v7852 = vadd.f32 %v7819, %v7836
        %v7853 = vmul.f32 %v7837, 0.2
        %v7854 = vmul.f32 %v7838, 0.2
        %v7855 = vmul.f32 %v7839, 0.2
        %v7856 = vmul.f32 %v7840, 0.2
        %v7857 = vmul.f32 %v7841, 0.2
        %v7858 = vmul.f32 %v7842, 0.2
        %v7859 = vmul.f32 %v7843, 0.2
        %v7860 = vmul.f32 %v7844, 0.2
        %v7861 = vmul.f32 %v7845, 0.2
        %v7862 = vmul.f32 %v7846, 0.2
        %v7863 = vmul.f32 %v7847, 0.2
        %v7864 = vmul.f32 %v7848, 0.2
        %v7865 = vmul.f32 %v7849, 0.2
        %v7866 = vmul.f32 %v7850, 0.2
        %v7867 = vmul.f32 %v7851, 0.2
        %v7868 = vmul.f32 %v7852, 0.2
        %v7869 = vmax.f32 %v7837, %v7853
        %v7870 = vmax.f32 %v7838, %v7854
        %v7871 = vmax.f32 %v7839, %v7855
        %v7872 = vmax.f32 %v7840, %v7856
        %v7873 = vmax.f32 %v7841, %v7857
        %v7874 = vmax.f32 %v7842, %v7858
        %v7875 = vmax.f32 %v7843, %v7859
        %v7876 = vmax.f32 %v7844, %v7860
        %v7877 = vmax.f32 %v7845, %v7861
        %v7878 = vmax.f32 %v7846, %v7862
        %v7879 = vmax.f32 %v7847, %v7863
        %v7880 = vmax.f32 %v7848, %v7864
        %v7881 = vmax.f32 %v7849, %v7865
        %v7882 = vmax.f32 %v7850, %v7866
        %v7883 = vmax.f32 %v7851, %v7867
        %v7884 = vmax.f32 %v7852, %v7868
        %v7885 = vadd.f32 %v7869, %v302
        %v7886 = vadd.f32 %v7870, %v303
        %v7887 = vadd.f32 %v7871, %v304
        %v7888 = vadd.f32 %v7872, %v305
        %v7889 = vadd.f32 %v7873, %v306
        %v7890 = vadd.f32 %v7874, %v307
        %v7891 = vadd.f32 %v7875, %v308
        %v7892 = vadd.f32 %v7876, %v309
        %v7893 = vadd.f32 %v7877, %v310
        %v7894 = vadd.f32 %v7878, %v311
        %v7895 = vadd.f32 %v7879, %v312
        %v7896 = vadd.f32 %v7880, %v313
        %v7897 = vadd.f32 %v7881, %v314
        %v7898 = vadd.f32 %v7882, %v315
        %v7899 = vadd.f32 %v7883, %v316
        %v7900 = vadd.f32 %v7884, %v317
        %7901 = vmax.xlane.f32.xlu0 %v7885
        %v7902 = vpop.xlane.xlu0 %7901
        %7903 = vmax.xlane.f32.xlu0 %v7886
        %v7904 = vpop.xlane.xlu0 %7903
        %7905 = vmax.xlane.f32.xlu0 %v7887
        %v7906 = vpop.xlane.xlu0 %7905
        %7907 = vmax.xlane.f32.xlu0 %v7888
        %v7908 = vpop.xlane.xlu0 %7907
        %7909 = vmax.xlane.f32.xlu0 %v7889
        %v7910 = vpop.xlane.xlu0 %7909
        %7911 = vmax.xlane.f32.xlu0 %v7890
        %v7912 = vpop.xlane.xlu0 %7911
        %7913 = vmax.xlane.f32.xlu0 %v7891
        %v7914 = vpop.xlane.xlu0 %7913
        %7915 = vmax.xlane.f32.xlu0 %v7892
        %v7916 = vpop.xlane.xlu0 %7915
        %7917 = vmax.xlane.f32.xlu0 %v7893
        %v7918 = vpop.xlane.xlu0 %7917
        %7919 = vmax.xlane.f32.xlu0 %v7894
        %v7920 = vpop.xlane.xlu0 %7919
        %7921 = vmax.xlane.f32.xlu0 %v7895
        %v7922 = vpop.xlane.xlu0 %7921
        %7923 = vmax.xlane.f32.xlu0 %v7896
        %v7924 = vpop.xlane.xlu0 %7923
        %7925 = vmax.xlane.f32.xlu0 %v7897
        %v7926 = vpop.xlane.xlu0 %7925
        %7927 = vmax.xlane.f32.xlu0 %v7898
        %v7928 = vpop.xlane.xlu0 %7927
        %7929 = vmax.xlane.f32.xlu0 %v7899
        %v7930 = vpop.xlane.xlu0 %7929
        %7931 = vmax.xlane.f32.xlu0 %v7900
        %v7932 = vpop.xlane.xlu0 %7931
        %v7933 = vsub.f32 %v7885, %v7902
        %v7934 = vsub.f32 %v7886, %v7904
        %v7935 = vsub.f32 %v7887, %v7906
        %v7936 = vsub.f32 %v7888, %v7908
        %v7937 = vsub.f32 %v7889, %v7910
        %v7938 = vsub.f32 %v7890, %v7912
        %v7939 = vsub.f32 %v7891, %v7914
        %v7940 = vsub.f32 %v7892, %v7916
        %v7941 = vsub.f32 %v7893, %v7918
        %v7942 = vsub.f32 %v7894, %v7920
        %v7943 = vsub.f32 %v7895, %v7922
        %v7944 = vsub.f32 %v7896, %v7924
        %v7945 = vsub.f32 %v7897, %v7926
        %v7946 = vsub.f32 %v7898, %v7928
        %v7947 = vsub.f32 %v7899, %v7930
        %v7948 = vsub.f32 %v7900, %v7932
        %v7949 = vmul.f32 %v7933, 1.442695
        %v7950 = vpow.pop %v7949
        %v7951 = vmul.f32 %v7934, 1.442695
        %v7952 = vpow.pop %v7951
        %v7953 = vmul.f32 %v7935, 1.442695
        %v7954 = vpow.pop %v7953
        %v7955 = vmul.f32 %v7936, 1.442695
        %v7956 = vpow.pop %v7955
        %v7957 = vmul.f32 %v7937, 1.442695
        %v7958 = vpow.pop %v7957
        %v7959 = vmul.f32 %v7938, 1.442695
        %v7960 = vpow.pop %v7959
        %v7961 = vmul.f32 %v7939, 1.442695
        %v7962 = vpow.pop %v7961
        %v7963 = vmul.f32 %v7940, 1.442695
        %v7964 = vpow.pop %v7963
        %v7965 = vmul.f32 %v7941, 1.442695
        %v7966 = vpow.pop %v7965
        %v7967 = vmul.f32 %v7942, 1.442695
        %v7968 = vpow.pop %v7967
        %v7969 = vmul.f32 %v7943, 1.442695
        %v7970 = vpow.pop %v7969
        %v7971 = vmul.f32 %v7944, 1.442695
        %v7972 = vpow.pop %v7971
        %v7973 = vmul.f32 %v7945, 1.442695
        %v7974 = vpow.pop %v7973
        %v7975 = vmul.f32 %v7946, 1.442695
        %v7976 = vpow.pop %v7975
        %v7977 = vmul.f32 %v7947, 1.442695
        %v7978 = vpow.pop %v7977
        %v7979 = vmul.f32 %v7948, 1.442695
        %v7980 = vpow.pop %v7979
        %7981 = vmatpush.msra.mxu0 1.0
        %7982 = vmatpush.msra.mxu0 1.0
        %7983 = vmatpush.msra.mxu0 1.0
        %7984 = vmatpush.msra.mxu0 1.0
        %7985 = vmatpush.msra.mxu0 1.0
        %7986 = vmatpush.msra.mxu0 1.0
        %7987 = vmatpush.msra.mxu0 1.0
        %7988 = vmatpush.msra.mxu0 1.0
        %7989 = vmatpush.msra.mxu0 1.0
        %7990 = vmatpush.msra.mxu0 1.0
        %7991 = vmatpush.msra.mxu0 1.0
        %7992 = vmatpush.msra.mxu0 1.0
        %7993 = vmatpush.msra.mxu0 1.0
        %7994 = vmatpush.msra.mxu0 1.0
        %7995 = vmatpush.msra.mxu0 1.0
        %7996 = vmatpush.msra.mxu0 1.0
        %7997 = vmatmul.f32.gmra.mxu0 %v7950
        %v7998 = vpop.f32.mrf.mxu0
        %v7999 = vadd.f32 0.0, %v7998
        %8000 = vmatmul.f32.gmra.mxu0 %v7952
        %v8001 = vpop.f32.mrf.mxu0
        %v8002 = vadd.f32 0.0, %v8001
        %8003 = vmatmul.f32.gmra.mxu0 %v7954
        %v8004 = vpop.f32.mrf.mxu0
        %v8005 = vadd.f32 0.0, %v8004
        %8006 = vmatmul.f32.gmra.mxu0 %v7956
        %v8007 = vpop.f32.mrf.mxu0
        %v8008 = vadd.f32 0.0, %v8007
        %8009 = vmatmul.f32.gmra.mxu0 %v7958
        %v8010 = vpop.f32.mrf.mxu0
        %v8011 = vadd.f32 0.0, %v8010
        %8012 = vmatmul.f32.gmra.mxu0 %v7960
        %v8013 = vpop.f32.mrf.mxu0
        %v8014 = vadd.f32 0.0, %v8013
        %8015 = vmatmul.f32.gmra.mxu0 %v7962
        %v8016 = vpop.f32.mrf.mxu0
        %v8017 = vadd.f32 0.0, %v8016
        %8018 = vmatmul.f32.gmra.mxu0 %v7964
        %v8019 = vpop.f32.mrf.mxu0
        %v8020 = vadd.f32 0.0, %v8019
        %8021 = vmatmul.f32.gmra.mxu0 %v7966
        %v8022 = vpop.f32.mrf.mxu0
        %v8023 = vadd.f32 0.0, %v8022
        %8024 = vmatmul.f32.gmra.mxu0 %v7968
        %v8025 = vpop.f32.mrf.mxu0
        %v8026 = vadd.f32 0.0, %v8025
        %8027 = vmatmul.f32.gmra.mxu0 %v7970
        %v8028 = vpop.f32.mrf.mxu0
        %v8029 = vadd.f32 0.0, %v8028
        %8030 = vmatmul.f32.gmra.mxu0 %v7972
        %v8031 = vpop.f32.mrf.mxu0
        %v8032 = vadd.f32 0.0, %v8031
        %8033 = vmatmul.f32.gmra.mxu0 %v7974
        %v8034 = vpop.f32.mrf.mxu0
        %v8035 = vadd.f32 0.0, %v8034
        %8036 = vmatmul.f32.gmra.mxu0 %v7976
        %v8037 = vpop.f32.mrf.mxu0
        %v8038 = vadd.f32 0.0, %v8037
        %8039 = vmatmul.f32.gmra.mxu0 %v7978
        %v8040 = vpop.f32.mrf.mxu0
        %v8041 = vadd.f32 0.0, %v8040
        %8042 = vmatmul.f32.gmra.mxu0 %v7980
        %v8043 = vpop.f32.mrf.mxu0
        %v8044 = vadd.f32 0.0, %v8043
        %8045 = vdwg.mxu0
        %8046 = vrot.lane.b32.xlu0 %v6512, 64
        %v8047 = vpop.permute.xlu0 %8046
        %8048 = vrot.lane.b32.xlu0 %v6515, 64
        %v8049 = vpop.permute.xlu0 %8048
        %8050 = vrot.lane.b32.xlu0 %v6518, 64
        %v8051 = vpop.permute.xlu0 %8050
        %8052 = vrot.lane.b32.xlu0 %v6521, 64
        %v8053 = vpop.permute.xlu0 %8052
        %8054 = vrot.lane.b32.xlu0 %v6524, 64
        %v8055 = vpop.permute.xlu0 %8054
        %8056 = vrot.lane.b32.xlu0 %v6527, 64
        %v8057 = vpop.permute.xlu0 %8056
        %8058 = vrot.lane.b32.xlu0 %v6530, 64
        %v8059 = vpop.permute.xlu0 %8058
        %8060 = vrot.lane.b32.xlu0 %v6533, 64
        %v8061 = vpop.permute.xlu0 %8060
        %8062 = vrot.lane.b32.xlu0 %v6536, 64
        %v8063 = vpop.permute.xlu0 %8062
        %8064 = vrot.lane.b32.xlu0 %v6539, 64
        %v8065 = vpop.permute.xlu0 %8064
        %8066 = vrot.lane.b32.xlu0 %v6542, 64
        %v8067 = vpop.permute.xlu0 %8066
        %8068 = vrot.lane.b32.xlu0 %v6545, 64
        %v8069 = vpop.permute.xlu0 %8068
        %8070 = vrot.lane.b32.xlu0 %v6548, 64
        %v8071 = vpop.permute.xlu0 %8070
        %8072 = vrot.lane.b32.xlu0 %v6551, 64
        %v8073 = vpop.permute.xlu0 %8072
        %8074 = vrot.lane.b32.xlu0 %v6554, 64
        %v8075 = vpop.permute.xlu0 %8074
        %8076 = vrot.lane.b32.xlu0 %v6557, 64
        %v8077 = vpop.permute.xlu0 %8076
        %8094 = vmatpush.msra.mxu0 %v8077
        %8095 = vmatpush.msra.mxu0 %v8075
        %8096 = vmatpush.msra.mxu0 %v8073
        %8097 = vmatpush.msra.mxu0 %v8071
        %8098 = vmatpush.msra.mxu0 %v8069
        %8099 = vmatpush.msra.mxu0 %v8067
        %8100 = vmatpush.msra.mxu0 %v8065
        %8101 = vmatpush.msra.mxu0 %v8063
        %8102 = vmatpush.msra.mxu0 %v8061
        %8103 = vmatpush.msra.mxu0 %v8059
        %8104 = vmatpush.msra.mxu0 %v8057
        %8105 = vmatpush.msra.mxu0 %v8055
        %8106 = vmatpush.msra.mxu0 %v8053
        %8107 = vmatpush.msra.mxu0 %v8051
        %8108 = vmatpush.msra.mxu0 %v8049
        %8109 = vmatpush.msra.mxu0 %v8047
        %8110 = vmatmul.f32.gmra.mxu0 %v7950
        %v8111 = vpop.f32.mrf.mxu0
        %v8112 = vadd.f32 0.0, %v8111
        %8113 = vmatmul.f32.gmra.mxu0 %v7952
        %v8114 = vpop.f32.mrf.mxu0
        %v8115 = vadd.f32 0.0, %v8114
        %8116 = vmatmul.f32.gmra.mxu0 %v7954
        %v8117 = vpop.f32.mrf.mxu0
        %v8118 = vadd.f32 0.0, %v8117
        %8119 = vmatmul.f32.gmra.mxu0 %v7956
        %v8120 = vpop.f32.mrf.mxu0
        %v8121 = vadd.f32 0.0, %v8120
        %8122 = vmatmul.f32.gmra.mxu0 %v7958
        %v8123 = vpop.f32.mrf.mxu0
        %v8124 = vadd.f32 0.0, %v8123
        %8125 = vmatmul.f32.gmra.mxu0 %v7960
        %v8126 = vpop.f32.mrf.mxu0
        %v8127 = vadd.f32 0.0, %v8126
        %8128 = vmatmul.f32.gmra.mxu0 %v7962
        %v8129 = vpop.f32.mrf.mxu0
        %v8130 = vadd.f32 0.0, %v8129
        %8131 = vmatmul.f32.gmra.mxu0 %v7964
        %v8132 = vpop.f32.mrf.mxu0
        %v8133 = vadd.f32 0.0, %v8132
        %8134 = vmatmul.f32.gmra.mxu0 %v7966
        %v8135 = vpop.f32.mrf.mxu0
        %v8136 = vadd.f32 0.0, %v8135
        %8137 = vmatmul.f32.gmra.mxu0 %v7968
        %v8138 = vpop.f32.mrf.mxu0
        %v8139 = vadd.f32 0.0, %v8138
        %8140 = vmatmul.f32.gmra.mxu0 %v7970
        %v8141 = vpop.f32.mrf.mxu0
        %v8142 = vadd.f32 0.0, %v8141
        %8143 = vmatmul.f32.gmra.mxu0 %v7972
        %v8144 = vpop.f32.mrf.mxu0
        %v8145 = vadd.f32 0.0, %v8144
        %8146 = vmatmul.f32.gmra.mxu0 %v7974
        %v8147 = vpop.f32.mrf.mxu0
        %v8148 = vadd.f32 0.0, %v8147
        %8149 = vmatmul.f32.gmra.mxu0 %v7976
        %v8150 = vpop.f32.mrf.mxu0
        %v8151 = vadd.f32 0.0, %v8150
        %8152 = vmatmul.f32.gmra.mxu0 %v7978
        %v8153 = vpop.f32.mrf.mxu0
        %v8154 = vadd.f32 0.0, %v8153
        %8155 = vmatmul.f32.gmra.mxu0 %v7980
        %v8156 = vpop.f32.mrf.mxu0
        %v8157 = vadd.f32 0.0, %v8156
        %8158 = vdwg.mxu0
        %v8159 = vrcp.pop %v7999
        %v8160 = vrcp.pop %v8002
        %v8161 = vrcp.pop %v8005
        %v8162 = vrcp.pop %v8008
        %v8163 = vrcp.pop %v8011
        %v8164 = vrcp.pop %v8014
        %v8165 = vrcp.pop %v8017
        %v8166 = vrcp.pop %v8020
        %v8167 = vrcp.pop %v8023
        %v8168 = vrcp.pop %v8026
        %v8169 = vrcp.pop %v8029
        %v8170 = vrcp.pop %v8032
        %v8171 = vrcp.pop %v8035
        %v8172 = vrcp.pop %v8038
        %v8173 = vrcp.pop %v8041
        %v8174 = vrcp.pop %v8044
        %8176 = vset.pattern.permute.xlu0 0
        %8177 = vperm.xlu0 %8176, %v8159
        %v8178 = vpop.permute.xlu0 %8177
        %8181 = vset.pattern.permute.xlu0 0
        %8182 = vperm.xlu0 %8181, %v8160
        %v8183 = vpop.permute.xlu0 %8182
        %8186 = vset.pattern.permute.xlu0 0
        %8187 = vperm.xlu0 %8186, %v8161
        %v8188 = vpop.permute.xlu0 %8187
        %8191 = vset.pattern.permute.xlu0 0
        %8192 = vperm.xlu0 %8191, %v8162
        %v8193 = vpop.permute.xlu0 %8192
        %8196 = vset.pattern.permute.xlu0 0
        %8197 = vperm.xlu0 %8196, %v8163
        %v8198 = vpop.permute.xlu0 %8197
        %8201 = vset.pattern.permute.xlu0 0
        %8202 = vperm.xlu0 %8201, %v8164
        %v8203 = vpop.permute.xlu0 %8202
        %8206 = vset.pattern.permute.xlu0 0
        %8207 = vperm.xlu0 %8206, %v8165
        %v8208 = vpop.permute.xlu0 %8207
        %8211 = vset.pattern.permute.xlu0 0
        %8212 = vperm.xlu0 %8211, %v8166
        %v8213 = vpop.permute.xlu0 %8212
        %8216 = vset.pattern.permute.xlu0 0
        %8217 = vperm.xlu0 %8216, %v8167
        %v8218 = vpop.permute.xlu0 %8217
        %8221 = vset.pattern.permute.xlu0 0
        %8222 = vperm.xlu0 %8221, %v8168
        %v8223 = vpop.permute.xlu0 %8222
        %8226 = vset.pattern.permute.xlu0 0
        %8227 = vperm.xlu0 %8226, %v8169
        %v8228 = vpop.permute.xlu0 %8227
        %8231 = vset.pattern.permute.xlu0 0
        %8232 = vperm.xlu0 %8231, %v8170
        %v8233 = vpop.permute.xlu0 %8232
        %8236 = vset.pattern.permute.xlu0 0
        %8237 = vperm.xlu0 %8236, %v8171
        %v8238 = vpop.permute.xlu0 %8237
        %8241 = vset.pattern.permute.xlu0 0
        %8242 = vperm.xlu0 %8241, %v8172
        %v8243 = vpop.permute.xlu0 %8242
        %8246 = vset.pattern.permute.xlu0 0
        %8247 = vperm.xlu0 %8246, %v8173
        %v8248 = vpop.permute.xlu0 %8247
        %8251 = vset.pattern.permute.xlu0 0
        %8252 = vperm.xlu0 %8251, %v8174
        %v8253 = vpop.permute.xlu0 %8252
        %v8255 = vmul.f32 %v8112, %v8178
        %v8256 = vmul.f32 %v8115, %v8183
        %v8257 = vmul.f32 %v8118, %v8188
        %v8258 = vmul.f32 %v8121, %v8193
        %v8259 = vmul.f32 %v8124, %v8198
        %v8260 = vmul.f32 %v8127, %v8203
        %v8261 = vmul.f32 %v8130, %v8208
        %v8262 = vmul.f32 %v8133, %v8213
        %v8263 = vmul.f32 %v8136, %v8218
        %v8264 = vmul.f32 %v8139, %v8223
        %v8265 = vmul.f32 %v8142, %v8228
        %v8266 = vmul.f32 %v8145, %v8233
        %v8267 = vmul.f32 %v8148, %v8238
        %v8268 = vmul.f32 %v8151, %v8243
        %v8269 = vmul.f32 %v8154, %v8248
        %v8270 = vmul.f32 %v8157, %v8253
        %v8271 = vadd.f32 %v7722, %v8255
        %v8272 = vadd.f32 %v7723, %v8256
        %v8273 = vadd.f32 %v7724, %v8257
        %v8274 = vadd.f32 %v7725, %v8258
        %v8275 = vadd.f32 %v7726, %v8259
        %v8276 = vadd.f32 %v7727, %v8260
        %v8277 = vadd.f32 %v7728, %v8261
        %v8278 = vadd.f32 %v7729, %v8262
        %v8279 = vadd.f32 %v7730, %v8263
        %v8280 = vadd.f32 %v7731, %v8264
        %v8281 = vadd.f32 %v7732, %v8265
        %v8282 = vadd.f32 %v7733, %v8266
        %v8283 = vadd.f32 %v7734, %v8267
        %v8284 = vadd.f32 %v7735, %v8268
        %v8285 = vadd.f32 %v7736, %v8269
        %v8286 = vadd.f32 %v7737, %v8270
        %s8287 = sld [smem:[#allocation2 + $0xb]]
        %8288 = vset.pattern.permute.xlu0 7
        %8289 = vperm.xlu0 %8288, %v6593
        %v8290 = vpop.permute.xlu0 %8289
        %8292 = vset.pattern.permute.xlu0 7
        %8293 = vperm.xlu0 %8292, %v6596
        %v8294 = vpop.permute.xlu0 %8293
        %8296 = vset.pattern.permute.xlu0 7
        %8297 = vperm.xlu0 %8296, %v6599
        %v8298 = vpop.permute.xlu0 %8297
        %8300 = vset.pattern.permute.xlu0 7
        %8301 = vperm.xlu0 %8300, %v6602
        %v8302 = vpop.permute.xlu0 %8301
        %8304 = vset.pattern.permute.xlu0 7
        %8305 = vperm.xlu0 %8304, %v6605
        %v8306 = vpop.permute.xlu0 %8305
        %8308 = vset.pattern.permute.xlu0 7
        %8309 = vperm.xlu0 %8308, %v6608
        %v8310 = vpop.permute.xlu0 %8309
        %8312 = vset.pattern.permute.xlu0 7
        %8313 = vperm.xlu0 %8312, %v6611
        %v8314 = vpop.permute.xlu0 %8313
        %8316 = vset.pattern.permute.xlu0 7
        %8317 = vperm.xlu0 %8316, %v6614
        %v8318 = vpop.permute.xlu0 %8317
        %8320 = vset.pattern.permute.xlu0 7
        %8321 = vperm.xlu0 %8320, %v6617
        %v8322 = vpop.permute.xlu0 %8321
        %8324 = vset.pattern.permute.xlu0 7
        %8325 = vperm.xlu0 %8324, %v6620
        %v8326 = vpop.permute.xlu0 %8325
        %8328 = vset.pattern.permute.xlu0 7
        %8329 = vperm.xlu0 %8328, %v6623
        %v8330 = vpop.permute.xlu0 %8329
        %8332 = vset.pattern.permute.xlu0 7
        %8333 = vperm.xlu0 %8332, %v6626
        %v8334 = vpop.permute.xlu0 %8333
        %8336 = vset.pattern.permute.xlu0 7
        %8337 = vperm.xlu0 %8336, %v6629
        %v8338 = vpop.permute.xlu0 %8337
        %8340 = vset.pattern.permute.xlu0 7
        %8341 = vperm.xlu0 %8340, %v6632
        %v8342 = vpop.permute.xlu0 %8341
        %8344 = vset.pattern.permute.xlu0 7
        %8345 = vperm.xlu0 %8344, %v6635
        %v8346 = vpop.permute.xlu0 %8345
        %8348 = vset.pattern.permute.xlu0 7
        %8349 = vperm.xlu0 %8348, %v6638
        %v8350 = vpop.permute.xlu0 %8349
        %v8352 = vperm.slane %v6656, 3
        %v8353 = vadd.f32 %v8290, %v8352
        %v8354 = vadd.f32 %v8294, %v8352
        %v8355 = vadd.f32 %v8298, %v8352
        %v8356 = vadd.f32 %v8302, %v8352
        %v8357 = vadd.f32 %v8306, %v8352
        %v8358 = vadd.f32 %v8310, %v8352
        %v8359 = vadd.f32 %v8314, %v8352
        %v8360 = vadd.f32 %v8318, %v8352
        %v8361 = vadd.f32 %v8322, %v8352
        %v8362 = vadd.f32 %v8326, %v8352
        %v8363 = vadd.f32 %v8330, %v8352
        %v8364 = vadd.f32 %v8334, %v8352
        %v8365 = vadd.f32 %v8338, %v8352
        %v8366 = vadd.f32 %v8342, %v8352
        %v8367 = vadd.f32 %v8346, %v8352
        %v8368 = vadd.f32 %v8350, %v8352
        %v8369 = vstv %s8287
        %v8370 = vmul.f32 %v8369, %v318
        %v8371 = vmul.f32 %v8369, %v319
        %v8372 = vmul.f32 %v8369, %v320
        %v8373 = vmul.f32 %v8369, %v321
        %v8374 = vmul.f32 %v8369, %v322
        %v8375 = vmul.f32 %v8369, %v323
        %v8376 = vmul.f32 %v8369, %v324
        %v8377 = vmul.f32 %v8369, %v325
        %v8378 = vmul.f32 %v8369, %v326
        %v8379 = vmul.f32 %v8369, %v327
        %v8380 = vmul.f32 %v8369, %v328
        %v8381 = vmul.f32 %v8369, %v329
        %v8382 = vmul.f32 %v8369, %v330
        %v8383 = vmul.f32 %v8369, %v331
        %v8384 = vmul.f32 %v8369, %v332
        %v8385 = vmul.f32 %v8369, %v333
        %v8386 = vadd.f32 %v8353, %v8370
        %v8387 = vadd.f32 %v8354, %v8371
        %v8388 = vadd.f32 %v8355, %v8372
        %v8389 = vadd.f32 %v8356, %v8373
        %v8390 = vadd.f32 %v8357, %v8374
        %v8391 = vadd.f32 %v8358, %v8375
        %v8392 = vadd.f32 %v8359, %v8376
        %v8393 = vadd.f32 %v8360, %v8377
        %v8394 = vadd.f32 %v8361, %v8378
        %v8395 = vadd.f32 %v8362, %v8379
        %v8396 = vadd.f32 %v8363, %v8380
        %v8397 = vadd.f32 %v8364, %v8381
        %v8398 = vadd.f32 %v8365, %v8382
        %v8399 = vadd.f32 %v8366, %v8383
        %v8400 = vadd.f32 %v8367, %v8384
        %v8401 = vadd.f32 %v8368, %v8385
        %v8402 = vmul.f32 %v8386, 0.2
        %v8403 = vmul.f32 %v8387, 0.2
        %v8404 = vmul.f32 %v8388, 0.2
        %v8405 = vmul.f32 %v8389, 0.2
        %v8406 = vmul.f32 %v8390, 0.2
        %v8407 = vmul.f32 %v8391, 0.2
        %v8408 = vmul.f32 %v8392, 0.2
        %v8409 = vmul.f32 %v8393, 0.2
        %v8410 = vmul.f32 %v8394, 0.2
        %v8411 = vmul.f32 %v8395, 0.2
        %v8412 = vmul.f32 %v8396, 0.2
        %v8413 = vmul.f32 %v8397, 0.2
        %v8414 = vmul.f32 %v8398, 0.2
        %v8415 = vmul.f32 %v8399, 0.2
        %v8416 = vmul.f32 %v8400, 0.2
        %v8417 = vmul.f32 %v8401, 0.2
        %v8418 = vmax.f32 %v8386, %v8402
        %v8419 = vmax.f32 %v8387, %v8403
        %v8420 = vmax.f32 %v8388, %v8404
        %v8421 = vmax.f32 %v8389, %v8405
        %v8422 = vmax.f32 %v8390, %v8406
        %v8423 = vmax.f32 %v8391, %v8407
        %v8424 = vmax.f32 %v8392, %v8408
        %v8425 = vmax.f32 %v8393, %v8409
        %v8426 = vmax.f32 %v8394, %v8410
        %v8427 = vmax.f32 %v8395, %v8411
        %v8428 = vmax.f32 %v8396, %v8412
        %v8429 = vmax.f32 %v8397, %v8413
        %v8430 = vmax.f32 %v8398, %v8414
        %v8431 = vmax.f32 %v8399, %v8415
        %v8432 = vmax.f32 %v8400, %v8416
        %v8433 = vmax.f32 %v8401, %v8417
        %v8434 = vadd.f32 %v8418, %v302
        %v8435 = vadd.f32 %v8419, %v303
        %v8436 = vadd.f32 %v8420, %v304
        %v8437 = vadd.f32 %v8421, %v305
        %v8438 = vadd.f32 %v8422, %v306
        %v8439 = vadd.f32 %v8423, %v307
        %v8440 = vadd.f32 %v8424, %v308
        %v8441 = vadd.f32 %v8425, %v309
        %v8442 = vadd.f32 %v8426, %v310
        %v8443 = vadd.f32 %v8427, %v311
        %v8444 = vadd.f32 %v8428, %v312
        %v8445 = vadd.f32 %v8429, %v313
        %v8446 = vadd.f32 %v8430, %v314
        %v8447 = vadd.f32 %v8431, %v315
        %v8448 = vadd.f32 %v8432, %v316
        %v8449 = vadd.f32 %v8433, %v317
        %8450 = vmax.xlane.f32.xlu0 %v8434
        %v8451 = vpop.xlane.xlu0 %8450
        %8452 = vmax.xlane.f32.xlu0 %v8435
        %v8453 = vpop.xlane.xlu0 %8452
        %8454 = vmax.xlane.f32.xlu0 %v8436
        %v8455 = vpop.xlane.xlu0 %8454
        %8456 = vmax.xlane.f32.xlu0 %v8437
        %v8457 = vpop.xlane.xlu0 %8456
        %8458 = vmax.xlane.f32.xlu0 %v8438
        %v8459 = vpop.xlane.xlu0 %8458
        %8460 = vmax.xlane.f32.xlu0 %v8439
        %v8461 = vpop.xlane.xlu0 %8460
        %8462 = vmax.xlane.f32.xlu0 %v8440
        %v8463 = vpop.xlane.xlu0 %8462
        %8464 = vmax.xlane.f32.xlu0 %v8441
        %v8465 = vpop.xlane.xlu0 %8464
        %8466 = vmax.xlane.f32.xlu0 %v8442
        %v8467 = vpop.xlane.xlu0 %8466
        %8468 = vmax.xlane.f32.xlu0 %v8443
        %v8469 = vpop.xlane.xlu0 %8468
        %8470 = vmax.xlane.f32.xlu0 %v8444
        %v8471 = vpop.xlane.xlu0 %8470
        %8472 = vmax.xlane.f32.xlu0 %v8445
        %v8473 = vpop.xlane.xlu0 %8472
        %8474 = vmax.xlane.f32.xlu0 %v8446
        %v8475 = vpop.xlane.xlu0 %8474
        %8476 = vmax.xlane.f32.xlu0 %v8447
        %v8477 = vpop.xlane.xlu0 %8476
        %8478 = vmax.xlane.f32.xlu0 %v8448
        %v8479 = vpop.xlane.xlu0 %8478
        %8480 = vmax.xlane.f32.xlu0 %v8449
        %v8481 = vpop.xlane.xlu0 %8480
        %v8482 = vsub.f32 %v8434, %v8451
        %v8483 = vsub.f32 %v8435, %v8453
        %v8484 = vsub.f32 %v8436, %v8455
        %v8485 = vsub.f32 %v8437, %v8457
        %v8486 = vsub.f32 %v8438, %v8459
        %v8487 = vsub.f32 %v8439, %v8461
        %v8488 = vsub.f32 %v8440, %v8463
        %v8489 = vsub.f32 %v8441, %v8465
        %v8490 = vsub.f32 %v8442, %v8467
        %v8491 = vsub.f32 %v8443, %v8469
        %v8492 = vsub.f32 %v8444, %v8471
        %v8493 = vsub.f32 %v8445, %v8473
        %v8494 = vsub.f32 %v8446, %v8475
        %v8495 = vsub.f32 %v8447, %v8477
        %v8496 = vsub.f32 %v8448, %v8479
        %v8497 = vsub.f32 %v8449, %v8481
        %v8498 = vmul.f32 %v8482, 1.442695
        %v8499 = vpow.pop %v8498
        %v8500 = vmul.f32 %v8483, 1.442695
        %v8501 = vpow.pop %v8500
        %v8502 = vmul.f32 %v8484, 1.442695
        %v8503 = vpow.pop %v8502
        %v8504 = vmul.f32 %v8485, 1.442695
        %v8505 = vpow.pop %v8504
        %v8506 = vmul.f32 %v8486, 1.442695
        %v8507 = vpow.pop %v8506
        %v8508 = vmul.f32 %v8487, 1.442695
        %v8509 = vpow.pop %v8508
        %v8510 = vmul.f32 %v8488, 1.442695
        %v8511 = vpow.pop %v8510
        %v8512 = vmul.f32 %v8489, 1.442695
        %v8513 = vpow.pop %v8512
        %v8514 = vmul.f32 %v8490, 1.442695
        %v8515 = vpow.pop %v8514
        %v8516 = vmul.f32 %v8491, 1.442695
        %v8517 = vpow.pop %v8516
        %v8518 = vmul.f32 %v8492, 1.442695
        %v8519 = vpow.pop %v8518
        %v8520 = vmul.f32 %v8493, 1.442695
        %v8521 = vpow.pop %v8520
        %v8522 = vmul.f32 %v8494, 1.442695
        %v8523 = vpow.pop %v8522
        %v8524 = vmul.f32 %v8495, 1.442695
        %v8525 = vpow.pop %v8524
        %v8526 = vmul.f32 %v8496, 1.442695
        %v8527 = vpow.pop %v8526
        %v8528 = vmul.f32 %v8497, 1.442695
        %v8529 = vpow.pop %v8528
        %8530 = vmatpush.msra.mxu0 1.0
        %8531 = vmatpush.msra.mxu0 1.0
        %8532 = vmatpush.msra.mxu0 1.0
        %8533 = vmatpush.msra.mxu0 1.0
        %8534 = vmatpush.msra.mxu0 1.0
        %8535 = vmatpush.msra.mxu0 1.0
        %8536 = vmatpush.msra.mxu0 1.0
        %8537 = vmatpush.msra.mxu0 1.0
        %8538 = vmatpush.msra.mxu0 1.0
        %8539 = vmatpush.msra.mxu0 1.0
        %8540 = vmatpush.msra.mxu0 1.0
        %8541 = vmatpush.msra.mxu0 1.0
        %8542 = vmatpush.msra.mxu0 1.0
        %8543 = vmatpush.msra.mxu0 1.0
        %8544 = vmatpush.msra.mxu0 1.0
        %8545 = vmatpush.msra.mxu0 1.0
        %8546 = vmatmul.f32.gmra.mxu0 %v8499
        %v8547 = vpop.f32.mrf.mxu0
        %v8548 = vadd.f32 0.0, %v8547
        %8549 = vmatmul.f32.gmra.mxu0 %v8501
        %v8550 = vpop.f32.mrf.mxu0
        %v8551 = vadd.f32 0.0, %v8550
        %8552 = vmatmul.f32.gmra.mxu0 %v8503
        %v8553 = vpop.f32.mrf.mxu0
        %v8554 = vadd.f32 0.0, %v8553
        %8555 = vmatmul.f32.gmra.mxu0 %v8505
        %v8556 = vpop.f32.mrf.mxu0
        %v8557 = vadd.f32 0.0, %v8556
        %8558 = vmatmul.f32.gmra.mxu0 %v8507
        %v8559 = vpop.f32.mrf.mxu0
        %v8560 = vadd.f32 0.0, %v8559
        %8561 = vmatmul.f32.gmra.mxu0 %v8509
        %v8562 = vpop.f32.mrf.mxu0
        %v8563 = vadd.f32 0.0, %v8562
        %8564 = vmatmul.f32.gmra.mxu0 %v8511
        %v8565 = vpop.f32.mrf.mxu0
        %v8566 = vadd.f32 0.0, %v8565
        %8567 = vmatmul.f32.gmra.mxu0 %v8513
        %v8568 = vpop.f32.mrf.mxu0
        %v8569 = vadd.f32 0.0, %v8568
        %8570 = vmatmul.f32.gmra.mxu0 %v8515
        %v8571 = vpop.f32.mrf.mxu0
        %v8572 = vadd.f32 0.0, %v8571
        %8573 = vmatmul.f32.gmra.mxu0 %v8517
        %v8574 = vpop.f32.mrf.mxu0
        %v8575 = vadd.f32 0.0, %v8574
        %8576 = vmatmul.f32.gmra.mxu0 %v8519
        %v8577 = vpop.f32.mrf.mxu0
        %v8578 = vadd.f32 0.0, %v8577
        %8579 = vmatmul.f32.gmra.mxu0 %v8521
        %v8580 = vpop.f32.mrf.mxu0
        %v8581 = vadd.f32 0.0, %v8580
        %8582 = vmatmul.f32.gmra.mxu0 %v8523
        %v8583 = vpop.f32.mrf.mxu0
        %v8584 = vadd.f32 0.0, %v8583
        %8585 = vmatmul.f32.gmra.mxu0 %v8525
        %v8586 = vpop.f32.mrf.mxu0
        %v8587 = vadd.f32 0.0, %v8586
        %8588 = vmatmul.f32.gmra.mxu0 %v8527
        %v8589 = vpop.f32.mrf.mxu0
        %v8590 = vadd.f32 0.0, %v8589
        %8591 = vmatmul.f32.gmra.mxu0 %v8529
        %v8592 = vpop.f32.mrf.mxu0
        %v8593 = vadd.f32 0.0, %v8592
        %8594 = vdwg.mxu0
        %8595 = vrot.lane.b32.xlu0 %v6512, 32
        %v8596 = vpop.permute.xlu0 %8595
        %8597 = vrot.lane.b32.xlu0 %v6515, 32
        %v8598 = vpop.permute.xlu0 %8597
        %8599 = vrot.lane.b32.xlu0 %v6518, 32
        %v8600 = vpop.permute.xlu0 %8599
        %8601 = vrot.lane.b32.xlu0 %v6521, 32
        %v8602 = vpop.permute.xlu0 %8601
        %8603 = vrot.lane.b32.xlu0 %v6524, 32
        %v8604 = vpop.permute.xlu0 %8603
        %8605 = vrot.lane.b32.xlu0 %v6527, 32
        %v8606 = vpop.permute.xlu0 %8605
        %8607 = vrot.lane.b32.xlu0 %v6530, 32
        %v8608 = vpop.permute.xlu0 %8607
        %8609 = vrot.lane.b32.xlu0 %v6533, 32
        %v8610 = vpop.permute.xlu0 %8609
        %8611 = vrot.lane.b32.xlu0 %v6536, 32
        %v8612 = vpop.permute.xlu0 %8611
        %8613 = vrot.lane.b32.xlu0 %v6539, 32
        %v8614 = vpop.permute.xlu0 %8613
        %8615 = vrot.lane.b32.xlu0 %v6542, 32
        %v8616 = vpop.permute.xlu0 %8615
        %8617 = vrot.lane.b32.xlu0 %v6545, 32
        %v8618 = vpop.permute.xlu0 %8617
        %8619 = vrot.lane.b32.xlu0 %v6548, 32
        %v8620 = vpop.permute.xlu0 %8619
        %8621 = vrot.lane.b32.xlu0 %v6551, 32
        %v8622 = vpop.permute.xlu0 %8621
        %8623 = vrot.lane.b32.xlu0 %v6554, 32
        %v8624 = vpop.permute.xlu0 %8623
        %8625 = vrot.lane.b32.xlu0 %v6557, 32
        %v8626 = vpop.permute.xlu0 %8625
        %8643 = vmatpush.msra.mxu0 %v8626
        %8644 = vmatpush.msra.mxu0 %v8624
        %8645 = vmatpush.msra.mxu0 %v8622
        %8646 = vmatpush.msra.mxu0 %v8620
        %8647 = vmatpush.msra.mxu0 %v8618
        %8648 = vmatpush.msra.mxu0 %v8616
        %8649 = vmatpush.msra.mxu0 %v8614
        %8650 = vmatpush.msra.mxu0 %v8612
        %8651 = vmatpush.msra.mxu0 %v8610
        %8652 = vmatpush.msra.mxu0 %v8608
        %8653 = vmatpush.msra.mxu0 %v8606
        %8654 = vmatpush.msra.mxu0 %v8604
        %8655 = vmatpush.msra.mxu0 %v8602
        %8656 = vmatpush.msra.mxu0 %v8600
        %8657 = vmatpush.msra.mxu0 %v8598
        %8658 = vmatpush.msra.mxu0 %v8596
        %8659 = vmatmul.f32.gmra.mxu0 %v8499
        %v8660 = vpop.f32.mrf.mxu0
        %v8661 = vadd.f32 0.0, %v8660
        %8662 = vmatmul.f32.gmra.mxu0 %v8501
        %v8663 = vpop.f32.mrf.mxu0
        %v8664 = vadd.f32 0.0, %v8663
        %8665 = vmatmul.f32.gmra.mxu0 %v8503
        %v8666 = vpop.f32.mrf.mxu0
        %v8667 = vadd.f32 0.0, %v8666
        %8668 = vmatmul.f32.gmra.mxu0 %v8505
        %v8669 = vpop.f32.mrf.mxu0
        %v8670 = vadd.f32 0.0, %v8669
        %8671 = vmatmul.f32.gmra.mxu0 %v8507
        %v8672 = vpop.f32.mrf.mxu0
        %v8673 = vadd.f32 0.0, %v8672
        %8674 = vmatmul.f32.gmra.mxu0 %v8509
        %v8675 = vpop.f32.mrf.mxu0
        %v8676 = vadd.f32 0.0, %v8675
        %8677 = vmatmul.f32.gmra.mxu0 %v8511
        %v8678 = vpop.f32.mrf.mxu0
        %v8679 = vadd.f32 0.0, %v8678
        %8680 = vmatmul.f32.gmra.mxu0 %v8513
        %v8681 = vpop.f32.mrf.mxu0
        %v8682 = vadd.f32 0.0, %v8681
        %8683 = vmatmul.f32.gmra.mxu0 %v8515
        %v8684 = vpop.f32.mrf.mxu0
        %v8685 = vadd.f32 0.0, %v8684
        %8686 = vmatmul.f32.gmra.mxu0 %v8517
        %v8687 = vpop.f32.mrf.mxu0
        %v8688 = vadd.f32 0.0, %v8687
        %8689 = vmatmul.f32.gmra.mxu0 %v8519
        %v8690 = vpop.f32.mrf.mxu0
        %v8691 = vadd.f32 0.0, %v8690
        %8692 = vmatmul.f32.gmra.mxu0 %v8521
        %v8693 = vpop.f32.mrf.mxu0
        %v8694 = vadd.f32 0.0, %v8693
        %8695 = vmatmul.f32.gmra.mxu0 %v8523
        %v8696 = vpop.f32.mrf.mxu0
        %v8697 = vadd.f32 0.0, %v8696
        %8698 = vmatmul.f32.gmra.mxu0 %v8525
        %v8699 = vpop.f32.mrf.mxu0
        %v8700 = vadd.f32 0.0, %v8699
        %8701 = vmatmul.f32.gmra.mxu0 %v8527
        %v8702 = vpop.f32.mrf.mxu0
        %v8703 = vadd.f32 0.0, %v8702
        %8704 = vmatmul.f32.gmra.mxu0 %v8529
        %v8705 = vpop.f32.mrf.mxu0
        %v8706 = vadd.f32 0.0, %v8705
        %8707 = vdwg.mxu0
        %v8708 = vrcp.pop %v8548
        %v8709 = vrcp.pop %v8551
        %v8710 = vrcp.pop %v8554
        %v8711 = vrcp.pop %v8557
        %v8712 = vrcp.pop %v8560
        %v8713 = vrcp.pop %v8563
        %v8714 = vrcp.pop %v8566
        %v8715 = vrcp.pop %v8569
        %v8716 = vrcp.pop %v8572
        %v8717 = vrcp.pop %v8575
        %v8718 = vrcp.pop %v8578
        %v8719 = vrcp.pop %v8581
        %v8720 = vrcp.pop %v8584
        %v8721 = vrcp.pop %v8587
        %v8722 = vrcp.pop %v8590
        %v8723 = vrcp.pop %v8593
        %8725 = vset.pattern.permute.xlu0 0
        %8726 = vperm.xlu0 %8725, %v8708
        %v8727 = vpop.permute.xlu0 %8726
        %8730 = vset.pattern.permute.xlu0 0
        %8731 = vperm.xlu0 %8730, %v8709
        %v8732 = vpop.permute.xlu0 %8731
        %8735 = vset.pattern.permute.xlu0 0
        %8736 = vperm.xlu0 %8735, %v8710
        %v8737 = vpop.permute.xlu0 %8736
        %8740 = vset.pattern.permute.xlu0 0
        %8741 = vperm.xlu0 %8740, %v8711
        %v8742 = vpop.permute.xlu0 %8741
        %8745 = vset.pattern.permute.xlu0 0
        %8746 = vperm.xlu0 %8745, %v8712
        %v8747 = vpop.permute.xlu0 %8746
        %8750 = vset.pattern.permute.xlu0 0
        %8751 = vperm.xlu0 %8750, %v8713
        %v8752 = vpop.permute.xlu0 %8751
        %8755 = vset.pattern.permute.xlu0 0
        %8756 = vperm.xlu0 %8755, %v8714
        %v8757 = vpop.permute.xlu0 %8756
        %8760 = vset.pattern.permute.xlu0 0
        %8761 = vperm.xlu0 %8760, %v8715
        %v8762 = vpop.permute.xlu0 %8761
        %8765 = vset.pattern.permute.xlu0 0
        %8766 = vperm.xlu0 %8765, %v8716
        %v8767 = vpop.permute.xlu0 %8766
        %8770 = vset.pattern.permute.xlu0 0
        %8771 = vperm.xlu0 %8770, %v8717
        %v8772 = vpop.permute.xlu0 %8771
        %8775 = vset.pattern.permute.xlu0 0
        %8776 = vperm.xlu0 %8775, %v8718
        %v8777 = vpop.permute.xlu0 %8776
        %8780 = vset.pattern.permute.xlu0 0
        %8781 = vperm.xlu0 %8780, %v8719
        %v8782 = vpop.permute.xlu0 %8781
        %8785 = vset.pattern.permute.xlu0 0
        %8786 = vperm.xlu0 %8785, %v8720
        %v8787 = vpop.permute.xlu0 %8786
        %8790 = vset.pattern.permute.xlu0 0
        %8791 = vperm.xlu0 %8790, %v8721
        %v8792 = vpop.permute.xlu0 %8791
        %8795 = vset.pattern.permute.xlu0 0
        %8796 = vperm.xlu0 %8795, %v8722
        %v8797 = vpop.permute.xlu0 %8796
        %8800 = vset.pattern.permute.xlu0 0
        %8801 = vperm.xlu0 %8800, %v8723
        %v8802 = vpop.permute.xlu0 %8801
        %v8804 = vmul.f32 %v8661, %v8727
        %v8805 = vmul.f32 %v8664, %v8732
        %v8806 = vmul.f32 %v8667, %v8737
        %v8807 = vmul.f32 %v8670, %v8742
        %v8808 = vmul.f32 %v8673, %v8747
        %v8809 = vmul.f32 %v8676, %v8752
        %v8810 = vmul.f32 %v8679, %v8757
        %v8811 = vmul.f32 %v8682, %v8762
        %v8812 = vmul.f32 %v8685, %v8767
        %v8813 = vmul.f32 %v8688, %v8772
        %v8814 = vmul.f32 %v8691, %v8777
        %v8815 = vmul.f32 %v8694, %v8782
        %v8816 = vmul.f32 %v8697, %v8787
        %v8817 = vmul.f32 %v8700, %v8792
        %v8818 = vmul.f32 %v8703, %v8797
        %v8819 = vmul.f32 %v8706, %v8802
        %v8820 = vadd.f32 %v8271, %v8804
        %v8821 = vadd.f32 %v8272, %v8805
        %v8822 = vadd.f32 %v8273, %v8806
        %v8823 = vadd.f32 %v8274, %v8807
        %v8824 = vadd.f32 %v8275, %v8808
        %v8825 = vadd.f32 %v8276, %v8809
        %v8826 = vadd.f32 %v8277, %v8810
        %v8827 = vadd.f32 %v8278, %v8811
        %v8828 = vadd.f32 %v8279, %v8812
        %v8829 = vadd.f32 %v8280, %v8813
        %v8830 = vadd.f32 %v8281, %v8814
        %v8831 = vadd.f32 %v8282, %v8815
        %v8832 = vadd.f32 %v8283, %v8816
        %v8833 = vadd.f32 %v8284, %v8817
        %v8834 = vadd.f32 %v8285, %v8818
        %v8835 = vadd.f32 %v8286, %v8819
        %v8836 = vmul.f32 %v8820, 0.25
        %v8837 = vmul.f32 %v8821, 0.25
        %v8838 = vmul.f32 %v8822, 0.25
        %v8839 = vmul.f32 %v8823, 0.25
        %v8840 = vmul.f32 %v8824, 0.25
        %v8841 = vmul.f32 %v8825, 0.25
        %v8842 = vmul.f32 %v8826, 0.25
        %v8843 = vmul.f32 %v8827, 0.25
        %v8844 = vmul.f32 %v8828, 0.25
        %v8845 = vmul.f32 %v8829, 0.25
        %v8846 = vmul.f32 %v8830, 0.25
        %v8847 = vmul.f32 %v8831, 0.25
        %v8848 = vmul.f32 %v8832, 0.25
        %v8849 = vmul.f32 %v8833, 0.25
        %v8850 = vmul.f32 %v8834, 0.25
        %v8851 = vmul.f32 %v8835, 0.25
        %v8852 = vld [vmem:[%s3 + $0x661] ss:$0 sm:$0xff]
        %v8853 = vadd.f32 %v8836, %v8852
        %v8854 = vadd.f32 %v8837, %v8852
        %v8855 = vadd.f32 %v8838, %v8852
        %v8856 = vadd.f32 %v8839, %v8852
        %v8857 = vadd.f32 %v8840, %v8852
        %v8858 = vadd.f32 %v8841, %v8852
        %v8859 = vadd.f32 %v8842, %v8852
        %v8860 = vadd.f32 %v8843, %v8852
        %v8861 = vadd.f32 %v8844, %v8852
        %v8862 = vadd.f32 %v8845, %v8852
        %v8863 = vadd.f32 %v8846, %v8852
        %v8864 = vadd.f32 %v8847, %v8852
        %v8865 = vadd.f32 %v8848, %v8852
        %v8866 = vadd.f32 %v8849, %v8852
        %v8867 = vadd.f32 %v8850, %v8852
        %v8868 = vadd.f32 %v8851, %v8852
        %v8869 = vsel %vm474, %v8853, 0.0
        %8870 = vadd.xlane.f32.xlu0 %v8869
        %v8871 = vpop.xlane.xlu0 %8870
        %v8872 = vsel %vm474, %v8854, 0.0
        %8873 = vadd.xlane.f32.xlu0 %v8872
        %v8874 = vpop.xlane.xlu0 %8873
        %v8875 = vsel %vm474, %v8855, 0.0
        %8876 = vadd.xlane.f32.xlu0 %v8875
        %v8877 = vpop.xlane.xlu0 %8876
        %v8878 = vsel %vm474, %v8856, 0.0
        %8879 = vadd.xlane.f32.xlu0 %v8878
        %v8880 = vpop.xlane.xlu0 %8879
        %v8881 = vsel %vm474, %v8857, 0.0
        %8882 = vadd.xlane.f32.xlu0 %v8881
        %v8883 = vpop.xlane.xlu0 %8882
        %v8884 = vsel %vm474, %v8858, 0.0
        %8885 = vadd.xlane.f32.xlu0 %v8884
        %v8886 = vpop.xlane.xlu0 %8885
        %v8887 = vsel %vm474, %v8859, 0.0
        %8888 = vadd.xlane.f32.xlu0 %v8887
        %v8889 = vpop.xlane.xlu0 %8888
        %v8890 = vsel %vm474, %v8860, 0.0
        %8891 = vadd.xlane.f32.xlu0 %v8890
        %v8892 = vpop.xlane.xlu0 %8891
        %v8893 = vsel %vm474, %v8861, 0.0
        %8894 = vadd.xlane.f32.xlu0 %v8893
        %v8895 = vpop.xlane.xlu0 %8894
        %v8896 = vsel %vm474, %v8862, 0.0
        %8897 = vadd.xlane.f32.xlu0 %v8896
        %v8898 = vpop.xlane.xlu0 %8897
        %v8899 = vsel %vm474, %v8863, 0.0
        %8900 = vadd.xlane.f32.xlu0 %v8899
        %v8901 = vpop.xlane.xlu0 %8900
        %v8902 = vsel %vm474, %v8864, 0.0
        %8903 = vadd.xlane.f32.xlu0 %v8902
        %v8904 = vpop.xlane.xlu0 %8903
        %v8905 = vsel %vm474, %v8865, 0.0
        %8906 = vadd.xlane.f32.xlu0 %v8905
        %v8907 = vpop.xlane.xlu0 %8906
        %v8908 = vsel %vm474, %v8866, 0.0
        %8909 = vadd.xlane.f32.xlu0 %v8908
        %v8910 = vpop.xlane.xlu0 %8909
        %v8911 = vsel %vm474, %v8867, 0.0
        %8912 = vadd.xlane.f32.xlu0 %v8911
        %v8913 = vpop.xlane.xlu0 %8912
        %v8914 = vsel %vm474, %v8868, 0.0
        %8915 = vadd.xlane.f32.xlu0 %v8914
        %v8916 = vpop.xlane.xlu0 %8915
        %v8917 = vmul.f32 %v8871, %v2952
        %v8918 = vmul.f32 %v8874, %v2952
        %v8919 = vmul.f32 %v8877, %v2952
        %v8920 = vmul.f32 %v8880, %v2952
        %v8921 = vmul.f32 %v8883, %v2952
        %v8922 = vmul.f32 %v8886, %v2952
        %v8923 = vmul.f32 %v8889, %v2952
        %v8924 = vmul.f32 %v8892, %v2952
        %v8925 = vmul.f32 %v8895, %v2952
        %v8926 = vmul.f32 %v8898, %v2952
        %v8927 = vmul.f32 %v8901, %v2952
        %v8928 = vmul.f32 %v8904, %v2952
        %v8929 = vmul.f32 %v8907, %v2952
        %v8930 = vmul.f32 %v8910, %v2952
        %v8931 = vmul.f32 %v8913, %v2952
        %v8932 = vmul.f32 %v8916, %v2952
        %v8933 = vsub.f32 %v8853, %v8917
        %v8934 = vsub.f32 %v8854, %v8918
        %v8935 = vsub.f32 %v8855, %v8919
        %v8936 = vsub.f32 %v8856, %v8920
        %v8937 = vsub.f32 %v8857, %v8921
        %v8938 = vsub.f32 %v8858, %v8922
        %v8939 = vsub.f32 %v8859, %v8923
        %v8940 = vsub.f32 %v8860, %v8924
        %v8941 = vsub.f32 %v8861, %v8925
        %v8942 = vsub.f32 %v8862, %v8926
        %v8943 = vsub.f32 %v8863, %v8927
        %v8944 = vsub.f32 %v8864, %v8928
        %v8945 = vsub.f32 %v8865, %v8929
        %v8946 = vsub.f32 %v8866, %v8930
        %v8947 = vsub.f32 %v8867, %v8931
        %v8948 = vsub.f32 %v8868, %v8932
        %v8949 = vmul.f32 %v8933, %v8933
        %v8950 = vmul.f32 %v8934, %v8934
        %v8951 = vmul.f32 %v8935, %v8935
        %v8952 = vmul.f32 %v8936, %v8936
        %v8953 = vmul.f32 %v8937, %v8937
        %v8954 = vmul.f32 %v8938, %v8938
        %v8955 = vmul.f32 %v8939, %v8939
        %v8956 = vmul.f32 %v8940, %v8940
        %v8957 = vmul.f32 %v8941, %v8941
        %v8958 = vmul.f32 %v8942, %v8942
        %v8959 = vmul.f32 %v8943, %v8943
        %v8960 = vmul.f32 %v8944, %v8944
        %v8961 = vmul.f32 %v8945, %v8945
        %v8962 = vmul.f32 %v8946, %v8946
        %v8963 = vmul.f32 %v8947, %v8947
        %v8964 = vmul.f32 %v8948, %v8948
        %v8965 = vsel %vm474, %v8949, 0.0
        %8966 = vadd.xlane.f32.xlu0 %v8965
        %v8967 = vpop.xlane.xlu0 %8966
        %v8968 = vsel %vm474, %v8950, 0.0
        %8969 = vadd.xlane.f32.xlu0 %v8968
        %v8970 = vpop.xlane.xlu0 %8969
        %v8971 = vsel %vm474, %v8951, 0.0
        %8972 = vadd.xlane.f32.xlu0 %v8971
        %v8973 = vpop.xlane.xlu0 %8972
        %v8974 = vsel %vm474, %v8952, 0.0
        %8975 = vadd.xlane.f32.xlu0 %v8974
        %v8976 = vpop.xlane.xlu0 %8975
        %v8977 = vsel %vm474, %v8953, 0.0
        %8978 = vadd.xlane.f32.xlu0 %v8977
        %v8979 = vpop.xlane.xlu0 %8978
        %v8980 = vsel %vm474, %v8954, 0.0
        %8981 = vadd.xlane.f32.xlu0 %v8980
        %v8982 = vpop.xlane.xlu0 %8981
        %v8983 = vsel %vm474, %v8955, 0.0
        %8984 = vadd.xlane.f32.xlu0 %v8983
        %v8985 = vpop.xlane.xlu0 %8984
        %v8986 = vsel %vm474, %v8956, 0.0
        %8987 = vadd.xlane.f32.xlu0 %v8986
        %v8988 = vpop.xlane.xlu0 %8987
        %v8989 = vsel %vm474, %v8957, 0.0
        %8990 = vadd.xlane.f32.xlu0 %v8989
        %v8991 = vpop.xlane.xlu0 %8990
        %v8992 = vsel %vm474, %v8958, 0.0
        %8993 = vadd.xlane.f32.xlu0 %v8992
        %v8994 = vpop.xlane.xlu0 %8993
        %v8995 = vsel %vm474, %v8959, 0.0
        %8996 = vadd.xlane.f32.xlu0 %v8995
        %v8997 = vpop.xlane.xlu0 %8996
        %v8998 = vsel %vm474, %v8960, 0.0
        %8999 = vadd.xlane.f32.xlu0 %v8998
        %v9000 = vpop.xlane.xlu0 %8999
        %v9001 = vsel %vm474, %v8961, 0.0
        %9002 = vadd.xlane.f32.xlu0 %v9001
        %v9003 = vpop.xlane.xlu0 %9002
        %v9004 = vsel %vm474, %v8962, 0.0
        %9005 = vadd.xlane.f32.xlu0 %v9004
        %v9006 = vpop.xlane.xlu0 %9005
        %v9007 = vsel %vm474, %v8963, 0.0
        %9008 = vadd.xlane.f32.xlu0 %v9007
        %v9009 = vpop.xlane.xlu0 %9008
        %v9010 = vsel %vm474, %v8964, 0.0
        %9011 = vadd.xlane.f32.xlu0 %v9010
        %v9012 = vpop.xlane.xlu0 %9011
        %v9013 = vmul.f32 %v8967, %v2952
        %v9014 = vmul.f32 %v8970, %v2952
        %v9015 = vmul.f32 %v8973, %v2952
        %v9016 = vmul.f32 %v8976, %v2952
        %v9017 = vmul.f32 %v8979, %v2952
        %v9018 = vmul.f32 %v8982, %v2952
        %v9019 = vmul.f32 %v8985, %v2952
        %v9020 = vmul.f32 %v8988, %v2952
        %v9021 = vmul.f32 %v8991, %v2952
        %v9022 = vmul.f32 %v8994, %v2952
        %v9023 = vmul.f32 %v8997, %v2952
        %v9024 = vmul.f32 %v9000, %v2952
        %v9025 = vmul.f32 %v9003, %v2952
        %v9026 = vmul.f32 %v9006, %v2952
        %v9027 = vmul.f32 %v9009, %v2952
        %v9028 = vmul.f32 %v9012, %v2952
        %v9029 = vadd.f32 %v9013, 1e-05
        %v9030 = vadd.f32 %v9014, 1e-05
        %v9031 = vadd.f32 %v9015, 1e-05
        %v9032 = vadd.f32 %v9016, 1e-05
        %v9033 = vadd.f32 %v9017, 1e-05
        %v9034 = vadd.f32 %v9018, 1e-05
        %v9035 = vadd.f32 %v9019, 1e-05
        %v9036 = vadd.f32 %v9020, 1e-05
        %v9037 = vadd.f32 %v9021, 1e-05
        %v9038 = vadd.f32 %v9022, 1e-05
        %v9039 = vadd.f32 %v9023, 1e-05
        %v9040 = vadd.f32 %v9024, 1e-05
        %v9041 = vadd.f32 %v9025, 1e-05
        %v9042 = vadd.f32 %v9026, 1e-05
        %v9043 = vadd.f32 %v9027, 1e-05
        %v9044 = vadd.f32 %v9028, 1e-05
        %v9045 = vrsqrt.pop %v9029
        %v9046 = vmul.f32 %v9045, %v9029
        %v9047 = vmul.f32 %v9046, %v9045
        %v9048 = vmul.f32 0.5, %v9047
        %v9049 = vsub.f32 1.5, %v9048
        %v9050 = vmul.f32 %v9045, %v9049
        %vm9051 = vweird.f32 %v9029
        %vm9052 = vweird.f32 %v9045
        %vm9053 = vmor %vm9051, %vm9052
        %v9054 = vsel %vm9053, %v9045, %v9050
        %v9055 = vrsqrt.pop %v9030
        %v9056 = vmul.f32 %v9055, %v9030
        %v9057 = vmul.f32 %v9056, %v9055
        %v9058 = vmul.f32 0.5, %v9057
        %v9059 = vsub.f32 1.5, %v9058
        %v9060 = vmul.f32 %v9055, %v9059
        %vm9061 = vweird.f32 %v9030
        %vm9062 = vweird.f32 %v9055
        %vm9063 = vmor %vm9061, %vm9062
        %v9064 = vsel %vm9063, %v9055, %v9060
        %v9065 = vrsqrt.pop %v9031
        %v9066 = vmul.f32 %v9065, %v9031
        %v9067 = vmul.f32 %v9066, %v9065
        %v9068 = vmul.f32 0.5, %v9067
        %v9069 = vsub.f32 1.5, %v9068
        %v9070 = vmul.f32 %v9065, %v9069
        %vm9071 = vweird.f32 %v9031
        %vm9072 = vweird.f32 %v9065
        %vm9073 = vmor %vm9071, %vm9072
        %v9074 = vsel %vm9073, %v9065, %v9070
        %v9075 = vrsqrt.pop %v9032
        %v9076 = vmul.f32 %v9075, %v9032
        %v9077 = vmul.f32 %v9076, %v9075
        %v9078 = vmul.f32 0.5, %v9077
        %v9079 = vsub.f32 1.5, %v9078
        %v9080 = vmul.f32 %v9075, %v9079
        %vm9081 = vweird.f32 %v9032
        %vm9082 = vweird.f32 %v9075
        %vm9083 = vmor %vm9081, %vm9082
        %v9084 = vsel %vm9083, %v9075, %v9080
        %v9085 = vrsqrt.pop %v9033
        %v9086 = vmul.f32 %v9085, %v9033
        %v9087 = vmul.f32 %v9086, %v9085
        %v9088 = vmul.f32 0.5, %v9087
        %v9089 = vsub.f32 1.5, %v9088
        %v9090 = vmul.f32 %v9085, %v9089
        %vm9091 = vweird.f32 %v9033
        %vm9092 = vweird.f32 %v9085
        %vm9093 = vmor %vm9091, %vm9092
        %v9094 = vsel %vm9093, %v9085, %v9090
        %v9095 = vrsqrt.pop %v9034
        %v9096 = vmul.f32 %v9095, %v9034
        %v9097 = vmul.f32 %v9096, %v9095
        %v9098 = vmul.f32 0.5, %v9097
        %v9099 = vsub.f32 1.5, %v9098
        %v9100 = vmul.f32 %v9095, %v9099
        %vm9101 = vweird.f32 %v9034
        %vm9102 = vweird.f32 %v9095
        %vm9103 = vmor %vm9101, %vm9102
        %v9104 = vsel %vm9103, %v9095, %v9100
        %v9105 = vrsqrt.pop %v9035
        %v9106 = vmul.f32 %v9105, %v9035
        %v9107 = vmul.f32 %v9106, %v9105
        %v9108 = vmul.f32 0.5, %v9107
        %v9109 = vsub.f32 1.5, %v9108
        %v9110 = vmul.f32 %v9105, %v9109
        %vm9111 = vweird.f32 %v9035
        %vm9112 = vweird.f32 %v9105
        %vm9113 = vmor %vm9111, %vm9112
        %v9114 = vsel %vm9113, %v9105, %v9110
        %v9115 = vrsqrt.pop %v9036
        %v9116 = vmul.f32 %v9115, %v9036
        %v9117 = vmul.f32 %v9116, %v9115
        %v9118 = vmul.f32 0.5, %v9117
        %v9119 = vsub.f32 1.5, %v9118
        %v9120 = vmul.f32 %v9115, %v9119
        %vm9121 = vweird.f32 %v9036
        %vm9122 = vweird.f32 %v9115
        %vm9123 = vmor %vm9121, %vm9122
        %v9124 = vsel %vm9123, %v9115, %v9120
        %v9125 = vrsqrt.pop %v9037
        %v9126 = vmul.f32 %v9125, %v9037
        %v9127 = vmul.f32 %v9126, %v9125
        %v9128 = vmul.f32 0.5, %v9127
        %v9129 = vsub.f32 1.5, %v9128
        %v9130 = vmul.f32 %v9125, %v9129
        %vm9131 = vweird.f32 %v9037
        %vm9132 = vweird.f32 %v9125
        %vm9133 = vmor %vm9131, %vm9132
        %v9134 = vsel %vm9133, %v9125, %v9130
        %v9135 = vrsqrt.pop %v9038
        %v9136 = vmul.f32 %v9135, %v9038
        %v9137 = vmul.f32 %v9136, %v9135
        %v9138 = vmul.f32 0.5, %v9137
        %v9139 = vsub.f32 1.5, %v9138
        %v9140 = vmul.f32 %v9135, %v9139
        %vm9141 = vweird.f32 %v9038
        %vm9142 = vweird.f32 %v9135
        %vm9143 = vmor %vm9141, %vm9142
        %v9144 = vsel %vm9143, %v9135, %v9140
        %v9145 = vrsqrt.pop %v9039
        %v9146 = vmul.f32 %v9145, %v9039
        %v9147 = vmul.f32 %v9146, %v9145
        %v9148 = vmul.f32 0.5, %v9147
        %v9149 = vsub.f32 1.5, %v9148
        %v9150 = vmul.f32 %v9145, %v9149
        %vm9151 = vweird.f32 %v9039
        %vm9152 = vweird.f32 %v9145
        %vm9153 = vmor %vm9151, %vm9152
        %v9154 = vsel %vm9153, %v9145, %v9150
        %v9155 = vrsqrt.pop %v9040
        %v9156 = vmul.f32 %v9155, %v9040
        %v9157 = vmul.f32 %v9156, %v9155
        %v9158 = vmul.f32 0.5, %v9157
        %v9159 = vsub.f32 1.5, %v9158
        %v9160 = vmul.f32 %v9155, %v9159
        %vm9161 = vweird.f32 %v9040
        %vm9162 = vweird.f32 %v9155
        %vm9163 = vmor %vm9161, %vm9162
        %v9164 = vsel %vm9163, %v9155, %v9160
        %v9165 = vrsqrt.pop %v9041
        %v9166 = vmul.f32 %v9165, %v9041
        %v9167 = vmul.f32 %v9166, %v9165
        %v9168 = vmul.f32 0.5, %v9167
        %v9169 = vsub.f32 1.5, %v9168
        %v9170 = vmul.f32 %v9165, %v9169
        %vm9171 = vweird.f32 %v9041
        %vm9172 = vweird.f32 %v9165
        %vm9173 = vmor %vm9171, %vm9172
        %v9174 = vsel %vm9173, %v9165, %v9170
        %v9175 = vrsqrt.pop %v9042
        %v9176 = vmul.f32 %v9175, %v9042
        %v9177 = vmul.f32 %v9176, %v9175
        %v9178 = vmul.f32 0.5, %v9177
        %v9179 = vsub.f32 1.5, %v9178
        %v9180 = vmul.f32 %v9175, %v9179
        %vm9181 = vweird.f32 %v9042
        %vm9182 = vweird.f32 %v9175
        %vm9183 = vmor %vm9181, %vm9182
        %v9184 = vsel %vm9183, %v9175, %v9180
        %v9185 = vrsqrt.pop %v9043
        %v9186 = vmul.f32 %v9185, %v9043
        %v9187 = vmul.f32 %v9186, %v9185
        %v9188 = vmul.f32 0.5, %v9187
        %v9189 = vsub.f32 1.5, %v9188
        %v9190 = vmul.f32 %v9185, %v9189
        %vm9191 = vweird.f32 %v9043
        %vm9192 = vweird.f32 %v9185
        %vm9193 = vmor %vm9191, %vm9192
        %v9194 = vsel %vm9193, %v9185, %v9190
        %v9195 = vrsqrt.pop %v9044
        %v9196 = vmul.f32 %v9195, %v9044
        %v9197 = vmul.f32 %v9196, %v9195
        %v9198 = vmul.f32 0.5, %v9197
        %v9199 = vsub.f32 1.5, %v9198
        %v9200 = vmul.f32 %v9195, %v9199
        %vm9201 = vweird.f32 %v9044
        %vm9202 = vweird.f32 %v9195
        %vm9203 = vmor %vm9201, %vm9202
        %v9204 = vsel %vm9203, %v9195, %v9200
        %v9205 = vmul.f32 %v8933, %v9054
        %v9206 = vmul.f32 %v8934, %v9064
        %v9207 = vmul.f32 %v8935, %v9074
        %v9208 = vmul.f32 %v8936, %v9084
        %v9209 = vmul.f32 %v8937, %v9094
        %v9210 = vmul.f32 %v8938, %v9104
        %v9211 = vmul.f32 %v8939, %v9114
        %v9212 = vmul.f32 %v8940, %v9124
        %v9213 = vmul.f32 %v8941, %v9134
        %v9214 = vmul.f32 %v8942, %v9144
        %v9215 = vmul.f32 %v8943, %v9154
        %v9216 = vmul.f32 %v8944, %v9164
        %v9217 = vmul.f32 %v8945, %v9174
        %v9218 = vmul.f32 %v8946, %v9184
        %v9219 = vmul.f32 %v8947, %v9194
        %v9220 = vmul.f32 %v8948, %v9204
        %v9221 = vld [vmem:[%s3 + $0x662] ss:$0 sm:$0xff]
        %v9222 = vmul.f32 %v9205, %v9221
        %v9223 = vmul.f32 %v9206, %v9221
        %v9224 = vmul.f32 %v9207, %v9221
        %v9225 = vmul.f32 %v9208, %v9221
        %v9226 = vmul.f32 %v9209, %v9221
        %v9227 = vmul.f32 %v9210, %v9221
        %v9228 = vmul.f32 %v9211, %v9221
        %v9229 = vmul.f32 %v9212, %v9221
        %v9230 = vmul.f32 %v9213, %v9221
        %v9231 = vmul.f32 %v9214, %v9221
        %v9232 = vmul.f32 %v9215, %v9221
        %v9233 = vmul.f32 %v9216, %v9221
        %v9234 = vmul.f32 %v9217, %v9221
        %v9235 = vmul.f32 %v9218, %v9221
        %v9236 = vmul.f32 %v9219, %v9221
        %v9237 = vmul.f32 %v9220, %v9221
        %v9238 = vld [vmem:[%s3 + $0x663] ss:$0 sm:$0xff]
        %v9239 = vadd.f32 %v9222, %v9238
        %v9240 = vadd.f32 %v9223, %v9238
        %v9241 = vadd.f32 %v9224, %v9238
        %v9242 = vadd.f32 %v9225, %v9238
        %v9243 = vadd.f32 %v9226, %v9238
        %v9244 = vadd.f32 %v9227, %v9238
        %v9245 = vadd.f32 %v9228, %v9238
        %v9246 = vadd.f32 %v9229, %v9238
        %v9247 = vadd.f32 %v9230, %v9238
        %v9248 = vadd.f32 %v9231, %v9238
        %v9249 = vadd.f32 %v9232, %v9238
        %v9250 = vadd.f32 %v9233, %v9238
        %v9251 = vadd.f32 %v9234, %v9238
        %v9252 = vadd.f32 %v9235, %v9238
        %v9253 = vadd.f32 %v9236, %v9238
        %v9254 = vadd.f32 %v9237, %v9238
        %v9255 = vadd.f32 %v9239, %v6439
        %v9256 = vadd.f32 %v9240, %v6442
        %v9257 = vadd.f32 %v9241, %v6445
        %v9258 = vadd.f32 %v9242, %v6448
        %v9259 = vadd.f32 %v9243, %v6451
        %v9260 = vadd.f32 %v9244, %v6454
        %v9261 = vadd.f32 %v9245, %v6457
        %v9262 = vadd.f32 %v9246, %v6460
        %v9263 = vadd.f32 %v9247, %v6463
        %v9264 = vadd.f32 %v9248, %v6466
        %v9265 = vadd.f32 %v9249, %v6469
        %v9266 = vadd.f32 %v9250, %v6472
        %v9267 = vadd.f32 %v9251, %v6475
        %v9268 = vadd.f32 %v9252, %v6478
        %v9269 = vadd.f32 %v9253, %v6481
        %v9270 = vadd.f32 %v9254, %v6484
        %v9271 = vmax.f32 %v9255, 0.0
        %v9272 = vmax.f32 %v9256, 0.0
        %v9273 = vmax.f32 %v9257, 0.0
        %v9274 = vmax.f32 %v9258, 0.0
        %v9275 = vmax.f32 %v9259, 0.0
        %v9276 = vmax.f32 %v9260, 0.0
        %v9277 = vmax.f32 %v9261, 0.0
        %v9278 = vmax.f32 %v9262, 0.0
        %v9279 = vmax.f32 %v9263, 0.0
        %v9280 = vmax.f32 %v9264, 0.0
        %v9281 = vmax.f32 %v9265, 0.0
        %v9282 = vmax.f32 %v9266, 0.0
        %v9283 = vmax.f32 %v9267, 0.0
        %v9284 = vmax.f32 %v9268, 0.0
        %v9285 = vmax.f32 %v9269, 0.0
        %v9286 = vmax.f32 %v9270, 0.0
        %v9287 = vld [vmem:[%s3 + $0x5d0] sm:$0xff]
        %v9288 = vld [vmem:[%s3 + $0x5e0] sm:$0xff]
        %v9289 = vld [vmem:[%s3 + $0x5f0] sm:$0xff]
        %v9290 = vld [vmem:[%s3 + $0x600] sm:$0xff]
        %v9291 = vld [vmem:[%s3 + $0x664] ss:$0 sm:$0xff]
        %v9293 = vsel %vm474, %v9271, 0
        %v9296 = vsel %vm474, %v9272, 0
        %v9299 = vsel %vm474, %v9273, 0
        %v9302 = vsel %vm474, %v9274, 0
        %v9305 = vsel %vm474, %v9275, 0
        %v9308 = vsel %vm474, %v9276, 0
        %v9311 = vsel %vm474, %v9277, 0
        %v9314 = vsel %vm474, %v9278, 0
        %v9317 = vsel %vm474, %v9279, 0
        %v9320 = vsel %vm474, %v9280, 0
        %v9323 = vsel %vm474, %v9281, 0
        %v9326 = vsel %vm474, %v9282, 0
        %v9329 = vsel %vm474, %v9283, 0
        %v9332 = vsel %vm474, %v9284, 0
        %v9335 = vsel %vm474, %v9285, 0
        %v9338 = vsel %vm474, %v9286, 0
        %9340 = vmatpush.msra.mxu0 0.0
        %9341 = vmatpush.msra.mxu0 0.0
        %9342 = vmatpush.msra.mxu0 0.0
        %9343 = vmatpush.msra.mxu0 0.0
        %9344 = vmatpush.msra.mxu0 0.0
        %9345 = vmatpush.msra.mxu0 0.0
        %9346 = vmatpush.msra.mxu0 0.0
        %9347 = vmatpush.msra.mxu0 0.0
        %9348 = vmatpush.msra.mxu0 0.0
        %9349 = vmatpush.msra.mxu0 0.0
        %9350 = vmatpush.msra.mxu0 0.0
        %9351 = vmatpush.msra.mxu0 0.0
        %9352 = vmatpush.msra.mxu0 %v9290
        %9353 = vmatpush.msra.mxu0 %v9289
        %9354 = vmatpush.msra.mxu0 %v9288
        %9355 = vmatpush.msra.mxu0 %v9287
        %9356 = vmatmul.f32.gmra.mxu0 %v9293
        %v9357 = vpop.f32.mrf.mxu0
        %v9358 = vadd.f32 %v9291, %v9357
        %9359 = vmatmul.f32.gmra.mxu0 %v9296
        %v9360 = vpop.f32.mrf.mxu0
        %v9361 = vadd.f32 %v9291, %v9360
        %9362 = vmatmul.f32.gmra.mxu0 %v9299
        %v9363 = vpop.f32.mrf.mxu0
        %v9364 = vadd.f32 %v9291, %v9363
        %9365 = vmatmul.f32.gmra.mxu0 %v9302
        %v9366 = vpop.f32.mrf.mxu0
        %v9367 = vadd.f32 %v9291, %v9366
        %9368 = vmatmul.f32.gmra.mxu0 %v9305
        %v9369 = vpop.f32.mrf.mxu0
        %v9370 = vadd.f32 %v9291, %v9369
        %9371 = vmatmul.f32.gmra.mxu0 %v9308
        %v9372 = vpop.f32.mrf.mxu0
        %v9373 = vadd.f32 %v9291, %v9372
        %9374 = vmatmul.f32.gmra.mxu0 %v9311
        %v9375 = vpop.f32.mrf.mxu0
        %v9376 = vadd.f32 %v9291, %v9375
        %9377 = vmatmul.f32.gmra.mxu0 %v9314
        %v9378 = vpop.f32.mrf.mxu0
        %v9379 = vadd.f32 %v9291, %v9378
        %9380 = vmatmul.f32.gmra.mxu0 %v9317
        %v9381 = vpop.f32.mrf.mxu0
        %v9382 = vadd.f32 %v9291, %v9381
        %9383 = vmatmul.f32.gmra.mxu0 %v9320
        %v9384 = vpop.f32.mrf.mxu0
        %v9385 = vadd.f32 %v9291, %v9384
        %9386 = vmatmul.f32.gmra.mxu0 %v9323
        %v9387 = vpop.f32.mrf.mxu0
        %v9388 = vadd.f32 %v9291, %v9387
        %9389 = vmatmul.f32.gmra.mxu0 %v9326
        %v9390 = vpop.f32.mrf.mxu0
        %v9391 = vadd.f32 %v9291, %v9390
        %9392 = vmatmul.f32.gmra.mxu0 %v9329
        %v9393 = vpop.f32.mrf.mxu0
        %v9394 = vadd.f32 %v9291, %v9393
        %9395 = vmatmul.f32.gmra.mxu0 %v9332
        %v9396 = vpop.f32.mrf.mxu0
        %v9397 = vadd.f32 %v9291, %v9396
        %9398 = vmatmul.f32.gmra.mxu0 %v9335
        %v9399 = vpop.f32.mrf.mxu0
        %v9400 = vadd.f32 %v9291, %v9399
        %9401 = vmatmul.f32.gmra.mxu0 %v9338
        %v9402 = vpop.f32.mrf.mxu0
        %v9403 = vadd.f32 %v9291, %v9402
        %9404 = vdwg.mxu0
        %v9405 = vsel %vm474, %v9358, 0.0
        %9406 = vadd.xlane.f32.xlu0 %v9405
        %v9407 = vpop.xlane.xlu0 %9406
        %v9408 = vsel %vm474, %v9361, 0.0
        %9409 = vadd.xlane.f32.xlu0 %v9408
        %v9410 = vpop.xlane.xlu0 %9409
        %v9411 = vsel %vm474, %v9364, 0.0
        %9412 = vadd.xlane.f32.xlu0 %v9411
        %v9413 = vpop.xlane.xlu0 %9412
        %v9414 = vsel %vm474, %v9367, 0.0
        %9415 = vadd.xlane.f32.xlu0 %v9414
        %v9416 = vpop.xlane.xlu0 %9415
        %v9417 = vsel %vm474, %v9370, 0.0
        %9418 = vadd.xlane.f32.xlu0 %v9417
        %v9419 = vpop.xlane.xlu0 %9418
        %v9420 = vsel %vm474, %v9373, 0.0
        %9421 = vadd.xlane.f32.xlu0 %v9420
        %v9422 = vpop.xlane.xlu0 %9421
        %v9423 = vsel %vm474, %v9376, 0.0
        %9424 = vadd.xlane.f32.xlu0 %v9423
        %v9425 = vpop.xlane.xlu0 %9424
        %v9426 = vsel %vm474, %v9379, 0.0
        %9427 = vadd.xlane.f32.xlu0 %v9426
        %v9428 = vpop.xlane.xlu0 %9427
        %v9429 = vsel %vm474, %v9382, 0.0
        %9430 = vadd.xlane.f32.xlu0 %v9429
        %v9431 = vpop.xlane.xlu0 %9430
        %v9432 = vsel %vm474, %v9385, 0.0
        %9433 = vadd.xlane.f32.xlu0 %v9432
        %v9434 = vpop.xlane.xlu0 %9433
        %v9435 = vsel %vm474, %v9388, 0.0
        %9436 = vadd.xlane.f32.xlu0 %v9435
        %v9437 = vpop.xlane.xlu0 %9436
        %v9438 = vsel %vm474, %v9391, 0.0
        %9439 = vadd.xlane.f32.xlu0 %v9438
        %v9440 = vpop.xlane.xlu0 %9439
        %v9441 = vsel %vm474, %v9394, 0.0
        %9442 = vadd.xlane.f32.xlu0 %v9441
        %v9443 = vpop.xlane.xlu0 %9442
        %v9444 = vsel %vm474, %v9397, 0.0
        %9445 = vadd.xlane.f32.xlu0 %v9444
        %v9446 = vpop.xlane.xlu0 %9445
        %v9447 = vsel %vm474, %v9400, 0.0
        %9448 = vadd.xlane.f32.xlu0 %v9447
        %v9449 = vpop.xlane.xlu0 %9448
        %v9450 = vsel %vm474, %v9403, 0.0
        %9451 = vadd.xlane.f32.xlu0 %v9450
        %v9452 = vpop.xlane.xlu0 %9451
        %v9453 = vmul.f32 %v9407, %v2952
        %v9454 = vmul.f32 %v9410, %v2952
        %v9455 = vmul.f32 %v9413, %v2952
        %v9456 = vmul.f32 %v9416, %v2952
        %v9457 = vmul.f32 %v9419, %v2952
        %v9458 = vmul.f32 %v9422, %v2952
        %v9459 = vmul.f32 %v9425, %v2952
        %v9460 = vmul.f32 %v9428, %v2952
        %v9461 = vmul.f32 %v9431, %v2952
        %v9462 = vmul.f32 %v9434, %v2952
        %v9463 = vmul.f32 %v9437, %v2952
        %v9464 = vmul.f32 %v9440, %v2952
        %v9465 = vmul.f32 %v9443, %v2952
        %v9466 = vmul.f32 %v9446, %v2952
        %v9467 = vmul.f32 %v9449, %v2952
        %v9468 = vmul.f32 %v9452, %v2952
        %v9469 = vsub.f32 %v9358, %v9453
        %v9470 = vsub.f32 %v9361, %v9454
        %v9471 = vsub.f32 %v9364, %v9455
        %v9472 = vsub.f32 %v9367, %v9456
        %v9473 = vsub.f32 %v9370, %v9457
        %v9474 = vsub.f32 %v9373, %v9458
        %v9475 = vsub.f32 %v9376, %v9459
        %v9476 = vsub.f32 %v9379, %v9460
        %v9477 = vsub.f32 %v9382, %v9461
        %v9478 = vsub.f32 %v9385, %v9462
        %v9479 = vsub.f32 %v9388, %v9463
        %v9480 = vsub.f32 %v9391, %v9464
        %v9481 = vsub.f32 %v9394, %v9465
        %v9482 = vsub.f32 %v9397, %v9466
        %v9483 = vsub.f32 %v9400, %v9467
        %v9484 = vsub.f32 %v9403, %v9468
        %v9485 = vmul.f32 %v9469, %v9469
        %v9486 = vmul.f32 %v9470, %v9470
        %v9487 = vmul.f32 %v9471, %v9471
        %v9488 = vmul.f32 %v9472, %v9472
        %v9489 = vmul.f32 %v9473, %v9473
        %v9490 = vmul.f32 %v9474, %v9474
        %v9491 = vmul.f32 %v9475, %v9475
        %v9492 = vmul.f32 %v9476, %v9476
        %v9493 = vmul.f32 %v9477, %v9477
        %v9494 = vmul.f32 %v9478, %v9478
        %v9495 = vmul.f32 %v9479, %v9479
        %v9496 = vmul.f32 %v9480, %v9480
        %v9497 = vmul.f32 %v9481, %v9481
        %v9498 = vmul.f32 %v9482, %v9482
        %v9499 = vmul.f32 %v9483, %v9483
        %v9500 = vmul.f32 %v9484, %v9484
        %v9501 = vsel %vm474, %v9485, 0.0
        %9502 = vadd.xlane.f32.xlu0 %v9501
        %v9503 = vpop.xlane.xlu0 %9502
        %v9504 = vsel %vm474, %v9486, 0.0
        %9505 = vadd.xlane.f32.xlu0 %v9504
        %v9506 = vpop.xlane.xlu0 %9505
        %v9507 = vsel %vm474, %v9487, 0.0
        %9508 = vadd.xlane.f32.xlu0 %v9507
        %v9509 = vpop.xlane.xlu0 %9508
        %v9510 = vsel %vm474, %v9488, 0.0
        %9511 = vadd.xlane.f32.xlu0 %v9510
        %v9512 = vpop.xlane.xlu0 %9511
        %v9513 = vsel %vm474, %v9489, 0.0
        %9514 = vadd.xlane.f32.xlu0 %v9513
        %v9515 = vpop.xlane.xlu0 %9514
        %v9516 = vsel %vm474, %v9490, 0.0
        %9517 = vadd.xlane.f32.xlu0 %v9516
        %v9518 = vpop.xlane.xlu0 %9517
        %v9519 = vsel %vm474, %v9491, 0.0
        %9520 = vadd.xlane.f32.xlu0 %v9519
        %v9521 = vpop.xlane.xlu0 %9520
        %v9522 = vsel %vm474, %v9492, 0.0
        %9523 = vadd.xlane.f32.xlu0 %v9522
        %v9524 = vpop.xlane.xlu0 %9523
        %v9525 = vsel %vm474, %v9493, 0.0
        %9526 = vadd.xlane.f32.xlu0 %v9525
        %v9527 = vpop.xlane.xlu0 %9526
        %v9528 = vsel %vm474, %v9494, 0.0
        %9529 = vadd.xlane.f32.xlu0 %v9528
        %v9530 = vpop.xlane.xlu0 %9529
        %v9531 = vsel %vm474, %v9495, 0.0
        %9532 = vadd.xlane.f32.xlu0 %v9531
        %v9533 = vpop.xlane.xlu0 %9532
        %v9534 = vsel %vm474, %v9496, 0.0
        %9535 = vadd.xlane.f32.xlu0 %v9534
        %v9536 = vpop.xlane.xlu0 %9535
        %v9537 = vsel %vm474, %v9497, 0.0
        %9538 = vadd.xlane.f32.xlu0 %v9537
        %v9539 = vpop.xlane.xlu0 %9538
        %v9540 = vsel %vm474, %v9498, 0.0
        %9541 = vadd.xlane.f32.xlu0 %v9540
        %v9542 = vpop.xlane.xlu0 %9541
        %v9543 = vsel %vm474, %v9499, 0.0
        %9544 = vadd.xlane.f32.xlu0 %v9543
        %v9545 = vpop.xlane.xlu0 %9544
        %v9546 = vsel %vm474, %v9500, 0.0
        %9547 = vadd.xlane.f32.xlu0 %v9546
        %v9548 = vpop.xlane.xlu0 %9547
        %v9549 = vmul.f32 %v9503, %v2952
        %v9550 = vmul.f32 %v9506, %v2952
        %v9551 = vmul.f32 %v9509, %v2952
        %v9552 = vmul.f32 %v9512, %v2952
        %v9553 = vmul.f32 %v9515, %v2952
        %v9554 = vmul.f32 %v9518, %v2952
        %v9555 = vmul.f32 %v9521, %v2952
        %v9556 = vmul.f32 %v9524, %v2952
        %v9557 = vmul.f32 %v9527, %v2952
        %v9558 = vmul.f32 %v9530, %v2952
        %v9559 = vmul.f32 %v9533, %v2952
        %v9560 = vmul.f32 %v9536, %v2952
        %v9561 = vmul.f32 %v9539, %v2952
        %v9562 = vmul.f32 %v9542, %v2952
        %v9563 = vmul.f32 %v9545, %v2952
        %v9564 = vmul.f32 %v9548, %v2952
        %v9565 = vadd.f32 %v9549, 1e-05
        %v9566 = vadd.f32 %v9550, 1e-05
        %v9567 = vadd.f32 %v9551, 1e-05
        %v9568 = vadd.f32 %v9552, 1e-05
        %v9569 = vadd.f32 %v9553, 1e-05
        %v9570 = vadd.f32 %v9554, 1e-05
        %v9571 = vadd.f32 %v9555, 1e-05
        %v9572 = vadd.f32 %v9556, 1e-05
        %v9573 = vadd.f32 %v9557, 1e-05
        %v9574 = vadd.f32 %v9558, 1e-05
        %v9575 = vadd.f32 %v9559, 1e-05
        %v9576 = vadd.f32 %v9560, 1e-05
        %v9577 = vadd.f32 %v9561, 1e-05
        %v9578 = vadd.f32 %v9562, 1e-05
        %v9579 = vadd.f32 %v9563, 1e-05
        %v9580 = vadd.f32 %v9564, 1e-05
        %v9581 = vrsqrt.pop %v9565
        %v9582 = vmul.f32 %v9581, %v9565
        %v9583 = vmul.f32 %v9582, %v9581
        %v9584 = vmul.f32 0.5, %v9583
        %v9585 = vsub.f32 1.5, %v9584
        %v9586 = vmul.f32 %v9581, %v9585
        %vm9587 = vweird.f32 %v9565
        %vm9588 = vweird.f32 %v9581
        %vm9589 = vmor %vm9587, %vm9588
        %v9590 = vsel %vm9589, %v9581, %v9586
        %v9591 = vrsqrt.pop %v9566
        %v9592 = vmul.f32 %v9591, %v9566
        %v9593 = vmul.f32 %v9592, %v9591
        %v9594 = vmul.f32 0.5, %v9593
        %v9595 = vsub.f32 1.5, %v9594
        %v9596 = vmul.f32 %v9591, %v9595
        %vm9597 = vweird.f32 %v9566
        %vm9598 = vweird.f32 %v9591
        %vm9599 = vmor %vm9597, %vm9598
        %v9600 = vsel %vm9599, %v9591, %v9596
        %v9601 = vrsqrt.pop %v9567
        %v9602 = vmul.f32 %v9601, %v9567
        %v9603 = vmul.f32 %v9602, %v9601
        %v9604 = vmul.f32 0.5, %v9603
        %v9605 = vsub.f32 1.5, %v9604
        %v9606 = vmul.f32 %v9601, %v9605
        %vm9607 = vweird.f32 %v9567
        %vm9608 = vweird.f32 %v9601
        %vm9609 = vmor %vm9607, %vm9608
        %v9610 = vsel %vm9609, %v9601, %v9606
        %v9611 = vrsqrt.pop %v9568
        %v9612 = vmul.f32 %v9611, %v9568
        %v9613 = vmul.f32 %v9612, %v9611
        %v9614 = vmul.f32 0.5, %v9613
        %v9615 = vsub.f32 1.5, %v9614
        %v9616 = vmul.f32 %v9611, %v9615
        %vm9617 = vweird.f32 %v9568
        %vm9618 = vweird.f32 %v9611
        %vm9619 = vmor %vm9617, %vm9618
        %v9620 = vsel %vm9619, %v9611, %v9616
        %v9621 = vrsqrt.pop %v9569
        %v9622 = vmul.f32 %v9621, %v9569
        %v9623 = vmul.f32 %v9622, %v9621
        %v9624 = vmul.f32 0.5, %v9623
        %v9625 = vsub.f32 1.5, %v9624
        %v9626 = vmul.f32 %v9621, %v9625
        %vm9627 = vweird.f32 %v9569
        %vm9628 = vweird.f32 %v9621
        %vm9629 = vmor %vm9627, %vm9628
        %v9630 = vsel %vm9629, %v9621, %v9626
        %v9631 = vrsqrt.pop %v9570
        %v9632 = vmul.f32 %v9631, %v9570
        %v9633 = vmul.f32 %v9632, %v9631
        %v9634 = vmul.f32 0.5, %v9633
        %v9635 = vsub.f32 1.5, %v9634
        %v9636 = vmul.f32 %v9631, %v9635
        %vm9637 = vweird.f32 %v9570
        %vm9638 = vweird.f32 %v9631
        %vm9639 = vmor %vm9637, %vm9638
        %v9640 = vsel %vm9639, %v9631, %v9636
        %v9641 = vrsqrt.pop %v9571
        %v9642 = vmul.f32 %v9641, %v9571
        %v9643 = vmul.f32 %v9642, %v9641
        %v9644 = vmul.f32 0.5, %v9643
        %v9645 = vsub.f32 1.5, %v9644
        %v9646 = vmul.f32 %v9641, %v9645
        %vm9647 = vweird.f32 %v9571
        %vm9648 = vweird.f32 %v9641
        %vm9649 = vmor %vm9647, %vm9648
        %v9650 = vsel %vm9649, %v9641, %v9646
        %v9651 = vrsqrt.pop %v9572
        %v9652 = vmul.f32 %v9651, %v9572
        %v9653 = vmul.f32 %v9652, %v9651
        %v9654 = vmul.f32 0.5, %v9653
        %v9655 = vsub.f32 1.5, %v9654
        %v9656 = vmul.f32 %v9651, %v9655
        %vm9657 = vweird.f32 %v9572
        %vm9658 = vweird.f32 %v9651
        %vm9659 = vmor %vm9657, %vm9658
        %v9660 = vsel %vm9659, %v9651, %v9656
        %v9661 = vrsqrt.pop %v9573
        %v9662 = vmul.f32 %v9661, %v9573
        %v9663 = vmul.f32 %v9662, %v9661
        %v9664 = vmul.f32 0.5, %v9663
        %v9665 = vsub.f32 1.5, %v9664
        %v9666 = vmul.f32 %v9661, %v9665
        %vm9667 = vweird.f32 %v9573
        %vm9668 = vweird.f32 %v9661
        %vm9669 = vmor %vm9667, %vm9668
        %v9670 = vsel %vm9669, %v9661, %v9666
        %v9671 = vrsqrt.pop %v9574
        %v9672 = vmul.f32 %v9671, %v9574
        %v9673 = vmul.f32 %v9672, %v9671
        %v9674 = vmul.f32 0.5, %v9673
        %v9675 = vsub.f32 1.5, %v9674
        %v9676 = vmul.f32 %v9671, %v9675
        %vm9677 = vweird.f32 %v9574
        %vm9678 = vweird.f32 %v9671
        %vm9679 = vmor %vm9677, %vm9678
        %v9680 = vsel %vm9679, %v9671, %v9676
        %v9681 = vrsqrt.pop %v9575
        %v9682 = vmul.f32 %v9681, %v9575
        %v9683 = vmul.f32 %v9682, %v9681
        %v9684 = vmul.f32 0.5, %v9683
        %v9685 = vsub.f32 1.5, %v9684
        %v9686 = vmul.f32 %v9681, %v9685
        %vm9687 = vweird.f32 %v9575
        %vm9688 = vweird.f32 %v9681
        %vm9689 = vmor %vm9687, %vm9688
        %v9690 = vsel %vm9689, %v9681, %v9686
        %v9691 = vrsqrt.pop %v9576
        %v9692 = vmul.f32 %v9691, %v9576
        %v9693 = vmul.f32 %v9692, %v9691
        %v9694 = vmul.f32 0.5, %v9693
        %v9695 = vsub.f32 1.5, %v9694
        %v9696 = vmul.f32 %v9691, %v9695
        %vm9697 = vweird.f32 %v9576
        %vm9698 = vweird.f32 %v9691
        %vm9699 = vmor %vm9697, %vm9698
        %v9700 = vsel %vm9699, %v9691, %v9696
        %v9701 = vrsqrt.pop %v9577
        %v9702 = vmul.f32 %v9701, %v9577
        %v9703 = vmul.f32 %v9702, %v9701
        %v9704 = vmul.f32 0.5, %v9703
        %v9705 = vsub.f32 1.5, %v9704
        %v9706 = vmul.f32 %v9701, %v9705
        %vm9707 = vweird.f32 %v9577
        %vm9708 = vweird.f32 %v9701
        %vm9709 = vmor %vm9707, %vm9708
        %v9710 = vsel %vm9709, %v9701, %v9706
        %v9711 = vrsqrt.pop %v9578
        %v9712 = vmul.f32 %v9711, %v9578
        %v9713 = vmul.f32 %v9712, %v9711
        %v9714 = vmul.f32 0.5, %v9713
        %v9715 = vsub.f32 1.5, %v9714
        %v9716 = vmul.f32 %v9711, %v9715
        %vm9717 = vweird.f32 %v9578
        %vm9718 = vweird.f32 %v9711
        %vm9719 = vmor %vm9717, %vm9718
        %v9720 = vsel %vm9719, %v9711, %v9716
        %v9721 = vrsqrt.pop %v9579
        %v9722 = vmul.f32 %v9721, %v9579
        %v9723 = vmul.f32 %v9722, %v9721
        %v9724 = vmul.f32 0.5, %v9723
        %v9725 = vsub.f32 1.5, %v9724
        %v9726 = vmul.f32 %v9721, %v9725
        %vm9727 = vweird.f32 %v9579
        %vm9728 = vweird.f32 %v9721
        %vm9729 = vmor %vm9727, %vm9728
        %v9730 = vsel %vm9729, %v9721, %v9726
        %v9731 = vrsqrt.pop %v9580
        %v9732 = vmul.f32 %v9731, %v9580
        %v9733 = vmul.f32 %v9732, %v9731
        %v9734 = vmul.f32 0.5, %v9733
        %v9735 = vsub.f32 1.5, %v9734
        %v9736 = vmul.f32 %v9731, %v9735
        %vm9737 = vweird.f32 %v9580
        %vm9738 = vweird.f32 %v9731
        %vm9739 = vmor %vm9737, %vm9738
        %v9740 = vsel %vm9739, %v9731, %v9736
        %v9741 = vmul.f32 %v9469, %v9590
        %v9742 = vmul.f32 %v9470, %v9600
        %v9743 = vmul.f32 %v9471, %v9610
        %v9744 = vmul.f32 %v9472, %v9620
        %v9745 = vmul.f32 %v9473, %v9630
        %v9746 = vmul.f32 %v9474, %v9640
        %v9747 = vmul.f32 %v9475, %v9650
        %v9748 = vmul.f32 %v9476, %v9660
        %v9749 = vmul.f32 %v9477, %v9670
        %v9750 = vmul.f32 %v9478, %v9680
        %v9751 = vmul.f32 %v9479, %v9690
        %v9752 = vmul.f32 %v9480, %v9700
        %v9753 = vmul.f32 %v9481, %v9710
        %v9754 = vmul.f32 %v9482, %v9720
        %v9755 = vmul.f32 %v9483, %v9730
        %v9756 = vmul.f32 %v9484, %v9740
        %v9757 = vld [vmem:[%s3 + $0x665] ss:$0 sm:$0xff]
        %v9758 = vmul.f32 %v9741, %v9757
        %v9759 = vmul.f32 %v9742, %v9757
        %v9760 = vmul.f32 %v9743, %v9757
        %v9761 = vmul.f32 %v9744, %v9757
        %v9762 = vmul.f32 %v9745, %v9757
        %v9763 = vmul.f32 %v9746, %v9757
        %v9764 = vmul.f32 %v9747, %v9757
        %v9765 = vmul.f32 %v9748, %v9757
        %v9766 = vmul.f32 %v9749, %v9757
        %v9767 = vmul.f32 %v9750, %v9757
        %v9768 = vmul.f32 %v9751, %v9757
        %v9769 = vmul.f32 %v9752, %v9757
        %v9770 = vmul.f32 %v9753, %v9757
        %v9771 = vmul.f32 %v9754, %v9757
        %v9772 = vmul.f32 %v9755, %v9757
        %v9773 = vmul.f32 %v9756, %v9757
        %v9774 = vld [vmem:[%s3 + $0x666] ss:$0 sm:$0xff]
        %v9775 = vadd.f32 %v9758, %v9774
        %v9776 = vadd.f32 %v9759, %v9774
        %v9777 = vadd.f32 %v9760, %v9774
        %v9778 = vadd.f32 %v9761, %v9774
        %v9779 = vadd.f32 %v9762, %v9774
        %v9780 = vadd.f32 %v9763, %v9774
        %v9781 = vadd.f32 %v9764, %v9774
        %v9782 = vadd.f32 %v9765, %v9774
        %v9783 = vadd.f32 %v9766, %v9774
        %v9784 = vadd.f32 %v9767, %v9774
        %v9785 = vadd.f32 %v9768, %v9774
        %v9786 = vadd.f32 %v9769, %v9774
        %v9787 = vadd.f32 %v9770, %v9774
        %v9788 = vadd.f32 %v9771, %v9774
        %v9789 = vadd.f32 %v9772, %v9774
        %v9790 = vadd.f32 %v9773, %v9774
        %v9791 = vmax.f32 %v9775, 0.0
        %v9792 = vmax.f32 %v9776, 0.0
        %v9793 = vmax.f32 %v9777, 0.0
        %v9794 = vmax.f32 %v9778, 0.0
        %v9795 = vmax.f32 %v9779, 0.0
        %v9796 = vmax.f32 %v9780, 0.0
        %v9797 = vmax.f32 %v9781, 0.0
        %v9798 = vmax.f32 %v9782, 0.0
        %v9799 = vmax.f32 %v9783, 0.0
        %v9800 = vmax.f32 %v9784, 0.0
        %v9801 = vmax.f32 %v9785, 0.0
        %v9802 = vmax.f32 %v9786, 0.0
        %v9803 = vmax.f32 %v9787, 0.0
        %v9804 = vmax.f32 %v9788, 0.0
        %v9805 = vmax.f32 %v9789, 0.0
        %v9806 = vmax.f32 %v9790, 0.0
        %v9807 = vld [vmem:[%s3 + $0x610] sm:$0xff]
        %v9808 = vld [vmem:[%s3 + $0x620] sm:$0xff]
        %v9809 = vld [vmem:[%s3 + $0x630] sm:$0xff]
        %v9810 = vld [vmem:[%s3 + $0x640] sm:$0xff]
        %v9811 = vld [vmem:[%s3 + $0x667] ss:$0 sm:$0xff]
        %v9813 = vsel %vm474, %v9791, 0
        %v9816 = vsel %vm474, %v9792, 0
        %v9819 = vsel %vm474, %v9793, 0
        %v9822 = vsel %vm474, %v9794, 0
        %v9825 = vsel %vm474, %v9795, 0
        %v9828 = vsel %vm474, %v9796, 0
        %v9831 = vsel %vm474, %v9797, 0
        %v9834 = vsel %vm474, %v9798, 0
        %v9837 = vsel %vm474, %v9799, 0
        %v9840 = vsel %vm474, %v9800, 0
        %v9843 = vsel %vm474, %v9801, 0
        %v9846 = vsel %vm474, %v9802, 0
        %v9849 = vsel %vm474, %v9803, 0
        %v9852 = vsel %vm474, %v9804, 0
        %v9855 = vsel %vm474, %v9805, 0
        %v9858 = vsel %vm474, %v9806, 0
        %9860 = vmatpush.msra.mxu0 0.0
        %9861 = vmatpush.msra.mxu0 0.0
        %9862 = vmatpush.msra.mxu0 0.0
        %9863 = vmatpush.msra.mxu0 0.0
        %9864 = vmatpush.msra.mxu0 0.0
        %9865 = vmatpush.msra.mxu0 0.0
        %9866 = vmatpush.msra.mxu0 0.0
        %9867 = vmatpush.msra.mxu0 0.0
        %9868 = vmatpush.msra.mxu0 0.0
        %9869 = vmatpush.msra.mxu0 0.0
        %9870 = vmatpush.msra.mxu0 0.0
        %9871 = vmatpush.msra.mxu0 0.0
        %9872 = vmatpush.msra.mxu0 %v9810
        %9873 = vmatpush.msra.mxu0 %v9809
        %9874 = vmatpush.msra.mxu0 %v9808
        %9875 = vmatpush.msra.mxu0 %v9807
        %9876 = vmatmul.f32.gmra.mxu0 %v9813
        %v9877 = vpop.f32.mrf.mxu0
        %v9878 = vadd.f32 %v9811, %v9877
        %9879 = vmatmul.f32.gmra.mxu0 %v9816
        %v9880 = vpop.f32.mrf.mxu0
        %v9881 = vadd.f32 %v9811, %v9880
        %9882 = vmatmul.f32.gmra.mxu0 %v9819
        %v9883 = vpop.f32.mrf.mxu0
        %v9884 = vadd.f32 %v9811, %v9883
        %9885 = vmatmul.f32.gmra.mxu0 %v9822
        %v9886 = vpop.f32.mrf.mxu0
        %v9887 = vadd.f32 %v9811, %v9886
        %9888 = vmatmul.f32.gmra.mxu0 %v9825
        %v9889 = vpop.f32.mrf.mxu0
        %v9890 = vadd.f32 %v9811, %v9889
        %9891 = vmatmul.f32.gmra.mxu0 %v9828
        %v9892 = vpop.f32.mrf.mxu0
        %v9893 = vadd.f32 %v9811, %v9892
        %9894 = vmatmul.f32.gmra.mxu0 %v9831
        %v9895 = vpop.f32.mrf.mxu0
        %v9896 = vadd.f32 %v9811, %v9895
        %9897 = vmatmul.f32.gmra.mxu0 %v9834
        %v9898 = vpop.f32.mrf.mxu0
        %v9899 = vadd.f32 %v9811, %v9898
        %9900 = vmatmul.f32.gmra.mxu0 %v9837
        %v9901 = vpop.f32.mrf.mxu0
        %v9902 = vadd.f32 %v9811, %v9901
        %9903 = vmatmul.f32.gmra.mxu0 %v9840
        %v9904 = vpop.f32.mrf.mxu0
        %v9905 = vadd.f32 %v9811, %v9904
        %9906 = vmatmul.f32.gmra.mxu0 %v9843
        %v9907 = vpop.f32.mrf.mxu0
        %v9908 = vadd.f32 %v9811, %v9907
        %9909 = vmatmul.f32.gmra.mxu0 %v9846
        %v9910 = vpop.f32.mrf.mxu0
        %v9911 = vadd.f32 %v9811, %v9910
        %9912 = vmatmul.f32.gmra.mxu0 %v9849
        %v9913 = vpop.f32.mrf.mxu0
        %v9914 = vadd.f32 %v9811, %v9913
        %9915 = vmatmul.f32.gmra.mxu0 %v9852
        %v9916 = vpop.f32.mrf.mxu0
        %v9917 = vadd.f32 %v9811, %v9916
        %9918 = vmatmul.f32.gmra.mxu0 %v9855
        %v9919 = vpop.f32.mrf.mxu0
        %v9920 = vadd.f32 %v9811, %v9919
        %9921 = vmatmul.f32.gmra.mxu0 %v9858
        %v9922 = vpop.f32.mrf.mxu0
        %v9923 = vadd.f32 %v9811, %v9922
        %9924 = vdwg.mxu0
        %9925 = vmax.xlane.f32.xlu0 %v9878
        %v9926 = vpop.xlane.xlu0 %9925
        %9927 = vmax.xlane.f32.xlu0 %v9881
        %v9928 = vpop.xlane.xlu0 %9927
        %9929 = vmax.xlane.f32.xlu0 %v9884
        %v9930 = vpop.xlane.xlu0 %9929
        %9931 = vmax.xlane.f32.xlu0 %v9887
        %v9932 = vpop.xlane.xlu0 %9931
        %9933 = vmax.xlane.f32.xlu0 %v9890
        %v9934 = vpop.xlane.xlu0 %9933
        %9935 = vmax.xlane.f32.xlu0 %v9893
        %v9936 = vpop.xlane.xlu0 %9935
        %9937 = vmax.xlane.f32.xlu0 %v9896
        %v9938 = vpop.xlane.xlu0 %9937
        %9939 = vmax.xlane.f32.xlu0 %v9899
        %v9940 = vpop.xlane.xlu0 %9939
        %9941 = vmax.xlane.f32.xlu0 %v9902
        %v9942 = vpop.xlane.xlu0 %9941
        %9943 = vmax.xlane.f32.xlu0 %v9905
        %v9944 = vpop.xlane.xlu0 %9943
        %9945 = vmax.xlane.f32.xlu0 %v9908
        %v9946 = vpop.xlane.xlu0 %9945
        %9947 = vmax.xlane.f32.xlu0 %v9911
        %v9948 = vpop.xlane.xlu0 %9947
        %9949 = vmax.xlane.f32.xlu0 %v9914
        %v9950 = vpop.xlane.xlu0 %9949
        %9951 = vmax.xlane.f32.xlu0 %v9917
        %v9952 = vpop.xlane.xlu0 %9951
        %9953 = vmax.xlane.f32.xlu0 %v9920
        %v9954 = vpop.xlane.xlu0 %9953
        %9955 = vmax.xlane.f32.xlu0 %v9923
        %v9956 = vpop.xlane.xlu0 %9955
        %v9957 = vsub.f32 %v9878, %v9926
        %v9958 = vsub.f32 %v9881, %v9928
        %v9959 = vsub.f32 %v9884, %v9930
        %v9960 = vsub.f32 %v9887, %v9932
        %v9961 = vsub.f32 %v9890, %v9934
        %v9962 = vsub.f32 %v9893, %v9936
        %v9963 = vsub.f32 %v9896, %v9938
        %v9964 = vsub.f32 %v9899, %v9940
        %v9965 = vsub.f32 %v9902, %v9942
        %v9966 = vsub.f32 %v9905, %v9944
        %v9967 = vsub.f32 %v9908, %v9946
        %v9968 = vsub.f32 %v9911, %v9948
        %v9969 = vsub.f32 %v9914, %v9950
        %v9970 = vsub.f32 %v9917, %v9952
        %v9971 = vsub.f32 %v9920, %v9954
        %v9972 = vsub.f32 %v9923, %v9956
        %v9973 = vmul.f32 %v9957, 1.442695
        %v9974 = vpow.pop %v9973
        %v9975 = vmul.f32 %v9958, 1.442695
        %v9976 = vpow.pop %v9975
        %v9977 = vmul.f32 %v9959, 1.442695
        %v9978 = vpow.pop %v9977
        %v9979 = vmul.f32 %v9960, 1.442695
        %v9980 = vpow.pop %v9979
        %v9981 = vmul.f32 %v9961, 1.442695
        %v9982 = vpow.pop %v9981
        %v9983 = vmul.f32 %v9962, 1.442695
        %v9984 = vpow.pop %v9983
        %v9985 = vmul.f32 %v9963, 1.442695
        %v9986 = vpow.pop %v9985
        %v9987 = vmul.f32 %v9964, 1.442695
        %v9988 = vpow.pop %v9987
        %v9989 = vmul.f32 %v9965, 1.442695
        %v9990 = vpow.pop %v9989
        %v9991 = vmul.f32 %v9966, 1.442695
        %v9992 = vpow.pop %v9991
        %v9993 = vmul.f32 %v9967, 1.442695
        %v9994 = vpow.pop %v9993
        %v9995 = vmul.f32 %v9968, 1.442695
        %v9996 = vpow.pop %v9995
        %v9997 = vmul.f32 %v9969, 1.442695
        %v9998 = vpow.pop %v9997
        %v9999 = vmul.f32 %v9970, 1.442695
        %v10000 = vpow.pop %v9999
        %v10001 = vmul.f32 %v9971, 1.442695
        %v10002 = vpow.pop %v10001
        %v10003 = vmul.f32 %v9972, 1.442695
        %v10004 = vpow.pop %v10003
        %10005 = vadd.xlane.f32.xlu0 %v9974
        %v10006 = vpop.xlane.xlu0 %10005
        %10007 = vadd.xlane.f32.xlu0 %v9976
        %v10008 = vpop.xlane.xlu0 %10007
        %10009 = vadd.xlane.f32.xlu0 %v9978
        %v10010 = vpop.xlane.xlu0 %10009
        %10011 = vadd.xlane.f32.xlu0 %v9980
        %v10012 = vpop.xlane.xlu0 %10011
        %10013 = vadd.xlane.f32.xlu0 %v9982
        %v10014 = vpop.xlane.xlu0 %10013
        %10015 = vadd.xlane.f32.xlu0 %v9984
        %v10016 = vpop.xlane.xlu0 %10015
        %10017 = vadd.xlane.f32.xlu0 %v9986
        %v10018 = vpop.xlane.xlu0 %10017
        %10019 = vadd.xlane.f32.xlu0 %v9988
        %v10020 = vpop.xlane.xlu0 %10019
        %10021 = vadd.xlane.f32.xlu0 %v9990
        %v10022 = vpop.xlane.xlu0 %10021
        %10023 = vadd.xlane.f32.xlu0 %v9992
        %v10024 = vpop.xlane.xlu0 %10023
        %10025 = vadd.xlane.f32.xlu0 %v9994
        %v10026 = vpop.xlane.xlu0 %10025
        %10027 = vadd.xlane.f32.xlu0 %v9996
        %v10028 = vpop.xlane.xlu0 %10027
        %10029 = vadd.xlane.f32.xlu0 %v9998
        %v10030 = vpop.xlane.xlu0 %10029
        %10031 = vadd.xlane.f32.xlu0 %v10000
        %v10032 = vpop.xlane.xlu0 %10031
        %10033 = vadd.xlane.f32.xlu0 %v10002
        %v10034 = vpop.xlane.xlu0 %10033
        %10035 = vadd.xlane.f32.xlu0 %v10004
        %v10036 = vpop.xlane.xlu0 %10035
        %v10037 = vlog2.pop %v10006
        %v10038 = vmul.f32 %v10037, 0.6931472
        %v10039 = vlog2.pop %v10008
        %v10040 = vmul.f32 %v10039, 0.6931472
        %v10041 = vlog2.pop %v10010
        %v10042 = vmul.f32 %v10041, 0.6931472
        %v10043 = vlog2.pop %v10012
        %v10044 = vmul.f32 %v10043, 0.6931472
        %v10045 = vlog2.pop %v10014
        %v10046 = vmul.f32 %v10045, 0.6931472
        %v10047 = vlog2.pop %v10016
        %v10048 = vmul.f32 %v10047, 0.6931472
        %v10049 = vlog2.pop %v10018
        %v10050 = vmul.f32 %v10049, 0.6931472
        %v10051 = vlog2.pop %v10020
        %v10052 = vmul.f32 %v10051, 0.6931472
        %v10053 = vlog2.pop %v10022
        %v10054 = vmul.f32 %v10053, 0.6931472
        %v10055 = vlog2.pop %v10024
        %v10056 = vmul.f32 %v10055, 0.6931472
        %v10057 = vlog2.pop %v10026
        %v10058 = vmul.f32 %v10057, 0.6931472
        %v10059 = vlog2.pop %v10028
        %v10060 = vmul.f32 %v10059, 0.6931472
        %v10061 = vlog2.pop %v10030
        %v10062 = vmul.f32 %v10061, 0.6931472
        %v10063 = vlog2.pop %v10032
        %v10064 = vmul.f32 %v10063, 0.6931472
        %v10065 = vlog2.pop %v10034
        %v10066 = vmul.f32 %v10065, 0.6931472
        %v10067 = vlog2.pop %v10036
        %v10068 = vmul.f32 %v10067, 0.6931472
        %v10069 = vadd.f32 %v10038, %v9926
        %v10070 = vadd.f32 %v10040, %v9928
        %v10071 = vadd.f32 %v10042, %v9930
        %v10072 = vadd.f32 %v10044, %v9932
        %v10073 = vadd.f32 %v10046, %v9934
        %v10074 = vadd.f32 %v10048, %v9936
        %v10075 = vadd.f32 %v10050, %v9938
        %v10076 = vadd.f32 %v10052, %v9940
        %v10077 = vadd.f32 %v10054, %v9942
        %v10078 = vadd.f32 %v10056, %v9944
        %v10079 = vadd.f32 %v10058, %v9946
        %v10080 = vadd.f32 %v10060, %v9948
        %v10081 = vadd.f32 %v10062, %v9950
        %v10082 = vadd.f32 %v10064, %v9952
        %v10083 = vadd.f32 %v10066, %v9954
        %v10084 = vadd.f32 %v10068, %v9956
        %v10085 = vsub.f32 %v9878, %v10069
        %v10086 = vsub.f32 %v9881, %v10070
        %v10087 = vsub.f32 %v9884, %v10071
        %v10088 = vsub.f32 %v9887, %v10072
        %v10089 = vsub.f32 %v9890, %v10073
        %v10090 = vsub.f32 %v9893, %v10074
        %v10091 = vsub.f32 %v9896, %v10075
        %v10092 = vsub.f32 %v9899, %v10076
        %v10093 = vsub.f32 %v9902, %v10077
        %v10094 = vsub.f32 %v9905, %v10078
        %v10095 = vsub.f32 %v9908, %v10079
        %v10096 = vsub.f32 %v9911, %v10080
        %v10097 = vsub.f32 %v9914, %v10081
        %v10098 = vsub.f32 %v9917, %v10082
        %v10099 = vsub.f32 %v9920, %v10083
        %v10100 = vsub.f32 %v9923, %v10084
        %10101 = vst [vmem:[%s284] sm:$0xff] %v10085
        %10102 = vst [vmem:[%s284 + $0x8] sm:$0xff] %v10086
        %10103 = vst [vmem:[%s284 + $0x10] sm:$0xff] %v10087
        %10104 = vst [vmem:[%s284 + $0x18] sm:$0xff] %v10088
        %10105 = vst [vmem:[%s284 + $0x20] sm:$0xff] %v10089
        %10106 = vst [vmem:[%s284 + $0x28] sm:$0xff] %v10090
        %10107 = vst [vmem:[%s284 + $0x30] sm:$0xff] %v10091
        %10108 = vst [vmem:[%s284 + $0x38] sm:$0xff] %v10092
        %10109 = vst [vmem:[%s284 + $0x40] sm:$0xff] %v10093
        %10110 = vst [vmem:[%s284 + $0x48] sm:$0xff] %v10094
        %10111 = vst [vmem:[%s284 + $0x50] sm:$0xff] %v10095
        %10112 = vst [vmem:[%s284 + $0x58] sm:$0xff] %v10096
        %10113 = vst [vmem:[%s284 + $0x60] sm:$0xff] %v10097
        %10114 = vst [vmem:[%s284 + $0x68] sm:$0xff] %v10098
        %10115 = vst [vmem:[%s284 + $0x70] sm:$0xff] %v10099
        %10116 = vst [vmem:[%s284 + $0x78] sm:$0xff] %v10100
        %s10117 = smul.u32 16, %s17
        %p10118 = scmp.lt.s32.totalorder %s10117, 63
        %s10119 = scalar_select %p10118, %s10117, 63
        %s10120 = smul.addr %s10119, 8
        %s10121 = scalar_lea.vmem %s5, %s10120
        // Predicated region
        $region45: #{particle_gnn_forward.1} parent=39 // pred_check
          %p10122 = pneg %p155
        $region46: #{particle_gnn_forward.1} parent=39 // pred_check_branch
          %10124 = sbr.rel (%p10122) target = $region48
        $region47: #{particle_gnn_forward.1} parent=39 // pred_region
          %s10125 = smul.u32 16, %s17
        $region48: #{particle_gnn_forward.1} parent=39 // pred_fallthru
          _
      $region40: #{particle_gnn_forward.1} parent=5 // pred_fallthru
        _
      %p10126 = scmp.le.s32.totalorder 2, %s12
      // Predicated region
      $region49: #{particle_gnn_forward.1} parent=5 // pred_check
        %p10127 = pneg %p10126
      $region50: #{particle_gnn_forward.1} parent=5 // pred_check_branch
        %10129 = sbr.rel (%p10127) target = $region52
      $region51: #{particle_gnn_forward.1} parent=5 // pred_region
        %s10130 = ssub.s32 %s12, 2
        // Predicated region
        $region53: #{particle_gnn_forward.1} parent=51 // pred_check
          %p10131 = pneg %p161
        $region54: #{particle_gnn_forward.1} parent=51 // pred_check_branch
          %10133 = sbr.rel (%p10131) target = $region56
        $region55: #{particle_gnn_forward.1} parent=51 // pred_region
          %s10134 = smul.u32 16, %s18
          %p10135 = scmp.lt.s32.totalorder %s10134, 63
          %s10136 = scalar_select %p10135, %s10134, 63
          %s10137 = smul.addr %s10136, 8
          %s10138 = scalar_lea.vmem %s5, %s10137
        $region56: #{particle_gnn_forward.1} parent=51 // pred_fallthru
          _
      $region52: #{particle_gnn_forward.1} parent=5 // pred_fallthru
        _
    $region6: #{particle_gnn_forward.1} parent=1 // loop_footer
      %s16 = sadd.s32 1, %s12
    $region7: #{particle_gnn_forward.1} parent=1 // loop_footer_branch
      %11 = sbr.rel target = $region3
    $region8: #{particle_gnn_forward.1} parent=1 // loop_exit
      _
    %10139 = vsyncpa [#allocation3], 1
    %s10140 = scalar_lea.sflag [#allocation3], 1
    %10141 = vsyncpa %s10140, 1

</llo_original>
